<compile_context>
chip_gen: v6e
topology: v6e:2x2x1
jax: 0.10.0
libtpu: 0.0.40
codegen_flags: <defaults>
</compile_context>

<pallas_src>
import numpy as np
import jax
import jax.numpy as jnp
from jax import lax
from jax.experimental import pallas as pl
from jax.experimental.pallas import tpu as pltpu

MNIST_IMAGE_SIZE = 28
CONV_K = 3
POOL = 2
NUM_IN_CH = 1
NUM_C1 = 32
NUM_C2 = 64
FC1_OUT = 128
NUM_CLASSES = 10
FC2_PAD = 128                       # lane-dense padded logits width

# conv1 geometry
H1 = MNIST_IMAGE_SIZE // POOL       # 14 pooled rows/cols after conv1
PIX1 = H1 * H1                      # 196 pooled pixels per sample
GRP1 = PIX1 // 4                    # 49 groups of 4 pooled pixels
K1 = 4 * CONV_K * CONV_K            # 36 taps per group row
K1_PAD = 128                        # lane-dense padded patch width
N1 = 4 * NUM_C1                     # 128 output lanes (4 pixels x 32 channels)

# conv2 geometry
H2 = H1 + 2                         # 16 padded feature-map rows/cols
LANES2 = H2 * NUM_C1                # 512 input lanes (w' x c)
P2 = H1 // POOL                     # 7 pooled output rows/cols
N2 = P2 * NUM_C2                    # 448 output lanes (pw x co)
D_FLAT = P2 * P2 * NUM_C2           # 3136 flattened features


def _tpu_tuning():
    """Generation-aware batch-tile targets and VMEM limit."""
    vmem_cap = 64 * 1024 * 1024
    try:
        info = pltpu.get_tpu_info()
        vmem_cap = int(getattr(info, "vmem_capacity_bytes", vmem_cap))
    except Exception:
        pass
    if vmem_cap >= 100 * 1024 * 1024:               # v5e / v6e: 128 MiB VMEM
        return 64, 64, 512, 64 * 1024 * 1024
    return 32, 32, 256, 40 * 1024 * 1024            # v7x: 64 MiB VMEM per TC


CONV1_BT, CONV2_BT, MLP_BT, VMEM_LIMIT = _tpu_tuning()


def _round_up(x, m):
    return (x + m - 1) // m * m


def _pick_bt(n_pad, target):
    """Largest multiple-of-8 divisor of n_pad <= target, keeping >=2 grid steps
    (v7x has 2 TensorCores).  Small batches run as a single full-extent block."""
    if n_pad <= 8:
        return n_pad
    best = 8
    d = 8
    limit = min(target, n_pad // 2)
    while d <= limit:
        if n_pad % d == 0:
            best = d
        d += 8
    return best


# ---------------------------------------------------------------------------
# Pallas kernels
# ---------------------------------------------------------------------------
def conv1_kernel(p_ref, w_ref, b_ref, o_ref):
    """conv1 (3x3, pad 1) + 2x2 maxpool + bias + ReLU.

    p_ref: (4, R, 128) bf16 -- per pool position; R = Bt*49 rows, each packing
           4 consecutive pooled pixels; lane j*9+t = tap t of pixel j (36->128).
    w_ref: (128, 128) bf16 block-diagonal (pixel j, tap t) -> (pixel j, channel).
    b_ref: (1, 128) f32 bias tiled over the 4 pixel slots.
    o_ref: (R, 128) bf16, lanes = (pixel-in-group, channel)  [lane-dense store].
    """
    w = w_ref[...]
    acc = jnp.dot(p_ref[0], w, preferred_element_type=jnp.float32)
    for q in range(1, POOL * POOL):
        acc = jnp.maximum(acc, jnp.dot(p_ref[q], w, preferred_element_type=jnp.float32))
    # bias + ReLU after the pool max (exactly equal numerics).
    o_ref[...] = jnp.maximum(acc + b_ref[...], 0.0).astype(o_ref.dtype)


def conv2_kernel(x_ref, w_ref, b_ref, o_ref):
    """conv2 (3x3, pad 1) + 2x2 maxpool + bias + ReLU with in-kernel tap handling.

    x_ref: (2, Bt*8, 512) bf16 -- zero-padded conv1 feature map, split by row
           parity p; rows (sample, row-pair j), lanes (w', c).
    w_ref: (3, 2, 512, 448) bf16 -- per (ky, pool dx) banded weights that fold
           the 3 kx taps; columns are (pw, co).
    b_ref: (1, 448) f32 bias tiled over the 7 pooled columns.
    o_ref: (Bt, 7, 448) bf16 -- rows (sample, pooled row), lanes (pw, co).
    """
    bt = o_ref.shape[0]
    rows_half = H2 // POOL                              # 8
    xs = (x_ref[0], x_ref[1])                           # (Bt*8, 512) each
    pooled = None
    for dx in range(POOL):
        # z[ky][p][n, j, (pw, co)] = partial conv (tap row ky) at full-res row 2j+p.
        z = [[jnp.dot(xs[p], w_ref[ky, dx], preferred_element_type=jnp.float32)
              .reshape(bt, rows_half, N2) for p in range(POOL)]
             for ky in range(CONV_K)]
        for dy in range(POOL):
            s = None
            for ky in range(CONV_K):
                t = dy + ky
                zz = z[ky][t % 2][:, (t // 2):(t // 2) + P2, :]      # (Bt, 7, 448)
                s = zz if s is None else s + zz
            pooled = s if pooled is None else jnp.maximum(pooled, s)
    o_ref[...] = jnp.maximum(pooled + b_ref[...], 0.0).astype(o_ref.dtype)


def mlp_kernel(x_ref, w1_ref, b1_ref, w2_ref, b2_ref, o_ref):
    """fc1 + ReLU + (dropout = identity at inference) + fc2 (lane-padded to 128)."""
    h = jnp.dot(x_ref[...], w1_ref[...], preferred_element_type=jnp.float32)
    h = jnp.maximum(h + b1_ref[...], 0.0)
    # TODO(synk): train-mode dropout (p=0.25) would use pltpu.prng_*; identity at eval.
    o_ref[...] = jnp.dot(h.astype(w2_ref.dtype), w2_ref[...],
                         preferred_element_type=jnp.float32) + b2_ref[...]


# ---------------------------------------------------------------------------
# Host-side glue (cheap XLA ops on small data)
# ---------------------------------------------------------------------------
def _conv1_patches(img):
    """(N, 28, 28) image -> (4, N*49, 128) bf16 pool-position patches.

    Row (n, g) packs pooled pixels m = 4g+j; lane j*9+t is tap t of pixel j
    (zero padded 36 -> 128 so the streamed minor dim is lane-dense)."""
    n = img.shape[0]
    xp = jnp.pad(img, ((0, 0), (1, 1), (1, 1)))
    groups = []
    for q in range(POOL * POOL):
        dy, dx = q // POOL, q % POOL
        taps = []
        for ky in range(CONV_K):
            for kx in range(CONV_K):
                taps.append(xp[:, dy + ky::POOL, dx + kx::POOL][:, :H1, :H1])
        p = jnp.stack(taps, axis=-1)                      # (N, 14, 14, 9)
        groups.append(p.reshape(n, GRP1, K1))             # (N, 49, 36)
    pat = jnp.stack(groups, axis=0).reshape(POOL * POOL, n * GRP1, K1)
    pat = jnp.pad(pat, ((0, 0), (0, 0), (0, K1_PAD - K1)))
    return pat.astype(jnp.bfloat16)


def conv1_layer(img, w_bd, b_t, n_pad):
    bt = _pick_bt(n_pad, CONV1_BT)
    rows = bt * GRP1
    pat = _conv1_patches(img)
    out = pl.pallas_call(
        conv1_kernel,
        out_shape=jax.ShapeDtypeStruct((n_pad * GRP1, N1), jnp.bfloat16),
        grid=(n_pad // bt,),
        in_specs=[
            pl.BlockSpec((POOL * POOL, rows, K1_PAD), lambda i: (0, i, 0)),
            pl.BlockSpec((K1_PAD, N1), lambda i: (0, 0)),
            pl.BlockSpec((1, N1), lambda i: (0, 0)),
        ],
        out_specs=pl.BlockSpec((rows, N1), lambda i: (i, 0)),
        compiler_params=pltpu.CompilerParams(
            dimension_semantics=("parallel",), vmem_limit_bytes=VMEM_LIMIT),
    )(pat, w_bd, b_t)
    return out.reshape(n_pad, H1, H1, NUM_C1)             # NHWC (N, 14, 14, 32)


def conv2_layer(fm, w_banks, b_t, n_pad):
    bt = _pick_bt(n_pad, CONV2_BT)
    rows_half = H2 // POOL                                 # 8
    fmp = jnp.pad(fm, ((0, 0), (1, 1), (1, 1), (0, 0)))    # (N, 16, 16, 32)
    fmp = fmp.reshape(n_pad, rows_half, POOL, LANES2)      # row y = 2j + p
    fmp = jnp.transpose(fmp, (2, 0, 1, 3)).reshape(POOL, n_pad * rows_half, LANES2)
    out = pl.pallas_call(
        conv2_kernel,
        out_shape=jax.ShapeDtypeStruct((n_pad, P2, N2), jnp.bfloat16),
        grid=(n_pad // bt,),
        in_specs=[
            pl.BlockSpec((POOL, bt * rows_half, LANES2), lambda i: (0, i, 0)),
            pl.BlockSpec((CONV_K, POOL, LANES2, N2), lambda i: (0, 0, 0, 0)),
            pl.BlockSpec((1, N2), lambda i: (0, 0)),
        ],
        out_specs=pl.BlockSpec((bt, P2, N2), lambda i: (i, 0, 0)),
        compiler_params=pltpu.CompilerParams(
            dimension_semantics=("parallel",), vmem_limit_bytes=VMEM_LIMIT),
    )(fmp, w_banks, b_t)
    return out.reshape(n_pad, D_FLAT)                      # NHWC flatten (N, 3136)


def mlp_head(x_flat, w1, b1, w2p, b2p, n_pad):
    bt = _pick_bt(n_pad, MLP_BT)
    out = pl.pallas_call(
        mlp_kernel,
        out_shape=jax.ShapeDtypeStruct((n_pad, FC2_PAD), jnp.float32),
        grid=(n_pad // bt,),
        in_specs=[
            pl.BlockSpec((bt, D_FLAT), lambda i: (i, 0)),
            pl.BlockSpec((D_FLAT, FC1_OUT), lambda i: (0, 0)),
            pl.BlockSpec((1, FC1_OUT), lambda i: (0, 0)),
            pl.BlockSpec((FC1_OUT, FC2_PAD), lambda i: (0, 0)),
            pl.BlockSpec((1, FC2_PAD), lambda i: (0, 0)),
        ],
        out_specs=pl.BlockSpec((bt, FC2_PAD), lambda i: (i, 0)),
        compiler_params=pltpu.CompilerParams(
            dimension_semantics=("parallel",), vmem_limit_bytes=VMEM_LIMIT),
    )(x_flat, w1, b1, w2p, b2p)
    return out


# ---------------------------------------------------------------------------
# One-time weight preprocessing (hoisted out of the per-call forward)
# ---------------------------------------------------------------------------
def prepare_params(params):
    # conv1: block-diagonal (pixel j, tap t) -> (pixel j, channel) weight.
    w1 = np.asarray(params["conv1_w"], np.float32).reshape(NUM_C1, CONV_K * CONV_K)
    w1_bd = np.zeros((K1_PAD, N1), np.float32)
    for j in range(4):
        w1_bd[j * 9:(j + 1) * 9, j * NUM_C1:(j + 1) * NUM_C1] = w1.T
    b1_t = np.tile(np.asarray(params["conv1_b"], np.float32), 4).reshape(1, N1)

    # conv2: per (ky, pool dx) banded weights folding the 3 kx taps.
    w2 = np.asarray(params["conv2_w"], np.float32)          # (64, 32, 3, 3)
    w2_banks = np.zeros((CONV_K, POOL, LANES2, N2), np.float32)
    for ky in range(CONV_K):
        for dx in range(POOL):
            for kx in range(CONV_K):
                blk = w2[:, :, ky, kx].T                    # (c, co)
                for pw in range(P2):
                    xw = POOL * pw + dx + kx
                    w2_banks[ky, dx, xw * NUM_C1:(xw + 1) * NUM_C1,
                             pw * NUM_C2:(pw + 1) * NUM_C2] = blk
    b2_t = np.tile(np.asarray(params["conv2_b"], np.float32), P2).reshape(1, N2)

    # fc1: permute input columns to the NHWC flatten order used by the kernels.
    fc1 = np.asarray(params["fc1_w"], np.float32).reshape(FC1_OUT, NUM_C2, P2, P2)
    fc1 = fc1.transpose(0, 2, 3, 1).reshape(FC1_OUT, D_FLAT).T     # (3136, 128)
    fc1_b = np.asarray(params["fc1_b"], np.float32).reshape(1, FC1_OUT)

    # fc2: pad to 128 output lanes (lane-dense stores); extra logits stay zero.
    fc2 = np.zeros((FC1_OUT, FC2_PAD), np.float32)
    fc2[:, :NUM_CLASSES] = np.asarray(params["fc2_w"], np.float32).T
    fc2_b = np.zeros((1, FC2_PAD), np.float32)
    fc2_b[0, :NUM_CLASSES] = np.asarray(params["fc2_b"], np.float32)

    return {
        "conv1_w": jnp.asarray(w1_bd, jnp.bfloat16),
        "conv1_b": jnp.asarray(b1_t, jnp.float32),
        "conv2_w": jnp.asarray(w2_banks, jnp.bfloat16),
        "conv2_b": jnp.asarray(b2_t, jnp.float32),
        "fc1_w": jnp.asarray(fc1, jnp.bfloat16),
        "fc1_b": jnp.asarray(fc1_b, jnp.float32),
        "fc2_w": jnp.asarray(fc2, jnp.bfloat16),
        "fc2_b": jnp.asarray(fc2_b, jnp.float32),
    }


# ---------------------------------------------------------------------------
# Full forward (matches CNN.forward in PyTorch, inference mode)
# ---------------------------------------------------------------------------
def cnn_forward(x_nchw, prepped):
    n = x_nchw.shape[0]
    n_pad = n if n <= 8 else _round_up(n, 8)           # <=7 samples of padding
    if n_pad != n:
        x_nchw = jnp.pad(x_nchw, ((0, n_pad - n), (0, 0), (0, 0), (0, 0)))
    img = x_nchw[:, 0]                                  # (N, 28, 28), 1 channel
    fm1 = conv1_layer(img, prepped["conv1_w"], prepped["conv1_b"], n_pad)
    x2 = conv2_layer(fm1, prepped["conv2_w"], prepped["conv2_b"], n_pad)
    logits = mlp_head(x2, prepped["fc1_w"], prepped["fc1_b"],
                      prepped["fc2_w"], prepped["fc2_b"], n_pad)
    return logits[:n, :NUM_CLASSES]


def reference_forward(x_nchw, params):
    """Pure-JAX reference with identical semantics & bf16 operand rounding."""
    n = x_nchw.shape[0]
    x = jnp.transpose(x_nchw, (0, 2, 3, 1))
    for w, b in ((params["conv1_w"], params["conv1_b"]),
                 (params["conv2_w"], params["conv2_b"])):
        k = jnp.transpose(w, (2, 3, 1, 0)).astype(jnp.bfloat16)   # HWIO
        y = lax.conv_general_dilated(x.astype(jnp.bfloat16), k, (1, 1), ((1, 1), (1, 1)),
                                     dimension_numbers=("NHWC", "HWIO", "NHWC"),
                                     preferred_element_type=jnp.float32) + b
        y = jnp.maximum(y, 0.0)
        y = lax.reduce_window(y, -jnp.inf, lax.max, (1, 2, 2, 1), (1, 2, 2, 1), "VALID")
        x = y.astype(jnp.bfloat16).astype(jnp.float32)
    x = jnp.transpose(x, (0, 3, 1, 2)).reshape(n, -1)
    h = jnp.dot(x.astype(jnp.bfloat16), params["fc1_w"].T.astype(jnp.bfloat16),
                preferred_element_type=jnp.float32) + params["fc1_b"]
    h = jnp.maximum(h, 0.0)
    return jnp.dot(h.astype(jnp.bfloat16), params["fc2_w"].T.astype(jnp.bfloat16),
                   preferred_element_type=jnp.float32) + params["fc2_b"]


def init_params(key):
    ks = jax.random.split(key, 8)
    return {
        "conv1_w": 0.1 * jax.random.normal(ks[0], (NUM_C1, NUM_IN_CH, CONV_K, CONV_K), jnp.float32),
        "conv1_b": 0.1 * jax.random.normal(ks[1], (NUM_C1,), jnp.float32),
        "conv2_w": 0.05 * jax.random.normal(ks[2], (NUM_C2, NUM_C1, CONV_K, CONV_K), jnp.float32),
        "conv2_b": 0.1 * jax.random.normal(ks[3], (NUM_C2,), jnp.float32),
        "fc1_w": 0.02 * jax.random.normal(ks[4], (FC1_OUT, D_FLAT), jnp.float32),
        "fc1_b": 0.1 * jax.random.normal(ks[5], (FC1_OUT,), jnp.float32),
        "fc2_w": 0.05 * jax.random.normal(ks[6], (NUM_CLASSES, FC1_OUT), jnp.float32),
        "fc2_b": 0.1 * jax.random.normal(ks[7], (NUM_CLASSES,), jnp.float32),
    }


if __name__ == "__main__":
    key = jax.random.PRNGKey(0)
    k_x, k_p = jax.random.split(key)
    params = init_params(k_p)
    prepped = prepare_params(params)
    fwd = jax.jit(cnn_forward)

    # Input shape is pinned by fc1 (64 * 28^2 / 2^4 = 3136): MNIST 28x28, 1 channel.
    # batch=2 exercises the full-extent single-step path; batch=30 the tiled path.
    for n in (2, 30):
        kx = jax.random.fold_in(k_x, n)
        x = jax.random.normal(kx, (n, NUM_IN_CH, MNIST_IMAGE_SIZE, MNIST_IMAGE_SIZE),
                              jnp.float32)
        out = jax.block_until_ready(fwd(x, prepped))
        ref = reference_forward(x, params)
        assert out.shape == (n, NUM_CLASSES), out.shape
        err = float(jnp.max(jnp.abs(out - ref)))
        assert jnp.allclose(out, ref, rtol=3e-2, atol=3e-2), err
    print("KERNEL_OK")
</pallas_src>

<mosaic_0001>
module attributes {stable_mosaic.version = 11 : i64} {
  func.func @conv1_kernel(%arg0: i32, %arg1: memref<4x98x128xbf16, #tpu.memory_space<vmem>>, %arg2: memref<128x128xbf16, #tpu.memory_space<vmem>>, %arg3: memref<1x128xf32, #tpu.memory_space<vmem>>, %arg4: memref<98x128xbf16, #tpu.memory_space<vmem>>) attributes {dimension_semantics = [#tpu.dimension_semantics<parallel>], iteration_bounds = array<i64: 1>, scalar_prefetch = 0 : i64, scratch_operands = 0 : i64, tpu.core_type = #tpu.core_type<tc>, window_params = [{transform_indices = @transform_0, window_bounds = array<i64: 4, 98, 128>}, {pipeline_mode = #tpu.pipeline_mode<synchronous>, transform_indices = @transform_1, window_bounds = array<i64: 128, 128>}, {pipeline_mode = #tpu.pipeline_mode<synchronous>, transform_indices = @transform_2, window_bounds = array<i64: 1, 128>}, {transform_indices = @transform_3, window_bounds = array<i64: 98, 128>}]} {
    %c0 = arith.constant 0 : index
    %c0_0 = arith.constant 0 : index
    %0 = vector.load %arg2[%c0, %c0_0] : memref<128x128xbf16, #tpu.memory_space<vmem>>, vector<128x128xbf16>
    %c0_1 = arith.constant 0 : index
    %c0_2 = arith.constant 0 : index
    %c0_3 = arith.constant 0 : index
    %1 = vector.load %arg1[%c0_1, %c0_2, %c0_3] : memref<4x98x128xbf16, #tpu.memory_space<vmem>>, vector<1x98x128xbf16>
    %2 = vector.shape_cast %1 : vector<1x98x128xbf16> to vector<98x128xbf16>
    %cst = arith.constant dense<0.000000e+00> : vector<98x128xf32>
    %3 = tpu.matmul %2, %0, %cst {dimension_numbers = #tpu.dot_dimension_numbers<[1], [0], [0], [1], [0, 0, 1, 1], [], []>} : vector<98x128xbf16>, vector<128x128xbf16>, vector<98x128xf32> -> vector<98x128xf32>
    %c1 = arith.constant 1 : index
    %c0_4 = arith.constant 0 : index
    %c0_5 = arith.constant 0 : index
    %4 = vector.load %arg1[%c1, %c0_4, %c0_5] : memref<4x98x128xbf16, #tpu.memory_space<vmem>>, vector<1x98x128xbf16>
    %5 = vector.shape_cast %4 : vector<1x98x128xbf16> to vector<98x128xbf16>
    %cst_6 = arith.constant dense<0.000000e+00> : vector<98x128xf32>
    %6 = tpu.matmul %5, %0, %cst_6 {dimension_numbers = #tpu.dot_dimension_numbers<[1], [0], [0], [1], [0, 0, 1, 1], [], []>} : vector<98x128xbf16>, vector<128x128xbf16>, vector<98x128xf32> -> vector<98x128xf32>
    %7 = arith.maximumf %3, %6 : vector<98x128xf32>
    %c2 = arith.constant 2 : index
    %c0_7 = arith.constant 0 : index
    %c0_8 = arith.constant 0 : index
    %8 = vector.load %arg1[%c2, %c0_7, %c0_8] : memref<4x98x128xbf16, #tpu.memory_space<vmem>>, vector<1x98x128xbf16>
    %9 = vector.shape_cast %8 : vector<1x98x128xbf16> to vector<98x128xbf16>
    %cst_9 = arith.constant dense<0.000000e+00> : vector<98x128xf32>
    %10 = tpu.matmul %9, %0, %cst_9 {dimension_numbers = #tpu.dot_dimension_numbers<[1], [0], [0], [1], [0, 0, 1, 1], [], []>} : vector<98x128xbf16>, vector<128x128xbf16>, vector<98x128xf32> -> vector<98x128xf32>
    %11 = arith.maximumf %7, %10 : vector<98x128xf32>
    %c3 = arith.constant 3 : index
    %c0_10 = arith.constant 0 : index
    %c0_11 = arith.constant 0 : index
    %12 = vector.load %arg1[%c3, %c0_10, %c0_11] : memref<4x98x128xbf16, #tpu.memory_space<vmem>>, vector<1x98x128xbf16>
    %13 = vector.shape_cast %12 : vector<1x98x128xbf16> to vector<98x128xbf16>
    %cst_12 = arith.constant dense<0.000000e+00> : vector<98x128xf32>
    %14 = tpu.matmul %13, %0, %cst_12 {dimension_numbers = #tpu.dot_dimension_numbers<[1], [0], [0], [1], [0, 0, 1, 1], [], []>} : vector<98x128xbf16>, vector<128x128xbf16>, vector<98x128xf32> -> vector<98x128xf32>
    %15 = arith.maximumf %11, %14 : vector<98x128xf32>
    %c0_13 = arith.constant 0 : index
    %c0_14 = arith.constant 0 : index
    %16 = vector.load %arg3[%c0_13, %c0_14] : memref<1x128xf32, #tpu.memory_space<vmem>>, vector<1x128xf32>
    %17 = vector.broadcast %16 : vector<1x128xf32> to vector<98x128xf32>
    %18 = arith.addf %15, %17 : vector<98x128xf32>
    %cst_15 = arith.constant 0.000000e+00 : f32
    %19 = vector.broadcast %cst_15 : f32 to vector<98x128xf32>
    %20 = arith.maximumf %18, %19 : vector<98x128xf32>
    %21 = arith.truncf %20 : vector<98x128xf32> to vector<98x128xbf16>
    %c0_16 = arith.constant 0 : index
    %c0_17 = arith.constant 0 : index
    %22 = vector.load %arg4[%c0_16, %c0_17] : memref<98x128xbf16, #tpu.memory_space<vmem>>, vector<98x128xbf16>
    tpu.vector_store %arg4[%c0_16, %c0_17], %21 {strides = array<i32>} : memref<98x128xbf16, #tpu.memory_space<vmem>>, vector<98x128xbf16>,
    return
  }
  func.func @transform_0(%arg0: i32) -> (i32, i32, i32) {
    %c0_i32 = arith.constant 0 : i32
    %c0_i32_0 = arith.constant 0 : i32
    %c0_i32_1 = arith.constant 0 : i32
    return %c0_i32, %arg0, %c0_i32_0 : i32, i32, i32
  }
  func.func @transform_1(%arg0: i32) -> (i32, i32) {
    %c0_i32 = arith.constant 0 : i32
    %c0_i32_0 = arith.constant 0 : i32
    %c0_i32_1 = arith.constant 0 : i32
    return %c0_i32, %c0_i32_0 : i32, i32
  }
  func.func @transform_2(%arg0: i32) -> (i32, i32) {
    %c0_i32 = arith.constant 0 : i32
    %c0_i32_0 = arith.constant 0 : i32
    %c0_i32_1 = arith.constant 0 : i32
    return %c0_i32, %c0_i32_0 : i32, i32
  }
  func.func @transform_3(%arg0: i32) -> (i32, i32) {
    %c0_i32 = arith.constant 0 : i32
    %c0_i32_0 = arith.constant 0 : i32
    return %arg0, %c0_i32 : i32, i32
  }
}

module attributes {stable_mosaic.version = 11 : i64} {
  func.func @conv2_kernel(%arg0: i32, %arg1: memref<2x16x512xbf16, #tpu.memory_space<vmem>>, %arg2: memref<3x2x512x448xbf16, #tpu.memory_space<vmem>>, %arg3: memref<1x448xf32, #tpu.memory_space<vmem>>, %arg4: memref<2x7x448xbf16, #tpu.memory_space<vmem>>) attributes {dimension_semantics = [#tpu.dimension_semantics<parallel>], iteration_bounds = array<i64: 1>, scalar_prefetch = 0 : i64, scratch_operands = 0 : i64, tpu.core_type = #tpu.core_type<tc>, window_params = [{transform_indices = @transform_0, window_bounds = array<i64: 2, 16, 512>}, {pipeline_mode = #tpu.pipeline_mode<synchronous>, transform_indices = @transform_1, window_bounds = array<i64: 3, 2, 512, 448>}, {pipeline_mode = #tpu.pipeline_mode<synchronous>, transform_indices = @transform_2, window_bounds = array<i64: 1, 448>}, {transform_indices = @transform_3, window_bounds = array<i64: 2, 7, 448>}]} {
    %c0 = arith.constant 0 : index
    %c0_0 = arith.constant 0 : index
    %c0_1 = arith.constant 0 : index
    %0 = vector.load %arg1[%c0, %c0_0, %c0_1] : memref<2x16x512xbf16, #tpu.memory_space<vmem>>, vector<1x16x512xbf16>
    %1 = vector.shape_cast %0 : vector<1x16x512xbf16> to vector<16x512xbf16>
    %c1 = arith.constant 1 : index
    %c0_2 = arith.constant 0 : index
    %c0_3 = arith.constant 0 : index
    %2 = vector.load %arg1[%c1, %c0_2, %c0_3] : memref<2x16x512xbf16, #tpu.memory_space<vmem>>, vector<1x16x512xbf16>
    %3 = vector.shape_cast %2 : vector<1x16x512xbf16> to vector<16x512xbf16>
    %c0_4 = arith.constant 0 : index
    %c0_5 = arith.constant 0 : index
    %c0_6 = arith.constant 0 : index
    %c0_7 = arith.constant 0 : index
    %4 = vector.load %arg2[%c0_4, %c0_5, %c0_6, %c0_7] : memref<3x2x512x448xbf16, #tpu.memory_space<vmem>>, vector<1x1x512x448xbf16>
    %5 = vector.shape_cast %4 : vector<1x1x512x448xbf16> to vector<512x448xbf16>
    %cst = arith.constant dense<0.000000e+00> : vector<16x448xf32>
    %6 = tpu.matmul %1, %5, %cst {dimension_numbers = #tpu.dot_dimension_numbers<[1], [0], [0], [1], [0, 0, 1, 1], [], []>} : vector<16x512xbf16>, vector<512x448xbf16>, vector<16x448xf32> -> vector<16x448xf32>
    %7 = vector.shape_cast %6 : vector<16x448xf32> to vector<2x8x448xf32>
    %c0_8 = arith.constant 0 : index
    %c0_9 = arith.constant 0 : index
    %c0_10 = arith.constant 0 : index
    %c0_11 = arith.constant 0 : index
    %8 = vector.load %arg2[%c0_8, %c0_9, %c0_10, %c0_11] : memref<3x2x512x448xbf16, #tpu.memory_space<vmem>>, vector<1x1x512x448xbf16>
    %9 = vector.shape_cast %8 : vector<1x1x512x448xbf16> to vector<512x448xbf16>
    %cst_12 = arith.constant dense<0.000000e+00> : vector<16x448xf32>
    %10 = tpu.matmul %3, %9, %cst_12 {dimension_numbers = #tpu.dot_dimension_numbers<[1], [0], [0], [1], [0, 0, 1, 1], [], []>} : vector<16x512xbf16>, vector<512x448xbf16>, vector<16x448xf32> -> vector<16x448xf32>
    %11 = vector.shape_cast %10 : vector<16x448xf32> to vector<2x8x448xf32>
    %c1_13 = arith.constant 1 : index
    %c0_14 = arith.constant 0 : index
    %c0_15 = arith.constant 0 : index
    %c0_16 = arith.constant 0 : index
    %12 = vector.load %arg2[%c1_13, %c0_14, %c0_15, %c0_16] : memref<3x2x512x448xbf16, #tpu.memory_space<vmem>>, vector<1x1x512x448xbf16>
    %13 = vector.shape_cast %12 : vector<1x1x512x448xbf16> to vector<512x448xbf16>
    %cst_17 = arith.constant dense<0.000000e+00> : vector<16x448xf32>
    %14 = tpu.matmul %1, %13, %cst_17 {dimension_numbers = #tpu.dot_dimension_numbers<[1], [0], [0], [1], [0, 0, 1, 1], [], []>} : vector<16x512xbf16>, vector<512x448xbf16>, vector<16x448xf32> -> vector<16x448xf32>
    %15 = vector.shape_cast %14 : vector<16x448xf32> to vector<2x8x448xf32>
    %c1_18 = arith.constant 1 : index
    %c0_19 = arith.constant 0 : index
    %c0_20 = arith.constant 0 : index
    %c0_21 = arith.constant 0 : index
    %16 = vector.load %arg2[%c1_18, %c0_19, %c0_20, %c0_21] : memref<3x2x512x448xbf16, #tpu.memory_space<vmem>>, vector<1x1x512x448xbf16>
    %17 = vector.shape_cast %16 : vector<1x1x512x448xbf16> to vector<512x448xbf16>
    %cst_22 = arith.constant dense<0.000000e+00> : vector<16x448xf32>
    %18 = tpu.matmul %3, %17, %cst_22 {dimension_numbers = #tpu.dot_dimension_numbers<[1], [0], [0], [1], [0, 0, 1, 1], [], []>} : vector<16x512xbf16>, vector<512x448xbf16>, vector<16x448xf32> -> vector<16x448xf32>
    %19 = vector.shape_cast %18 : vector<16x448xf32> to vector<2x8x448xf32>
    %c2 = arith.constant 2 : index
    %c0_23 = arith.constant 0 : index
    %c0_24 = arith.constant 0 : index
    %c0_25 = arith.constant 0 : index
    %20 = vector.load %arg2[%c2, %c0_23, %c0_24, %c0_25] : memref<3x2x512x448xbf16, #tpu.memory_space<vmem>>, vector<1x1x512x448xbf16>
    %21 = vector.shape_cast %20 : vector<1x1x512x448xbf16> to vector<512x448xbf16>
    %cst_26 = arith.constant dense<0.000000e+00> : vector<16x448xf32>
    %22 = tpu.matmul %1, %21, %cst_26 {dimension_numbers = #tpu.dot_dimension_numbers<[1], [0], [0], [1], [0, 0, 1, 1], [], []>} : vector<16x512xbf16>, vector<512x448xbf16>, vector<16x448xf32> -> vector<16x448xf32>
    %23 = vector.shape_cast %22 : vector<16x448xf32> to vector<2x8x448xf32>
    %c2_27 = arith.constant 2 : index
    %c0_28 = arith.constant 0 : index
    %c0_29 = arith.constant 0 : index
    %c0_30 = arith.constant 0 : index
    %24 = vector.load %arg2[%c2_27, %c0_28, %c0_29, %c0_30] : memref<3x2x512x448xbf16, #tpu.memory_space<vmem>>, vector<1x1x512x448xbf16>
    %25 = vector.shape_cast %24 : vector<1x1x512x448xbf16> to vector<512x448xbf16>
    %cst_31 = arith.constant dense<0.000000e+00> : vector<16x448xf32>
    %26 = tpu.matmul %3, %25, %cst_31 {dimension_numbers = #tpu.dot_dimension_numbers<[1], [0], [0], [1], [0, 0, 1, 1], [], []>} : vector<16x512xbf16>, vector<512x448xbf16>, vector<16x448xf32> -> vector<16x448xf32>
    %27 = vector.shape_cast %26 : vector<16x448xf32> to vector<2x8x448xf32>
    %28 = vector.extract_strided_slice %7 {offsets = [0, 0, 0], sizes = [2, 7, 448], strides = [1, 1, 1]} : vector<2x8x448xf32> to vector<2x7x448xf32>
    %29 = vector.extract_strided_slice %19 {offsets = [0, 0, 0], sizes = [2, 7, 448], strides = [1, 1, 1]} : vector<2x8x448xf32> to vector<2x7x448xf32>
    %30 = arith.addf %28, %29 : vector<2x7x448xf32>
    %31 = vector.extract_strided_slice %23 {offsets = [0, 1, 0], sizes = [2, 7, 448], strides = [1, 1, 1]} : vector<2x8x448xf32> to vector<2x7x448xf32>
    %32 = arith.addf %30, %31 : vector<2x7x448xf32>
    %33 = vector.extract_strided_slice %11 {offsets = [0, 0, 0], sizes = [2, 7, 448], strides = [1, 1, 1]} : vector<2x8x448xf32> to vector<2x7x448xf32>
    %34 = vector.extract_strided_slice %15 {offsets = [0, 1, 0], sizes = [2, 7, 448], strides = [1, 1, 1]} : vector<2x8x448xf32> to vector<2x7x448xf32>
    %35 = arith.addf %33, %34 : vector<2x7x448xf32>
    %36 = vector.extract_strided_slice %27 {offsets = [0, 1, 0], sizes = [2, 7, 448], strides = [1, 1, 1]} : vector<2x8x448xf32> to vector<2x7x448xf32>
    %37 = arith.addf %35, %36 : vector<2x7x448xf32>
    %38 = arith.maximumf %32, %37 : vector<2x7x448xf32>
    %c0_32 = arith.constant 0 : index
    %c1_33 = arith.constant 1 : index
    %c0_34 = arith.constant 0 : index
    %c0_35 = arith.constant 0 : index
    %39 = vector.load %arg2[%c0_32, %c1_33, %c0_34, %c0_35] : memref<3x2x512x448xbf16, #tpu.memory_space<vmem>>, vector<1x1x512x448xbf16>
    %40 = vector.shape_cast %39 : vector<1x1x512x448xbf16> to vector<512x448xbf16>
    %cst_36 = arith.constant dense<0.000000e+00> : vector<16x448xf32>
    %41 = tpu.matmul %1, %40, %cst_36 {dimension_numbers = #tpu.dot_dimension_numbers<[1], [0], [0], [1], [0, 0, 1, 1], [], []>} : vector<16x512xbf16>, vector<512x448xbf16>, vector<16x448xf32> -> vector<16x448xf32>
    %42 = vector.shape_cast %41 : vector<16x448xf32> to vector<2x8x448xf32>
    %c0_37 = arith.constant 0 : index
    %c1_38 = arith.constant 1 : index
    %c0_39 = arith.constant 0 : index
    %c0_40 = arith.constant 0 : index
    %43 = vector.load %arg2[%c0_37, %c1_38, %c0_39, %c0_40] : memref<3x2x512x448xbf16, #tpu.memory_space<vmem>>, vector<1x1x512x448xbf16>
    %44 = vector.shape_cast %43 : vector<1x1x512x448xbf16> to vector<512x448xbf16>
    %cst_41 = arith.constant dense<0.000000e+00> : vector<16x448xf32>
    %45 = tpu.matmul %3, %44, %cst_41 {dimension_numbers = #tpu.dot_dimension_numbers<[1], [0], [0], [1], [0, 0, 1, 1], [], []>} : vector<16x512xbf16>, vector<512x448xbf16>, vector<16x448xf32> -> vector<16x448xf32>
    %46 = vector.shape_cast %45 : vector<16x448xf32> to vector<2x8x448xf32>
    %c1_42 = arith.constant 1 : index
    %c1_43 = arith.constant 1 : index
    %c0_44 = arith.constant 0 : index
    %c0_45 = arith.constant 0 : index
    %47 = vector.load %arg2[%c1_42, %c1_43, %c0_44, %c0_45] : memref<3x2x512x448xbf16, #tpu.memory_space<vmem>>, vector<1x1x512x448xbf16>
    %48 = vector.shape_cast %47 : vector<1x1x512x448xbf16> to vector<512x448xbf16>
    %cst_46 = arith.constant dense<0.000000e+00> : vector<16x448xf32>
    %49 = tpu.matmul %1, %48, %cst_46 {dimension_numbers = #tpu.dot_dimension_numbers<[1], [0], [0], [1], [0, 0, 1, 1], [], []>} : vector<16x512xbf16>, vector<512x448xbf16>, vector<16x448xf32> -> vector<16x448xf32>
    %50 = vector.shape_cast %49 : vector<16x448xf32> to vector<2x8x448xf32>
    %c1_47 = arith.constant 1 : index
    %c1_48 = arith.constant 1 : index
    %c0_49 = arith.constant 0 : index
    %c0_50 = arith.constant 0 : index
    %51 = vector.load %arg2[%c1_47, %c1_48, %c0_49, %c0_50] : memref<3x2x512x448xbf16, #tpu.memory_space<vmem>>, vector<1x1x512x448xbf16>
    %52 = vector.shape_cast %51 : vector<1x1x512x448xbf16> to vector<512x448xbf16>
    %cst_51 = arith.constant dense<0.000000e+00> : vector<16x448xf32>
    %53 = tpu.matmul %3, %52, %cst_51 {dimension_numbers = #tpu.dot_dimension_numbers<[1], [0], [0], [1], [0, 0, 1, 1], [], []>} : vector<16x512xbf16>, vector<512x448xbf16>, vector<16x448xf32> -> vector<16x448xf32>
    %54 = vector.shape_cast %53 : vector<16x448xf32> to vector<2x8x448xf32>
    %c2_52 = arith.constant 2 : index
    %c1_53 = arith.constant 1 : index
    %c0_54 = arith.constant 0 : index
    %c0_55 = arith.constant 0 : index
    %55 = vector.load %arg2[%c2_52, %c1_53, %c0_54, %c0_55] : memref<3x2x512x448xbf16, #tpu.memory_space<vmem>>, vector<1x1x512x448xbf16>
    %56 = vector.shape_cast %55 : vector<1x1x512x448xbf16> to vector<512x448xbf16>
    %cst_56 = arith.constant dense<0.000000e+00> : vector<16x448xf32>
    %57 = tpu.matmul %1, %56, %cst_56 {dimension_numbers = #tpu.dot_dimension_numbers<[1], [0], [0], [1], [0, 0, 1, 1], [], []>} : vector<16x512xbf16>, vector<512x448xbf16>, vector<16x448xf32> -> vector<16x448xf32>
    %58 = vector.shape_cast %57 : vector<16x448xf32> to vector<2x8x448xf32>
    %c2_57 = arith.constant 2 : index
    %c1_58 = arith.constant 1 : index
    %c0_59 = arith.constant 0 : index
    %c0_60 = arith.constant 0 : index
    %59 = vector.load %arg2[%c2_57, %c1_58, %c0_59, %c0_60] : memref<3x2x512x448xbf16, #tpu.memory_space<vmem>>, vector<1x1x512x448xbf16>
    %60 = vector.shape_cast %59 : vector<1x1x512x448xbf16> to vector<512x448xbf16>
    %cst_61 = arith.constant dense<0.000000e+00> : vector<16x448xf32>
    %61 = tpu.matmul %3, %60, %cst_61 {dimension_numbers = #tpu.dot_dimension_numbers<[1], [0], [0], [1], [0, 0, 1, 1], [], []>} : vector<16x512xbf16>, vector<512x448xbf16>, vector<16x448xf32> -> vector<16x448xf32>
    %62 = vector.shape_cast %61 : vector<16x448xf32> to vector<2x8x448xf32>
    %63 = vector.extract_strided_slice %42 {offsets = [0, 0, 0], sizes = [2, 7, 448], strides = [1, 1, 1]} : vector<2x8x448xf32> to vector<2x7x448xf32>
    %64 = vector.extract_strided_slice %54 {offsets = [0, 0, 0], sizes = [2, 7, 448], strides = [1, 1, 1]} : vector<2x8x448xf32> to vector<2x7x448xf32>
    %65 = arith.addf %63, %64 : vector<2x7x448xf32>
    %66 = vector.extract_strided_slice %58 {offsets = [0, 1, 0], sizes = [2, 7, 448], strides = [1, 1, 1]} : vector<2x8x448xf32> to vector<2x7x448xf32>
    %67 = arith.addf %65, %66 : vector<2x7x448xf32>
    %68 = arith.maximumf %38, %67 : vector<2x7x448xf32>
    %69 = vector.extract_strided_slice %46 {offsets = [0, 0, 0], sizes = [2, 7, 448], strides = [1, 1, 1]} : vector<2x8x448xf32> to vector<2x7x448xf32>
    %70 = vector.extract_strided_slice %50 {offsets = [0, 1, 0], sizes = [2, 7, 448], strides = [1, 1, 1]} : vector<2x8x448xf32> to vector<2x7x448xf32>
    %71 = arith.addf %69, %70 : vector<2x7x448xf32>
    %72 = vector.extract_strided_slice %62 {offsets = [0, 1, 0], sizes = [2, 7, 448], strides = [1, 1, 1]} : vector<2x8x448xf32> to vector<2x7x448xf32>
    %73 = arith.addf %71, %72 : vector<2x7x448xf32>
    %74 = arith.maximumf %68, %73 : vector<2x7x448xf32>
    %c0_62 = arith.constant 0 : index
    %c0_63 = arith.constant 0 : index
    %75 = vector.load %arg3[%c0_62, %c0_63] : memref<1x448xf32, #tpu.memory_space<vmem>>, vector<1x448xf32>
    %76 = vector.shape_cast %75 : vector<1x448xf32> to vector<1x1x448xf32>
    %77 = vector.broadcast %76 : vector<1x1x448xf32> to vector<2x7x448xf32>
    %78 = arith.addf %74, %77 : vector<2x7x448xf32>
    %cst_64 = arith.constant 0.000000e+00 : f32
    %79 = vector.broadcast %cst_64 : f32 to vector<2x7x448xf32>
    %80 = arith.maximumf %78, %79 : vector<2x7x448xf32>
    %81 = arith.truncf %80 : vector<2x7x448xf32> to vector<2x7x448xbf16>
    %c0_65 = arith.constant 0 : index
    %c0_66 = arith.constant 0 : index
    %c0_67 = arith.constant 0 : index
    %82 = vector.load %arg4[%c0_65, %c0_66, %c0_67] : memref<2x7x448xbf16, #tpu.memory_space<vmem>>, vector<2x7x448xbf16>
    tpu.vector_store %arg4[%c0_65, %c0_66, %c0_67], %81 {strides = array<i32>} : memref<2x7x448xbf16, #tpu.memory_space<vmem>>, vector<2x7x448xbf16>,
    return
  }
  func.func @transform_0(%arg0: i32) -> (i32, i32, i32) {
    %c0_i32 = arith.constant 0 : i32
    %c0_i32_0 = arith.constant 0 : i32
    %c0_i32_1 = arith.constant 0 : i32
    return %c0_i32, %arg0, %c0_i32_0 : i32, i32, i32
  }
  func.func @transform_1(%arg0: i32) -> (i32, i32, i32, i32) {
    %c0_i32 = arith.constant 0 : i32
    %c0_i32_0 = arith.constant 0 : i32
    %c0_i32_1 = arith.constant 0 : i32
    %c0_i32_2 = arith.constant 0 : i32
    %c0_i32_3 = arith.constant 0 : i32
    return %c0_i32, %c0_i32_0, %c0_i32_1, %c0_i32_2 : i32, i32, i32, i32
  }
  func.func @transform_2(%arg0: i32) -> (i32, i32) {
    %c0_i32 = arith.constant 0 : i32
    %c0_i32_0 = arith.constant 0 : i32
    %c0_i32_1 = arith.constant 0 : i32
    return %c0_i32, %c0_i32_0 : i32, i32
  }
  func.func @transform_3(%arg0: i32) -> (i32, i32, i32) {
    %c0_i32 = arith.constant 0 : i32
    %c0_i32_0 = arith.constant 0 : i32
    %c0_i32_1 = arith.constant 0 : i32
    return %arg0, %c0_i32, %c0_i32_0 : i32, i32, i32
  }
}

module attributes {stable_mosaic.version = 11 : i64} {
  func.func @mlp_kernel(%arg0: i32, %arg1: memref<2x3136xbf16, #tpu.memory_space<vmem>>, %arg2: memref<3136x128xbf16, #tpu.memory_space<vmem>>, %arg3: memref<1x128xf32, #tpu.memory_space<vmem>>, %arg4: memref<128x128xbf16, #tpu.memory_space<vmem>>, %arg5: memref<1x128xf32, #tpu.memory_space<vmem>>, %arg6: memref<2x128xf32, #tpu.memory_space<vmem>>) attributes {dimension_semantics = [#tpu.dimension_semantics<parallel>], iteration_bounds = array<i64: 1>, scalar_prefetch = 0 : i64, scratch_operands = 0 : i64, tpu.core_type = #tpu.core_type<tc>, window_params = [{transform_indices = @transform_0, window_bounds = array<i64: 2, 3136>}, {pipeline_mode = #tpu.pipeline_mode<synchronous>, transform_indices = @transform_1, window_bounds = array<i64: 3136, 128>}, {pipeline_mode = #tpu.pipeline_mode<synchronous>, transform_indices = @transform_2, window_bounds = array<i64: 1, 128>}, {pipeline_mode = #tpu.pipeline_mode<synchronous>, transform_indices = @transform_3, window_bounds = array<i64: 128, 128>}, {pipeline_mode = #tpu.pipeline_mode<synchronous>, transform_indices = @transform_4, window_bounds = array<i64: 1, 128>}, {transform_indices = @transform_5, window_bounds = array<i64: 2, 128>}]} {
    %c0 = arith.constant 0 : index
    %c0_0 = arith.constant 0 : index
    %0 = vector.load %arg1[%c0, %c0_0] : memref<2x3136xbf16, #tpu.memory_space<vmem>>, vector<2x3136xbf16>
    %c0_1 = arith.constant 0 : index
    %c0_2 = arith.constant 0 : index
    %1 = vector.load %arg2[%c0_1, %c0_2] : memref<3136x128xbf16, #tpu.memory_space<vmem>>, vector<3136x128xbf16>
    %cst = arith.constant dense<0.000000e+00> : vector<2x128xf32>
    %2 = tpu.matmul %0, %1, %cst {dimension_numbers = #tpu.dot_dimension_numbers<[1], [0], [0], [1], [0, 0, 1, 1], [], []>} : vector<2x3136xbf16>, vector<3136x128xbf16>, vector<2x128xf32> -> vector<2x128xf32>
    %c0_3 = arith.constant 0 : index
    %c0_4 = arith.constant 0 : index
    %3 = vector.load %arg3[%c0_3, %c0_4] : memref<1x128xf32, #tpu.memory_space<vmem>>, vector<1x128xf32>
    %4 = vector.broadcast %3 : vector<1x128xf32> to vector<2x128xf32>
    %5 = arith.addf %2, %4 : vector<2x128xf32>
    %cst_5 = arith.constant 0.000000e+00 : f32
    %6 = vector.broadcast %cst_5 : f32 to vector<2x128xf32>
    %7 = arith.maximumf %5, %6 : vector<2x128xf32>
    %8 = arith.truncf %7 : vector<2x128xf32> to vector<2x128xbf16>
    %c0_6 = arith.constant 0 : index
    %c0_7 = arith.constant 0 : index
    %9 = vector.load %arg4[%c0_6, %c0_7] : memref<128x128xbf16, #tpu.memory_space<vmem>>, vector<128x128xbf16>
    %cst_8 = arith.constant dense<0.000000e+00> : vector<2x128xf32>
    %10 = tpu.matmul %8, %9, %cst_8 {dimension_numbers = #tpu.dot_dimension_numbers<[1], [0], [0], [1], [0, 0, 1, 1], [], []>} : vector<2x128xbf16>, vector<128x128xbf16>, vector<2x128xf32> -> vector<2x128xf32>
    %c0_9 = arith.constant 0 : index
    %c0_10 = arith.constant 0 : index
    %11 = vector.load %arg5[%c0_9, %c0_10] : memref<1x128xf32, #tpu.memory_space<vmem>>, vector<1x128xf32>
    %12 = vector.broadcast %11 : vector<1x128xf32> to vector<2x128xf32>
    %13 = arith.addf %10, %12 : vector<2x128xf32>
    %c0_11 = arith.constant 0 : index
    %c0_12 = arith.constant 0 : index
    %14 = vector.load %arg6[%c0_11, %c0_12] : memref<2x128xf32, #tpu.memory_space<vmem>>, vector<2x128xf32>
    tpu.vector_store %arg6[%c0_11, %c0_12], %13 {strides = array<i32>} : memref<2x128xf32, #tpu.memory_space<vmem>>, vector<2x128xf32>,
    return
  }
  func.func @transform_0(%arg0: i32) -> (i32, i32) {
    %c0_i32 = arith.constant 0 : i32
    %c0_i32_0 = arith.constant 0 : i32
    return %arg0, %c0_i32 : i32, i32
  }
  func.func @transform_1(%arg0: i32) -> (i32, i32) {
    %c0_i32 = arith.constant 0 : i32
    %c0_i32_0 = arith.constant 0 : i32
    %c0_i32_1 = arith.constant 0 : i32
    return %c0_i32, %c0_i32_0 : i32, i32
  }
  func.func @transform_2(%arg0: i32) -> (i32, i32) {
    %c0_i32 = arith.constant 0 : i32
    %c0_i32_0 = arith.constant 0 : i32
    %c0_i32_1 = arith.constant 0 : i32
    return %c0_i32, %c0_i32_0 : i32, i32
  }
  func.func @transform_3(%arg0: i32) -> (i32, i32) {
    %c0_i32 = arith.constant 0 : i32
    %c0_i32_0 = arith.constant 0 : i32
    %c0_i32_1 = arith.constant 0 : i32
    return %c0_i32, %c0_i32_0 : i32, i32
  }
  func.func @transform_4(%arg0: i32) -> (i32, i32) {
    %c0_i32 = arith.constant 0 : i32
    %c0_i32_0 = arith.constant 0 : i32
    %c0_i32_1 = arith.constant 0 : i32
    return %c0_i32, %c0_i32_0 : i32, i32
  }
  func.func @transform_5(%arg0: i32) -> (i32, i32) {
    %c0_i32 = arith.constant 0 : i32
    %c0_i32_0 = arith.constant 0 : i32
    return %arg0, %c0_i32 : i32, i32
  }
}

</mosaic_0001>

<llo_original>
// kernel: cnn_forward.3
$region0: #{cnn_forward.3}
  #allocation0 [shape = 'u32[]', space=smem, size = 0x4, offset = 0x4, fixed_abs, tag = 'smem constant byte address 0x4 - core index']
  #allocation1 [shape = 'u32[144,128]{1,0:T(1,128)}', space=vmem, size = 0x12000, scoped, tag = 'internal scratch']
  %s0 = inlined_call_operand.vmem [shape: bf16[4,98,128], index: 0, kind: input, shape index: {}]
  %s1 = inlined_call_operand.hbm [shape: bf16[128,128], index: 1, kind: input, shape index: {}]
  %s2 = inlined_call_operand.hbm [shape: f32[1,128], index: 2, kind: input, shape index: {}]
  %s3 = inlined_call_operand.vmem [shape: bf16[98,128], index: 3, kind: output, shape index: {}]
  %s4 = sld [smem:[#allocation0]]
  $region30: #{cnn_forward.3} parent=0
    _
  %s6 = ssub.s32 1, %s4
  %s7 = scalar_select 0, %s6, %s4
  $region1: #{cnn_forward.3} parent=0
    #allocation2 [shape = 'u8[32768]{0}', space=vmem, size = 0x8000, scoped, tag = 'input window, operand 1, single buffered']
    #allocation3 [shape = 's32[1]{0}', space=sflag, size = 0x4, scoped, tag = 'scoped memory for cnn_forward.3']
    #allocation4 [shape = 'u8[512]{0}', space=vmem, size = 0x400, scoped, tag = 'input window, operand 2, single buffered']
    #allocation5 [shape = 's32[1]{0}', space=sflag, size = 0x4, scoped, tag = 'scoped memory for cnn_forward.3']
    %8 = vsyncpa [#allocation3], 0
    %9 = vsyncpa [#allocation5], 0
    // Predicated region
    $region2: #{cnn_forward.3} parent=1 // pred_check
      _
    $region3: #{cnn_forward.3} parent=1 // pred_check_branch
      %11 = sbr.rel (0) target = $region5
    $region4: #{cnn_forward.3} parent=1 // pred_region
      _
    $region5: #{cnn_forward.3} parent=1 // pred_fallthru
      _
    // Predicated region
    $region6: #{cnn_forward.3} parent=1 // pred_check
      _
    $region7: #{cnn_forward.3} parent=1 // pred_check_branch
      %13 = sbr.rel (0) target = $region9
    $region8: #{cnn_forward.3} parent=1 // pred_region
      %s15 = ssub.s32 1024, 1024
      %16 = vsyncadd [#allocation3], %s15
      %s17 = sshll.u32 [#allocation2], 4
      %s18 = int_to_ptr.vmem [resolvable:$true] %s17
      %23 = dma.hbm_to_vmem [thread:$0]  %s1, 1024, %s18, [#allocation3], 64, 64, 4
    $region9: #{cnn_forward.3} parent=1 // pred_fallthru
      _
    // Predicated region
    $region10: #{cnn_forward.3} parent=1 // pred_check
      _
    $region11: #{cnn_forward.3} parent=1 // pred_check_branch
      %25 = sbr.rel (0) target = $region13
    $region12: #{cnn_forward.3} parent=1 // pred_region
      %s27 = ssub.s32 16, 16
      %28 = vsyncadd [#allocation5], %s27
      %s30 = sshll.u32 [#allocation4], 4
      %s31 = int_to_ptr.vmem [resolvable:$true] %s30
      %33 = dma.hbm_to_vmem [thread:$0]  %s2, 16, %s31, [#allocation5]
    $region13: #{cnn_forward.3} parent=1 // pred_fallthru
      _
    // Predicated region
    $region14: #{cnn_forward.3} parent=1 // pred_check
      _
    $region15: #{cnn_forward.3} parent=1 // pred_check_branch
      %35 = sbr.rel (0) target = $region17
    $region16: #{cnn_forward.3} parent=1 // pred_region
      %36 = dma.done [#allocation3], 1024
    $region17: #{cnn_forward.3} parent=1 // pred_fallthru
      _
    // Predicated region
    $region18: #{cnn_forward.3} parent=1 // pred_check
      _
    $region19: #{cnn_forward.3} parent=1 // pred_check_branch
      %38 = sbr.rel (0) target = $region21
    $region20: #{cnn_forward.3} parent=1 // pred_region
      %39 = dma.done [#allocation5], 16
    $region21: #{cnn_forward.3} parent=1 // pred_fallthru
      _
    %v41 = vld [vmem:[#allocation2] sm:$0xf]
    %v42 = vld [vmem:[#allocation2 + $0x4] sm:$0xf]
    %v43 = vld [vmem:[#allocation2 + $0x8] sm:$0xf]
    %v44 = vld [vmem:[#allocation2 + $0xc] sm:$0xf]
    %v45 = vld [vmem:[#allocation2 + $0x10] sm:$0xf]
    %v46 = vld [vmem:[#allocation2 + $0x14] sm:$0xf]
    %v47 = vld [vmem:[#allocation2 + $0x18] sm:$0xf]
    %v48 = vld [vmem:[#allocation2 + $0x1c] sm:$0xf]
    %v49 = vld [vmem:[#allocation2 + $0x20] sm:$0xf]
    %v50 = vld [vmem:[#allocation2 + $0x24] sm:$0xf]
    %v51 = vld [vmem:[#allocation2 + $0x28] sm:$0xf]
    %v52 = vld [vmem:[#allocation2 + $0x2c] sm:$0xf]
    %v53 = vld [vmem:[#allocation2 + $0x30] sm:$0xf]
    %v54 = vld [vmem:[#allocation2 + $0x34] sm:$0xf]
    %v55 = vld [vmem:[#allocation2 + $0x38] sm:$0xf]
    %v56 = vld [vmem:[#allocation2 + $0x3c] sm:$0xf]
    %v57 = vld [vmem:[%s0] sm:$0xf]
    %v58 = vld [vmem:[%s0 + $0x4] sm:$0xf]
    %v59 = vld [vmem:[%s0 + $0x8] sm:$0xf]
    %v60 = vld [vmem:[%s0 + $0xc] sm:$0xf]
    %v61 = vld [vmem:[%s0 + $0x10] sm:$0xf]
    %v62 = vld [vmem:[%s0 + $0x14] sm:$0xf]
    %v63 = vld [vmem:[%s0 + $0x18] sm:$0xf]
    %v64 = vld [vmem:[%s0 + $0x1c] sm:$0xf]
    %v65 = vld [vmem:[%s0 + $0x20] sm:$0xf]
    %v66 = vld [vmem:[%s0 + $0x24] sm:$0xf]
    %v67 = vld [vmem:[%s0 + $0x28] sm:$0xf]
    %v68 = vld [vmem:[%s0 + $0x2c] sm:$0xf]
    %v69 = vld [vmem:[%s0 + $0x30] sm:$0x1]
    %v83 = vunpack.c.l.b16 %v57
    %v84 = vunpack.c.l.b16 %v58
    %v85 = vunpack.c.l.b16 %v59
    %v86 = vunpack.c.l.b16 %v60
    %v87 = vunpack.c.l.b16 %v61
    %v88 = vunpack.c.l.b16 %v62
    %v89 = vunpack.c.l.b16 %v63
    %v90 = vunpack.c.l.b16 %v64
    %v91 = vunpack.c.l.b16 %v65
    %v92 = vunpack.c.l.b16 %v66
    %v93 = vunpack.c.l.b16 %v67
    %v94 = vunpack.c.l.b16 %v68
    %v95 = vunpack.c.l.b16 %v69
    %v96 = vpack.c.b16 %v84, %v83
    %v97 = vpack.c.b16 %v86, %v85
    %v98 = vpack.c.b16 %v88, %v87
    %v99 = vpack.c.b16 %v90, %v89
    %v100 = vpack.c.b16 %v92, %v91
    %v101 = vpack.c.b16 %v94, %v93
    %v102 = vpack.c.b16 %v95, %v95
    %v126 = vunpack.c.l.b16 %v41
    %v127 = vunpack.c.l.b16 %v42
    %v128 = vunpack.c.l.b16 %v43
    %v129 = vunpack.c.l.b16 %v44
    %v130 = vunpack.c.l.b16 %v45
    %v131 = vunpack.c.l.b16 %v46
    %v132 = vunpack.c.l.b16 %v47
    %v133 = vunpack.c.l.b16 %v48
    %v134 = vunpack.c.l.b16 %v49
    %v135 = vunpack.c.l.b16 %v50
    %v136 = vunpack.c.l.b16 %v51
    %v137 = vunpack.c.l.b16 %v52
    %v138 = vunpack.c.l.b16 %v53
    %v139 = vunpack.c.l.b16 %v54
    %v140 = vunpack.c.l.b16 %v55
    %v141 = vunpack.c.l.b16 %v56
    %v142 = vpack.c.b16 %v127, %v126
    %v143 = vpack.c.b16 %v129, %v128
    %v144 = vpack.c.b16 %v131, %v130
    %v145 = vpack.c.b16 %v133, %v132
    %v146 = vpack.c.b16 %v135, %v134
    %v147 = vpack.c.b16 %v137, %v136
    %v148 = vpack.c.b16 %v139, %v138
    %v149 = vpack.c.b16 %v141, %v140
    %158 = vmatprep.subr.bf16.mxu0 0
    %159 = vmatpush1.bf16.msra.mxu0 %v149
    %160 = vmatprep.subr.bf16.mxu0 0
    %161 = vmatpush1.bf16.msra.mxu0 %v148
    %162 = vmatprep.subr.bf16.mxu0 0
    %163 = vmatpush1.bf16.msra.mxu0 %v147
    %164 = vmatprep.subr.bf16.mxu0 0
    %165 = vmatpush1.bf16.msra.mxu0 %v146
    %166 = vmatprep.subr.bf16.mxu0 0
    %167 = vmatpush1.bf16.msra.mxu0 %v145
    %168 = vmatprep.subr.bf16.mxu0 0
    %169 = vmatpush1.bf16.msra.mxu0 %v144
    %170 = vmatprep.subr.bf16.mxu0 0
    %171 = vmatpush1.bf16.msra.mxu0 %v143
    %172 = vmatprep.subr.bf16.mxu0 0
    %173 = vmatpush1.bf16.msra.mxu0 %v142
    %174 = vmatprep.subr.bf16.mxu0 0
    %175 = vmatpush2.bf16.msra.mxu0 0
    %176 = vmatprep.subr.bf16.mxu0 0
    %177 = vmatpush2.bf16.msra.mxu0 0
    %178 = vmatprep.subr.bf16.mxu0 0
    %179 = vmatpush2.bf16.msra.mxu0 0
    %180 = vmatprep.subr.bf16.mxu0 0
    %181 = vmatpush2.bf16.msra.mxu0 0
    %182 = vmatprep.subr.bf16.mxu0 0
    %183 = vmatpush2.bf16.msra.mxu0 0
    %184 = vmatprep.subr.bf16.mxu0 0
    %185 = vmatpush2.bf16.msra.mxu0 0
    %186 = vmatprep.subr.bf16.mxu0 0
    %187 = vmatpush2.bf16.msra.mxu0 0
    %188 = vmatprep.subr.bf16.mxu0 0
    %189 = vmatpush2.bf16.msra.mxu0 0
    %190 = vmatprep.mubr.bf16.mxu0 0
    %191 = vmatmul.mubr.bf16.gmra.mxu0 %v96
    %v192 = vpop.f32.mrf.mxu0
    %v193 = vadd.f32 0.0, %v192
    %v194 = vpop.f32.mrf.mxu0
    %v195 = vpop.f32.mrf.mxu0
    %v196 = vadd.f32 0.0, %v195
    %v197 = vpop.f32.mrf.mxu0
    %198 = vmatprep.mubr.bf16.mxu0 0
    %199 = vmatmul.mubr.bf16.gmra.mxu0 %v97
    %v200 = vpop.f32.mrf.mxu0
    %v201 = vadd.f32 0.0, %v200
    %v202 = vpop.f32.mrf.mxu0
    %v203 = vpop.f32.mrf.mxu0
    %v204 = vadd.f32 0.0, %v203
    %v205 = vpop.f32.mrf.mxu0
    %206 = vmatprep.mubr.bf16.mxu0 0
    %207 = vmatmul.mubr.bf16.gmra.mxu0 %v98
    %v208 = vpop.f32.mrf.mxu0
    %v209 = vadd.f32 0.0, %v208
    %v210 = vpop.f32.mrf.mxu0
    %v211 = vpop.f32.mrf.mxu0
    %v212 = vadd.f32 0.0, %v211
    %v213 = vpop.f32.mrf.mxu0
    %214 = vmatprep.mubr.bf16.mxu0 0
    %215 = vmatmul.mubr.bf16.gmra.mxu0 %v99
    %v216 = vpop.f32.mrf.mxu0
    %v217 = vadd.f32 0.0, %v216
    %v218 = vpop.f32.mrf.mxu0
    %v219 = vpop.f32.mrf.mxu0
    %v220 = vadd.f32 0.0, %v219
    %v221 = vpop.f32.mrf.mxu0
    %222 = vmatprep.mubr.bf16.mxu0 0
    %223 = vmatmul.mubr.bf16.gmra.mxu0 %v100
    %v224 = vpop.f32.mrf.mxu0
    %v225 = vadd.f32 0.0, %v224
    %v226 = vpop.f32.mrf.mxu0
    %v227 = vpop.f32.mrf.mxu0
    %v228 = vadd.f32 0.0, %v227
    %v229 = vpop.f32.mrf.mxu0
    %230 = vmatprep.mubr.bf16.mxu0 0
    %231 = vmatmul.mubr.bf16.gmra.mxu0 %v101
    %v232 = vpop.f32.mrf.mxu0
    %v233 = vadd.f32 0.0, %v232
    %v234 = vpop.f32.mrf.mxu0
    %v235 = vpop.f32.mrf.mxu0
    %v236 = vadd.f32 0.0, %v235
    %v237 = vpop.f32.mrf.mxu0
    %238 = vmatprep.mubr.bf16.mxu0 0
    %239 = vmatmul.mubr.bf16.gmra.mxu0 %v102
    %v240 = vpop.f32.mrf.mxu0
    %v241 = vadd.f32 0.0, %v240
    %v242 = vpop.f32.mrf.mxu0
    %v243 = vpop.f32.mrf.mxu0
    %v244 = vpop.f32.mrf.mxu0
    %245 = vdwg.mxu0
    %s246 = scalar_lea.vmem %s0, 52
    %v247 = vld [vmem:[%s246] sm:$0xf]
    %v248 = vld [vmem:[%s246 + $0x4] sm:$0xf]
    %v249 = vld [vmem:[%s246 + $0x8] sm:$0xf]
    %v250 = vld [vmem:[%s246 + $0xc] sm:$0xf]
    %v251 = vld [vmem:[%s246 + $0x10] sm:$0xf]
    %v252 = vld [vmem:[%s246 + $0x14] sm:$0xf]
    %v253 = vld [vmem:[%s246 + $0x18] sm:$0xf]
    %v254 = vld [vmem:[%s246 + $0x1c] sm:$0xf]
    %v255 = vld [vmem:[%s246 + $0x20] sm:$0xf]
    %v256 = vld [vmem:[%s246 + $0x24] sm:$0xf]
    %v257 = vld [vmem:[%s246 + $0x28] sm:$0xf]
    %v258 = vld [vmem:[%s246 + $0x2c] sm:$0xf]
    %v259 = vld [vmem:[%s246 + $0x30] sm:$0x1]
    %v273 = vunpack.c.l.b16 %v247
    %v274 = vunpack.c.l.b16 %v248
    %v275 = vunpack.c.l.b16 %v249
    %v276 = vunpack.c.l.b16 %v250
    %v277 = vunpack.c.l.b16 %v251
    %v278 = vunpack.c.l.b16 %v252
    %v279 = vunpack.c.l.b16 %v253
    %v280 = vunpack.c.l.b16 %v254
    %v281 = vunpack.c.l.b16 %v255
    %v282 = vunpack.c.l.b16 %v256
    %v283 = vunpack.c.l.b16 %v257
    %v284 = vunpack.c.l.b16 %v258
    %v285 = vunpack.c.l.b16 %v259
    %v286 = vpack.c.b16 %v274, %v273
    %v287 = vpack.c.b16 %v276, %v275
    %v288 = vpack.c.b16 %v278, %v277
    %v289 = vpack.c.b16 %v280, %v279
    %v290 = vpack.c.b16 %v282, %v281
    %v291 = vpack.c.b16 %v284, %v283
    %v292 = vpack.c.b16 %v285, %v285
    %300 = vmatprep.subr.bf16.mxu0 0
    %301 = vmatpush1.bf16.msra.mxu0 %v149
    %302 = vmatprep.subr.bf16.mxu0 0
    %303 = vmatpush1.bf16.msra.mxu0 %v148
    %304 = vmatprep.subr.bf16.mxu0 0
    %305 = vmatpush1.bf16.msra.mxu0 %v147
    %306 = vmatprep.subr.bf16.mxu0 0
    %307 = vmatpush1.bf16.msra.mxu0 %v146
    %308 = vmatprep.subr.bf16.mxu0 0
    %309 = vmatpush1.bf16.msra.mxu0 %v145
    %310 = vmatprep.subr.bf16.mxu0 0
    %311 = vmatpush1.bf16.msra.mxu0 %v144
    %312 = vmatprep.subr.bf16.mxu0 0
    %313 = vmatpush1.bf16.msra.mxu0 %v143
    %314 = vmatprep.subr.bf16.mxu0 0
    %315 = vmatpush1.bf16.msra.mxu0 %v142
    %316 = vmatprep.subr.bf16.mxu0 0
    %317 = vmatpush2.bf16.msra.mxu0 0
    %318 = vmatprep.subr.bf16.mxu0 0
    %319 = vmatpush2.bf16.msra.mxu0 0
    %320 = vmatprep.subr.bf16.mxu0 0
    %321 = vmatpush2.bf16.msra.mxu0 0
    %322 = vmatprep.subr.bf16.mxu0 0
    %323 = vmatpush2.bf16.msra.mxu0 0
    %324 = vmatprep.subr.bf16.mxu0 0
    %325 = vmatpush2.bf16.msra.mxu0 0
    %326 = vmatprep.subr.bf16.mxu0 0
    %327 = vmatpush2.bf16.msra.mxu0 0
    %328 = vmatprep.subr.bf16.mxu0 0
    %329 = vmatpush2.bf16.msra.mxu0 0
    %330 = vmatprep.subr.bf16.mxu0 0
    %331 = vmatpush2.bf16.msra.mxu0 0
    %332 = vmatprep.mubr.bf16.mxu0 0
    %333 = vmatmul.mubr.bf16.gmra.mxu0 %v286
    %v334 = vpop.f32.mrf.mxu0
    %v335 = vadd.f32 0.0, %v334
    %v336 = vpop.f32.mrf.mxu0
    %v337 = vpop.f32.mrf.mxu0
    %v338 = vadd.f32 0.0, %v337
    %v339 = vpop.f32.mrf.mxu0
    %340 = vmatprep.mubr.bf16.mxu0 0
    %341 = vmatmul.mubr.bf16.gmra.mxu0 %v287
    %v342 = vpop.f32.mrf.mxu0
    %v343 = vadd.f32 0.0, %v342
    %v344 = vpop.f32.mrf.mxu0
    %v345 = vpop.f32.mrf.mxu0
    %v346 = vadd.f32 0.0, %v345
    %v347 = vpop.f32.mrf.mxu0
    %348 = vmatprep.mubr.bf16.mxu0 0
    %349 = vmatmul.mubr.bf16.gmra.mxu0 %v288
    %v350 = vpop.f32.mrf.mxu0
    %v351 = vadd.f32 0.0, %v350
    %v352 = vpop.f32.mrf.mxu0
    %v353 = vpop.f32.mrf.mxu0
    %v354 = vadd.f32 0.0, %v353
    %v355 = vpop.f32.mrf.mxu0
    %356 = vmatprep.mubr.bf16.mxu0 0
    %357 = vmatmul.mubr.bf16.gmra.mxu0 %v289
    %v358 = vpop.f32.mrf.mxu0
    %v359 = vadd.f32 0.0, %v358
    %v360 = vpop.f32.mrf.mxu0
    %v361 = vpop.f32.mrf.mxu0
    %v362 = vadd.f32 0.0, %v361
    %v363 = vpop.f32.mrf.mxu0
    %364 = vmatprep.mubr.bf16.mxu0 0
    %365 = vmatmul.mubr.bf16.gmra.mxu0 %v290
    %v366 = vpop.f32.mrf.mxu0
    %v367 = vadd.f32 0.0, %v366
    %v368 = vpop.f32.mrf.mxu0
    %v369 = vpop.f32.mrf.mxu0
    %v370 = vadd.f32 0.0, %v369
    %v371 = vpop.f32.mrf.mxu0
    %372 = vmatprep.mubr.bf16.mxu0 0
    %373 = vmatmul.mubr.bf16.gmra.mxu0 %v291
    %v374 = vpop.f32.mrf.mxu0
    %v375 = vadd.f32 0.0, %v374
    %v376 = vpop.f32.mrf.mxu0
    %v377 = vpop.f32.mrf.mxu0
    %v378 = vadd.f32 0.0, %v377
    %v379 = vpop.f32.mrf.mxu0
    %380 = vmatprep.mubr.bf16.mxu0 0
    %381 = vmatmul.mubr.bf16.gmra.mxu0 %v292
    %v382 = vpop.f32.mrf.mxu0
    %v383 = vadd.f32 0.0, %v382
    %v384 = vpop.f32.mrf.mxu0
    %v385 = vpop.f32.mrf.mxu0
    %v386 = vpop.f32.mrf.mxu0
    %387 = vdwg.mxu0
    %v388 = vmax.f32 %v193, %v335
    %v389 = vmax.f32 %v196, %v338
    %v390 = vmax.f32 %v201, %v343
    %v391 = vmax.f32 %v204, %v346
    %v392 = vmax.f32 %v209, %v351
    %v393 = vmax.f32 %v212, %v354
    %v394 = vmax.f32 %v217, %v359
    %v395 = vmax.f32 %v220, %v362
    %v396 = vmax.f32 %v225, %v367
    %v397 = vmax.f32 %v228, %v370
    %v398 = vmax.f32 %v233, %v375
    %v399 = vmax.f32 %v236, %v378
    %v400 = vmax.f32 %v241, %v383
    %s401 = scalar_lea.vmem %s0, 104
    %v402 = vld [vmem:[%s401] sm:$0xf]
    %v403 = vld [vmem:[%s401 + $0x4] sm:$0xf]
    %v404 = vld [vmem:[%s401 + $0x8] sm:$0xf]
    %v405 = vld [vmem:[%s401 + $0xc] sm:$0xf]
    %v406 = vld [vmem:[%s401 + $0x10] sm:$0xf]
    %v407 = vld [vmem:[%s401 + $0x14] sm:$0xf]
    %v408 = vld [vmem:[%s401 + $0x18] sm:$0xf]
    %v409 = vld [vmem:[%s401 + $0x1c] sm:$0xf]
    %v410 = vld [vmem:[%s401 + $0x20] sm:$0xf]
    %v411 = vld [vmem:[%s401 + $0x24] sm:$0xf]
    %v412 = vld [vmem:[%s401 + $0x28] sm:$0xf]
    %v413 = vld [vmem:[%s401 + $0x2c] sm:$0xf]
    %v414 = vld [vmem:[%s401 + $0x30] sm:$0x1]
    %v428 = vunpack.c.l.b16 %v402
    %v429 = vunpack.c.l.b16 %v403
    %v430 = vunpack.c.l.b16 %v404
    %v431 = vunpack.c.l.b16 %v405
    %v432 = vunpack.c.l.b16 %v406
    %v433 = vunpack.c.l.b16 %v407
    %v434 = vunpack.c.l.b16 %v408
    %v435 = vunpack.c.l.b16 %v409
    %v436 = vunpack.c.l.b16 %v410
    %v437 = vunpack.c.l.b16 %v411
    %v438 = vunpack.c.l.b16 %v412
    %v439 = vunpack.c.l.b16 %v413
    %v440 = vunpack.c.l.b16 %v414
    %v441 = vpack.c.b16 %v429, %v428
    %v442 = vpack.c.b16 %v431, %v430
    %v443 = vpack.c.b16 %v433, %v432
    %v444 = vpack.c.b16 %v435, %v434
    %v445 = vpack.c.b16 %v437, %v436
    %v446 = vpack.c.b16 %v439, %v438
    %v447 = vpack.c.b16 %v440, %v440
    %455 = vmatprep.subr.bf16.mxu0 0
    %456 = vmatpush1.bf16.msra.mxu0 %v149
    %457 = vmatprep.subr.bf16.mxu0 0
    %458 = vmatpush1.bf16.msra.mxu0 %v148
    %459 = vmatprep.subr.bf16.mxu0 0
    %460 = vmatpush1.bf16.msra.mxu0 %v147
    %461 = vmatprep.subr.bf16.mxu0 0
    %462 = vmatpush1.bf16.msra.mxu0 %v146
    %463 = vmatprep.subr.bf16.mxu0 0
    %464 = vmatpush1.bf16.msra.mxu0 %v145
    %465 = vmatprep.subr.bf16.mxu0 0
    %466 = vmatpush1.bf16.msra.mxu0 %v144
    %467 = vmatprep.subr.bf16.mxu0 0
    %468 = vmatpush1.bf16.msra.mxu0 %v143
    %469 = vmatprep.subr.bf16.mxu0 0
    %470 = vmatpush1.bf16.msra.mxu0 %v142
    %471 = vmatprep.subr.bf16.mxu0 0
    %472 = vmatpush2.bf16.msra.mxu0 0
    %473 = vmatprep.subr.bf16.mxu0 0
    %474 = vmatpush2.bf16.msra.mxu0 0
    %475 = vmatprep.subr.bf16.mxu0 0
    %476 = vmatpush2.bf16.msra.mxu0 0
    %477 = vmatprep.subr.bf16.mxu0 0
    %478 = vmatpush2.bf16.msra.mxu0 0
    %479 = vmatprep.subr.bf16.mxu0 0
    %480 = vmatpush2.bf16.msra.mxu0 0
    %481 = vmatprep.subr.bf16.mxu0 0
    %482 = vmatpush2.bf16.msra.mxu0 0
    %483 = vmatprep.subr.bf16.mxu0 0
    %484 = vmatpush2.bf16.msra.mxu0 0
    %485 = vmatprep.subr.bf16.mxu0 0
    %486 = vmatpush2.bf16.msra.mxu0 0
    %487 = vmatprep.mubr.bf16.mxu0 0
    %488 = vmatmul.mubr.bf16.gmra.mxu0 %v441
    %v489 = vpop.f32.mrf.mxu0
    %v490 = vadd.f32 0.0, %v489
    %v491 = vpop.f32.mrf.mxu0
    %v492 = vpop.f32.mrf.mxu0
    %v493 = vadd.f32 0.0, %v492
    %v494 = vpop.f32.mrf.mxu0
    %495 = vmatprep.mubr.bf16.mxu0 0
    %496 = vmatmul.mubr.bf16.gmra.mxu0 %v442
    %v497 = vpop.f32.mrf.mxu0
    %v498 = vadd.f32 0.0, %v497
    %v499 = vpop.f32.mrf.mxu0
    %v500 = vpop.f32.mrf.mxu0
    %v501 = vadd.f32 0.0, %v500
    %v502 = vpop.f32.mrf.mxu0
    %503 = vmatprep.mubr.bf16.mxu0 0
    %504 = vmatmul.mubr.bf16.gmra.mxu0 %v443
    %v505 = vpop.f32.mrf.mxu0
    %v506 = vadd.f32 0.0, %v505
    %v507 = vpop.f32.mrf.mxu0
    %v508 = vpop.f32.mrf.mxu0
    %v509 = vadd.f32 0.0, %v508
    %v510 = vpop.f32.mrf.mxu0
    %511 = vmatprep.mubr.bf16.mxu0 0
    %512 = vmatmul.mubr.bf16.gmra.mxu0 %v444
    %v513 = vpop.f32.mrf.mxu0
    %v514 = vadd.f32 0.0, %v513
    %v515 = vpop.f32.mrf.mxu0
    %v516 = vpop.f32.mrf.mxu0
    %v517 = vadd.f32 0.0, %v516
    %v518 = vpop.f32.mrf.mxu0
    %519 = vmatprep.mubr.bf16.mxu0 0
    %520 = vmatmul.mubr.bf16.gmra.mxu0 %v445
    %v521 = vpop.f32.mrf.mxu0
    %v522 = vadd.f32 0.0, %v521
    %v523 = vpop.f32.mrf.mxu0
    %v524 = vpop.f32.mrf.mxu0
    %v525 = vadd.f32 0.0, %v524
    %v526 = vpop.f32.mrf.mxu0
    %527 = vmatprep.mubr.bf16.mxu0 0
    %528 = vmatmul.mubr.bf16.gmra.mxu0 %v446
    %v529 = vpop.f32.mrf.mxu0
    %v530 = vadd.f32 0.0, %v529
    %v531 = vpop.f32.mrf.mxu0
    %v532 = vpop.f32.mrf.mxu0
    %v533 = vadd.f32 0.0, %v532
    %v534 = vpop.f32.mrf.mxu0
    %535 = vmatprep.mubr.bf16.mxu0 0
    %536 = vmatmul.mubr.bf16.gmra.mxu0 %v447
    %v537 = vpop.f32.mrf.mxu0
    %v538 = vadd.f32 0.0, %v537
    %v539 = vpop.f32.mrf.mxu0
    %v540 = vpop.f32.mrf.mxu0
    %v541 = vpop.f32.mrf.mxu0
    %542 = vdwg.mxu0
    %v543 = vmax.f32 %v388, %v490
    %v544 = vmax.f32 %v389, %v493
    %v545 = vmax.f32 %v390, %v498
    %v546 = vmax.f32 %v391, %v501
    %v547 = vmax.f32 %v392, %v506
    %v548 = vmax.f32 %v393, %v509
    %v549 = vmax.f32 %v394, %v514
    %v550 = vmax.f32 %v395, %v517
    %v551 = vmax.f32 %v396, %v522
    %v552 = vmax.f32 %v397, %v525
    %v553 = vmax.f32 %v398, %v530
    %v554 = vmax.f32 %v399, %v533
    %v555 = vmax.f32 %v400, %v538
    %s556 = scalar_lea.vmem %s0, 156
    %v557 = vld [vmem:[%s556] sm:$0xf]
    %v558 = vld [vmem:[%s556 + $0x4] sm:$0xf]
    %v559 = vld [vmem:[%s556 + $0x8] sm:$0xf]
    %v560 = vld [vmem:[%s556 + $0xc] sm:$0xf]
    %v561 = vld [vmem:[%s556 + $0x10] sm:$0xf]
    %v562 = vld [vmem:[%s556 + $0x14] sm:$0xf]
    %v563 = vld [vmem:[%s556 + $0x18] sm:$0xf]
    %v564 = vld [vmem:[%s556 + $0x1c] sm:$0xf]
    %v565 = vld [vmem:[%s556 + $0x20] sm:$0xf]
    %v566 = vld [vmem:[%s556 + $0x24] sm:$0xf]
    %v567 = vld [vmem:[%s556 + $0x28] sm:$0xf]
    %v568 = vld [vmem:[%s556 + $0x2c] sm:$0xf]
    %v569 = vld [vmem:[%s556 + $0x30] sm:$0x1]
    %v583 = vunpack.c.l.b16 %v557
    %v584 = vunpack.c.l.b16 %v558
    %v585 = vunpack.c.l.b16 %v559
    %v586 = vunpack.c.l.b16 %v560
    %v587 = vunpack.c.l.b16 %v561
    %v588 = vunpack.c.l.b16 %v562
    %v589 = vunpack.c.l.b16 %v563
    %v590 = vunpack.c.l.b16 %v564
    %v591 = vunpack.c.l.b16 %v565
    %v592 = vunpack.c.l.b16 %v566
    %v593 = vunpack.c.l.b16 %v567
    %v594 = vunpack.c.l.b16 %v568
    %v595 = vunpack.c.l.b16 %v569
    %v596 = vpack.c.b16 %v584, %v583
    %v597 = vpack.c.b16 %v586, %v585
    %v598 = vpack.c.b16 %v588, %v587
    %v599 = vpack.c.b16 %v590, %v589
    %v600 = vpack.c.b16 %v592, %v591
    %v601 = vpack.c.b16 %v594, %v593
    %v602 = vpack.c.b16 %v595, %v595
    %610 = vmatprep.subr.bf16.mxu0 0
    %611 = vmatpush1.bf16.msra.mxu0 %v149
    %612 = vmatprep.subr.bf16.mxu0 0
    %613 = vmatpush1.bf16.msra.mxu0 %v148
    %614 = vmatprep.subr.bf16.mxu0 0
    %615 = vmatpush1.bf16.msra.mxu0 %v147
    %616 = vmatprep.subr.bf16.mxu0 0
    %617 = vmatpush1.bf16.msra.mxu0 %v146
    %618 = vmatprep.subr.bf16.mxu0 0
    %619 = vmatpush1.bf16.msra.mxu0 %v145
    %620 = vmatprep.subr.bf16.mxu0 0
    %621 = vmatpush1.bf16.msra.mxu0 %v144
    %622 = vmatprep.subr.bf16.mxu0 0
    %623 = vmatpush1.bf16.msra.mxu0 %v143
    %624 = vmatprep.subr.bf16.mxu0 0
    %625 = vmatpush1.bf16.msra.mxu0 %v142
    %626 = vmatprep.subr.bf16.mxu0 0
    %627 = vmatpush2.bf16.msra.mxu0 0
    %628 = vmatprep.subr.bf16.mxu0 0
    %629 = vmatpush2.bf16.msra.mxu0 0
    %630 = vmatprep.subr.bf16.mxu0 0
    %631 = vmatpush2.bf16.msra.mxu0 0
    %632 = vmatprep.subr.bf16.mxu0 0
    %633 = vmatpush2.bf16.msra.mxu0 0
    %634 = vmatprep.subr.bf16.mxu0 0
    %635 = vmatpush2.bf16.msra.mxu0 0
    %636 = vmatprep.subr.bf16.mxu0 0
    %637 = vmatpush2.bf16.msra.mxu0 0
    %638 = vmatprep.subr.bf16.mxu0 0
    %639 = vmatpush2.bf16.msra.mxu0 0
    %640 = vmatprep.subr.bf16.mxu0 0
    %641 = vmatpush2.bf16.msra.mxu0 0
    %642 = vmatprep.mubr.bf16.mxu0 0
    %643 = vmatmul.mubr.bf16.gmra.mxu0 %v596
    %v644 = vpop.f32.mrf.mxu0
    %v645 = vadd.f32 0.0, %v644
    %v646 = vpop.f32.mrf.mxu0
    %v647 = vpop.f32.mrf.mxu0
    %v648 = vadd.f32 0.0, %v647
    %v649 = vpop.f32.mrf.mxu0
    %650 = vmatprep.mubr.bf16.mxu0 0
    %651 = vmatmul.mubr.bf16.gmra.mxu0 %v597
    %v652 = vpop.f32.mrf.mxu0
    %v653 = vadd.f32 0.0, %v652
    %v654 = vpop.f32.mrf.mxu0
    %v655 = vpop.f32.mrf.mxu0
    %v656 = vadd.f32 0.0, %v655
    %v657 = vpop.f32.mrf.mxu0
    %658 = vmatprep.mubr.bf16.mxu0 0
    %659 = vmatmul.mubr.bf16.gmra.mxu0 %v598
    %v660 = vpop.f32.mrf.mxu0
    %v661 = vadd.f32 0.0, %v660
    %v662 = vpop.f32.mrf.mxu0
    %v663 = vpop.f32.mrf.mxu0
    %v664 = vadd.f32 0.0, %v663
    %v665 = vpop.f32.mrf.mxu0
    %666 = vmatprep.mubr.bf16.mxu0 0
    %667 = vmatmul.mubr.bf16.gmra.mxu0 %v599
    %v668 = vpop.f32.mrf.mxu0
    %v669 = vadd.f32 0.0, %v668
    %v670 = vpop.f32.mrf.mxu0
    %v671 = vpop.f32.mrf.mxu0
    %v672 = vadd.f32 0.0, %v671
    %v673 = vpop.f32.mrf.mxu0
    %674 = vmatprep.mubr.bf16.mxu0 0
    %675 = vmatmul.mubr.bf16.gmra.mxu0 %v600
    %v676 = vpop.f32.mrf.mxu0
    %v677 = vadd.f32 0.0, %v676
    %v678 = vpop.f32.mrf.mxu0
    %v679 = vpop.f32.mrf.mxu0
    %v680 = vadd.f32 0.0, %v679
    %v681 = vpop.f32.mrf.mxu0
    %682 = vmatprep.mubr.bf16.mxu0 0
    %683 = vmatmul.mubr.bf16.gmra.mxu0 %v601
    %v684 = vpop.f32.mrf.mxu0
    %v685 = vadd.f32 0.0, %v684
    %v686 = vpop.f32.mrf.mxu0
    %v687 = vpop.f32.mrf.mxu0
    %v688 = vadd.f32 0.0, %v687
    %v689 = vpop.f32.mrf.mxu0
    %690 = vmatprep.mubr.bf16.mxu0 0
    %691 = vmatmul.mubr.bf16.gmra.mxu0 %v602
    %v692 = vpop.f32.mrf.mxu0
    %v693 = vadd.f32 0.0, %v692
    %v694 = vpop.f32.mrf.mxu0
    %v695 = vpop.f32.mrf.mxu0
    %v696 = vpop.f32.mrf.mxu0
    %697 = vdwg.mxu0
    %v698 = vmax.f32 %v543, %v645
    %v699 = vmax.f32 %v544, %v648
    %v700 = vmax.f32 %v545, %v653
    %v701 = vmax.f32 %v546, %v656
    %v702 = vmax.f32 %v547, %v661
    %v703 = vmax.f32 %v548, %v664
    %v704 = vmax.f32 %v549, %v669
    %v705 = vmax.f32 %v550, %v672
    %v706 = vmax.f32 %v551, %v677
    %v707 = vmax.f32 %v552, %v680
    %v708 = vmax.f32 %v553, %v685
    %v709 = vmax.f32 %v554, %v688
    %v710 = vmax.f32 %v555, %v693
    %v711 = vld [vmem:[#allocation4] sm:$0x1]
    %v713 = vlaneseq
    %v714 = vshrl.u32 %v713, 7
    %v715 = vsub.s32 0, %v714
    %v716 = vrot.slane %v711, %v715
    %v718 = vadd.f32 %v698, %v716
    %v719 = vadd.f32 %v699, %v716
    %v720 = vadd.f32 %v700, %v716
    %v721 = vadd.f32 %v701, %v716
    %v722 = vadd.f32 %v702, %v716
    %v723 = vadd.f32 %v703, %v716
    %v724 = vadd.f32 %v704, %v716
    %v725 = vadd.f32 %v705, %v716
    %v726 = vadd.f32 %v706, %v716
    %v727 = vadd.f32 %v707, %v716
    %v728 = vadd.f32 %v708, %v716
    %v729 = vadd.f32 %v709, %v716
    %v730 = vadd.f32 %v710, %v716
    %v731 = vmax.f32 %v718, 0.0
    %v732 = vmax.f32 %v719, 0.0
    %v733 = vmax.f32 %v720, 0.0
    %v734 = vmax.f32 %v721, 0.0
    %v735 = vmax.f32 %v722, 0.0
    %v736 = vmax.f32 %v723, 0.0
    %v737 = vmax.f32 %v724, 0.0
    %v738 = vmax.f32 %v725, 0.0
    %v739 = vmax.f32 %v726, 0.0
    %v740 = vmax.f32 %v727, 0.0
    %v741 = vmax.f32 %v728, 0.0
    %v742 = vmax.f32 %v729, 0.0
    %v743 = vmax.f32 %v730, 0.0
    %v744 = vpack.c.bf16 %v732, %v731
    %v745 = vpack.c.bf16 %v734, %v733
    %v746 = vpack.c.bf16 %v736, %v735
    %v747 = vpack.c.bf16 %v738, %v737
    %v748 = vpack.c.bf16 %v740, %v739
    %v749 = vpack.c.bf16 %v742, %v741
    %v750 = vpack.c.bf16 %v743, %v743
    %v758 = vunpack.c.l.b16 %v744
    %v759 = vunpack.c.h.b16 %v744
    %v760 = vunpack.c.l.b16 %v745
    %v761 = vunpack.c.h.b16 %v745
    %v762 = vunpack.c.l.b16 %v746
    %v763 = vunpack.c.h.b16 %v746
    %v764 = vunpack.c.l.b16 %v747
    %v765 = vunpack.c.h.b16 %v747
    %v766 = vunpack.c.l.b16 %v748
    %v767 = vunpack.c.h.b16 %v748
    %v768 = vunpack.c.l.b16 %v749
    %v769 = vunpack.c.h.b16 %v749
    %v770 = vunpack.c.l.b16 %v750
    %v771 = vpack.c.b16 %v758, %v758
    %v772 = vpack.c.b16 %v759, %v759
    %v773 = vpack.c.b16 %v760, %v760
    %v774 = vpack.c.b16 %v761, %v761
    %v775 = vpack.c.b16 %v762, %v762
    %v776 = vpack.c.b16 %v763, %v763
    %v777 = vpack.c.b16 %v764, %v764
    %v778 = vpack.c.b16 %v765, %v765
    %v779 = vpack.c.b16 %v766, %v766
    %v780 = vpack.c.b16 %v767, %v767
    %v781 = vpack.c.b16 %v768, %v768
    %v782 = vpack.c.b16 %v769, %v769
    %v783 = vpack.c.b16 %v770, %v770
    %797 = vst [vmem:[%s3] sm:$0xf] %v771
    %798 = vst [vmem:[%s3 + $0x4] sm:$0xf] %v772
    %799 = vst [vmem:[%s3 + $0x8] sm:$0xf] %v773
    %800 = vst [vmem:[%s3 + $0xc] sm:$0xf] %v774
    %801 = vst [vmem:[%s3 + $0x10] sm:$0xf] %v775
    %802 = vst [vmem:[%s3 + $0x14] sm:$0xf] %v776
    %803 = vst [vmem:[%s3 + $0x18] sm:$0xf] %v777
    %804 = vst [vmem:[%s3 + $0x1c] sm:$0xf] %v778
    %805 = vst [vmem:[%s3 + $0x20] sm:$0xf] %v779
    %806 = vst [vmem:[%s3 + $0x24] sm:$0xf] %v780
    %807 = vst [vmem:[%s3 + $0x28] sm:$0xf] %v781
    %808 = vst [vmem:[%s3 + $0x2c] sm:$0xf] %v782
    %809 = vst [vmem:[%s3 + $0x30] sm:$0x1] %v783
    // Predicated region
    $region22: #{cnn_forward.3} parent=1 // pred_check
      _
    $region23: #{cnn_forward.3} parent=1 // pred_check_branch
      %811 = sbr.rel (0) target = $region25
    $region24: #{cnn_forward.3} parent=1 // pred_region
      _
    $region25: #{cnn_forward.3} parent=1 // pred_fallthru
      _
    // Predicated region
    $region26: #{cnn_forward.3} parent=1 // pred_check
      _
    $region27: #{cnn_forward.3} parent=1 // pred_check_branch
      %813 = sbr.rel (0) target = $region29
    $region28: #{cnn_forward.3} parent=1 // pred_region
      _
    $region29: #{cnn_forward.3} parent=1 // pred_fallthru
      _
    %814 = vsyncpa [#allocation3], 1
    %815 = vsyncpa [#allocation5], 1

// kernel: cnn_forward.5
$region0: #{cnn_forward.5}
  #allocation0 [shape = 'u32[]', space=smem, size = 0x4, offset = 0x4, fixed_abs, tag = 'smem constant byte address 0x4 - core index']
  #allocation1 [shape = 'u32[144,128]{1,0:T(1,128)}', space=vmem, size = 0x12000, scoped, tag = 'internal scratch']
  %s0 = inlined_call_operand.vmem [shape: bf16[2,3136], index: 0, kind: input, shape index: {}]
  %s1 = inlined_call_operand.vmem [shape: bf16[3136,128], index: 1, kind: input, shape index: {}]
  %s2 = inlined_call_operand.vmem [shape: f32[1,128], index: 2, kind: input, shape index: {}]
  %s3 = inlined_call_operand.vmem [shape: bf16[128,128], index: 3, kind: input, shape index: {}]
  %s4 = inlined_call_operand.vmem [shape: f32[1,128], index: 4, kind: input, shape index: {}]
  %s5 = inlined_call_operand.hbm [shape: f32[2,128], index: 5, kind: output, shape index: {}]
  %s6 = sld [smem:[#allocation0]]
  $region30: #{cnn_forward.5} parent=0
    _
  %s8 = ssub.s32 1, %s6
  %s9 = scalar_select 0, %s8, %s6
  $region1: #{cnn_forward.5} parent=0
    #allocation2 [shape = 'u8[1024]{0}', space=vmem, size = 0x400, scoped, tag = 'output window, operand 0, single buffered']
    #allocation3 [shape = 's32[1]{0}', space=sflag, size = 0x4, scoped, tag = 'scoped memory for cnn_forward.5']
    %10 = vsyncpa [#allocation3], 0
    // Predicated region
    $region2: #{cnn_forward.5} parent=1 // pred_check
      _
    $region3: #{cnn_forward.5} parent=1 // pred_check_branch
      %12 = sbr.rel (0) target = $region5
    $region4: #{cnn_forward.5} parent=1 // pred_region
      _
    $region5: #{cnn_forward.5} parent=1 // pred_fallthru
      _
    // Predicated region
    $region6: #{cnn_forward.5} parent=1 // pred_check
      _
    $region7: #{cnn_forward.5} parent=1 // pred_check_branch
      %14 = sbr.rel (0) target = $region9
    $region8: #{cnn_forward.5} parent=1 // pred_region
      _
    $region9: #{cnn_forward.5} parent=1 // pred_fallthru
      _
    // Predicated region
    $region10: #{cnn_forward.5} parent=1 // pred_check
      _
    $region11: #{cnn_forward.5} parent=1 // pred_check_branch
      %16 = sbr.rel (0) target = $region13
    $region12: #{cnn_forward.5} parent=1 // pred_region
      _
    $region13: #{cnn_forward.5} parent=1 // pred_fallthru
      _
    // Predicated region
    $region14: #{cnn_forward.5} parent=1 // pred_check
      _
    $region15: #{cnn_forward.5} parent=1 // pred_check_branch
      %18 = sbr.rel (0) target = $region17
    $region16: #{cnn_forward.5} parent=1 // pred_region
      _
    $region17: #{cnn_forward.5} parent=1 // pred_fallthru
      _
    // Predicated region
    $region18: #{cnn_forward.5} parent=1 // pred_check
      _
    $region19: #{cnn_forward.5} parent=1 // pred_check_branch
      %20 = sbr.rel (0) target = $region21
    $region20: #{cnn_forward.5} parent=1 // pred_region
      _
    $region21: #{cnn_forward.5} parent=1 // pred_fallthru
      _
    %v22 = vld [vmem:[%s0] sm:$0xff]
    %v23 = vld [vmem:[%s0 + $0x8] sm:$0xff]
    %v24 = vld [vmem:[%s0 + $0x10] sm:$0xff]
    %v25 = vld [vmem:[%s0 + $0x18] sm:$0x1]
    %v26 = vld [vmem:[%s1] sm:$0xf]
    %v27 = vld [vmem:[%s1 + $0x4] sm:$0xf]
    %v28 = vld [vmem:[%s1 + $0x8] sm:$0xf]
    %v29 = vld [vmem:[%s1 + $0xc] sm:$0xf]
    %v30 = vld [vmem:[%s1 + $0x10] sm:$0xf]
    %v31 = vld [vmem:[%s1 + $0x14] sm:$0xf]
    %v32 = vld [vmem:[%s1 + $0x18] sm:$0xf]
    %v33 = vld [vmem:[%s1 + $0x1c] sm:$0xf]
    %v34 = vld [vmem:[%s1 + $0x20] sm:$0xf]
    %v35 = vld [vmem:[%s1 + $0x24] sm:$0xf]
    %v36 = vld [vmem:[%s1 + $0x28] sm:$0xf]
    %v37 = vld [vmem:[%s1 + $0x2c] sm:$0xf]
    %v38 = vld [vmem:[%s1 + $0x30] sm:$0xf]
    %v39 = vld [vmem:[%s1 + $0x34] sm:$0xf]
    %v40 = vld [vmem:[%s1 + $0x38] sm:$0xf]
    %v41 = vld [vmem:[%s1 + $0x3c] sm:$0xf]
    %v42 = vld [vmem:[%s1 + $0x40] sm:$0xf]
    %v43 = vld [vmem:[%s1 + $0x44] sm:$0xf]
    %v44 = vld [vmem:[%s1 + $0x48] sm:$0xf]
    %v45 = vld [vmem:[%s1 + $0x4c] sm:$0xf]
    %v46 = vld [vmem:[%s1 + $0x50] sm:$0xf]
    %v47 = vld [vmem:[%s1 + $0x54] sm:$0xf]
    %v48 = vld [vmem:[%s1 + $0x58] sm:$0xf]
    %v49 = vld [vmem:[%s1 + $0x5c] sm:$0xf]
    %v50 = vld [vmem:[%s1 + $0x60] sm:$0xf]
    %v51 = vld [vmem:[%s1 + $0x64] sm:$0xf]
    %v52 = vld [vmem:[%s1 + $0x68] sm:$0xf]
    %v53 = vld [vmem:[%s1 + $0x6c] sm:$0xf]
    %v54 = vld [vmem:[%s1 + $0x70] sm:$0xf]
    %v55 = vld [vmem:[%s1 + $0x74] sm:$0xf]
    %v56 = vld [vmem:[%s1 + $0x78] sm:$0xf]
    %v57 = vld [vmem:[%s1 + $0x7c] sm:$0xf]
    %v58 = vld [vmem:[%s1 + $0x80] sm:$0xf]
    %v59 = vld [vmem:[%s1 + $0x84] sm:$0xf]
    %v60 = vld [vmem:[%s1 + $0x88] sm:$0xf]
    %v61 = vld [vmem:[%s1 + $0x8c] sm:$0xf]
    %v62 = vld [vmem:[%s1 + $0x90] sm:$0xf]
    %v63 = vld [vmem:[%s1 + $0x94] sm:$0xf]
    %v64 = vld [vmem:[%s1 + $0x98] sm:$0xf]
    %v65 = vld [vmem:[%s1 + $0x9c] sm:$0xf]
    %v66 = vld [vmem:[%s1 + $0xa0] sm:$0xf]
    %v67 = vld [vmem:[%s1 + $0xa4] sm:$0xf]
    %v68 = vld [vmem:[%s1 + $0xa8] sm:$0xf]
    %v69 = vld [vmem:[%s1 + $0xac] sm:$0xf]
    %v70 = vld [vmem:[%s1 + $0xb0] sm:$0xf]
    %v71 = vld [vmem:[%s1 + $0xb4] sm:$0xf]
    %v72 = vld [vmem:[%s1 + $0xb8] sm:$0xf]
    %v73 = vld [vmem:[%s1 + $0xbc] sm:$0xf]
    %v74 = vld [vmem:[%s1 + $0xc0] sm:$0xf]
    %v75 = vld [vmem:[%s1 + $0xc4] sm:$0xf]
    %v76 = vld [vmem:[%s1 + $0xc8] sm:$0xf]
    %v77 = vld [vmem:[%s1 + $0xcc] sm:$0xf]
    %v78 = vld [vmem:[%s1 + $0xd0] sm:$0xf]
    %v79 = vld [vmem:[%s1 + $0xd4] sm:$0xf]
    %v80 = vld [vmem:[%s1 + $0xd8] sm:$0xf]
    %v81 = vld [vmem:[%s1 + $0xdc] sm:$0xf]
    %v82 = vld [vmem:[%s1 + $0xe0] sm:$0xf]
    %v83 = vld [vmem:[%s1 + $0xe4] sm:$0xf]
    %v84 = vld [vmem:[%s1 + $0xe8] sm:$0xf]
    %v85 = vld [vmem:[%s1 + $0xec] sm:$0xf]
    %v86 = vld [vmem:[%s1 + $0xf0] sm:$0xf]
    %v87 = vld [vmem:[%s1 + $0xf4] sm:$0xf]
    %v88 = vld [vmem:[%s1 + $0xf8] sm:$0xf]
    %v89 = vld [vmem:[%s1 + $0xfc] sm:$0xf]
    %v90 = vld [vmem:[%s1 + $0x100] sm:$0xf]
    %v91 = vld [vmem:[%s1 + $0x104] sm:$0xf]
    %v92 = vld [vmem:[%s1 + $0x108] sm:$0xf]
    %v93 = vld [vmem:[%s1 + $0x10c] sm:$0xf]
    %v94 = vld [vmem:[%s1 + $0x110] sm:$0xf]
    %v95 = vld [vmem:[%s1 + $0x114] sm:$0xf]
    %v96 = vld [vmem:[%s1 + $0x118] sm:$0xf]
    %v97 = vld [vmem:[%s1 + $0x11c] sm:$0xf]
    %v98 = vld [vmem:[%s1 + $0x120] sm:$0xf]
    %v99 = vld [vmem:[%s1 + $0x124] sm:$0xf]
    %v100 = vld [vmem:[%s1 + $0x128] sm:$0xf]
    %v101 = vld [vmem:[%s1 + $0x12c] sm:$0xf]
    %v102 = vld [vmem:[%s1 + $0x130] sm:$0xf]
    %v103 = vld [vmem:[%s1 + $0x134] sm:$0xf]
    %v104 = vld [vmem:[%s1 + $0x138] sm:$0xf]
    %v105 = vld [vmem:[%s1 + $0x13c] sm:$0xf]
    %v106 = vld [vmem:[%s1 + $0x140] sm:$0xf]
    %v107 = vld [vmem:[%s1 + $0x144] sm:$0xf]
    %v108 = vld [vmem:[%s1 + $0x148] sm:$0xf]
    %v109 = vld [vmem:[%s1 + $0x14c] sm:$0xf]
    %v110 = vld [vmem:[%s1 + $0x150] sm:$0xf]
    %v111 = vld [vmem:[%s1 + $0x154] sm:$0xf]
    %v112 = vld [vmem:[%s1 + $0x158] sm:$0xf]
    %v113 = vld [vmem:[%s1 + $0x15c] sm:$0xf]
    %v114 = vld [vmem:[%s1 + $0x160] sm:$0xf]
    %v115 = vld [vmem:[%s1 + $0x164] sm:$0xf]
    %v116 = vld [vmem:[%s1 + $0x168] sm:$0xf]
    %v117 = vld [vmem:[%s1 + $0x16c] sm:$0xf]
    %v118 = vld [vmem:[%s1 + $0x170] sm:$0xf]
    %v119 = vld [vmem:[%s1 + $0x174] sm:$0xf]
    %v120 = vld [vmem:[%s1 + $0x178] sm:$0xf]
    %v121 = vld [vmem:[%s1 + $0x17c] sm:$0xf]
    %v122 = vld [vmem:[%s1 + $0x180] sm:$0xf]
    %v123 = vld [vmem:[%s1 + $0x184] sm:$0xf]
    %v124 = vld [vmem:[%s1 + $0x188] sm:$0xf]
    %v125 = vld [vmem:[%s1 + $0x18c] sm:$0xf]
    %v126 = vld [vmem:[%s1 + $0x190] sm:$0xf]
    %v127 = vld [vmem:[%s1 + $0x194] sm:$0xf]
    %v128 = vld [vmem:[%s1 + $0x198] sm:$0xf]
    %v129 = vld [vmem:[%s1 + $0x19c] sm:$0xf]
    %v130 = vld [vmem:[%s1 + $0x1a0] sm:$0xf]
    %v131 = vld [vmem:[%s1 + $0x1a4] sm:$0xf]
    %v132 = vld [vmem:[%s1 + $0x1a8] sm:$0xf]
    %v133 = vld [vmem:[%s1 + $0x1ac] sm:$0xf]
    %v134 = vld [vmem:[%s1 + $0x1b0] sm:$0xf]
    %v135 = vld [vmem:[%s1 + $0x1b4] sm:$0xf]
    %v136 = vld [vmem:[%s1 + $0x1b8] sm:$0xf]
    %v137 = vld [vmem:[%s1 + $0x1bc] sm:$0xf]
    %v138 = vld [vmem:[%s1 + $0x1c0] sm:$0xf]
    %v139 = vld [vmem:[%s1 + $0x1c4] sm:$0xf]
    %v140 = vld [vmem:[%s1 + $0x1c8] sm:$0xf]
    %v141 = vld [vmem:[%s1 + $0x1cc] sm:$0xf]
    %v142 = vld [vmem:[%s1 + $0x1d0] sm:$0xf]
    %v143 = vld [vmem:[%s1 + $0x1d4] sm:$0xf]
    %v144 = vld [vmem:[%s1 + $0x1d8] sm:$0xf]
    %v145 = vld [vmem:[%s1 + $0x1dc] sm:$0xf]
    %v146 = vld [vmem:[%s1 + $0x1e0] sm:$0xf]
    %v147 = vld [vmem:[%s1 + $0x1e4] sm:$0xf]
    %v148 = vld [vmem:[%s1 + $0x1e8] sm:$0xf]
    %v149 = vld [vmem:[%s1 + $0x1ec] sm:$0xf]
    %v150 = vld [vmem:[%s1 + $0x1f0] sm:$0xf]
    %v151 = vld [vmem:[%s1 + $0x1f4] sm:$0xf]
    %v152 = vld [vmem:[%s1 + $0x1f8] sm:$0xf]
    %v153 = vld [vmem:[%s1 + $0x1fc] sm:$0xf]
    %v154 = vld [vmem:[%s1 + $0x200] sm:$0xf]
    %v155 = vld [vmem:[%s1 + $0x204] sm:$0xf]
    %v156 = vld [vmem:[%s1 + $0x208] sm:$0xf]
    %v157 = vld [vmem:[%s1 + $0x20c] sm:$0xf]
    %v158 = vld [vmem:[%s1 + $0x210] sm:$0xf]
    %v159 = vld [vmem:[%s1 + $0x214] sm:$0xf]
    %v160 = vld [vmem:[%s1 + $0x218] sm:$0xf]
    %v161 = vld [vmem:[%s1 + $0x21c] sm:$0xf]
    %v162 = vld [vmem:[%s1 + $0x220] sm:$0xf]
    %v163 = vld [vmem:[%s1 + $0x224] sm:$0xf]
    %v164 = vld [vmem:[%s1 + $0x228] sm:$0xf]
    %v165 = vld [vmem:[%s1 + $0x22c] sm:$0xf]
    %v166 = vld [vmem:[%s1 + $0x230] sm:$0xf]
    %v167 = vld [vmem:[%s1 + $0x234] sm:$0xf]
    %v168 = vld [vmem:[%s1 + $0x238] sm:$0xf]
    %v169 = vld [vmem:[%s1 + $0x23c] sm:$0xf]
    %v170 = vld [vmem:[%s1 + $0x240] sm:$0xf]
    %v171 = vld [vmem:[%s1 + $0x244] sm:$0xf]
    %v172 = vld [vmem:[%s1 + $0x248] sm:$0xf]
    %v173 = vld [vmem:[%s1 + $0x24c] sm:$0xf]
    %v174 = vld [vmem:[%s1 + $0x250] sm:$0xf]
    %v175 = vld [vmem:[%s1 + $0x254] sm:$0xf]
    %v176 = vld [vmem:[%s1 + $0x258] sm:$0xf]
    %v177 = vld [vmem:[%s1 + $0x25c] sm:$0xf]
    %v178 = vld [vmem:[%s1 + $0x260] sm:$0xf]
    %v179 = vld [vmem:[%s1 + $0x264] sm:$0xf]
    %v180 = vld [vmem:[%s1 + $0x268] sm:$0xf]
    %v181 = vld [vmem:[%s1 + $0x26c] sm:$0xf]
    %v182 = vld [vmem:[%s1 + $0x270] sm:$0xf]
    %v183 = vld [vmem:[%s1 + $0x274] sm:$0xf]
    %v184 = vld [vmem:[%s1 + $0x278] sm:$0xf]
    %v185 = vld [vmem:[%s1 + $0x27c] sm:$0xf]
    %v186 = vld [vmem:[%s1 + $0x280] sm:$0xf]
    %v187 = vld [vmem:[%s1 + $0x284] sm:$0xf]
    %v188 = vld [vmem:[%s1 + $0x288] sm:$0xf]
    %v189 = vld [vmem:[%s1 + $0x28c] sm:$0xf]
    %v190 = vld [vmem:[%s1 + $0x290] sm:$0xf]
    %v191 = vld [vmem:[%s1 + $0x294] sm:$0xf]
    %v192 = vld [vmem:[%s1 + $0x298] sm:$0xf]
    %v193 = vld [vmem:[%s1 + $0x29c] sm:$0xf]
    %v194 = vld [vmem:[%s1 + $0x2a0] sm:$0xf]
    %v195 = vld [vmem:[%s1 + $0x2a4] sm:$0xf]
    %v196 = vld [vmem:[%s1 + $0x2a8] sm:$0xf]
    %v197 = vld [vmem:[%s1 + $0x2ac] sm:$0xf]
    %v198 = vld [vmem:[%s1 + $0x2b0] sm:$0xf]
    %v199 = vld [vmem:[%s1 + $0x2b4] sm:$0xf]
    %v200 = vld [vmem:[%s1 + $0x2b8] sm:$0xf]
    %v201 = vld [vmem:[%s1 + $0x2bc] sm:$0xf]
    %v202 = vld [vmem:[%s1 + $0x2c0] sm:$0xf]
    %v203 = vld [vmem:[%s1 + $0x2c4] sm:$0xf]
    %v204 = vld [vmem:[%s1 + $0x2c8] sm:$0xf]
    %v205 = vld [vmem:[%s1 + $0x2cc] sm:$0xf]
    %v206 = vld [vmem:[%s1 + $0x2d0] sm:$0xf]
    %v207 = vld [vmem:[%s1 + $0x2d4] sm:$0xf]
    %v208 = vld [vmem:[%s1 + $0x2d8] sm:$0xf]
    %v209 = vld [vmem:[%s1 + $0x2dc] sm:$0xf]
    %v210 = vld [vmem:[%s1 + $0x2e0] sm:$0xf]
    %v211 = vld [vmem:[%s1 + $0x2e4] sm:$0xf]
    %v212 = vld [vmem:[%s1 + $0x2e8] sm:$0xf]
    %v213 = vld [vmem:[%s1 + $0x2ec] sm:$0xf]
    %v214 = vld [vmem:[%s1 + $0x2f0] sm:$0xf]
    %v215 = vld [vmem:[%s1 + $0x2f4] sm:$0xf]
    %v216 = vld [vmem:[%s1 + $0x2f8] sm:$0xf]
    %v217 = vld [vmem:[%s1 + $0x2fc] sm:$0xf]
    %v218 = vld [vmem:[%s1 + $0x300] sm:$0xf]
    %v219 = vld [vmem:[%s1 + $0x304] sm:$0xf]
    %v220 = vld [vmem:[%s1 + $0x308] sm:$0xf]
    %v221 = vld [vmem:[%s1 + $0x30c] sm:$0xf]
    %v222 = vld [vmem:[%s1 + $0x310] sm:$0xf]
    %v223 = vld [vmem:[%s1 + $0x314] sm:$0xf]
    %v224 = vld [vmem:[%s1 + $0x318] sm:$0xf]
    %v225 = vld [vmem:[%s1 + $0x31c] sm:$0xf]
    %v226 = vld [vmem:[%s1 + $0x320] sm:$0xf]
    %v227 = vld [vmem:[%s1 + $0x324] sm:$0xf]
    %v228 = vld [vmem:[%s1 + $0x328] sm:$0xf]
    %v229 = vld [vmem:[%s1 + $0x32c] sm:$0xf]
    %v230 = vld [vmem:[%s1 + $0x330] sm:$0xf]
    %v231 = vld [vmem:[%s1 + $0x334] sm:$0xf]
    %v232 = vld [vmem:[%s1 + $0x338] sm:$0xf]
    %v233 = vld [vmem:[%s1 + $0x33c] sm:$0xf]
    %v234 = vld [vmem:[%s1 + $0x340] sm:$0xf]
    %v235 = vld [vmem:[%s1 + $0x344] sm:$0xf]
    %v236 = vld [vmem:[%s1 + $0x348] sm:$0xf]
    %v237 = vld [vmem:[%s1 + $0x34c] sm:$0xf]
    %v238 = vld [vmem:[%s1 + $0x350] sm:$0xf]
    %v239 = vld [vmem:[%s1 + $0x354] sm:$0xf]
    %v240 = vld [vmem:[%s1 + $0x358] sm:$0xf]
    %v241 = vld [vmem:[%s1 + $0x35c] sm:$0xf]
    %v242 = vld [vmem:[%s1 + $0x360] sm:$0xf]
    %v243 = vld [vmem:[%s1 + $0x364] sm:$0xf]
    %v244 = vld [vmem:[%s1 + $0x368] sm:$0xf]
    %v245 = vld [vmem:[%s1 + $0x36c] sm:$0xf]
    %v246 = vld [vmem:[%s1 + $0x370] sm:$0xf]
    %v247 = vld [vmem:[%s1 + $0x374] sm:$0xf]
    %v248 = vld [vmem:[%s1 + $0x378] sm:$0xf]
    %v249 = vld [vmem:[%s1 + $0x37c] sm:$0xf]
    %v250 = vld [vmem:[%s1 + $0x380] sm:$0xf]
    %v251 = vld [vmem:[%s1 + $0x384] sm:$0xf]
    %v252 = vld [vmem:[%s1 + $0x388] sm:$0xf]
    %v253 = vld [vmem:[%s1 + $0x38c] sm:$0xf]
    %v254 = vld [vmem:[%s1 + $0x390] sm:$0xf]
    %v255 = vld [vmem:[%s1 + $0x394] sm:$0xf]
    %v256 = vld [vmem:[%s1 + $0x398] sm:$0xf]
    %v257 = vld [vmem:[%s1 + $0x39c] sm:$0xf]
    %v258 = vld [vmem:[%s1 + $0x3a0] sm:$0xf]
    %v259 = vld [vmem:[%s1 + $0x3a4] sm:$0xf]
    %v260 = vld [vmem:[%s1 + $0x3a8] sm:$0xf]
    %v261 = vld [vmem:[%s1 + $0x3ac] sm:$0xf]
    %v262 = vld [vmem:[%s1 + $0x3b0] sm:$0xf]
    %v263 = vld [vmem:[%s1 + $0x3b4] sm:$0xf]
    %v264 = vld [vmem:[%s1 + $0x3b8] sm:$0xf]
    %v265 = vld [vmem:[%s1 + $0x3bc] sm:$0xf]
    %v266 = vld [vmem:[%s1 + $0x3c0] sm:$0xf]
    %v267 = vld [vmem:[%s1 + $0x3c4] sm:$0xf]
    %v268 = vld [vmem:[%s1 + $0x3c8] sm:$0xf]
    %v269 = vld [vmem:[%s1 + $0x3cc] sm:$0xf]
    %v270 = vld [vmem:[%s1 + $0x3d0] sm:$0xf]
    %v271 = vld [vmem:[%s1 + $0x3d4] sm:$0xf]
    %v272 = vld [vmem:[%s1 + $0x3d8] sm:$0xf]
    %v273 = vld [vmem:[%s1 + $0x3dc] sm:$0xf]
    %v274 = vld [vmem:[%s1 + $0x3e0] sm:$0xf]
    %v275 = vld [vmem:[%s1 + $0x3e4] sm:$0xf]
    %v276 = vld [vmem:[%s1 + $0x3e8] sm:$0xf]
    %v277 = vld [vmem:[%s1 + $0x3ec] sm:$0xf]
    %v278 = vld [vmem:[%s1 + $0x3f0] sm:$0xf]
    %v279 = vld [vmem:[%s1 + $0x3f4] sm:$0xf]
    %v280 = vld [vmem:[%s1 + $0x3f8] sm:$0xf]
    %v281 = vld [vmem:[%s1 + $0x3fc] sm:$0xf]
    %v282 = vld [vmem:[%s1 + $0x400] sm:$0xf]
    %v283 = vld [vmem:[%s1 + $0x404] sm:$0xf]
    %v284 = vld [vmem:[%s1 + $0x408] sm:$0xf]
    %v285 = vld [vmem:[%s1 + $0x40c] sm:$0xf]
    %v286 = vld [vmem:[%s1 + $0x410] sm:$0xf]
    %v287 = vld [vmem:[%s1 + $0x414] sm:$0xf]
    %v288 = vld [vmem:[%s1 + $0x418] sm:$0xf]
    %v289 = vld [vmem:[%s1 + $0x41c] sm:$0xf]
    %v290 = vld [vmem:[%s1 + $0x420] sm:$0xf]
    %v291 = vld [vmem:[%s1 + $0x424] sm:$0xf]
    %v292 = vld [vmem:[%s1 + $0x428] sm:$0xf]
    %v293 = vld [vmem:[%s1 + $0x42c] sm:$0xf]
    %v294 = vld [vmem:[%s1 + $0x430] sm:$0xf]
    %v295 = vld [vmem:[%s1 + $0x434] sm:$0xf]
    %v296 = vld [vmem:[%s1 + $0x438] sm:$0xf]
    %v297 = vld [vmem:[%s1 + $0x43c] sm:$0xf]
    %v298 = vld [vmem:[%s1 + $0x440] sm:$0xf]
    %v299 = vld [vmem:[%s1 + $0x444] sm:$0xf]
    %v300 = vld [vmem:[%s1 + $0x448] sm:$0xf]
    %v301 = vld [vmem:[%s1 + $0x44c] sm:$0xf]
    %v302 = vld [vmem:[%s1 + $0x450] sm:$0xf]
    %v303 = vld [vmem:[%s1 + $0x454] sm:$0xf]
    %v304 = vld [vmem:[%s1 + $0x458] sm:$0xf]
    %v305 = vld [vmem:[%s1 + $0x45c] sm:$0xf]
    %v306 = vld [vmem:[%s1 + $0x460] sm:$0xf]
    %v307 = vld [vmem:[%s1 + $0x464] sm:$0xf]
    %v308 = vld [vmem:[%s1 + $0x468] sm:$0xf]
    %v309 = vld [vmem:[%s1 + $0x46c] sm:$0xf]
    %v310 = vld [vmem:[%s1 + $0x470] sm:$0xf]
    %v311 = vld [vmem:[%s1 + $0x474] sm:$0xf]
    %v312 = vld [vmem:[%s1 + $0x478] sm:$0xf]
    %v313 = vld [vmem:[%s1 + $0x47c] sm:$0xf]
    %v314 = vld [vmem:[%s1 + $0x480] sm:$0xf]
    %v315 = vld [vmem:[%s1 + $0x484] sm:$0xf]
    %v316 = vld [vmem:[%s1 + $0x488] sm:$0xf]
    %v317 = vld [vmem:[%s1 + $0x48c] sm:$0xf]
    %v318 = vld [vmem:[%s1 + $0x490] sm:$0xf]
    %v319 = vld [vmem:[%s1 + $0x494] sm:$0xf]
    %v320 = vld [vmem:[%s1 + $0x498] sm:$0xf]
    %v321 = vld [vmem:[%s1 + $0x49c] sm:$0xf]
    %v322 = vld [vmem:[%s1 + $0x4a0] sm:$0xf]
    %v323 = vld [vmem:[%s1 + $0x4a4] sm:$0xf]
    %v324 = vld [vmem:[%s1 + $0x4a8] sm:$0xf]
    %v325 = vld [vmem:[%s1 + $0x4ac] sm:$0xf]
    %v326 = vld [vmem:[%s1 + $0x4b0] sm:$0xf]
    %v327 = vld [vmem:[%s1 + $0x4b4] sm:$0xf]
    %v328 = vld [vmem:[%s1 + $0x4b8] sm:$0xf]
    %v329 = vld [vmem:[%s1 + $0x4bc] sm:$0xf]
    %v330 = vld [vmem:[%s1 + $0x4c0] sm:$0xf]
    %v331 = vld [vmem:[%s1 + $0x4c4] sm:$0xf]
    %v332 = vld [vmem:[%s1 + $0x4c8] sm:$0xf]
    %v333 = vld [vmem:[%s1 + $0x4cc] sm:$0xf]
    %v334 = vld [vmem:[%s1 + $0x4d0] sm:$0xf]
    %v335 = vld [vmem:[%s1 + $0x4d4] sm:$0xf]
    %v336 = vld [vmem:[%s1 + $0x4d8] sm:$0xf]
    %v337 = vld [vmem:[%s1 + $0x4dc] sm:$0xf]
    %v338 = vld [vmem:[%s1 + $0x4e0] sm:$0xf]
    %v339 = vld [vmem:[%s1 + $0x4e4] sm:$0xf]
    %v340 = vld [vmem:[%s1 + $0x4e8] sm:$0xf]
    %v341 = vld [vmem:[%s1 + $0x4ec] sm:$0xf]
    %v342 = vld [vmem:[%s1 + $0x4f0] sm:$0xf]
    %v343 = vld [vmem:[%s1 + $0x4f4] sm:$0xf]
    %v344 = vld [vmem:[%s1 + $0x4f8] sm:$0xf]
    %v345 = vld [vmem:[%s1 + $0x4fc] sm:$0xf]
    %v346 = vld [vmem:[%s1 + $0x500] sm:$0xf]
    %v347 = vld [vmem:[%s1 + $0x504] sm:$0xf]
    %v348 = vld [vmem:[%s1 + $0x508] sm:$0xf]
    %v349 = vld [vmem:[%s1 + $0x50c] sm:$0xf]
    %v350 = vld [vmem:[%s1 + $0x510] sm:$0xf]
    %v351 = vld [vmem:[%s1 + $0x514] sm:$0xf]
    %v352 = vld [vmem:[%s1 + $0x518] sm:$0xf]
    %v353 = vld [vmem:[%s1 + $0x51c] sm:$0xf]
    %v354 = vld [vmem:[%s1 + $0x520] sm:$0xf]
    %v355 = vld [vmem:[%s1 + $0x524] sm:$0xf]
    %v356 = vld [vmem:[%s1 + $0x528] sm:$0xf]
    %v357 = vld [vmem:[%s1 + $0x52c] sm:$0xf]
    %v358 = vld [vmem:[%s1 + $0x530] sm:$0xf]
    %v359 = vld [vmem:[%s1 + $0x534] sm:$0xf]
    %v360 = vld [vmem:[%s1 + $0x538] sm:$0xf]
    %v361 = vld [vmem:[%s1 + $0x53c] sm:$0xf]
    %v362 = vld [vmem:[%s1 + $0x540] sm:$0xf]
    %v363 = vld [vmem:[%s1 + $0x544] sm:$0xf]
    %v364 = vld [vmem:[%s1 + $0x548] sm:$0xf]
    %v365 = vld [vmem:[%s1 + $0x54c] sm:$0xf]
    %v366 = vld [vmem:[%s1 + $0x550] sm:$0xf]
    %v367 = vld [vmem:[%s1 + $0x554] sm:$0xf]
    %v368 = vld [vmem:[%s1 + $0x558] sm:$0xf]
    %v369 = vld [vmem:[%s1 + $0x55c] sm:$0xf]
    %v370 = vld [vmem:[%s1 + $0x560] sm:$0xf]
    %v371 = vld [vmem:[%s1 + $0x564] sm:$0xf]
    %v372 = vld [vmem:[%s1 + $0x568] sm:$0xf]
    %v373 = vld [vmem:[%s1 + $0x56c] sm:$0xf]
    %v374 = vld [vmem:[%s1 + $0x570] sm:$0xf]
    %v375 = vld [vmem:[%s1 + $0x574] sm:$0xf]
    %v376 = vld [vmem:[%s1 + $0x578] sm:$0xf]
    %v377 = vld [vmem:[%s1 + $0x57c] sm:$0xf]
    %v378 = vld [vmem:[%s1 + $0x580] sm:$0xf]
    %v379 = vld [vmem:[%s1 + $0x584] sm:$0xf]
    %v380 = vld [vmem:[%s1 + $0x588] sm:$0xf]
    %v381 = vld [vmem:[%s1 + $0x58c] sm:$0xf]
    %v382 = vld [vmem:[%s1 + $0x590] sm:$0xf]
    %v383 = vld [vmem:[%s1 + $0x594] sm:$0xf]
    %v384 = vld [vmem:[%s1 + $0x598] sm:$0xf]
    %v385 = vld [vmem:[%s1 + $0x59c] sm:$0xf]
    %v386 = vld [vmem:[%s1 + $0x5a0] sm:$0xf]
    %v387 = vld [vmem:[%s1 + $0x5a4] sm:$0xf]
    %v388 = vld [vmem:[%s1 + $0x5a8] sm:$0xf]
    %v389 = vld [vmem:[%s1 + $0x5ac] sm:$0xf]
    %v390 = vld [vmem:[%s1 + $0x5b0] sm:$0xf]
    %v391 = vld [vmem:[%s1 + $0x5b4] sm:$0xf]
    %v392 = vld [vmem:[%s1 + $0x5b8] sm:$0xf]
    %v393 = vld [vmem:[%s1 + $0x5bc] sm:$0xf]
    %v394 = vld [vmem:[%s1 + $0x5c0] sm:$0xf]
    %v395 = vld [vmem:[%s1 + $0x5c4] sm:$0xf]
    %v396 = vld [vmem:[%s1 + $0x5c8] sm:$0xf]
    %v397 = vld [vmem:[%s1 + $0x5cc] sm:$0xf]
    %v398 = vld [vmem:[%s1 + $0x5d0] sm:$0xf]
    %v399 = vld [vmem:[%s1 + $0x5d4] sm:$0xf]
    %v400 = vld [vmem:[%s1 + $0x5d8] sm:$0xf]
    %v401 = vld [vmem:[%s1 + $0x5dc] sm:$0xf]
    %v402 = vld [vmem:[%s1 + $0x5e0] sm:$0xf]
    %v403 = vld [vmem:[%s1 + $0x5e4] sm:$0xf]
    %v404 = vld [vmem:[%s1 + $0x5e8] sm:$0xf]
    %v405 = vld [vmem:[%s1 + $0x5ec] sm:$0xf]
    %v406 = vld [vmem:[%s1 + $0x5f0] sm:$0xf]
    %v407 = vld [vmem:[%s1 + $0x5f4] sm:$0xf]
    %v408 = vld [vmem:[%s1 + $0x5f8] sm:$0xf]
    %v409 = vld [vmem:[%s1 + $0x5fc] sm:$0xf]
    %v410 = vld [vmem:[%s1 + $0x600] sm:$0xf]
    %v411 = vld [vmem:[%s1 + $0x604] sm:$0xf]
    %v412 = vld [vmem:[%s1 + $0x608] sm:$0xf]
    %v413 = vld [vmem:[%s1 + $0x60c] sm:$0xf]
    %v414 = vld [vmem:[%s1 + $0x610] sm:$0xf]
    %v415 = vld [vmem:[%s1 + $0x614] sm:$0xf]
    %v416 = vld [vmem:[%s1 + $0x618] sm:$0xf]
    %v417 = vld [vmem:[%s1 + $0x61c] sm:$0xf]
    %v418 = vld [vmem:[%s2] sm:$0x1]
    %v420 = vlaneseq
    %v421 = vshrl.u32 %v420, 7
    %v422 = vsub.s32 0, %v421
    %v423 = vrot.slane %v418, %v422
    %v429 = vcombine.high %v22, %v22
    %v431 = vunpack.c.l.s4 1966171168
    %v432 = vunpack.c.0.s8 %v431
    %v433 = vlaneseq
    %v434 = vshrl.u32 %v433, 7
    %v435 = vsub.s32 %v432, %v434
    %v436 = vrot.slane %v22, %v435
    %v438 = vunpack.c.l.s4 1966171168
    %v439 = vunpack.c.0.s8 %v438
    %v440 = vlaneseq
    %v441 = vshrl.u32 %v440, 7
    %v442 = vsub.s32 %v439, %v441
    %v443 = vrot.slane %v429, %v442
    %v444 = vcombine.high %v436, %v436
    %v445 = vcombine.high %v443, %v443
    %v447 = vunpack.c.l.s4 1966171168
    %v448 = vunpack.c.0.s8 %v447
    %v449 = vlaneseq
    %v450 = vshrl.u32 %v449, 7
    %v451 = vsub.s32 %v448, %v450
    %v452 = vrot.slane %v436, %v451
    %v454 = vunpack.c.l.s4 1966171168
    %v455 = vunpack.c.0.s8 %v454
    %v456 = vlaneseq
    %v457 = vshrl.u32 %v456, 7
    %v458 = vsub.s32 %v455, %v457
    %v459 = vrot.slane %v443, %v458
    %v461 = vunpack.c.l.s4 1966171168
    %v462 = vunpack.c.0.s8 %v461
    %v463 = vlaneseq
    %v464 = vshrl.u32 %v463, 7
    %v465 = vsub.s32 %v462, %v464
    %v466 = vrot.slane %v444, %v465
    %v468 = vunpack.c.l.s4 1966171168
    %v469 = vunpack.c.0.s8 %v468
    %v470 = vlaneseq
    %v471 = vshrl.u32 %v470, 7
    %v472 = vsub.s32 %v469, %v471
    %v473 = vrot.slane %v445, %v472
    %v474 = vcombine.high %v452, %v452
    %v475 = vcombine.high %v459, %v459
    %v476 = vcombine.high %v466, %v466
    %v477 = vcombine.high %v473, %v473
    %v478 = vcombine.high %v23, %v23
    %v480 = vunpack.c.l.s4 1966171168
    %v481 = vunpack.c.0.s8 %v480
    %v482 = vlaneseq
    %v483 = vshrl.u32 %v482, 7
    %v484 = vsub.s32 %v481, %v483
    %v485 = vrot.slane %v23, %v484
    %v487 = vunpack.c.l.s4 1966171168
    %v488 = vunpack.c.0.s8 %v487
    %v489 = vlaneseq
    %v490 = vshrl.u32 %v489, 7
    %v491 = vsub.s32 %v488, %v490
    %v492 = vrot.slane %v478, %v491
    %v493 = vcombine.high %v485, %v485
    %v494 = vcombine.high %v492, %v492
    %v496 = vunpack.c.l.s4 1966171168
    %v497 = vunpack.c.0.s8 %v496
    %v498 = vlaneseq
    %v499 = vshrl.u32 %v498, 7
    %v500 = vsub.s32 %v497, %v499
    %v501 = vrot.slane %v485, %v500
    %v503 = vunpack.c.l.s4 1966171168
    %v504 = vunpack.c.0.s8 %v503
    %v505 = vlaneseq
    %v506 = vshrl.u32 %v505, 7
    %v507 = vsub.s32 %v504, %v506
    %v508 = vrot.slane %v492, %v507
    %v510 = vunpack.c.l.s4 1966171168
    %v511 = vunpack.c.0.s8 %v510
    %v512 = vlaneseq
    %v513 = vshrl.u32 %v512, 7
    %v514 = vsub.s32 %v511, %v513
    %v515 = vrot.slane %v493, %v514
    %v517 = vunpack.c.l.s4 1966171168
    %v518 = vunpack.c.0.s8 %v517
    %v519 = vlaneseq
    %v520 = vshrl.u32 %v519, 7
    %v521 = vsub.s32 %v518, %v520
    %v522 = vrot.slane %v494, %v521
    %v523 = vcombine.high %v501, %v501
    %v524 = vcombine.high %v508, %v508
    %v525 = vcombine.high %v515, %v515
    %v526 = vcombine.high %v522, %v522
    %v527 = vcombine.high %v24, %v24
    %v529 = vunpack.c.l.s4 1966171168
    %v530 = vunpack.c.0.s8 %v529
    %v531 = vlaneseq
    %v532 = vshrl.u32 %v531, 7
    %v533 = vsub.s32 %v530, %v532
    %v534 = vrot.slane %v24, %v533
    %v536 = vunpack.c.l.s4 1966171168
    %v537 = vunpack.c.0.s8 %v536
    %v538 = vlaneseq
    %v539 = vshrl.u32 %v538, 7
    %v540 = vsub.s32 %v537, %v539
    %v541 = vrot.slane %v527, %v540
    %v542 = vcombine.high %v534, %v534
    %v543 = vcombine.high %v541, %v541
    %v545 = vunpack.c.l.s4 1966171168
    %v546 = vunpack.c.0.s8 %v545
    %v547 = vlaneseq
    %v548 = vshrl.u32 %v547, 7
    %v549 = vsub.s32 %v546, %v548
    %v550 = vrot.slane %v534, %v549
    %v552 = vunpack.c.l.s4 1966171168
    %v553 = vunpack.c.0.s8 %v552
    %v554 = vlaneseq
    %v555 = vshrl.u32 %v554, 7
    %v556 = vsub.s32 %v553, %v555
    %v557 = vrot.slane %v541, %v556
    %v559 = vunpack.c.l.s4 1966171168
    %v560 = vunpack.c.0.s8 %v559
    %v561 = vlaneseq
    %v562 = vshrl.u32 %v561, 7
    %v563 = vsub.s32 %v560, %v562
    %v564 = vrot.slane %v542, %v563
    %v566 = vunpack.c.l.s4 1966171168
    %v567 = vunpack.c.0.s8 %v566
    %v568 = vlaneseq
    %v569 = vshrl.u32 %v568, 7
    %v570 = vsub.s32 %v567, %v569
    %v571 = vrot.slane %v543, %v570
    %v572 = vcombine.high %v550, %v550
    %v573 = vcombine.high %v557, %v557
    %v574 = vcombine.high %v564, %v564
    %v575 = vcombine.high %v571, %v571
    %v577 = vunpack.c.l.s4 1966171168
    %v578 = vunpack.c.0.s8 %v577
    %v579 = vlaneseq
    %v580 = vshrl.u32 %v579, 7
    %v581 = vsub.s32 %v578, %v580
    %v582 = vrot.slane %v25, %v581
    %v584 = vunpack.c.l.s4 1966171168
    %v585 = vunpack.c.0.s8 %v584
    %v586 = vlaneseq
    %v587 = vshrl.u32 %v586, 7
    %v588 = vsub.s32 %v585, %v587
    %v589 = vrot.slane %v582, %v588
    %v1006 = vunpack.c.l.b16 %v26
    %v1007 = vunpack.c.l.b16 %v27
    %v1008 = vunpack.c.l.b16 %v28
    %v1009 = vunpack.c.l.b16 %v29
    %v1010 = vunpack.c.l.b16 %v30
    %v1011 = vunpack.c.l.b16 %v31
    %v1012 = vunpack.c.l.b16 %v32
    %v1013 = vunpack.c.l.b16 %v33
    %v1014 = vunpack.c.l.b16 %v34
    %v1015 = vunpack.c.l.b16 %v35
    %v1016 = vunpack.c.l.b16 %v36
    %v1017 = vunpack.c.l.b16 %v37
    %v1018 = vunpack.c.l.b16 %v38
    %v1019 = vunpack.c.l.b16 %v39
    %v1020 = vunpack.c.l.b16 %v40
    %v1021 = vunpack.c.l.b16 %v41
    %v1022 = vunpack.c.l.b16 %v42
    %v1023 = vunpack.c.l.b16 %v43
    %v1024 = vunpack.c.l.b16 %v44
    %v1025 = vunpack.c.l.b16 %v45
    %v1026 = vunpack.c.l.b16 %v46
    %v1027 = vunpack.c.l.b16 %v47
    %v1028 = vunpack.c.l.b16 %v48
    %v1029 = vunpack.c.l.b16 %v49
    %v1030 = vunpack.c.l.b16 %v50
    %v1031 = vunpack.c.l.b16 %v51
    %v1032 = vunpack.c.l.b16 %v52
    %v1033 = vunpack.c.l.b16 %v53
    %v1034 = vunpack.c.l.b16 %v54
    %v1035 = vunpack.c.l.b16 %v55
    %v1036 = vunpack.c.l.b16 %v56
    %v1037 = vunpack.c.l.b16 %v57
    %v1038 = vunpack.c.l.b16 %v58
    %v1039 = vunpack.c.l.b16 %v59
    %v1040 = vunpack.c.l.b16 %v60
    %v1041 = vunpack.c.l.b16 %v61
    %v1042 = vunpack.c.l.b16 %v62
    %v1043 = vunpack.c.l.b16 %v63
    %v1044 = vunpack.c.l.b16 %v64
    %v1045 = vunpack.c.l.b16 %v65
    %v1046 = vunpack.c.l.b16 %v66
    %v1047 = vunpack.c.l.b16 %v67
    %v1048 = vunpack.c.l.b16 %v68
    %v1049 = vunpack.c.l.b16 %v69
    %v1050 = vunpack.c.l.b16 %v70
    %v1051 = vunpack.c.l.b16 %v71
    %v1052 = vunpack.c.l.b16 %v72
    %v1053 = vunpack.c.l.b16 %v73
    %v1054 = vunpack.c.l.b16 %v74
    %v1055 = vunpack.c.l.b16 %v75
    %v1056 = vunpack.c.l.b16 %v76
    %v1057 = vunpack.c.l.b16 %v77
    %v1058 = vunpack.c.l.b16 %v78
    %v1059 = vunpack.c.l.b16 %v79
    %v1060 = vunpack.c.l.b16 %v80
    %v1061 = vunpack.c.l.b16 %v81
    %v1062 = vunpack.c.l.b16 %v82
    %v1063 = vunpack.c.l.b16 %v83
    %v1064 = vunpack.c.l.b16 %v84
    %v1065 = vunpack.c.l.b16 %v85
    %v1066 = vunpack.c.l.b16 %v86
    %v1067 = vunpack.c.l.b16 %v87
    %v1068 = vunpack.c.l.b16 %v88
    %v1069 = vunpack.c.l.b16 %v89
    %v1070 = vunpack.c.l.b16 %v90
    %v1071 = vunpack.c.l.b16 %v91
    %v1072 = vunpack.c.l.b16 %v92
    %v1073 = vunpack.c.l.b16 %v93
    %v1074 = vunpack.c.l.b16 %v94
    %v1075 = vunpack.c.l.b16 %v95
    %v1076 = vunpack.c.l.b16 %v96
    %v1077 = vunpack.c.l.b16 %v97
    %v1078 = vunpack.c.l.b16 %v98
    %v1079 = vunpack.c.l.b16 %v99
    %v1080 = vunpack.c.l.b16 %v100
    %v1081 = vunpack.c.l.b16 %v101
    %v1082 = vunpack.c.l.b16 %v102
    %v1083 = vunpack.c.l.b16 %v103
    %v1084 = vunpack.c.l.b16 %v104
    %v1085 = vunpack.c.l.b16 %v105
    %v1086 = vunpack.c.l.b16 %v106
    %v1087 = vunpack.c.l.b16 %v107
    %v1088 = vunpack.c.l.b16 %v108
    %v1089 = vunpack.c.l.b16 %v109
    %v1090 = vunpack.c.l.b16 %v110
    %v1091 = vunpack.c.l.b16 %v111
    %v1092 = vunpack.c.l.b16 %v112
    %v1093 = vunpack.c.l.b16 %v113
    %v1094 = vunpack.c.l.b16 %v114
    %v1095 = vunpack.c.l.b16 %v115
    %v1096 = vunpack.c.l.b16 %v116
    %v1097 = vunpack.c.l.b16 %v117
    %v1098 = vunpack.c.l.b16 %v118
    %v1099 = vunpack.c.l.b16 %v119
    %v1100 = vunpack.c.l.b16 %v120
    %v1101 = vunpack.c.l.b16 %v121
    %v1102 = vunpack.c.l.b16 %v122
    %v1103 = vunpack.c.l.b16 %v123
    %v1104 = vunpack.c.l.b16 %v124
    %v1105 = vunpack.c.l.b16 %v125
    %v1106 = vunpack.c.l.b16 %v126
    %v1107 = vunpack.c.l.b16 %v127
    %v1108 = vunpack.c.l.b16 %v128
    %v1109 = vunpack.c.l.b16 %v129
    %v1110 = vunpack.c.l.b16 %v130
    %v1111 = vunpack.c.l.b16 %v131
    %v1112 = vunpack.c.l.b16 %v132
    %v1113 = vunpack.c.l.b16 %v133
    %v1114 = vunpack.c.l.b16 %v134
    %v1115 = vunpack.c.l.b16 %v135
    %v1116 = vunpack.c.l.b16 %v136
    %v1117 = vunpack.c.l.b16 %v137
    %v1118 = vunpack.c.l.b16 %v138
    %v1119 = vunpack.c.l.b16 %v139
    %v1120 = vunpack.c.l.b16 %v140
    %v1121 = vunpack.c.l.b16 %v141
    %v1122 = vunpack.c.l.b16 %v142
    %v1123 = vunpack.c.l.b16 %v143
    %v1124 = vunpack.c.l.b16 %v144
    %v1125 = vunpack.c.l.b16 %v145
    %v1126 = vunpack.c.l.b16 %v146
    %v1127 = vunpack.c.l.b16 %v147
    %v1128 = vunpack.c.l.b16 %v148
    %v1129 = vunpack.c.l.b16 %v149
    %v1130 = vunpack.c.l.b16 %v150
    %v1131 = vunpack.c.l.b16 %v151
    %v1132 = vunpack.c.l.b16 %v152
    %v1133 = vunpack.c.l.b16 %v153
    %v1134 = vunpack.c.l.b16 %v154
    %v1135 = vunpack.c.l.b16 %v155
    %v1136 = vunpack.c.l.b16 %v156
    %v1137 = vunpack.c.l.b16 %v157
    %v1138 = vunpack.c.l.b16 %v158
    %v1139 = vunpack.c.l.b16 %v159
    %v1140 = vunpack.c.l.b16 %v160
    %v1141 = vunpack.c.l.b16 %v161
    %v1142 = vunpack.c.l.b16 %v162
    %v1143 = vunpack.c.l.b16 %v163
    %v1144 = vunpack.c.l.b16 %v164
    %v1145 = vunpack.c.l.b16 %v165
    %v1146 = vunpack.c.l.b16 %v166
    %v1147 = vunpack.c.l.b16 %v167
    %v1148 = vunpack.c.l.b16 %v168
    %v1149 = vunpack.c.l.b16 %v169
    %v1150 = vunpack.c.l.b16 %v170
    %v1151 = vunpack.c.l.b16 %v171
    %v1152 = vunpack.c.l.b16 %v172
    %v1153 = vunpack.c.l.b16 %v173
    %v1154 = vunpack.c.l.b16 %v174
    %v1155 = vunpack.c.l.b16 %v175
    %v1156 = vunpack.c.l.b16 %v176
    %v1157 = vunpack.c.l.b16 %v177
    %v1158 = vunpack.c.l.b16 %v178
    %v1159 = vunpack.c.l.b16 %v179
    %v1160 = vunpack.c.l.b16 %v180
    %v1161 = vunpack.c.l.b16 %v181
    %v1162 = vunpack.c.l.b16 %v182
    %v1163 = vunpack.c.l.b16 %v183
    %v1164 = vunpack.c.l.b16 %v184
    %v1165 = vunpack.c.l.b16 %v185
    %v1166 = vunpack.c.l.b16 %v186
    %v1167 = vunpack.c.l.b16 %v187
    %v1168 = vunpack.c.l.b16 %v188
    %v1169 = vunpack.c.l.b16 %v189
    %v1170 = vunpack.c.l.b16 %v190
    %v1171 = vunpack.c.l.b16 %v191
    %v1172 = vunpack.c.l.b16 %v192
    %v1173 = vunpack.c.l.b16 %v193
    %v1174 = vunpack.c.l.b16 %v194
    %v1175 = vunpack.c.l.b16 %v195
    %v1176 = vunpack.c.l.b16 %v196
    %v1177 = vunpack.c.l.b16 %v197
    %v1178 = vunpack.c.l.b16 %v198
    %v1179 = vunpack.c.l.b16 %v199
    %v1180 = vunpack.c.l.b16 %v200
    %v1181 = vunpack.c.l.b16 %v201
    %v1182 = vunpack.c.l.b16 %v202
    %v1183 = vunpack.c.l.b16 %v203
    %v1184 = vunpack.c.l.b16 %v204
    %v1185 = vunpack.c.l.b16 %v205
    %v1186 = vunpack.c.l.b16 %v206
    %v1187 = vunpack.c.l.b16 %v207
    %v1188 = vunpack.c.l.b16 %v208
    %v1189 = vunpack.c.l.b16 %v209
    %v1190 = vunpack.c.l.b16 %v210
    %v1191 = vunpack.c.l.b16 %v211
    %v1192 = vunpack.c.l.b16 %v212
    %v1193 = vunpack.c.l.b16 %v213
    %v1194 = vunpack.c.l.b16 %v214
    %v1195 = vunpack.c.l.b16 %v215
    %v1196 = vunpack.c.l.b16 %v216
    %v1197 = vunpack.c.l.b16 %v217
    %v1198 = vunpack.c.l.b16 %v218
    %v1199 = vunpack.c.l.b16 %v219
    %v1200 = vunpack.c.l.b16 %v220
    %v1201 = vunpack.c.l.b16 %v221
    %v1202 = vunpack.c.l.b16 %v222
    %v1203 = vunpack.c.l.b16 %v223
    %v1204 = vunpack.c.l.b16 %v224
    %v1205 = vunpack.c.l.b16 %v225
    %v1206 = vunpack.c.l.b16 %v226
    %v1207 = vunpack.c.l.b16 %v227
    %v1208 = vunpack.c.l.b16 %v228
    %v1209 = vunpack.c.l.b16 %v229
    %v1210 = vunpack.c.l.b16 %v230
    %v1211 = vunpack.c.l.b16 %v231
    %v1212 = vunpack.c.l.b16 %v232
    %v1213 = vunpack.c.l.b16 %v233
    %v1214 = vunpack.c.l.b16 %v234
    %v1215 = vunpack.c.l.b16 %v235
    %v1216 = vunpack.c.l.b16 %v236
    %v1217 = vunpack.c.l.b16 %v237
    %v1218 = vunpack.c.l.b16 %v238
    %v1219 = vunpack.c.l.b16 %v239
    %v1220 = vunpack.c.l.b16 %v240
    %v1221 = vunpack.c.l.b16 %v241
    %v1222 = vunpack.c.l.b16 %v242
    %v1223 = vunpack.c.l.b16 %v243
    %v1224 = vunpack.c.l.b16 %v244
    %v1225 = vunpack.c.l.b16 %v245
    %v1226 = vunpack.c.l.b16 %v246
    %v1227 = vunpack.c.l.b16 %v247
    %v1228 = vunpack.c.l.b16 %v248
    %v1229 = vunpack.c.l.b16 %v249
    %v1230 = vunpack.c.l.b16 %v250
    %v1231 = vunpack.c.l.b16 %v251
    %v1232 = vunpack.c.l.b16 %v252
    %v1233 = vunpack.c.l.b16 %v253
    %v1234 = vunpack.c.l.b16 %v254
    %v1235 = vunpack.c.l.b16 %v255
    %v1236 = vunpack.c.l.b16 %v256
    %v1237 = vunpack.c.l.b16 %v257
    %v1238 = vunpack.c.l.b16 %v258
    %v1239 = vunpack.c.l.b16 %v259
    %v1240 = vunpack.c.l.b16 %v260
    %v1241 = vunpack.c.l.b16 %v261
    %v1242 = vunpack.c.l.b16 %v262
    %v1243 = vunpack.c.l.b16 %v263
    %v1244 = vunpack.c.l.b16 %v264
    %v1245 = vunpack.c.l.b16 %v265
    %v1246 = vunpack.c.l.b16 %v266
    %v1247 = vunpack.c.l.b16 %v267
    %v1248 = vunpack.c.l.b16 %v268
    %v1249 = vunpack.c.l.b16 %v269
    %v1250 = vunpack.c.l.b16 %v270
    %v1251 = vunpack.c.l.b16 %v271
    %v1252 = vunpack.c.l.b16 %v272
    %v1253 = vunpack.c.l.b16 %v273
    %v1254 = vunpack.c.l.b16 %v274
    %v1255 = vunpack.c.l.b16 %v275
    %v1256 = vunpack.c.l.b16 %v276
    %v1257 = vunpack.c.l.b16 %v277
    %v1258 = vunpack.c.l.b16 %v278
    %v1259 = vunpack.c.l.b16 %v279
    %v1260 = vunpack.c.l.b16 %v280
    %v1261 = vunpack.c.l.b16 %v281
    %v1262 = vunpack.c.l.b16 %v282
    %v1263 = vunpack.c.l.b16 %v283
    %v1264 = vunpack.c.l.b16 %v284
    %v1265 = vunpack.c.l.b16 %v285
    %v1266 = vunpack.c.l.b16 %v286
    %v1267 = vunpack.c.l.b16 %v287
    %v1268 = vunpack.c.l.b16 %v288
    %v1269 = vunpack.c.l.b16 %v289
    %v1270 = vunpack.c.l.b16 %v290
    %v1271 = vunpack.c.l.b16 %v291
    %v1272 = vunpack.c.l.b16 %v292
    %v1273 = vunpack.c.l.b16 %v293
    %v1274 = vunpack.c.l.b16 %v294
    %v1275 = vunpack.c.l.b16 %v295
    %v1276 = vunpack.c.l.b16 %v296
    %v1277 = vunpack.c.l.b16 %v297
    %v1278 = vunpack.c.l.b16 %v298
    %v1279 = vunpack.c.l.b16 %v299
    %v1280 = vunpack.c.l.b16 %v300
    %v1281 = vunpack.c.l.b16 %v301
    %v1282 = vunpack.c.l.b16 %v302
    %v1283 = vunpack.c.l.b16 %v303
    %v1284 = vunpack.c.l.b16 %v304
    %v1285 = vunpack.c.l.b16 %v305
    %v1286 = vunpack.c.l.b16 %v306
    %v1287 = vunpack.c.l.b16 %v307
    %v1288 = vunpack.c.l.b16 %v308
    %v1289 = vunpack.c.l.b16 %v309
    %v1290 = vunpack.c.l.b16 %v310
    %v1291 = vunpack.c.l.b16 %v311
    %v1292 = vunpack.c.l.b16 %v312
    %v1293 = vunpack.c.l.b16 %v313
    %v1294 = vunpack.c.l.b16 %v314
    %v1295 = vunpack.c.l.b16 %v315
    %v1296 = vunpack.c.l.b16 %v316
    %v1297 = vunpack.c.l.b16 %v317
    %v1298 = vunpack.c.l.b16 %v318
    %v1299 = vunpack.c.l.b16 %v319
    %v1300 = vunpack.c.l.b16 %v320
    %v1301 = vunpack.c.l.b16 %v321
    %v1302 = vunpack.c.l.b16 %v322
    %v1303 = vunpack.c.l.b16 %v323
    %v1304 = vunpack.c.l.b16 %v324
    %v1305 = vunpack.c.l.b16 %v325
    %v1306 = vunpack.c.l.b16 %v326
    %v1307 = vunpack.c.l.b16 %v327
    %v1308 = vunpack.c.l.b16 %v328
    %v1309 = vunpack.c.l.b16 %v329
    %v1310 = vunpack.c.l.b16 %v330
    %v1311 = vunpack.c.l.b16 %v331
    %v1312 = vunpack.c.l.b16 %v332
    %v1313 = vunpack.c.l.b16 %v333
    %v1314 = vunpack.c.l.b16 %v334
    %v1315 = vunpack.c.l.b16 %v335
    %v1316 = vunpack.c.l.b16 %v336
    %v1317 = vunpack.c.l.b16 %v337
    %v1318 = vunpack.c.l.b16 %v338
    %v1319 = vunpack.c.l.b16 %v339
    %v1320 = vunpack.c.l.b16 %v340
    %v1321 = vunpack.c.l.b16 %v341
    %v1322 = vunpack.c.l.b16 %v342
    %v1323 = vunpack.c.l.b16 %v343
    %v1324 = vunpack.c.l.b16 %v344
    %v1325 = vunpack.c.l.b16 %v345
    %v1326 = vunpack.c.l.b16 %v346
    %v1327 = vunpack.c.l.b16 %v347
    %v1328 = vunpack.c.l.b16 %v348
    %v1329 = vunpack.c.l.b16 %v349
    %v1330 = vunpack.c.l.b16 %v350
    %v1331 = vunpack.c.l.b16 %v351
    %v1332 = vunpack.c.l.b16 %v352
    %v1333 = vunpack.c.l.b16 %v353
    %v1334 = vunpack.c.l.b16 %v354
    %v1335 = vunpack.c.l.b16 %v355
    %v1336 = vunpack.c.l.b16 %v356
    %v1337 = vunpack.c.l.b16 %v357
    %v1338 = vunpack.c.l.b16 %v358
    %v1339 = vunpack.c.l.b16 %v359
    %v1340 = vunpack.c.l.b16 %v360
    %v1341 = vunpack.c.l.b16 %v361
    %v1342 = vunpack.c.l.b16 %v362
    %v1343 = vunpack.c.l.b16 %v363
    %v1344 = vunpack.c.l.b16 %v364
    %v1345 = vunpack.c.l.b16 %v365
    %v1346 = vunpack.c.l.b16 %v366
    %v1347 = vunpack.c.l.b16 %v367
    %v1348 = vunpack.c.l.b16 %v368
    %v1349 = vunpack.c.l.b16 %v369
    %v1350 = vunpack.c.l.b16 %v370
    %v1351 = vunpack.c.l.b16 %v371
    %v1352 = vunpack.c.l.b16 %v372
    %v1353 = vunpack.c.l.b16 %v373
    %v1354 = vunpack.c.l.b16 %v374
    %v1355 = vunpack.c.l.b16 %v375
    %v1356 = vunpack.c.l.b16 %v376
    %v1357 = vunpack.c.l.b16 %v377
    %v1358 = vunpack.c.l.b16 %v378
    %v1359 = vunpack.c.l.b16 %v379
    %v1360 = vunpack.c.l.b16 %v380
    %v1361 = vunpack.c.l.b16 %v381
    %v1362 = vunpack.c.l.b16 %v382
    %v1363 = vunpack.c.l.b16 %v383
    %v1364 = vunpack.c.l.b16 %v384
    %v1365 = vunpack.c.l.b16 %v385
    %v1366 = vunpack.c.l.b16 %v386
    %v1367 = vunpack.c.l.b16 %v387
    %v1368 = vunpack.c.l.b16 %v388
    %v1369 = vunpack.c.l.b16 %v389
    %v1370 = vunpack.c.l.b16 %v390
    %v1371 = vunpack.c.l.b16 %v391
    %v1372 = vunpack.c.l.b16 %v392
    %v1373 = vunpack.c.l.b16 %v393
    %v1374 = vunpack.c.l.b16 %v394
    %v1375 = vunpack.c.l.b16 %v395
    %v1376 = vunpack.c.l.b16 %v396
    %v1377 = vunpack.c.l.b16 %v397
    %v1378 = vunpack.c.l.b16 %v398
    %v1379 = vunpack.c.l.b16 %v399
    %v1380 = vunpack.c.l.b16 %v400
    %v1381 = vunpack.c.l.b16 %v401
    %v1382 = vunpack.c.l.b16 %v402
    %v1383 = vunpack.c.l.b16 %v403
    %v1384 = vunpack.c.l.b16 %v404
    %v1385 = vunpack.c.l.b16 %v405
    %v1386 = vunpack.c.l.b16 %v406
    %v1387 = vunpack.c.l.b16 %v407
    %v1388 = vunpack.c.l.b16 %v408
    %v1389 = vunpack.c.l.b16 %v409
    %v1390 = vunpack.c.l.b16 %v410
    %v1391 = vunpack.c.l.b16 %v411
    %v1392 = vunpack.c.l.b16 %v412
    %v1393 = vunpack.c.l.b16 %v413
    %v1394 = vunpack.c.l.b16 %v414
    %v1395 = vunpack.c.l.b16 %v415
    %v1396 = vunpack.c.l.b16 %v416
    %v1397 = vunpack.c.l.b16 %v417
    %v1398 = vpack.c.b16 %v1007, %v1006
    %v1399 = vpack.c.b16 %v1009, %v1008
    %v1400 = vpack.c.b16 %v1011, %v1010
    %v1401 = vpack.c.b16 %v1013, %v1012
    %v1402 = vpack.c.b16 %v1015, %v1014
    %v1403 = vpack.c.b16 %v1017, %v1016
    %v1404 = vpack.c.b16 %v1019, %v1018
    %v1405 = vpack.c.b16 %v1021, %v1020
    %v1406 = vpack.c.b16 %v1023, %v1022
    %v1407 = vpack.c.b16 %v1025, %v1024
    %v1408 = vpack.c.b16 %v1027, %v1026
    %v1409 = vpack.c.b16 %v1029, %v1028
    %v1410 = vpack.c.b16 %v1031, %v1030
    %v1411 = vpack.c.b16 %v1033, %v1032
    %v1412 = vpack.c.b16 %v1035, %v1034
    %v1413 = vpack.c.b16 %v1037, %v1036
    %v1414 = vpack.c.b16 %v1039, %v1038
    %v1415 = vpack.c.b16 %v1041, %v1040
    %v1416 = vpack.c.b16 %v1043, %v1042
    %v1417 = vpack.c.b16 %v1045, %v1044
    %v1418 = vpack.c.b16 %v1047, %v1046
    %v1419 = vpack.c.b16 %v1049, %v1048
    %v1420 = vpack.c.b16 %v1051, %v1050
    %v1421 = vpack.c.b16 %v1053, %v1052
    %v1422 = vpack.c.b16 %v1055, %v1054
    %v1423 = vpack.c.b16 %v1057, %v1056
    %v1424 = vpack.c.b16 %v1059, %v1058
    %v1425 = vpack.c.b16 %v1061, %v1060
    %v1426 = vpack.c.b16 %v1063, %v1062
    %v1427 = vpack.c.b16 %v1065, %v1064
    %v1428 = vpack.c.b16 %v1067, %v1066
    %v1429 = vpack.c.b16 %v1069, %v1068
    %v1430 = vpack.c.b16 %v1071, %v1070
    %v1431 = vpack.c.b16 %v1073, %v1072
    %v1432 = vpack.c.b16 %v1075, %v1074
    %v1433 = vpack.c.b16 %v1077, %v1076
    %v1434 = vpack.c.b16 %v1079, %v1078
    %v1435 = vpack.c.b16 %v1081, %v1080
    %v1436 = vpack.c.b16 %v1083, %v1082
    %v1437 = vpack.c.b16 %v1085, %v1084
    %v1438 = vpack.c.b16 %v1087, %v1086
    %v1439 = vpack.c.b16 %v1089, %v1088
    %v1440 = vpack.c.b16 %v1091, %v1090
    %v1441 = vpack.c.b16 %v1093, %v1092
    %v1442 = vpack.c.b16 %v1095, %v1094
    %v1443 = vpack.c.b16 %v1097, %v1096
    %v1444 = vpack.c.b16 %v1099, %v1098
    %v1445 = vpack.c.b16 %v1101, %v1100
    %v1446 = vpack.c.b16 %v1103, %v1102
    %v1447 = vpack.c.b16 %v1105, %v1104
    %v1448 = vpack.c.b16 %v1107, %v1106
    %v1449 = vpack.c.b16 %v1109, %v1108
    %v1450 = vpack.c.b16 %v1111, %v1110
    %v1451 = vpack.c.b16 %v1113, %v1112
    %v1452 = vpack.c.b16 %v1115, %v1114
    %v1453 = vpack.c.b16 %v1117, %v1116
    %v1454 = vpack.c.b16 %v1119, %v1118
    %v1455 = vpack.c.b16 %v1121, %v1120
    %v1456 = vpack.c.b16 %v1123, %v1122
    %v1457 = vpack.c.b16 %v1125, %v1124
    %v1458 = vpack.c.b16 %v1127, %v1126
    %v1459 = vpack.c.b16 %v1129, %v1128
    %v1460 = vpack.c.b16 %v1131, %v1130
    %v1461 = vpack.c.b16 %v1133, %v1132
    %v1462 = vpack.c.b16 %v1135, %v1134
    %v1463 = vpack.c.b16 %v1137, %v1136
    %v1464 = vpack.c.b16 %v1139, %v1138
    %v1465 = vpack.c.b16 %v1141, %v1140
    %v1466 = vpack.c.b16 %v1143, %v1142
    %v1467 = vpack.c.b16 %v1145, %v1144
    %v1468 = vpack.c.b16 %v1147, %v1146
    %v1469 = vpack.c.b16 %v1149, %v1148
    %v1470 = vpack.c.b16 %v1151, %v1150
    %v1471 = vpack.c.b16 %v1153, %v1152
    %v1472 = vpack.c.b16 %v1155, %v1154
    %v1473 = vpack.c.b16 %v1157, %v1156
    %v1474 = vpack.c.b16 %v1159, %v1158
    %v1475 = vpack.c.b16 %v1161, %v1160
    %v1476 = vpack.c.b16 %v1163, %v1162
    %v1477 = vpack.c.b16 %v1165, %v1164
    %v1478 = vpack.c.b16 %v1167, %v1166
    %v1479 = vpack.c.b16 %v1169, %v1168
    %v1480 = vpack.c.b16 %v1171, %v1170
    %v1481 = vpack.c.b16 %v1173, %v1172
    %v1482 = vpack.c.b16 %v1175, %v1174
    %v1483 = vpack.c.b16 %v1177, %v1176
    %v1484 = vpack.c.b16 %v1179, %v1178
    %v1485 = vpack.c.b16 %v1181, %v1180
    %v1486 = vpack.c.b16 %v1183, %v1182
    %v1487 = vpack.c.b16 %v1185, %v1184
    %v1488 = vpack.c.b16 %v1187, %v1186
    %v1489 = vpack.c.b16 %v1189, %v1188
    %v1490 = vpack.c.b16 %v1191, %v1190
    %v1491 = vpack.c.b16 %v1193, %v1192
    %v1492 = vpack.c.b16 %v1195, %v1194
    %v1493 = vpack.c.b16 %v1197, %v1196
    %v1494 = vpack.c.b16 %v1199, %v1198
    %v1495 = vpack.c.b16 %v1201, %v1200
    %v1496 = vpack.c.b16 %v1203, %v1202
    %v1497 = vpack.c.b16 %v1205, %v1204
    %v1498 = vpack.c.b16 %v1207, %v1206
    %v1499 = vpack.c.b16 %v1209, %v1208
    %v1500 = vpack.c.b16 %v1211, %v1210
    %v1501 = vpack.c.b16 %v1213, %v1212
    %v1502 = vpack.c.b16 %v1215, %v1214
    %v1503 = vpack.c.b16 %v1217, %v1216
    %v1504 = vpack.c.b16 %v1219, %v1218
    %v1505 = vpack.c.b16 %v1221, %v1220
    %v1506 = vpack.c.b16 %v1223, %v1222
    %v1507 = vpack.c.b16 %v1225, %v1224
    %v1508 = vpack.c.b16 %v1227, %v1226
    %v1509 = vpack.c.b16 %v1229, %v1228
    %v1510 = vpack.c.b16 %v1231, %v1230
    %v1511 = vpack.c.b16 %v1233, %v1232
    %v1512 = vpack.c.b16 %v1235, %v1234
    %v1513 = vpack.c.b16 %v1237, %v1236
    %v1514 = vpack.c.b16 %v1239, %v1238
    %v1515 = vpack.c.b16 %v1241, %v1240
    %v1516 = vpack.c.b16 %v1243, %v1242
    %v1517 = vpack.c.b16 %v1245, %v1244
    %v1518 = vpack.c.b16 %v1247, %v1246
    %v1519 = vpack.c.b16 %v1249, %v1248
    %v1520 = vpack.c.b16 %v1251, %v1250
    %v1521 = vpack.c.b16 %v1253, %v1252
    %v1522 = vpack.c.b16 %v1255, %v1254
    %v1523 = vpack.c.b16 %v1257, %v1256
    %v1524 = vpack.c.b16 %v1259, %v1258
    %v1525 = vpack.c.b16 %v1261, %v1260
    %v1526 = vpack.c.b16 %v1263, %v1262
    %v1527 = vpack.c.b16 %v1265, %v1264
    %v1528 = vpack.c.b16 %v1267, %v1266
    %v1529 = vpack.c.b16 %v1269, %v1268
    %v1530 = vpack.c.b16 %v1271, %v1270
    %v1531 = vpack.c.b16 %v1273, %v1272
    %v1532 = vpack.c.b16 %v1275, %v1274
    %v1533 = vpack.c.b16 %v1277, %v1276
    %v1534 = vpack.c.b16 %v1279, %v1278
    %v1535 = vpack.c.b16 %v1281, %v1280
    %v1536 = vpack.c.b16 %v1283, %v1282
    %v1537 = vpack.c.b16 %v1285, %v1284
    %v1538 = vpack.c.b16 %v1287, %v1286
    %v1539 = vpack.c.b16 %v1289, %v1288
    %v1540 = vpack.c.b16 %v1291, %v1290
    %v1541 = vpack.c.b16 %v1293, %v1292
    %v1542 = vpack.c.b16 %v1295, %v1294
    %v1543 = vpack.c.b16 %v1297, %v1296
    %v1544 = vpack.c.b16 %v1299, %v1298
    %v1545 = vpack.c.b16 %v1301, %v1300
    %v1546 = vpack.c.b16 %v1303, %v1302
    %v1547 = vpack.c.b16 %v1305, %v1304
    %v1548 = vpack.c.b16 %v1307, %v1306
    %v1549 = vpack.c.b16 %v1309, %v1308
    %v1550 = vpack.c.b16 %v1311, %v1310
    %v1551 = vpack.c.b16 %v1313, %v1312
    %v1552 = vpack.c.b16 %v1315, %v1314
    %v1553 = vpack.c.b16 %v1317, %v1316
    %v1554 = vpack.c.b16 %v1319, %v1318
    %v1555 = vpack.c.b16 %v1321, %v1320
    %v1556 = vpack.c.b16 %v1323, %v1322
    %v1557 = vpack.c.b16 %v1325, %v1324
    %v1558 = vpack.c.b16 %v1327, %v1326
    %v1559 = vpack.c.b16 %v1329, %v1328
    %v1560 = vpack.c.b16 %v1331, %v1330
    %v1561 = vpack.c.b16 %v1333, %v1332
    %v1562 = vpack.c.b16 %v1335, %v1334
    %v1563 = vpack.c.b16 %v1337, %v1336
    %v1564 = vpack.c.b16 %v1339, %v1338
    %v1565 = vpack.c.b16 %v1341, %v1340
    %v1566 = vpack.c.b16 %v1343, %v1342
    %v1567 = vpack.c.b16 %v1345, %v1344
    %v1568 = vpack.c.b16 %v1347, %v1346
    %v1569 = vpack.c.b16 %v1349, %v1348
    %v1570 = vpack.c.b16 %v1351, %v1350
    %v1571 = vpack.c.b16 %v1353, %v1352
    %v1572 = vpack.c.b16 %v1355, %v1354
    %v1573 = vpack.c.b16 %v1357, %v1356
    %v1574 = vpack.c.b16 %v1359, %v1358
    %v1575 = vpack.c.b16 %v1361, %v1360
    %v1576 = vpack.c.b16 %v1363, %v1362
    %v1577 = vpack.c.b16 %v1365, %v1364
    %v1578 = vpack.c.b16 %v1367, %v1366
    %v1579 = vpack.c.b16 %v1369, %v1368
    %v1580 = vpack.c.b16 %v1371, %v1370
    %v1581 = vpack.c.b16 %v1373, %v1372
    %v1582 = vpack.c.b16 %v1375, %v1374
    %v1583 = vpack.c.b16 %v1377, %v1376
    %v1584 = vpack.c.b16 %v1379, %v1378
    %v1585 = vpack.c.b16 %v1381, %v1380
    %v1586 = vpack.c.b16 %v1383, %v1382
    %v1587 = vpack.c.b16 %v1385, %v1384
    %v1588 = vpack.c.b16 %v1387, %v1386
    %v1589 = vpack.c.b16 %v1389, %v1388
    %v1590 = vpack.c.b16 %v1391, %v1390
    %v1591 = vpack.c.b16 %v1393, %v1392
    %v1592 = vpack.c.b16 %v1395, %v1394
    %v1593 = vpack.c.b16 %v1397, %v1396
    %vm1790 = vcmask 523264
    %v1792 = vsel %vm1790, %v589, 0
    %1794 = vmatprep.subr.bf16.mxu0 0
    %1795 = vmatpush1.bf16.msra.mxu0 %v1405
    %1796 = vmatprep.subr.bf16.mxu0 0
    %1797 = vmatpush1.bf16.msra.mxu0 %v1404
    %1798 = vmatprep.subr.bf16.mxu0 0
    %1799 = vmatpush1.bf16.msra.mxu0 %v1403
    %1800 = vmatprep.subr.bf16.mxu0 0
    %1801 = vmatpush1.bf16.msra.mxu0 %v1402
    %1802 = vmatprep.subr.bf16.mxu0 0
    %1803 = vmatpush1.bf16.msra.mxu0 %v1401
    %1804 = vmatprep.subr.bf16.mxu0 0
    %1805 = vmatpush1.bf16.msra.mxu0 %v1400
    %1806 = vmatprep.subr.bf16.mxu0 0
    %1807 = vmatpush1.bf16.msra.mxu0 %v1399
    %1808 = vmatprep.subr.bf16.mxu0 0
    %1809 = vmatpush1.bf16.msra.mxu0 %v1398
    %1810 = vmatprep.subr.bf16.mxu0 0
    %1811 = vmatpush2.bf16.msra.mxu0 %v1413
    %1812 = vmatprep.subr.bf16.mxu0 0
    %1813 = vmatpush2.bf16.msra.mxu0 %v1412
    %1814 = vmatprep.subr.bf16.mxu0 0
    %1815 = vmatpush2.bf16.msra.mxu0 %v1411
    %1816 = vmatprep.subr.bf16.mxu0 0
    %1817 = vmatpush2.bf16.msra.mxu0 %v1410
    %1818 = vmatprep.subr.bf16.mxu0 0
    %1819 = vmatpush2.bf16.msra.mxu0 %v1409
    %1820 = vmatprep.subr.bf16.mxu0 0
    %1821 = vmatpush2.bf16.msra.mxu0 %v1408
    %1822 = vmatprep.subr.bf16.mxu0 0
    %1823 = vmatpush2.bf16.msra.mxu0 %v1407
    %1824 = vmatprep.subr.bf16.mxu0 0
    %1825 = vmatpush2.bf16.msra.mxu0 %v1406
    %1826 = vmatprep.mubr.bf16.mxu0 %v466
    %1827 = vmatmul.mubr.bf16.gmra.mxu0 %v452
    %v1828 = vpop.f32.mrf.mxu0
    %v1829 = vadd.f32 %v423, %v1828
    %v1830 = vpop.f32.mrf.mxu0
    %v1831 = vpop.f32.mrf.mxu0
    %v1832 = vpop.f32.mrf.mxu0
    %1833 = vdwg.mxu0
    %1834 = vmatprep.subr.bf16.mxu0 0
    %1835 = vmatpush1.bf16.msra.mxu0 %v1421
    %1836 = vmatprep.subr.bf16.mxu0 0
    %1837 = vmatpush1.bf16.msra.mxu0 %v1420
    %1838 = vmatprep.subr.bf16.mxu0 0
    %1839 = vmatpush1.bf16.msra.mxu0 %v1419
    %1840 = vmatprep.subr.bf16.mxu0 0
    %1841 = vmatpush1.bf16.msra.mxu0 %v1418
    %1842 = vmatprep.subr.bf16.mxu0 0
    %1843 = vmatpush1.bf16.msra.mxu0 %v1417
    %1844 = vmatprep.subr.bf16.mxu0 0
    %1845 = vmatpush1.bf16.msra.mxu0 %v1416
    %1846 = vmatprep.subr.bf16.mxu0 0
    %1847 = vmatpush1.bf16.msra.mxu0 %v1415
    %1848 = vmatprep.subr.bf16.mxu0 0
    %1849 = vmatpush1.bf16.msra.mxu0 %v1414
    %1850 = vmatprep.subr.bf16.mxu0 0
    %1851 = vmatpush2.bf16.msra.mxu0 %v1429
    %1852 = vmatprep.subr.bf16.mxu0 0
    %1853 = vmatpush2.bf16.msra.mxu0 %v1428
    %1854 = vmatprep.subr.bf16.mxu0 0
    %1855 = vmatpush2.bf16.msra.mxu0 %v1427
    %1856 = vmatprep.subr.bf16.mxu0 0
    %1857 = vmatpush2.bf16.msra.mxu0 %v1426
    %1858 = vmatprep.subr.bf16.mxu0 0
    %1859 = vmatpush2.bf16.msra.mxu0 %v1425
    %1860 = vmatprep.subr.bf16.mxu0 0
    %1861 = vmatpush2.bf16.msra.mxu0 %v1424
    %1862 = vmatprep.subr.bf16.mxu0 0
    %1863 = vmatpush2.bf16.msra.mxu0 %v1423
    %1864 = vmatprep.subr.bf16.mxu0 0
    %1865 = vmatpush2.bf16.msra.mxu0 %v1422
    %1866 = vmatprep.mubr.bf16.mxu0 %v476
    %1867 = vmatmul.mubr.bf16.gmra.mxu0 %v474
    %v1868 = vpop.f32.mrf.mxu0
    %v1869 = vadd.f32 %v1829, %v1868
    %v1870 = vpop.f32.mrf.mxu0
    %v1871 = vpop.f32.mrf.mxu0
    %v1872 = vpop.f32.mrf.mxu0
    %1873 = vdwg.mxu0
    %1874 = vmatprep.subr.bf16.mxu0 0
    %1875 = vmatpush1.bf16.msra.mxu0 %v1437
    %1876 = vmatprep.subr.bf16.mxu0 0
    %1877 = vmatpush1.bf16.msra.mxu0 %v1436
    %1878 = vmatprep.subr.bf16.mxu0 0
    %1879 = vmatpush1.bf16.msra.mxu0 %v1435
    %1880 = vmatprep.subr.bf16.mxu0 0
    %1881 = vmatpush1.bf16.msra.mxu0 %v1434
    %1882 = vmatprep.subr.bf16.mxu0 0
    %1883 = vmatpush1.bf16.msra.mxu0 %v1433
    %1884 = vmatprep.subr.bf16.mxu0 0
    %1885 = vmatpush1.bf16.msra.mxu0 %v1432
    %1886 = vmatprep.subr.bf16.mxu0 0
    %1887 = vmatpush1.bf16.msra.mxu0 %v1431
    %1888 = vmatprep.subr.bf16.mxu0 0
    %1889 = vmatpush1.bf16.msra.mxu0 %v1430
    %1890 = vmatprep.subr.bf16.mxu0 0
    %1891 = vmatpush2.bf16.msra.mxu0 %v1445
    %1892 = vmatprep.subr.bf16.mxu0 0
    %1893 = vmatpush2.bf16.msra.mxu0 %v1444
    %1894 = vmatprep.subr.bf16.mxu0 0
    %1895 = vmatpush2.bf16.msra.mxu0 %v1443
    %1896 = vmatprep.subr.bf16.mxu0 0
    %1897 = vmatpush2.bf16.msra.mxu0 %v1442
    %1898 = vmatprep.subr.bf16.mxu0 0
    %1899 = vmatpush2.bf16.msra.mxu0 %v1441
    %1900 = vmatprep.subr.bf16.mxu0 0
    %1901 = vmatpush2.bf16.msra.mxu0 %v1440
    %1902 = vmatprep.subr.bf16.mxu0 0
    %1903 = vmatpush2.bf16.msra.mxu0 %v1439
    %1904 = vmatprep.subr.bf16.mxu0 0
    %1905 = vmatpush2.bf16.msra.mxu0 %v1438
    %1906 = vmatprep.mubr.bf16.mxu0 %v473
    %1907 = vmatmul.mubr.bf16.gmra.mxu0 %v459
    %v1908 = vpop.f32.mrf.mxu0
    %v1909 = vadd.f32 %v1869, %v1908
    %v1910 = vpop.f32.mrf.mxu0
    %v1911 = vpop.f32.mrf.mxu0
    %v1912 = vpop.f32.mrf.mxu0
    %1913 = vdwg.mxu0
    %1914 = vmatprep.subr.bf16.mxu0 0
    %1915 = vmatpush1.bf16.msra.mxu0 %v1453
    %1916 = vmatprep.subr.bf16.mxu0 0
    %1917 = vmatpush1.bf16.msra.mxu0 %v1452
    %1918 = vmatprep.subr.bf16.mxu0 0
    %1919 = vmatpush1.bf16.msra.mxu0 %v1451
    %1920 = vmatprep.subr.bf16.mxu0 0
    %1921 = vmatpush1.bf16.msra.mxu0 %v1450
    %1922 = vmatprep.subr.bf16.mxu0 0
    %1923 = vmatpush1.bf16.msra.mxu0 %v1449
    %1924 = vmatprep.subr.bf16.mxu0 0
    %1925 = vmatpush1.bf16.msra.mxu0 %v1448
    %1926 = vmatprep.subr.bf16.mxu0 0
    %1927 = vmatpush1.bf16.msra.mxu0 %v1447
    %1928 = vmatprep.subr.bf16.mxu0 0
    %1929 = vmatpush1.bf16.msra.mxu0 %v1446
    %1930 = vmatprep.subr.bf16.mxu0 0
    %1931 = vmatpush2.bf16.msra.mxu0 %v1461
    %1932 = vmatprep.subr.bf16.mxu0 0
    %1933 = vmatpush2.bf16.msra.mxu0 %v1460
    %1934 = vmatprep.subr.bf16.mxu0 0
    %1935 = vmatpush2.bf16.msra.mxu0 %v1459
    %1936 = vmatprep.subr.bf16.mxu0 0
    %1937 = vmatpush2.bf16.msra.mxu0 %v1458
    %1938 = vmatprep.subr.bf16.mxu0 0
    %1939 = vmatpush2.bf16.msra.mxu0 %v1457
    %1940 = vmatprep.subr.bf16.mxu0 0
    %1941 = vmatpush2.bf16.msra.mxu0 %v1456
    %1942 = vmatprep.subr.bf16.mxu0 0
    %1943 = vmatpush2.bf16.msra.mxu0 %v1455
    %1944 = vmatprep.subr.bf16.mxu0 0
    %1945 = vmatpush2.bf16.msra.mxu0 %v1454
    %1946 = vmatprep.mubr.bf16.mxu0 %v477
    %1947 = vmatmul.mubr.bf16.gmra.mxu0 %v475
    %v1948 = vpop.f32.mrf.mxu0
    %v1949 = vadd.f32 %v1909, %v1948
    %v1950 = vpop.f32.mrf.mxu0
    %v1951 = vpop.f32.mrf.mxu0
    %v1952 = vpop.f32.mrf.mxu0
    %1953 = vdwg.mxu0
    %1954 = vmatprep.subr.bf16.mxu0 0
    %1955 = vmatpush1.bf16.msra.mxu0 %v1469
    %1956 = vmatprep.subr.bf16.mxu0 0
    %1957 = vmatpush1.bf16.msra.mxu0 %v1468
    %1958 = vmatprep.subr.bf16.mxu0 0
    %1959 = vmatpush1.bf16.msra.mxu0 %v1467
    %1960 = vmatprep.subr.bf16.mxu0 0
    %1961 = vmatpush1.bf16.msra.mxu0 %v1466
    %1962 = vmatprep.subr.bf16.mxu0 0
    %1963 = vmatpush1.bf16.msra.mxu0 %v1465
    %1964 = vmatprep.subr.bf16.mxu0 0
    %1965 = vmatpush1.bf16.msra.mxu0 %v1464
    %1966 = vmatprep.subr.bf16.mxu0 0
    %1967 = vmatpush1.bf16.msra.mxu0 %v1463
    %1968 = vmatprep.subr.bf16.mxu0 0
    %1969 = vmatpush1.bf16.msra.mxu0 %v1462
    %1970 = vmatprep.subr.bf16.mxu0 0
    %1971 = vmatpush2.bf16.msra.mxu0 %v1477
    %1972 = vmatprep.subr.bf16.mxu0 0
    %1973 = vmatpush2.bf16.msra.mxu0 %v1476
    %1974 = vmatprep.subr.bf16.mxu0 0
    %1975 = vmatpush2.bf16.msra.mxu0 %v1475
    %1976 = vmatprep.subr.bf16.mxu0 0
    %1977 = vmatpush2.bf16.msra.mxu0 %v1474
    %1978 = vmatprep.subr.bf16.mxu0 0
    %1979 = vmatpush2.bf16.msra.mxu0 %v1473
    %1980 = vmatprep.subr.bf16.mxu0 0
    %1981 = vmatpush2.bf16.msra.mxu0 %v1472
    %1982 = vmatprep.subr.bf16.mxu0 0
    %1983 = vmatpush2.bf16.msra.mxu0 %v1471
    %1984 = vmatprep.subr.bf16.mxu0 0
    %1985 = vmatpush2.bf16.msra.mxu0 %v1470
    %1986 = vmatprep.mubr.bf16.mxu0 %v515
    %1987 = vmatmul.mubr.bf16.gmra.mxu0 %v501
    %v1988 = vpop.f32.mrf.mxu0
    %v1989 = vadd.f32 %v1949, %v1988
    %v1990 = vpop.f32.mrf.mxu0
    %v1991 = vpop.f32.mrf.mxu0
    %v1992 = vpop.f32.mrf.mxu0
    %1993 = vdwg.mxu0
    %1994 = vmatprep.subr.bf16.mxu0 0
    %1995 = vmatpush1.bf16.msra.mxu0 %v1485
    %1996 = vmatprep.subr.bf16.mxu0 0
    %1997 = vmatpush1.bf16.msra.mxu0 %v1484
    %1998 = vmatprep.subr.bf16.mxu0 0
    %1999 = vmatpush1.bf16.msra.mxu0 %v1483
    %2000 = vmatprep.subr.bf16.mxu0 0
    %2001 = vmatpush1.bf16.msra.mxu0 %v1482
    %2002 = vmatprep.subr.bf16.mxu0 0
    %2003 = vmatpush1.bf16.msra.mxu0 %v1481
    %2004 = vmatprep.subr.bf16.mxu0 0
    %2005 = vmatpush1.bf16.msra.mxu0 %v1480
    %2006 = vmatprep.subr.bf16.mxu0 0
    %2007 = vmatpush1.bf16.msra.mxu0 %v1479
    %2008 = vmatprep.subr.bf16.mxu0 0
    %2009 = vmatpush1.bf16.msra.mxu0 %v1478
    %2010 = vmatprep.subr.bf16.mxu0 0
    %2011 = vmatpush2.bf16.msra.mxu0 %v1493
    %2012 = vmatprep.subr.bf16.mxu0 0
    %2013 = vmatpush2.bf16.msra.mxu0 %v1492
    %2014 = vmatprep.subr.bf16.mxu0 0
    %2015 = vmatpush2.bf16.msra.mxu0 %v1491
    %2016 = vmatprep.subr.bf16.mxu0 0
    %2017 = vmatpush2.bf16.msra.mxu0 %v1490
    %2018 = vmatprep.subr.bf16.mxu0 0
    %2019 = vmatpush2.bf16.msra.mxu0 %v1489
    %2020 = vmatprep.subr.bf16.mxu0 0
    %2021 = vmatpush2.bf16.msra.mxu0 %v1488
    %2022 = vmatprep.subr.bf16.mxu0 0
    %2023 = vmatpush2.bf16.msra.mxu0 %v1487
    %2024 = vmatprep.subr.bf16.mxu0 0
    %2025 = vmatpush2.bf16.msra.mxu0 %v1486
    %2026 = vmatprep.mubr.bf16.mxu0 %v525
    %2027 = vmatmul.mubr.bf16.gmra.mxu0 %v523
    %v2028 = vpop.f32.mrf.mxu0
    %v2029 = vadd.f32 %v1989, %v2028
    %v2030 = vpop.f32.mrf.mxu0
    %v2031 = vpop.f32.mrf.mxu0
    %v2032 = vpop.f32.mrf.mxu0
    %2033 = vdwg.mxu0
    %2034 = vmatprep.subr.bf16.mxu0 0
    %2035 = vmatpush1.bf16.msra.mxu0 %v1501
    %2036 = vmatprep.subr.bf16.mxu0 0
    %2037 = vmatpush1.bf16.msra.mxu0 %v1500
    %2038 = vmatprep.subr.bf16.mxu0 0
    %2039 = vmatpush1.bf16.msra.mxu0 %v1499
    %2040 = vmatprep.subr.bf16.mxu0 0
    %2041 = vmatpush1.bf16.msra.mxu0 %v1498
    %2042 = vmatprep.subr.bf16.mxu0 0
    %2043 = vmatpush1.bf16.msra.mxu0 %v1497
    %2044 = vmatprep.subr.bf16.mxu0 0
    %2045 = vmatpush1.bf16.msra.mxu0 %v1496
    %2046 = vmatprep.subr.bf16.mxu0 0
    %2047 = vmatpush1.bf16.msra.mxu0 %v1495
    %2048 = vmatprep.subr.bf16.mxu0 0
    %2049 = vmatpush1.bf16.msra.mxu0 %v1494
    %2050 = vmatprep.subr.bf16.mxu0 0
    %2051 = vmatpush2.bf16.msra.mxu0 %v1509
    %2052 = vmatprep.subr.bf16.mxu0 0
    %2053 = vmatpush2.bf16.msra.mxu0 %v1508
    %2054 = vmatprep.subr.bf16.mxu0 0
    %2055 = vmatpush2.bf16.msra.mxu0 %v1507
    %2056 = vmatprep.subr.bf16.mxu0 0
    %2057 = vmatpush2.bf16.msra.mxu0 %v1506
    %2058 = vmatprep.subr.bf16.mxu0 0
    %2059 = vmatpush2.bf16.msra.mxu0 %v1505
    %2060 = vmatprep.subr.bf16.mxu0 0
    %2061 = vmatpush2.bf16.msra.mxu0 %v1504
    %2062 = vmatprep.subr.bf16.mxu0 0
    %2063 = vmatpush2.bf16.msra.mxu0 %v1503
    %2064 = vmatprep.subr.bf16.mxu0 0
    %2065 = vmatpush2.bf16.msra.mxu0 %v1502
    %2066 = vmatprep.mubr.bf16.mxu0 %v522
    %2067 = vmatmul.mubr.bf16.gmra.mxu0 %v508
    %v2068 = vpop.f32.mrf.mxu0
    %v2069 = vadd.f32 %v2029, %v2068
    %v2070 = vpop.f32.mrf.mxu0
    %v2071 = vpop.f32.mrf.mxu0
    %v2072 = vpop.f32.mrf.mxu0
    %2073 = vdwg.mxu0
    %2074 = vmatprep.subr.bf16.mxu0 0
    %2075 = vmatpush1.bf16.msra.mxu0 %v1517
    %2076 = vmatprep.subr.bf16.mxu0 0
    %2077 = vmatpush1.bf16.msra.mxu0 %v1516
    %2078 = vmatprep.subr.bf16.mxu0 0
    %2079 = vmatpush1.bf16.msra.mxu0 %v1515
    %2080 = vmatprep.subr.bf16.mxu0 0
    %2081 = vmatpush1.bf16.msra.mxu0 %v1514
    %2082 = vmatprep.subr.bf16.mxu0 0
    %2083 = vmatpush1.bf16.msra.mxu0 %v1513
    %2084 = vmatprep.subr.bf16.mxu0 0
    %2085 = vmatpush1.bf16.msra.mxu0 %v1512
    %2086 = vmatprep.subr.bf16.mxu0 0
    %2087 = vmatpush1.bf16.msra.mxu0 %v1511
    %2088 = vmatprep.subr.bf16.mxu0 0
    %2089 = vmatpush1.bf16.msra.mxu0 %v1510
    %2090 = vmatprep.subr.bf16.mxu0 0
    %2091 = vmatpush2.bf16.msra.mxu0 %v1525
    %2092 = vmatprep.subr.bf16.mxu0 0
    %2093 = vmatpush2.bf16.msra.mxu0 %v1524
    %2094 = vmatprep.subr.bf16.mxu0 0
    %2095 = vmatpush2.bf16.msra.mxu0 %v1523
    %2096 = vmatprep.subr.bf16.mxu0 0
    %2097 = vmatpush2.bf16.msra.mxu0 %v1522
    %2098 = vmatprep.subr.bf16.mxu0 0
    %2099 = vmatpush2.bf16.msra.mxu0 %v1521
    %2100 = vmatprep.subr.bf16.mxu0 0
    %2101 = vmatpush2.bf16.msra.mxu0 %v1520
    %2102 = vmatprep.subr.bf16.mxu0 0
    %2103 = vmatpush2.bf16.msra.mxu0 %v1519
    %2104 = vmatprep.subr.bf16.mxu0 0
    %2105 = vmatpush2.bf16.msra.mxu0 %v1518
    %2106 = vmatprep.mubr.bf16.mxu0 %v526
    %2107 = vmatmul.mubr.bf16.gmra.mxu0 %v524
    %v2108 = vpop.f32.mrf.mxu0
    %v2109 = vadd.f32 %v2069, %v2108
    %v2110 = vpop.f32.mrf.mxu0
    %v2111 = vpop.f32.mrf.mxu0
    %v2112 = vpop.f32.mrf.mxu0
    %2113 = vdwg.mxu0
    %2114 = vmatprep.subr.bf16.mxu0 0
    %2115 = vmatpush1.bf16.msra.mxu0 %v1533
    %2116 = vmatprep.subr.bf16.mxu0 0
    %2117 = vmatpush1.bf16.msra.mxu0 %v1532
    %2118 = vmatprep.subr.bf16.mxu0 0
    %2119 = vmatpush1.bf16.msra.mxu0 %v1531
    %2120 = vmatprep.subr.bf16.mxu0 0
    %2121 = vmatpush1.bf16.msra.mxu0 %v1530
    %2122 = vmatprep.subr.bf16.mxu0 0
    %2123 = vmatpush1.bf16.msra.mxu0 %v1529
    %2124 = vmatprep.subr.bf16.mxu0 0
    %2125 = vmatpush1.bf16.msra.mxu0 %v1528
    %2126 = vmatprep.subr.bf16.mxu0 0
    %2127 = vmatpush1.bf16.msra.mxu0 %v1527
    %2128 = vmatprep.subr.bf16.mxu0 0
    %2129 = vmatpush1.bf16.msra.mxu0 %v1526
    %2130 = vmatprep.subr.bf16.mxu0 0
    %2131 = vmatpush2.bf16.msra.mxu0 %v1541
    %2132 = vmatprep.subr.bf16.mxu0 0
    %2133 = vmatpush2.bf16.msra.mxu0 %v1540
    %2134 = vmatprep.subr.bf16.mxu0 0
    %2135 = vmatpush2.bf16.msra.mxu0 %v1539
    %2136 = vmatprep.subr.bf16.mxu0 0
    %2137 = vmatpush2.bf16.msra.mxu0 %v1538
    %2138 = vmatprep.subr.bf16.mxu0 0
    %2139 = vmatpush2.bf16.msra.mxu0 %v1537
    %2140 = vmatprep.subr.bf16.mxu0 0
    %2141 = vmatpush2.bf16.msra.mxu0 %v1536
    %2142 = vmatprep.subr.bf16.mxu0 0
    %2143 = vmatpush2.bf16.msra.mxu0 %v1535
    %2144 = vmatprep.subr.bf16.mxu0 0
    %2145 = vmatpush2.bf16.msra.mxu0 %v1534
    %2146 = vmatprep.mubr.bf16.mxu0 %v564
    %2147 = vmatmul.mubr.bf16.gmra.mxu0 %v550
    %v2148 = vpop.f32.mrf.mxu0
    %v2149 = vadd.f32 %v2109, %v2148
    %v2150 = vpop.f32.mrf.mxu0
    %v2151 = vpop.f32.mrf.mxu0
    %v2152 = vpop.f32.mrf.mxu0
    %2153 = vdwg.mxu0
    %2154 = vmatprep.subr.bf16.mxu0 0
    %2155 = vmatpush1.bf16.msra.mxu0 %v1549
    %2156 = vmatprep.subr.bf16.mxu0 0
    %2157 = vmatpush1.bf16.msra.mxu0 %v1548
    %2158 = vmatprep.subr.bf16.mxu0 0
    %2159 = vmatpush1.bf16.msra.mxu0 %v1547
    %2160 = vmatprep.subr.bf16.mxu0 0
    %2161 = vmatpush1.bf16.msra.mxu0 %v1546
    %2162 = vmatprep.subr.bf16.mxu0 0
    %2163 = vmatpush1.bf16.msra.mxu0 %v1545
    %2164 = vmatprep.subr.bf16.mxu0 0
    %2165 = vmatpush1.bf16.msra.mxu0 %v1544
    %2166 = vmatprep.subr.bf16.mxu0 0
    %2167 = vmatpush1.bf16.msra.mxu0 %v1543
    %2168 = vmatprep.subr.bf16.mxu0 0
    %2169 = vmatpush1.bf16.msra.mxu0 %v1542
    %2170 = vmatprep.subr.bf16.mxu0 0
    %2171 = vmatpush2.bf16.msra.mxu0 %v1557
    %2172 = vmatprep.subr.bf16.mxu0 0
    %2173 = vmatpush2.bf16.msra.mxu0 %v1556
    %2174 = vmatprep.subr.bf16.mxu0 0
    %2175 = vmatpush2.bf16.msra.mxu0 %v1555
    %2176 = vmatprep.subr.bf16.mxu0 0
    %2177 = vmatpush2.bf16.msra.mxu0 %v1554
    %2178 = vmatprep.subr.bf16.mxu0 0
    %2179 = vmatpush2.bf16.msra.mxu0 %v1553
    %2180 = vmatprep.subr.bf16.mxu0 0
    %2181 = vmatpush2.bf16.msra.mxu0 %v1552
    %2182 = vmatprep.subr.bf16.mxu0 0
    %2183 = vmatpush2.bf16.msra.mxu0 %v1551
    %2184 = vmatprep.subr.bf16.mxu0 0
    %2185 = vmatpush2.bf16.msra.mxu0 %v1550
    %2186 = vmatprep.mubr.bf16.mxu0 %v574
    %2187 = vmatmul.mubr.bf16.gmra.mxu0 %v572
    %v2188 = vpop.f32.mrf.mxu0
    %v2189 = vadd.f32 %v2149, %v2188
    %v2190 = vpop.f32.mrf.mxu0
    %v2191 = vpop.f32.mrf.mxu0
    %v2192 = vpop.f32.mrf.mxu0
    %2193 = vdwg.mxu0
    %2194 = vmatprep.subr.bf16.mxu0 0
    %2195 = vmatpush1.bf16.msra.mxu0 %v1565
    %2196 = vmatprep.subr.bf16.mxu0 0
    %2197 = vmatpush1.bf16.msra.mxu0 %v1564
    %2198 = vmatprep.subr.bf16.mxu0 0
    %2199 = vmatpush1.bf16.msra.mxu0 %v1563
    %2200 = vmatprep.subr.bf16.mxu0 0
    %2201 = vmatpush1.bf16.msra.mxu0 %v1562
    %2202 = vmatprep.subr.bf16.mxu0 0
    %2203 = vmatpush1.bf16.msra.mxu0 %v1561
    %2204 = vmatprep.subr.bf16.mxu0 0
    %2205 = vmatpush1.bf16.msra.mxu0 %v1560
    %2206 = vmatprep.subr.bf16.mxu0 0
    %2207 = vmatpush1.bf16.msra.mxu0 %v1559
    %2208 = vmatprep.subr.bf16.mxu0 0
    %2209 = vmatpush1.bf16.msra.mxu0 %v1558
    %2210 = vmatprep.subr.bf16.mxu0 0
    %2211 = vmatpush2.bf16.msra.mxu0 %v1573
    %2212 = vmatprep.subr.bf16.mxu0 0
    %2213 = vmatpush2.bf16.msra.mxu0 %v1572
    %2214 = vmatprep.subr.bf16.mxu0 0
    %2215 = vmatpush2.bf16.msra.mxu0 %v1571
    %2216 = vmatprep.subr.bf16.mxu0 0
    %2217 = vmatpush2.bf16.msra.mxu0 %v1570
    %2218 = vmatprep.subr.bf16.mxu0 0
    %2219 = vmatpush2.bf16.msra.mxu0 %v1569
    %2220 = vmatprep.subr.bf16.mxu0 0
    %2221 = vmatpush2.bf16.msra.mxu0 %v1568
    %2222 = vmatprep.subr.bf16.mxu0 0
    %2223 = vmatpush2.bf16.msra.mxu0 %v1567
    %2224 = vmatprep.subr.bf16.mxu0 0
    %2225 = vmatpush2.bf16.msra.mxu0 %v1566
    %2226 = vmatprep.mubr.bf16.mxu0 %v571
    %2227 = vmatmul.mubr.bf16.gmra.mxu0 %v557
    %v2228 = vpop.f32.mrf.mxu0
    %v2229 = vadd.f32 %v2189, %v2228
    %v2230 = vpop.f32.mrf.mxu0
    %v2231 = vpop.f32.mrf.mxu0
    %v2232 = vpop.f32.mrf.mxu0
    %2233 = vdwg.mxu0
    %2234 = vmatprep.subr.bf16.mxu0 0
    %2235 = vmatpush1.bf16.msra.mxu0 %v1581
    %2236 = vmatprep.subr.bf16.mxu0 0
    %2237 = vmatpush1.bf16.msra.mxu0 %v1580
    %2238 = vmatprep.subr.bf16.mxu0 0
    %2239 = vmatpush1.bf16.msra.mxu0 %v1579
    %2240 = vmatprep.subr.bf16.mxu0 0
    %2241 = vmatpush1.bf16.msra.mxu0 %v1578
    %2242 = vmatprep.subr.bf16.mxu0 0
    %2243 = vmatpush1.bf16.msra.mxu0 %v1577
    %2244 = vmatprep.subr.bf16.mxu0 0
    %2245 = vmatpush1.bf16.msra.mxu0 %v1576
    %2246 = vmatprep.subr.bf16.mxu0 0
    %2247 = vmatpush1.bf16.msra.mxu0 %v1575
    %2248 = vmatprep.subr.bf16.mxu0 0
    %2249 = vmatpush1.bf16.msra.mxu0 %v1574
    %2250 = vmatprep.subr.bf16.mxu0 0
    %2251 = vmatpush2.bf16.msra.mxu0 %v1589
    %2252 = vmatprep.subr.bf16.mxu0 0
    %2253 = vmatpush2.bf16.msra.mxu0 %v1588
    %2254 = vmatprep.subr.bf16.mxu0 0
    %2255 = vmatpush2.bf16.msra.mxu0 %v1587
    %2256 = vmatprep.subr.bf16.mxu0 0
    %2257 = vmatpush2.bf16.msra.mxu0 %v1586
    %2258 = vmatprep.subr.bf16.mxu0 0
    %2259 = vmatpush2.bf16.msra.mxu0 %v1585
    %2260 = vmatprep.subr.bf16.mxu0 0
    %2261 = vmatpush2.bf16.msra.mxu0 %v1584
    %2262 = vmatprep.subr.bf16.mxu0 0
    %2263 = vmatpush2.bf16.msra.mxu0 %v1583
    %2264 = vmatprep.subr.bf16.mxu0 0
    %2265 = vmatpush2.bf16.msra.mxu0 %v1582
    %2266 = vmatprep.mubr.bf16.mxu0 %v575
    %2267 = vmatmul.mubr.bf16.gmra.mxu0 %v573
    %v2268 = vpop.f32.mrf.mxu0
    %v2269 = vadd.f32 %v2229, %v2268
    %v2270 = vpop.f32.mrf.mxu0
    %v2271 = vpop.f32.mrf.mxu0
    %v2272 = vpop.f32.mrf.mxu0
    %2273 = vdwg.mxu0
    %2274 = vmatprep.subr.bf16.mxu0 0
    %2275 = vmatpush1.bf16.msra.mxu0 0
    %2276 = vmatprep.subr.bf16.mxu0 0
    %2277 = vmatpush1.bf16.msra.mxu0 0
    %2278 = vmatprep.subr.bf16.mxu0 0
    %2279 = vmatpush1.bf16.msra.mxu0 0
    %2280 = vmatprep.subr.bf16.mxu0 0
    %2281 = vmatpush1.bf16.msra.mxu0 0
    %2282 = vmatprep.subr.bf16.mxu0 0
    %2283 = vmatpush1.bf16.msra.mxu0 %v1593
    %2284 = vmatprep.subr.bf16.mxu0 0
    %2285 = vmatpush1.bf16.msra.mxu0 %v1592
    %2286 = vmatprep.subr.bf16.mxu0 0
    %2287 = vmatpush1.bf16.msra.mxu0 %v1591
    %2288 = vmatprep.subr.bf16.mxu0 0
    %2289 = vmatpush1.bf16.msra.mxu0 %v1590
    %2290 = vmatprep.subr.bf16.mxu0 0
    %2291 = vmatpush2.bf16.msra.mxu0 0
    %2292 = vmatprep.subr.bf16.mxu0 0
    %2293 = vmatpush2.bf16.msra.mxu0 0
    %2294 = vmatprep.subr.bf16.mxu0 0
    %2295 = vmatpush2.bf16.msra.mxu0 0
    %2296 = vmatprep.subr.bf16.mxu0 0
    %2297 = vmatpush2.bf16.msra.mxu0 0
    %2298 = vmatprep.subr.bf16.mxu0 0
    %2299 = vmatpush2.bf16.msra.mxu0 0
    %2300 = vmatprep.subr.bf16.mxu0 0
    %2301 = vmatpush2.bf16.msra.mxu0 0
    %2302 = vmatprep.subr.bf16.mxu0 0
    %2303 = vmatpush2.bf16.msra.mxu0 0
    %2304 = vmatprep.subr.bf16.mxu0 0
    %2305 = vmatpush2.bf16.msra.mxu0 0
    %2306 = vmatprep.mubr.bf16.mxu0 0
    %2307 = vmatmul.mubr.bf16.gmra.mxu0 %v1792
    %v2308 = vpop.f32.mrf.mxu0
    %v2309 = vadd.f32 %v2269, %v2308
    %v2310 = vpop.f32.mrf.mxu0
    %v2311 = vpop.f32.mrf.mxu0
    %v2312 = vpop.f32.mrf.mxu0
    %2313 = vdwg.mxu0
    %v2314 = vmax.f32 %v2309, 0.0
    %v2315 = vpack.c.bf16 %v2314, %v2314
    %v2316 = vld [vmem:[%s3] sm:$0xf]
    %v2317 = vld [vmem:[%s3 + $0x4] sm:$0xf]
    %v2318 = vld [vmem:[%s3 + $0x8] sm:$0xf]
    %v2319 = vld [vmem:[%s3 + $0xc] sm:$0xf]
    %v2320 = vld [vmem:[%s3 + $0x10] sm:$0xf]
    %v2321 = vld [vmem:[%s3 + $0x14] sm:$0xf]
    %v2322 = vld [vmem:[%s3 + $0x18] sm:$0xf]
    %v2323 = vld [vmem:[%s3 + $0x1c] sm:$0xf]
    %v2324 = vld [vmem:[%s3 + $0x20] sm:$0xf]
    %v2325 = vld [vmem:[%s3 + $0x24] sm:$0xf]
    %v2326 = vld [vmem:[%s3 + $0x28] sm:$0xf]
    %v2327 = vld [vmem:[%s3 + $0x2c] sm:$0xf]
    %v2328 = vld [vmem:[%s3 + $0x30] sm:$0xf]
    %v2329 = vld [vmem:[%s3 + $0x34] sm:$0xf]
    %v2330 = vld [vmem:[%s3 + $0x38] sm:$0xf]
    %v2331 = vld [vmem:[%s3 + $0x3c] sm:$0xf]
    %v2332 = vld [vmem:[%s4] sm:$0x1]
    %v2334 = vlaneseq
    %v2335 = vshrl.u32 %v2334, 7
    %v2336 = vsub.s32 0, %v2335
    %v2337 = vrot.slane %v2332, %v2336
    %v2355 = vunpack.c.l.b16 %v2316
    %v2356 = vunpack.c.l.b16 %v2317
    %v2357 = vunpack.c.l.b16 %v2318
    %v2358 = vunpack.c.l.b16 %v2319
    %v2359 = vunpack.c.l.b16 %v2320
    %v2360 = vunpack.c.l.b16 %v2321
    %v2361 = vunpack.c.l.b16 %v2322
    %v2362 = vunpack.c.l.b16 %v2323
    %v2363 = vunpack.c.l.b16 %v2324
    %v2364 = vunpack.c.l.b16 %v2325
    %v2365 = vunpack.c.l.b16 %v2326
    %v2366 = vunpack.c.l.b16 %v2327
    %v2367 = vunpack.c.l.b16 %v2328
    %v2368 = vunpack.c.l.b16 %v2329
    %v2369 = vunpack.c.l.b16 %v2330
    %v2370 = vunpack.c.l.b16 %v2331
    %v2371 = vpack.c.b16 %v2356, %v2355
    %v2372 = vpack.c.b16 %v2358, %v2357
    %v2373 = vpack.c.b16 %v2360, %v2359
    %v2374 = vpack.c.b16 %v2362, %v2361
    %v2375 = vpack.c.b16 %v2364, %v2363
    %v2376 = vpack.c.b16 %v2366, %v2365
    %v2377 = vpack.c.b16 %v2368, %v2367
    %v2378 = vpack.c.b16 %v2370, %v2369
    %2387 = vmatprep.subr.bf16.mxu0 0
    %2388 = vmatpush1.bf16.msra.mxu0 %v2378
    %2389 = vmatprep.subr.bf16.mxu0 0
    %2390 = vmatpush1.bf16.msra.mxu0 %v2377
    %2391 = vmatprep.subr.bf16.mxu0 0
    %2392 = vmatpush1.bf16.msra.mxu0 %v2376
    %2393 = vmatprep.subr.bf16.mxu0 0
    %2394 = vmatpush1.bf16.msra.mxu0 %v2375
    %2395 = vmatprep.subr.bf16.mxu0 0
    %2396 = vmatpush1.bf16.msra.mxu0 %v2374
    %2397 = vmatprep.subr.bf16.mxu0 0
    %2398 = vmatpush1.bf16.msra.mxu0 %v2373
    %2399 = vmatprep.subr.bf16.mxu0 0
    %2400 = vmatpush1.bf16.msra.mxu0 %v2372
    %2401 = vmatprep.subr.bf16.mxu0 0
    %2402 = vmatpush1.bf16.msra.mxu0 %v2371
    %2403 = vmatprep.subr.bf16.mxu0 0
    %2404 = vmatpush2.bf16.msra.mxu0 0
    %2405 = vmatprep.subr.bf16.mxu0 0
    %2406 = vmatpush2.bf16.msra.mxu0 0
    %2407 = vmatprep.subr.bf16.mxu0 0
    %2408 = vmatpush2.bf16.msra.mxu0 0
    %2409 = vmatprep.subr.bf16.mxu0 0
    %2410 = vmatpush2.bf16.msra.mxu0 0
    %2411 = vmatprep.subr.bf16.mxu0 0
    %2412 = vmatpush2.bf16.msra.mxu0 0
    %2413 = vmatprep.subr.bf16.mxu0 0
    %2414 = vmatpush2.bf16.msra.mxu0 0
    %2415 = vmatprep.subr.bf16.mxu0 0
    %2416 = vmatpush2.bf16.msra.mxu0 0
    %2417 = vmatprep.subr.bf16.mxu0 0
    %2418 = vmatpush2.bf16.msra.mxu0 0
    %2419 = vmatprep.mubr.bf16.mxu0 0
    %2420 = vmatmul.mubr.bf16.gmra.mxu0 %v2315
    %v2421 = vpop.f32.mrf.mxu0
    %v2422 = vadd.f32 %v2337, %v2421
    %v2423 = vpop.f32.mrf.mxu0
    %v2424 = vpop.f32.mrf.mxu0
    %v2425 = vpop.f32.mrf.mxu0
    %2426 = vdwg.mxu0
    %2427 = vst [vmem:[#allocation2] sm:$0x3] %v2422
    // Predicated region
    $region22: #{cnn_forward.5} parent=1 // pred_check
      _
    $region23: #{cnn_forward.5} parent=1 // pred_check_branch
      %2429 = sbr.rel (0) target = $region25
    $region24: #{cnn_forward.5} parent=1 // pred_region
      %s2431 = ssub.s32 32, 32
      %2432 = vsyncadd [#allocation3], %s2431
      %s2434 = sshll.u32 [#allocation2], 4
      %s2435 = int_to_ptr.vmem [resolvable:$true] %s2434
      %2437 = dma.vmem_to_hbm [thread:$0]  %s2435, 32, %s5, [#allocation3]
    $region25: #{cnn_forward.5} parent=1 // pred_fallthru
      _
    // Predicated region
    $region26: #{cnn_forward.5} parent=1 // pred_check
      _
    $region27: #{cnn_forward.5} parent=1 // pred_check_branch
      %2439 = sbr.rel (0) target = $region29
    $region28: #{cnn_forward.5} parent=1 // pred_region
      %2440 = dma.done [#allocation3], 32
    $region29: #{cnn_forward.5} parent=1 // pred_fallthru
      _
    %2441 = vsyncpa [#allocation3], 1

// kernel: cnn_forward.4
$region0: #{cnn_forward.4}
  #allocation0 [shape = 'u32[]', space=smem, size = 0x4, offset = 0x4, fixed_abs, tag = 'smem constant byte address 0x4 - core index']
  #allocation1 [shape = 'u32[144,128]{1,0:T(1,128)}', space=vmem, size = 0x12000, scoped, tag = 'internal scratch']
  %s0 = inlined_call_operand.vmem [shape: bf16[2,16,512], index: 0, kind: input, shape index: {}]
  %s1 = inlined_call_operand.vmem [shape: bf16[3,2,512,448], index: 1, kind: input, shape index: {}]
  %s2 = inlined_call_operand.vmem [shape: f32[1,448], index: 2, kind: input, shape index: {}]
  %s3 = inlined_call_operand.vmem [shape: bf16[2,7,448], index: 3, kind: output, shape index: {}]
  %s4 = sld [smem:[#allocation0]]
  $region22: #{cnn_forward.4} parent=0
    _
  %s6 = ssub.s32 1, %s4
  %s7 = scalar_select 0, %s6, %s4
  // Predicated region
  $region2: #{cnn_forward.4} parent=0 // pred_check
    _
  $region3: #{cnn_forward.4} parent=0 // pred_check_branch
    %9 = sbr.rel (0) target = $region5
  $region4: #{cnn_forward.4} parent=0 // pred_region
    _
  $region5: #{cnn_forward.4} parent=0 // pred_fallthru
    _
  // Predicated region
  $region6: #{cnn_forward.4} parent=0 // pred_check
    _
  $region7: #{cnn_forward.4} parent=0 // pred_check_branch
    %11 = sbr.rel (0) target = $region9
  $region8: #{cnn_forward.4} parent=0 // pred_region
    _
  $region9: #{cnn_forward.4} parent=0 // pred_fallthru
    _
  // Predicated region
  $region10: #{cnn_forward.4} parent=0 // pred_check
    _
  $region11: #{cnn_forward.4} parent=0 // pred_check_branch
    %13 = sbr.rel (0) target = $region13
  $region12: #{cnn_forward.4} parent=0 // pred_region
    _
  $region13: #{cnn_forward.4} parent=0 // pred_fallthru
    _
  %v14 = vld [vmem:[%s0] sm:$0xff]
  %v15 = vld [vmem:[%s0 + $0x8] sm:$0xff]
  %v16 = vld [vmem:[%s0 + $0x10] sm:$0xff]
  %v17 = vld [vmem:[%s0 + $0x18] sm:$0xff]
  %s18 = scalar_lea.vmem %s0, 32
  %v19 = vld [vmem:[%s18] sm:$0xff]
  %v20 = vld [vmem:[%s18 + $0x8] sm:$0xff]
  %v21 = vld [vmem:[%s18 + $0x10] sm:$0xff]
  %v22 = vld [vmem:[%s18 + $0x18] sm:$0xff]
  %v23 = vld [vmem:[%s1] sm:$0xff]
  %v24 = vld [vmem:[%s1 + $0x8] sm:$0xff]
  %v25 = vld [vmem:[%s1 + $0x10] sm:$0xff]
  %v26 = vld [vmem:[%s1 + $0x18] sm:$0xff]
  %v27 = vld [vmem:[%s1 + $0x20] sm:$0xff]
  %v28 = vld [vmem:[%s1 + $0x28] sm:$0xff]
  %v29 = vld [vmem:[%s1 + $0x30] sm:$0xff]
  %v30 = vld [vmem:[%s1 + $0x38] sm:$0xff]
  %v31 = vld [vmem:[%s1 + $0x40] sm:$0xff]
  %v32 = vld [vmem:[%s1 + $0x48] sm:$0xff]
  %v33 = vld [vmem:[%s1 + $0x50] sm:$0xff]
  %v34 = vld [vmem:[%s1 + $0x58] sm:$0xff]
  %v35 = vld [vmem:[%s1 + $0x60] sm:$0xff]
  %v36 = vld [vmem:[%s1 + $0x68] sm:$0xff]
  %v37 = vld [vmem:[%s1 + $0x70] sm:$0xff]
  %v38 = vld [vmem:[%s1 + $0x78] sm:$0xff]
  %v39 = vld [vmem:[%s1 + $0x80] sm:$0xff]
  %v40 = vld [vmem:[%s1 + $0x88] sm:$0xff]
  %v41 = vld [vmem:[%s1 + $0x90] sm:$0xff]
  %v42 = vld [vmem:[%s1 + $0x98] sm:$0xff]
  %v43 = vld [vmem:[%s1 + $0xa0] sm:$0xff]
  %v44 = vld [vmem:[%s1 + $0xa8] sm:$0xff]
  %v45 = vld [vmem:[%s1 + $0xb0] sm:$0xff]
  %v46 = vld [vmem:[%s1 + $0xb8] sm:$0xff]
  %v47 = vld [vmem:[%s1 + $0xc0] sm:$0xff]
  %v48 = vld [vmem:[%s1 + $0xc8] sm:$0xff]
  %v49 = vld [vmem:[%s1 + $0xd0] sm:$0xff]
  %v50 = vld [vmem:[%s1 + $0xd8] sm:$0xff]
  %v51 = vld [vmem:[%s1 + $0xe0] sm:$0xff]
  %v52 = vld [vmem:[%s1 + $0xe8] sm:$0xff]
  %v53 = vld [vmem:[%s1 + $0xf0] sm:$0xff]
  %v54 = vld [vmem:[%s1 + $0xf8] sm:$0xff]
  %v55 = vld [vmem:[%s1 + $0x100] sm:$0xff]
  %v56 = vld [vmem:[%s1 + $0x108] sm:$0xff]
  %v57 = vld [vmem:[%s1 + $0x110] sm:$0xff]
  %v58 = vld [vmem:[%s1 + $0x118] sm:$0xff]
  %v59 = vld [vmem:[%s1 + $0x120] sm:$0xff]
  %v60 = vld [vmem:[%s1 + $0x128] sm:$0xff]
  %v61 = vld [vmem:[%s1 + $0x130] sm:$0xff]
  %v62 = vld [vmem:[%s1 + $0x138] sm:$0xff]
  %v63 = vld [vmem:[%s1 + $0x140] sm:$0xff]
  %v64 = vld [vmem:[%s1 + $0x148] sm:$0xff]
  %v65 = vld [vmem:[%s1 + $0x150] sm:$0xff]
  %v66 = vld [vmem:[%s1 + $0x158] sm:$0xff]
  %v67 = vld [vmem:[%s1 + $0x160] sm:$0xff]
  %v68 = vld [vmem:[%s1 + $0x168] sm:$0xff]
  %v69 = vld [vmem:[%s1 + $0x170] sm:$0xff]
  %v70 = vld [vmem:[%s1 + $0x178] sm:$0xff]
  %v71 = vld [vmem:[%s1 + $0x180] sm:$0xff]
  %v72 = vld [vmem:[%s1 + $0x188] sm:$0xff]
  %v73 = vld [vmem:[%s1 + $0x190] sm:$0xff]
  %v74 = vld [vmem:[%s1 + $0x198] sm:$0xff]
  %v75 = vld [vmem:[%s1 + $0x1a0] sm:$0xff]
  %v76 = vld [vmem:[%s1 + $0x1a8] sm:$0xff]
  %v77 = vld [vmem:[%s1 + $0x1b0] sm:$0xff]
  %v78 = vld [vmem:[%s1 + $0x1b8] sm:$0xff]
  %v79 = vld [vmem:[%s1 + $0x1c0] sm:$0xff]
  %v80 = vld [vmem:[%s1 + $0x1c8] sm:$0xff]
  %v81 = vld [vmem:[%s1 + $0x1d0] sm:$0xff]
  %v82 = vld [vmem:[%s1 + $0x1d8] sm:$0xff]
  %v83 = vld [vmem:[%s1 + $0x1e0] sm:$0xff]
  %v84 = vld [vmem:[%s1 + $0x1e8] sm:$0xff]
  %v85 = vld [vmem:[%s1 + $0x1f0] sm:$0xff]
  %v86 = vld [vmem:[%s1 + $0x1f8] sm:$0xff]
  %v87 = vld [vmem:[%s1 + $0x200] sm:$0xff]
  %v88 = vld [vmem:[%s1 + $0x208] sm:$0xff]
  %v89 = vld [vmem:[%s1 + $0x210] sm:$0xff]
  %v90 = vld [vmem:[%s1 + $0x218] sm:$0xff]
  %v91 = vld [vmem:[%s1 + $0x220] sm:$0xff]
  %v92 = vld [vmem:[%s1 + $0x228] sm:$0xff]
  %v93 = vld [vmem:[%s1 + $0x230] sm:$0xff]
  %v94 = vld [vmem:[%s1 + $0x238] sm:$0xff]
  %v95 = vld [vmem:[%s1 + $0x240] sm:$0xff]
  %v96 = vld [vmem:[%s1 + $0x248] sm:$0xff]
  %v97 = vld [vmem:[%s1 + $0x250] sm:$0xff]
  %v98 = vld [vmem:[%s1 + $0x258] sm:$0xff]
  %v99 = vld [vmem:[%s1 + $0x260] sm:$0xff]
  %v100 = vld [vmem:[%s1 + $0x268] sm:$0xff]
  %v101 = vld [vmem:[%s1 + $0x270] sm:$0xff]
  %v102 = vld [vmem:[%s1 + $0x278] sm:$0xff]
  %v103 = vld [vmem:[%s1 + $0x280] sm:$0xff]
  %v104 = vld [vmem:[%s1 + $0x288] sm:$0xff]
  %v105 = vld [vmem:[%s1 + $0x290] sm:$0xff]
  %v106 = vld [vmem:[%s1 + $0x298] sm:$0xff]
  %v107 = vld [vmem:[%s1 + $0x2a0] sm:$0xff]
  %v108 = vld [vmem:[%s1 + $0x2a8] sm:$0xff]
  %v109 = vld [vmem:[%s1 + $0x2b0] sm:$0xff]
  %v110 = vld [vmem:[%s1 + $0x2b8] sm:$0xff]
  %v111 = vld [vmem:[%s1 + $0x2c0] sm:$0xff]
  %v112 = vld [vmem:[%s1 + $0x2c8] sm:$0xff]
  %v113 = vld [vmem:[%s1 + $0x2d0] sm:$0xff]
  %v114 = vld [vmem:[%s1 + $0x2d8] sm:$0xff]
  %v115 = vld [vmem:[%s1 + $0x2e0] sm:$0xff]
  %v116 = vld [vmem:[%s1 + $0x2e8] sm:$0xff]
  %v117 = vld [vmem:[%s1 + $0x2f0] sm:$0xff]
  %v118 = vld [vmem:[%s1 + $0x2f8] sm:$0xff]
  %v119 = vld [vmem:[%s1 + $0x300] sm:$0xff]
  %v120 = vld [vmem:[%s1 + $0x308] sm:$0xff]
  %v121 = vld [vmem:[%s1 + $0x310] sm:$0xff]
  %v122 = vld [vmem:[%s1 + $0x318] sm:$0xff]
  %v123 = vld [vmem:[%s1 + $0x320] sm:$0xff]
  %v124 = vld [vmem:[%s1 + $0x328] sm:$0xff]
  %v125 = vld [vmem:[%s1 + $0x330] sm:$0xff]
  %v126 = vld [vmem:[%s1 + $0x338] sm:$0xff]
  %v127 = vld [vmem:[%s1 + $0x340] sm:$0xff]
  %v128 = vld [vmem:[%s1 + $0x348] sm:$0xff]
  %v129 = vld [vmem:[%s1 + $0x350] sm:$0xff]
  %v130 = vld [vmem:[%s1 + $0x358] sm:$0xff]
  %v131 = vld [vmem:[%s1 + $0x360] sm:$0xff]
  %v132 = vld [vmem:[%s1 + $0x368] sm:$0xff]
  %v133 = vld [vmem:[%s1 + $0x370] sm:$0xff]
  %v134 = vld [vmem:[%s1 + $0x378] sm:$0xff]
  %v135 = vld [vmem:[%s1 + $0x380] sm:$0xff]
  %v136 = vld [vmem:[%s1 + $0x388] sm:$0xff]
  %v137 = vld [vmem:[%s1 + $0x390] sm:$0xff]
  %v138 = vld [vmem:[%s1 + $0x398] sm:$0xff]
  %v139 = vld [vmem:[%s1 + $0x3a0] sm:$0xff]
  %v140 = vld [vmem:[%s1 + $0x3a8] sm:$0xff]
  %v141 = vld [vmem:[%s1 + $0x3b0] sm:$0xff]
  %v142 = vld [vmem:[%s1 + $0x3b8] sm:$0xff]
  %v143 = vld [vmem:[%s1 + $0x3c0] sm:$0xff]
  %v144 = vld [vmem:[%s1 + $0x3c8] sm:$0xff]
  %v145 = vld [vmem:[%s1 + $0x3d0] sm:$0xff]
  %v146 = vld [vmem:[%s1 + $0x3d8] sm:$0xff]
  %v147 = vld [vmem:[%s1 + $0x3e0] sm:$0xff]
  %v148 = vld [vmem:[%s1 + $0x3e8] sm:$0xff]
  %v149 = vld [vmem:[%s1 + $0x3f0] sm:$0xff]
  %v150 = vld [vmem:[%s1 + $0x3f8] sm:$0xff]
  %v155 = vunpack.c.l.b16 %v14
  %v156 = vunpack.c.h.b16 %v14
  %v157 = vunpack.c.l.b16 %v15
  %v158 = vunpack.c.h.b16 %v15
  %v159 = vunpack.c.l.b16 %v16
  %v160 = vunpack.c.h.b16 %v16
  %v161 = vunpack.c.l.b16 %v17
  %v162 = vunpack.c.h.b16 %v17
  %v163 = vpack.c.b16 %v159, %v155
  %v164 = vpack.c.b16 %v160, %v156
  %v165 = vpack.c.b16 %v161, %v157
  %v166 = vpack.c.b16 %v162, %v158
  %v299 = vunpack.c.l.b16 %v23
  %v300 = vunpack.c.h.b16 %v23
  %v301 = vunpack.c.l.b16 %v24
  %v302 = vunpack.c.h.b16 %v24
  %v303 = vunpack.c.l.b16 %v25
  %v304 = vunpack.c.h.b16 %v25
  %v305 = vunpack.c.l.b16 %v26
  %v306 = vunpack.c.h.b16 %v26
  %v307 = vunpack.c.l.b16 %v27
  %v308 = vunpack.c.h.b16 %v27
  %v309 = vunpack.c.l.b16 %v28
  %v310 = vunpack.c.h.b16 %v28
  %v311 = vunpack.c.l.b16 %v29
  %v312 = vunpack.c.h.b16 %v29
  %v313 = vunpack.c.l.b16 %v30
  %v314 = vunpack.c.h.b16 %v30
  %v315 = vunpack.c.l.b16 %v31
  %v316 = vunpack.c.h.b16 %v31
  %v317 = vunpack.c.l.b16 %v32
  %v318 = vunpack.c.h.b16 %v32
  %v319 = vunpack.c.l.b16 %v33
  %v320 = vunpack.c.h.b16 %v33
  %v321 = vunpack.c.l.b16 %v34
  %v322 = vunpack.c.h.b16 %v34
  %v323 = vunpack.c.l.b16 %v35
  %v324 = vunpack.c.h.b16 %v35
  %v325 = vunpack.c.l.b16 %v36
  %v326 = vunpack.c.h.b16 %v36
  %v327 = vunpack.c.l.b16 %v37
  %v328 = vunpack.c.h.b16 %v37
  %v329 = vunpack.c.l.b16 %v38
  %v330 = vunpack.c.h.b16 %v38
  %v331 = vunpack.c.l.b16 %v39
  %v332 = vunpack.c.h.b16 %v39
  %v333 = vunpack.c.l.b16 %v40
  %v334 = vunpack.c.h.b16 %v40
  %v335 = vunpack.c.l.b16 %v41
  %v336 = vunpack.c.h.b16 %v41
  %v337 = vunpack.c.l.b16 %v42
  %v338 = vunpack.c.h.b16 %v42
  %v339 = vunpack.c.l.b16 %v43
  %v340 = vunpack.c.h.b16 %v43
  %v341 = vunpack.c.l.b16 %v44
  %v342 = vunpack.c.h.b16 %v44
  %v343 = vunpack.c.l.b16 %v45
  %v344 = vunpack.c.h.b16 %v45
  %v345 = vunpack.c.l.b16 %v46
  %v346 = vunpack.c.h.b16 %v46
  %v347 = vunpack.c.l.b16 %v47
  %v348 = vunpack.c.h.b16 %v47
  %v349 = vunpack.c.l.b16 %v48
  %v350 = vunpack.c.h.b16 %v48
  %v351 = vunpack.c.l.b16 %v49
  %v352 = vunpack.c.h.b16 %v49
  %v353 = vunpack.c.l.b16 %v50
  %v354 = vunpack.c.h.b16 %v50
  %v355 = vunpack.c.l.b16 %v51
  %v356 = vunpack.c.h.b16 %v51
  %v357 = vunpack.c.l.b16 %v52
  %v358 = vunpack.c.h.b16 %v52
  %v359 = vunpack.c.l.b16 %v53
  %v360 = vunpack.c.h.b16 %v53
  %v361 = vunpack.c.l.b16 %v54
  %v362 = vunpack.c.h.b16 %v54
  %v363 = vunpack.c.l.b16 %v55
  %v364 = vunpack.c.h.b16 %v55
  %v365 = vunpack.c.l.b16 %v56
  %v366 = vunpack.c.h.b16 %v56
  %v367 = vunpack.c.l.b16 %v57
  %v368 = vunpack.c.h.b16 %v57
  %v369 = vunpack.c.l.b16 %v58
  %v370 = vunpack.c.h.b16 %v58
  %v371 = vunpack.c.l.b16 %v59
  %v372 = vunpack.c.h.b16 %v59
  %v373 = vunpack.c.l.b16 %v60
  %v374 = vunpack.c.h.b16 %v60
  %v375 = vunpack.c.l.b16 %v61
  %v376 = vunpack.c.h.b16 %v61
  %v377 = vunpack.c.l.b16 %v62
  %v378 = vunpack.c.h.b16 %v62
  %v379 = vunpack.c.l.b16 %v63
  %v380 = vunpack.c.h.b16 %v63
  %v381 = vunpack.c.l.b16 %v64
  %v382 = vunpack.c.h.b16 %v64
  %v383 = vunpack.c.l.b16 %v65
  %v384 = vunpack.c.h.b16 %v65
  %v385 = vunpack.c.l.b16 %v66
  %v386 = vunpack.c.h.b16 %v66
  %v387 = vunpack.c.l.b16 %v67
  %v388 = vunpack.c.h.b16 %v67
  %v389 = vunpack.c.l.b16 %v68
  %v390 = vunpack.c.h.b16 %v68
  %v391 = vunpack.c.l.b16 %v69
  %v392 = vunpack.c.h.b16 %v69
  %v393 = vunpack.c.l.b16 %v70
  %v394 = vunpack.c.h.b16 %v70
  %v395 = vunpack.c.l.b16 %v71
  %v396 = vunpack.c.h.b16 %v71
  %v397 = vunpack.c.l.b16 %v72
  %v398 = vunpack.c.h.b16 %v72
  %v399 = vunpack.c.l.b16 %v73
  %v400 = vunpack.c.h.b16 %v73
  %v401 = vunpack.c.l.b16 %v74
  %v402 = vunpack.c.h.b16 %v74
  %v403 = vunpack.c.l.b16 %v75
  %v404 = vunpack.c.h.b16 %v75
  %v405 = vunpack.c.l.b16 %v76
  %v406 = vunpack.c.h.b16 %v76
  %v407 = vunpack.c.l.b16 %v77
  %v408 = vunpack.c.h.b16 %v77
  %v409 = vunpack.c.l.b16 %v78
  %v410 = vunpack.c.h.b16 %v78
  %v411 = vunpack.c.l.b16 %v79
  %v412 = vunpack.c.h.b16 %v79
  %v413 = vunpack.c.l.b16 %v80
  %v414 = vunpack.c.h.b16 %v80
  %v415 = vunpack.c.l.b16 %v81
  %v416 = vunpack.c.h.b16 %v81
  %v417 = vunpack.c.l.b16 %v82
  %v418 = vunpack.c.h.b16 %v82
  %v419 = vunpack.c.l.b16 %v83
  %v420 = vunpack.c.h.b16 %v83
  %v421 = vunpack.c.l.b16 %v84
  %v422 = vunpack.c.h.b16 %v84
  %v423 = vunpack.c.l.b16 %v85
  %v424 = vunpack.c.h.b16 %v85
  %v425 = vunpack.c.l.b16 %v86
  %v426 = vunpack.c.h.b16 %v86
  %v427 = vunpack.c.l.b16 %v87
  %v428 = vunpack.c.h.b16 %v87
  %v429 = vunpack.c.l.b16 %v88
  %v430 = vunpack.c.h.b16 %v88
  %v431 = vunpack.c.l.b16 %v89
  %v432 = vunpack.c.h.b16 %v89
  %v433 = vunpack.c.l.b16 %v90
  %v434 = vunpack.c.h.b16 %v90
  %v435 = vunpack.c.l.b16 %v91
  %v436 = vunpack.c.h.b16 %v91
  %v437 = vunpack.c.l.b16 %v92
  %v438 = vunpack.c.h.b16 %v92
  %v439 = vunpack.c.l.b16 %v93
  %v440 = vunpack.c.h.b16 %v93
  %v441 = vunpack.c.l.b16 %v94
  %v442 = vunpack.c.h.b16 %v94
  %v443 = vunpack.c.l.b16 %v95
  %v444 = vunpack.c.h.b16 %v95
  %v445 = vunpack.c.l.b16 %v96
  %v446 = vunpack.c.h.b16 %v96
  %v447 = vunpack.c.l.b16 %v97
  %v448 = vunpack.c.h.b16 %v97
  %v449 = vunpack.c.l.b16 %v98
  %v450 = vunpack.c.h.b16 %v98
  %v451 = vunpack.c.l.b16 %v99
  %v452 = vunpack.c.h.b16 %v99
  %v453 = vunpack.c.l.b16 %v100
  %v454 = vunpack.c.h.b16 %v100
  %v455 = vunpack.c.l.b16 %v101
  %v456 = vunpack.c.h.b16 %v101
  %v457 = vunpack.c.l.b16 %v102
  %v458 = vunpack.c.h.b16 %v102
  %v459 = vunpack.c.l.b16 %v103
  %v460 = vunpack.c.h.b16 %v103
  %v461 = vunpack.c.l.b16 %v104
  %v462 = vunpack.c.h.b16 %v104
  %v463 = vunpack.c.l.b16 %v105
  %v464 = vunpack.c.h.b16 %v105
  %v465 = vunpack.c.l.b16 %v106
  %v466 = vunpack.c.h.b16 %v106
  %v467 = vunpack.c.l.b16 %v107
  %v468 = vunpack.c.h.b16 %v107
  %v469 = vunpack.c.l.b16 %v108
  %v470 = vunpack.c.h.b16 %v108
  %v471 = vunpack.c.l.b16 %v109
  %v472 = vunpack.c.h.b16 %v109
  %v473 = vunpack.c.l.b16 %v110
  %v474 = vunpack.c.h.b16 %v110
  %v475 = vunpack.c.l.b16 %v111
  %v476 = vunpack.c.h.b16 %v111
  %v477 = vunpack.c.l.b16 %v112
  %v478 = vunpack.c.h.b16 %v112
  %v479 = vunpack.c.l.b16 %v113
  %v480 = vunpack.c.h.b16 %v113
  %v481 = vunpack.c.l.b16 %v114
  %v482 = vunpack.c.h.b16 %v114
  %v483 = vunpack.c.l.b16 %v115
  %v484 = vunpack.c.h.b16 %v115
  %v485 = vunpack.c.l.b16 %v116
  %v486 = vunpack.c.h.b16 %v116
  %v487 = vunpack.c.l.b16 %v117
  %v488 = vunpack.c.h.b16 %v117
  %v489 = vunpack.c.l.b16 %v118
  %v490 = vunpack.c.h.b16 %v118
  %v491 = vunpack.c.l.b16 %v119
  %v492 = vunpack.c.h.b16 %v119
  %v493 = vunpack.c.l.b16 %v120
  %v494 = vunpack.c.h.b16 %v120
  %v495 = vunpack.c.l.b16 %v121
  %v496 = vunpack.c.h.b16 %v121
  %v497 = vunpack.c.l.b16 %v122
  %v498 = vunpack.c.h.b16 %v122
  %v499 = vunpack.c.l.b16 %v123
  %v500 = vunpack.c.h.b16 %v123
  %v501 = vunpack.c.l.b16 %v124
  %v502 = vunpack.c.h.b16 %v124
  %v503 = vunpack.c.l.b16 %v125
  %v504 = vunpack.c.h.b16 %v125
  %v505 = vunpack.c.l.b16 %v126
  %v506 = vunpack.c.h.b16 %v126
  %v507 = vunpack.c.l.b16 %v127
  %v508 = vunpack.c.h.b16 %v127
  %v509 = vunpack.c.l.b16 %v128
  %v510 = vunpack.c.h.b16 %v128
  %v511 = vunpack.c.l.b16 %v129
  %v512 = vunpack.c.h.b16 %v129
  %v513 = vunpack.c.l.b16 %v130
  %v514 = vunpack.c.h.b16 %v130
  %v515 = vunpack.c.l.b16 %v131
  %v516 = vunpack.c.h.b16 %v131
  %v517 = vunpack.c.l.b16 %v132
  %v518 = vunpack.c.h.b16 %v132
  %v519 = vunpack.c.l.b16 %v133
  %v520 = vunpack.c.h.b16 %v133
  %v521 = vunpack.c.l.b16 %v134
  %v522 = vunpack.c.h.b16 %v134
  %v523 = vunpack.c.l.b16 %v135
  %v524 = vunpack.c.h.b16 %v135
  %v525 = vunpack.c.l.b16 %v136
  %v526 = vunpack.c.h.b16 %v136
  %v527 = vunpack.c.l.b16 %v137
  %v528 = vunpack.c.h.b16 %v137
  %v529 = vunpack.c.l.b16 %v138
  %v530 = vunpack.c.h.b16 %v138
  %v531 = vunpack.c.l.b16 %v139
  %v532 = vunpack.c.h.b16 %v139
  %v533 = vunpack.c.l.b16 %v140
  %v534 = vunpack.c.h.b16 %v140
  %v535 = vunpack.c.l.b16 %v141
  %v536 = vunpack.c.h.b16 %v141
  %v537 = vunpack.c.l.b16 %v142
  %v538 = vunpack.c.h.b16 %v142
  %v539 = vunpack.c.l.b16 %v143
  %v540 = vunpack.c.h.b16 %v143
  %v541 = vunpack.c.l.b16 %v144
  %v542 = vunpack.c.h.b16 %v144
  %v543 = vunpack.c.l.b16 %v145
  %v544 = vunpack.c.h.b16 %v145
  %v545 = vunpack.c.l.b16 %v146
  %v546 = vunpack.c.h.b16 %v146
  %v547 = vunpack.c.l.b16 %v147
  %v548 = vunpack.c.h.b16 %v147
  %v549 = vunpack.c.l.b16 %v148
  %v550 = vunpack.c.h.b16 %v148
  %v551 = vunpack.c.l.b16 %v149
  %v552 = vunpack.c.h.b16 %v149
  %v553 = vunpack.c.l.b16 %v150
  %v554 = vunpack.c.h.b16 %v150
  %v555 = vpack.c.b16 %v303, %v299
  %v556 = vpack.c.b16 %v304, %v300
  %v557 = vpack.c.b16 %v305, %v301
  %v558 = vpack.c.b16 %v306, %v302
  %v559 = vpack.c.b16 %v311, %v307
  %v560 = vpack.c.b16 %v312, %v308
  %v561 = vpack.c.b16 %v313, %v309
  %v562 = vpack.c.b16 %v314, %v310
  %v563 = vpack.c.b16 %v319, %v315
  %v564 = vpack.c.b16 %v320, %v316
  %v565 = vpack.c.b16 %v321, %v317
  %v566 = vpack.c.b16 %v322, %v318
  %v567 = vpack.c.b16 %v327, %v323
  %v568 = vpack.c.b16 %v328, %v324
  %v569 = vpack.c.b16 %v329, %v325
  %v570 = vpack.c.b16 %v330, %v326
  %v571 = vpack.c.b16 %v335, %v331
  %v572 = vpack.c.b16 %v336, %v332
  %v573 = vpack.c.b16 %v337, %v333
  %v574 = vpack.c.b16 %v338, %v334
  %v575 = vpack.c.b16 %v343, %v339
  %v576 = vpack.c.b16 %v344, %v340
  %v577 = vpack.c.b16 %v345, %v341
  %v578 = vpack.c.b16 %v346, %v342
  %v579 = vpack.c.b16 %v351, %v347
  %v580 = vpack.c.b16 %v352, %v348
  %v581 = vpack.c.b16 %v353, %v349
  %v582 = vpack.c.b16 %v354, %v350
  %v583 = vpack.c.b16 %v359, %v355
  %v584 = vpack.c.b16 %v360, %v356
  %v585 = vpack.c.b16 %v361, %v357
  %v586 = vpack.c.b16 %v362, %v358
  %v587 = vpack.c.b16 %v367, %v363
  %v588 = vpack.c.b16 %v368, %v364
  %v589 = vpack.c.b16 %v369, %v365
  %v590 = vpack.c.b16 %v370, %v366
  %v591 = vpack.c.b16 %v375, %v371
  %v592 = vpack.c.b16 %v376, %v372
  %v593 = vpack.c.b16 %v377, %v373
  %v594 = vpack.c.b16 %v378, %v374
  %v595 = vpack.c.b16 %v383, %v379
  %v596 = vpack.c.b16 %v384, %v380
  %v597 = vpack.c.b16 %v385, %v381
  %v598 = vpack.c.b16 %v386, %v382
  %v599 = vpack.c.b16 %v391, %v387
  %v600 = vpack.c.b16 %v392, %v388
  %v601 = vpack.c.b16 %v393, %v389
  %v602 = vpack.c.b16 %v394, %v390
  %v603 = vpack.c.b16 %v399, %v395
  %v604 = vpack.c.b16 %v400, %v396
  %v605 = vpack.c.b16 %v401, %v397
  %v606 = vpack.c.b16 %v402, %v398
  %v607 = vpack.c.b16 %v407, %v403
  %v608 = vpack.c.b16 %v408, %v404
  %v609 = vpack.c.b16 %v409, %v405
  %v610 = vpack.c.b16 %v410, %v406
  %v611 = vpack.c.b16 %v415, %v411
  %v612 = vpack.c.b16 %v416, %v412
  %v613 = vpack.c.b16 %v417, %v413
  %v614 = vpack.c.b16 %v418, %v414
  %v615 = vpack.c.b16 %v423, %v419
  %v616 = vpack.c.b16 %v424, %v420
  %v617 = vpack.c.b16 %v425, %v421
  %v618 = vpack.c.b16 %v426, %v422
  %v619 = vpack.c.b16 %v431, %v427
  %v620 = vpack.c.b16 %v432, %v428
  %v621 = vpack.c.b16 %v433, %v429
  %v622 = vpack.c.b16 %v434, %v430
  %v623 = vpack.c.b16 %v439, %v435
  %v624 = vpack.c.b16 %v440, %v436
  %v625 = vpack.c.b16 %v441, %v437
  %v626 = vpack.c.b16 %v442, %v438
  %v627 = vpack.c.b16 %v447, %v443
  %v628 = vpack.c.b16 %v448, %v444
  %v629 = vpack.c.b16 %v449, %v445
  %v630 = vpack.c.b16 %v450, %v446
  %v631 = vpack.c.b16 %v455, %v451
  %v632 = vpack.c.b16 %v456, %v452
  %v633 = vpack.c.b16 %v457, %v453
  %v634 = vpack.c.b16 %v458, %v454
  %v635 = vpack.c.b16 %v463, %v459
  %v636 = vpack.c.b16 %v464, %v460
  %v637 = vpack.c.b16 %v465, %v461
  %v638 = vpack.c.b16 %v466, %v462
  %v639 = vpack.c.b16 %v471, %v467
  %v640 = vpack.c.b16 %v472, %v468
  %v641 = vpack.c.b16 %v473, %v469
  %v642 = vpack.c.b16 %v474, %v470
  %v643 = vpack.c.b16 %v479, %v475
  %v644 = vpack.c.b16 %v480, %v476
  %v645 = vpack.c.b16 %v481, %v477
  %v646 = vpack.c.b16 %v482, %v478
  %v647 = vpack.c.b16 %v487, %v483
  %v648 = vpack.c.b16 %v488, %v484
  %v649 = vpack.c.b16 %v489, %v485
  %v650 = vpack.c.b16 %v490, %v486
  %v651 = vpack.c.b16 %v495, %v491
  %v652 = vpack.c.b16 %v496, %v492
  %v653 = vpack.c.b16 %v497, %v493
  %v654 = vpack.c.b16 %v498, %v494
  %v655 = vpack.c.b16 %v503, %v499
  %v656 = vpack.c.b16 %v504, %v500
  %v657 = vpack.c.b16 %v505, %v501
  %v658 = vpack.c.b16 %v506, %v502
  %v659 = vpack.c.b16 %v511, %v507
  %v660 = vpack.c.b16 %v512, %v508
  %v661 = vpack.c.b16 %v513, %v509
  %v662 = vpack.c.b16 %v514, %v510
  %v663 = vpack.c.b16 %v519, %v515
  %v664 = vpack.c.b16 %v520, %v516
  %v665 = vpack.c.b16 %v521, %v517
  %v666 = vpack.c.b16 %v522, %v518
  %v667 = vpack.c.b16 %v527, %v523
  %v668 = vpack.c.b16 %v528, %v524
  %v669 = vpack.c.b16 %v529, %v525
  %v670 = vpack.c.b16 %v530, %v526
  %v671 = vpack.c.b16 %v535, %v531
  %v672 = vpack.c.b16 %v536, %v532
  %v673 = vpack.c.b16 %v537, %v533
  %v674 = vpack.c.b16 %v538, %v534
  %v675 = vpack.c.b16 %v543, %v539
  %v676 = vpack.c.b16 %v544, %v540
  %v677 = vpack.c.b16 %v545, %v541
  %v678 = vpack.c.b16 %v546, %v542
  %v679 = vpack.c.b16 %v551, %v547
  %v680 = vpack.c.b16 %v552, %v548
  %v681 = vpack.c.b16 %v553, %v549
  %v682 = vpack.c.b16 %v554, %v550
  %811 = vmatprep.subr.bf16.mxu0 %v584
  %812 = vmatpush1.bf16.msra.mxu0 %v583
  %813 = vmatprep.subr.bf16.mxu0 %v580
  %814 = vmatpush1.bf16.msra.mxu0 %v579
  %815 = vmatprep.subr.bf16.mxu0 %v576
  %816 = vmatpush1.bf16.msra.mxu0 %v575
  %817 = vmatprep.subr.bf16.mxu0 %v572
  %818 = vmatpush1.bf16.msra.mxu0 %v571
  %819 = vmatprep.subr.bf16.mxu0 %v568
  %820 = vmatpush1.bf16.msra.mxu0 %v567
  %821 = vmatprep.subr.bf16.mxu0 %v564
  %822 = vmatpush1.bf16.msra.mxu0 %v563
  %823 = vmatprep.subr.bf16.mxu0 %v560
  %824 = vmatpush1.bf16.msra.mxu0 %v559
  %825 = vmatprep.subr.bf16.mxu0 %v556
  %826 = vmatpush1.bf16.msra.mxu0 %v555
  %827 = vmatprep.subr.bf16.mxu0 %v616
  %828 = vmatpush2.bf16.msra.mxu0 %v615
  %829 = vmatprep.subr.bf16.mxu0 %v612
  %830 = vmatpush2.bf16.msra.mxu0 %v611
  %831 = vmatprep.subr.bf16.mxu0 %v608
  %832 = vmatpush2.bf16.msra.mxu0 %v607
  %833 = vmatprep.subr.bf16.mxu0 %v604
  %834 = vmatpush2.bf16.msra.mxu0 %v603
  %835 = vmatprep.subr.bf16.mxu0 %v600
  %836 = vmatpush2.bf16.msra.mxu0 %v599
  %837 = vmatprep.subr.bf16.mxu0 %v596
  %838 = vmatpush2.bf16.msra.mxu0 %v595
  %839 = vmatprep.subr.bf16.mxu0 %v592
  %840 = vmatpush2.bf16.msra.mxu0 %v591
  %841 = vmatprep.subr.bf16.mxu0 %v588
  %842 = vmatpush2.bf16.msra.mxu0 %v587
  %843 = vmatprep.mubr.bf16.mxu0 %v164
  %844 = vmatmul.mubr.bf16.gmra.mxu0 %v163
  %v845 = vpop.f32.mrf.mxu0
  %v846 = vadd.f32 0.0, %v845
  %v847 = vpop.f32.mrf.mxu0
  %v848 = vadd.f32 0.0, %v847
  %v849 = vpop.f32.mrf.mxu0
  %v850 = vadd.f32 0.0, %v849
  %v851 = vpop.f32.mrf.mxu0
  %v852 = vadd.f32 0.0, %v851
  %853 = vdwg.mxu0
  %854 = vmatprep.subr.bf16.mxu0 %v648
  %855 = vmatpush1.bf16.msra.mxu0 %v647
  %856 = vmatprep.subr.bf16.mxu0 %v644
  %857 = vmatpush1.bf16.msra.mxu0 %v643
  %858 = vmatprep.subr.bf16.mxu0 %v640
  %859 = vmatpush1.bf16.msra.mxu0 %v639
  %860 = vmatprep.subr.bf16.mxu0 %v636
  %861 = vmatpush1.bf16.msra.mxu0 %v635
  %862 = vmatprep.subr.bf16.mxu0 %v632
  %863 = vmatpush1.bf16.msra.mxu0 %v631
  %864 = vmatprep.subr.bf16.mxu0 %v628
  %865 = vmatpush1.bf16.msra.mxu0 %v627
  %866 = vmatprep.subr.bf16.mxu0 %v624
  %867 = vmatpush1.bf16.msra.mxu0 %v623
  %868 = vmatprep.subr.bf16.mxu0 %v620
  %869 = vmatpush1.bf16.msra.mxu0 %v619
  %870 = vmatprep.subr.bf16.mxu0 %v680
  %871 = vmatpush2.bf16.msra.mxu0 %v679
  %872 = vmatprep.subr.bf16.mxu0 %v676
  %873 = vmatpush2.bf16.msra.mxu0 %v675
  %874 = vmatprep.subr.bf16.mxu0 %v672
  %875 = vmatpush2.bf16.msra.mxu0 %v671
  %876 = vmatprep.subr.bf16.mxu0 %v668
  %877 = vmatpush2.bf16.msra.mxu0 %v667
  %878 = vmatprep.subr.bf16.mxu0 %v664
  %879 = vmatpush2.bf16.msra.mxu0 %v663
  %880 = vmatprep.subr.bf16.mxu0 %v660
  %881 = vmatpush2.bf16.msra.mxu0 %v659
  %882 = vmatprep.subr.bf16.mxu0 %v656
  %883 = vmatpush2.bf16.msra.mxu0 %v655
  %884 = vmatprep.subr.bf16.mxu0 %v652
  %885 = vmatpush2.bf16.msra.mxu0 %v651
  %886 = vmatprep.mubr.bf16.mxu0 %v166
  %887 = vmatmul.mubr.bf16.gmra.mxu0 %v165
  %v888 = vpop.f32.mrf.mxu0
  %v889 = vadd.f32 %v846, %v888
  %v890 = vpop.f32.mrf.mxu0
  %v891 = vadd.f32 %v848, %v890
  %v892 = vpop.f32.mrf.mxu0
  %v893 = vadd.f32 %v850, %v892
  %v894 = vpop.f32.mrf.mxu0
  %v895 = vadd.f32 %v852, %v894
  %896 = vdwg.mxu0
  %897 = vmatprep.subr.bf16.mxu0 %v586
  %898 = vmatpush1.bf16.msra.mxu0 %v585
  %899 = vmatprep.subr.bf16.mxu0 %v582
  %900 = vmatpush1.bf16.msra.mxu0 %v581
  %901 = vmatprep.subr.bf16.mxu0 %v578
  %902 = vmatpush1.bf16.msra.mxu0 %v577
  %903 = vmatprep.subr.bf16.mxu0 %v574
  %904 = vmatpush1.bf16.msra.mxu0 %v573
  %905 = vmatprep.subr.bf16.mxu0 %v570
  %906 = vmatpush1.bf16.msra.mxu0 %v569
  %907 = vmatprep.subr.bf16.mxu0 %v566
  %908 = vmatpush1.bf16.msra.mxu0 %v565
  %909 = vmatprep.subr.bf16.mxu0 %v562
  %910 = vmatpush1.bf16.msra.mxu0 %v561
  %911 = vmatprep.subr.bf16.mxu0 %v558
  %912 = vmatpush1.bf16.msra.mxu0 %v557
  %913 = vmatprep.subr.bf16.mxu0 %v618
  %914 = vmatpush2.bf16.msra.mxu0 %v617
  %915 = vmatprep.subr.bf16.mxu0 %v614
  %916 = vmatpush2.bf16.msra.mxu0 %v613
  %917 = vmatprep.subr.bf16.mxu0 %v610
  %918 = vmatpush2.bf16.msra.mxu0 %v609
  %919 = vmatprep.subr.bf16.mxu0 %v606
  %920 = vmatpush2.bf16.msra.mxu0 %v605
  %921 = vmatprep.subr.bf16.mxu0 %v602
  %922 = vmatpush2.bf16.msra.mxu0 %v601
  %923 = vmatprep.subr.bf16.mxu0 %v598
  %924 = vmatpush2.bf16.msra.mxu0 %v597
  %925 = vmatprep.subr.bf16.mxu0 %v594
  %926 = vmatpush2.bf16.msra.mxu0 %v593
  %927 = vmatprep.subr.bf16.mxu0 %v590
  %928 = vmatpush2.bf16.msra.mxu0 %v589
  %929 = vmatprep.mubr.bf16.mxu0 %v164
  %930 = vmatmul.mubr.bf16.gmra.mxu0 %v163
  %v931 = vpop.f32.mrf.mxu0
  %v932 = vadd.f32 0.0, %v931
  %v933 = vpop.f32.mrf.mxu0
  %v934 = vadd.f32 0.0, %v933
  %v935 = vpop.f32.mrf.mxu0
  %v936 = vadd.f32 0.0, %v935
  %v937 = vpop.f32.mrf.mxu0
  %v938 = vadd.f32 0.0, %v937
  %939 = vdwg.mxu0
  %940 = vmatprep.subr.bf16.mxu0 %v650
  %941 = vmatpush1.bf16.msra.mxu0 %v649
  %942 = vmatprep.subr.bf16.mxu0 %v646
  %943 = vmatpush1.bf16.msra.mxu0 %v645
  %944 = vmatprep.subr.bf16.mxu0 %v642
  %945 = vmatpush1.bf16.msra.mxu0 %v641
  %946 = vmatprep.subr.bf16.mxu0 %v638
  %947 = vmatpush1.bf16.msra.mxu0 %v637
  %948 = vmatprep.subr.bf16.mxu0 %v634
  %949 = vmatpush1.bf16.msra.mxu0 %v633
  %950 = vmatprep.subr.bf16.mxu0 %v630
  %951 = vmatpush1.bf16.msra.mxu0 %v629
  %952 = vmatprep.subr.bf16.mxu0 %v626
  %953 = vmatpush1.bf16.msra.mxu0 %v625
  %954 = vmatprep.subr.bf16.mxu0 %v622
  %955 = vmatpush1.bf16.msra.mxu0 %v621
  %956 = vmatprep.subr.bf16.mxu0 %v682
  %957 = vmatpush2.bf16.msra.mxu0 %v681
  %958 = vmatprep.subr.bf16.mxu0 %v678
  %959 = vmatpush2.bf16.msra.mxu0 %v677
  %960 = vmatprep.subr.bf16.mxu0 %v674
  %961 = vmatpush2.bf16.msra.mxu0 %v673
  %962 = vmatprep.subr.bf16.mxu0 %v670
  %963 = vmatpush2.bf16.msra.mxu0 %v669
  %964 = vmatprep.subr.bf16.mxu0 %v666
  %965 = vmatpush2.bf16.msra.mxu0 %v665
  %966 = vmatprep.subr.bf16.mxu0 %v662
  %967 = vmatpush2.bf16.msra.mxu0 %v661
  %968 = vmatprep.subr.bf16.mxu0 %v658
  %969 = vmatpush2.bf16.msra.mxu0 %v657
  %970 = vmatprep.subr.bf16.mxu0 %v654
  %971 = vmatpush2.bf16.msra.mxu0 %v653
  %972 = vmatprep.mubr.bf16.mxu0 %v166
  %973 = vmatmul.mubr.bf16.gmra.mxu0 %v165
  %v974 = vpop.f32.mrf.mxu0
  %v975 = vadd.f32 %v932, %v974
  %v976 = vpop.f32.mrf.mxu0
  %v977 = vadd.f32 %v934, %v976
  %v978 = vpop.f32.mrf.mxu0
  %v979 = vadd.f32 %v936, %v978
  %v980 = vpop.f32.mrf.mxu0
  %v981 = vadd.f32 %v938, %v980
  %982 = vdwg.mxu0
  %v987 = vunpack.c.l.b16 %v19
  %v988 = vunpack.c.h.b16 %v19
  %v989 = vunpack.c.l.b16 %v20
  %v990 = vunpack.c.h.b16 %v20
  %v991 = vunpack.c.l.b16 %v21
  %v992 = vunpack.c.h.b16 %v21
  %v993 = vunpack.c.l.b16 %v22
  %v994 = vunpack.c.h.b16 %v22
  %v995 = vpack.c.b16 %v991, %v987
  %v996 = vpack.c.b16 %v992, %v988
  %v997 = vpack.c.b16 %v993, %v989
  %v998 = vpack.c.b16 %v994, %v990
  %1003 = vmatprep.subr.bf16.mxu0 %v584
  %1004 = vmatpush1.bf16.msra.mxu0 %v583
  %1005 = vmatprep.subr.bf16.mxu0 %v580
  %1006 = vmatpush1.bf16.msra.mxu0 %v579
  %1007 = vmatprep.subr.bf16.mxu0 %v576
  %1008 = vmatpush1.bf16.msra.mxu0 %v575
  %1009 = vmatprep.subr.bf16.mxu0 %v572
  %1010 = vmatpush1.bf16.msra.mxu0 %v571
  %1011 = vmatprep.subr.bf16.mxu0 %v568
  %1012 = vmatpush1.bf16.msra.mxu0 %v567
  %1013 = vmatprep.subr.bf16.mxu0 %v564
  %1014 = vmatpush1.bf16.msra.mxu0 %v563
  %1015 = vmatprep.subr.bf16.mxu0 %v560
  %1016 = vmatpush1.bf16.msra.mxu0 %v559
  %1017 = vmatprep.subr.bf16.mxu0 %v556
  %1018 = vmatpush1.bf16.msra.mxu0 %v555
  %1019 = vmatprep.subr.bf16.mxu0 %v616
  %1020 = vmatpush2.bf16.msra.mxu0 %v615
  %1021 = vmatprep.subr.bf16.mxu0 %v612
  %1022 = vmatpush2.bf16.msra.mxu0 %v611
  %1023 = vmatprep.subr.bf16.mxu0 %v608
  %1024 = vmatpush2.bf16.msra.mxu0 %v607
  %1025 = vmatprep.subr.bf16.mxu0 %v604
  %1026 = vmatpush2.bf16.msra.mxu0 %v603
  %1027 = vmatprep.subr.bf16.mxu0 %v600
  %1028 = vmatpush2.bf16.msra.mxu0 %v599
  %1029 = vmatprep.subr.bf16.mxu0 %v596
  %1030 = vmatpush2.bf16.msra.mxu0 %v595
  %1031 = vmatprep.subr.bf16.mxu0 %v592
  %1032 = vmatpush2.bf16.msra.mxu0 %v591
  %1033 = vmatprep.subr.bf16.mxu0 %v588
  %1034 = vmatpush2.bf16.msra.mxu0 %v587
  %1035 = vmatprep.mubr.bf16.mxu0 %v996
  %1036 = vmatmul.mubr.bf16.gmra.mxu0 %v995
  %v1037 = vpop.f32.mrf.mxu0
  %v1038 = vadd.f32 0.0, %v1037
  %v1039 = vpop.f32.mrf.mxu0
  %v1040 = vadd.f32 0.0, %v1039
  %v1041 = vpop.f32.mrf.mxu0
  %v1042 = vadd.f32 0.0, %v1041
  %v1043 = vpop.f32.mrf.mxu0
  %v1044 = vadd.f32 0.0, %v1043
  %1045 = vdwg.mxu0
  %1046 = vmatprep.subr.bf16.mxu0 %v648
  %1047 = vmatpush1.bf16.msra.mxu0 %v647
  %1048 = vmatprep.subr.bf16.mxu0 %v644
  %1049 = vmatpush1.bf16.msra.mxu0 %v643
  %1050 = vmatprep.subr.bf16.mxu0 %v640
  %1051 = vmatpush1.bf16.msra.mxu0 %v639
  %1052 = vmatprep.subr.bf16.mxu0 %v636
  %1053 = vmatpush1.bf16.msra.mxu0 %v635
  %1054 = vmatprep.subr.bf16.mxu0 %v632
  %1055 = vmatpush1.bf16.msra.mxu0 %v631
  %1056 = vmatprep.subr.bf16.mxu0 %v628
  %1057 = vmatpush1.bf16.msra.mxu0 %v627
  %1058 = vmatprep.subr.bf16.mxu0 %v624
  %1059 = vmatpush1.bf16.msra.mxu0 %v623
  %1060 = vmatprep.subr.bf16.mxu0 %v620
  %1061 = vmatpush1.bf16.msra.mxu0 %v619
  %1062 = vmatprep.subr.bf16.mxu0 %v680
  %1063 = vmatpush2.bf16.msra.mxu0 %v679
  %1064 = vmatprep.subr.bf16.mxu0 %v676
  %1065 = vmatpush2.bf16.msra.mxu0 %v675
  %1066 = vmatprep.subr.bf16.mxu0 %v672
  %1067 = vmatpush2.bf16.msra.mxu0 %v671
  %1068 = vmatprep.subr.bf16.mxu0 %v668
  %1069 = vmatpush2.bf16.msra.mxu0 %v667
  %1070 = vmatprep.subr.bf16.mxu0 %v664
  %1071 = vmatpush2.bf16.msra.mxu0 %v663
  %1072 = vmatprep.subr.bf16.mxu0 %v660
  %1073 = vmatpush2.bf16.msra.mxu0 %v659
  %1074 = vmatprep.subr.bf16.mxu0 %v656
  %1075 = vmatpush2.bf16.msra.mxu0 %v655
  %1076 = vmatprep.subr.bf16.mxu0 %v652
  %1077 = vmatpush2.bf16.msra.mxu0 %v651
  %1078 = vmatprep.mubr.bf16.mxu0 %v998
  %1079 = vmatmul.mubr.bf16.gmra.mxu0 %v997
  %v1080 = vpop.f32.mrf.mxu0
  %v1081 = vadd.f32 %v1038, %v1080
  %v1082 = vpop.f32.mrf.mxu0
  %v1083 = vadd.f32 %v1040, %v1082
  %v1084 = vpop.f32.mrf.mxu0
  %v1085 = vadd.f32 %v1042, %v1084
  %v1086 = vpop.f32.mrf.mxu0
  %v1087 = vadd.f32 %v1044, %v1086
  %1088 = vdwg.mxu0
  %1089 = vmatprep.subr.bf16.mxu0 %v586
  %1090 = vmatpush1.bf16.msra.mxu0 %v585
  %1091 = vmatprep.subr.bf16.mxu0 %v582
  %1092 = vmatpush1.bf16.msra.mxu0 %v581
  %1093 = vmatprep.subr.bf16.mxu0 %v578
  %1094 = vmatpush1.bf16.msra.mxu0 %v577
  %1095 = vmatprep.subr.bf16.mxu0 %v574
  %1096 = vmatpush1.bf16.msra.mxu0 %v573
  %1097 = vmatprep.subr.bf16.mxu0 %v570
  %1098 = vmatpush1.bf16.msra.mxu0 %v569
  %1099 = vmatprep.subr.bf16.mxu0 %v566
  %1100 = vmatpush1.bf16.msra.mxu0 %v565
  %1101 = vmatprep.subr.bf16.mxu0 %v562
  %1102 = vmatpush1.bf16.msra.mxu0 %v561
  %1103 = vmatprep.subr.bf16.mxu0 %v558
  %1104 = vmatpush1.bf16.msra.mxu0 %v557
  %1105 = vmatprep.subr.bf16.mxu0 %v618
  %1106 = vmatpush2.bf16.msra.mxu0 %v617
  %1107 = vmatprep.subr.bf16.mxu0 %v614
  %1108 = vmatpush2.bf16.msra.mxu0 %v613
  %1109 = vmatprep.subr.bf16.mxu0 %v610
  %1110 = vmatpush2.bf16.msra.mxu0 %v609
  %1111 = vmatprep.subr.bf16.mxu0 %v606
  %1112 = vmatpush2.bf16.msra.mxu0 %v605
  %1113 = vmatprep.subr.bf16.mxu0 %v602
  %1114 = vmatpush2.bf16.msra.mxu0 %v601
  %1115 = vmatprep.subr.bf16.mxu0 %v598
  %1116 = vmatpush2.bf16.msra.mxu0 %v597
  %1117 = vmatprep.subr.bf16.mxu0 %v594
  %1118 = vmatpush2.bf16.msra.mxu0 %v593
  %1119 = vmatprep.subr.bf16.mxu0 %v590
  %1120 = vmatpush2.bf16.msra.mxu0 %v589
  %1121 = vmatprep.mubr.bf16.mxu0 %v996
  %1122 = vmatmul.mubr.bf16.gmra.mxu0 %v995
  %v1123 = vpop.f32.mrf.mxu0
  %v1124 = vadd.f32 0.0, %v1123
  %v1125 = vpop.f32.mrf.mxu0
  %v1126 = vadd.f32 0.0, %v1125
  %v1127 = vpop.f32.mrf.mxu0
  %v1128 = vadd.f32 0.0, %v1127
  %v1129 = vpop.f32.mrf.mxu0
  %v1130 = vadd.f32 0.0, %v1129
  %1131 = vdwg.mxu0
  %1132 = vmatprep.subr.bf16.mxu0 %v650
  %1133 = vmatpush1.bf16.msra.mxu0 %v649
  %1134 = vmatprep.subr.bf16.mxu0 %v646
  %1135 = vmatpush1.bf16.msra.mxu0 %v645
  %1136 = vmatprep.subr.bf16.mxu0 %v642
  %1137 = vmatpush1.bf16.msra.mxu0 %v641
  %1138 = vmatprep.subr.bf16.mxu0 %v638
  %1139 = vmatpush1.bf16.msra.mxu0 %v637
  %1140 = vmatprep.subr.bf16.mxu0 %v634
  %1141 = vmatpush1.bf16.msra.mxu0 %v633
  %1142 = vmatprep.subr.bf16.mxu0 %v630
  %1143 = vmatpush1.bf16.msra.mxu0 %v629
  %1144 = vmatprep.subr.bf16.mxu0 %v626
  %1145 = vmatpush1.bf16.msra.mxu0 %v625
  %1146 = vmatprep.subr.bf16.mxu0 %v622
  %1147 = vmatpush1.bf16.msra.mxu0 %v621
  %1148 = vmatprep.subr.bf16.mxu0 %v682
  %1149 = vmatpush2.bf16.msra.mxu0 %v681
  %1150 = vmatprep.subr.bf16.mxu0 %v678
  %1151 = vmatpush2.bf16.msra.mxu0 %v677
  %1152 = vmatprep.subr.bf16.mxu0 %v674
  %1153 = vmatpush2.bf16.msra.mxu0 %v673
  %1154 = vmatprep.subr.bf16.mxu0 %v670
  %1155 = vmatpush2.bf16.msra.mxu0 %v669
  %1156 = vmatprep.subr.bf16.mxu0 %v666
  %1157 = vmatpush2.bf16.msra.mxu0 %v665
  %1158 = vmatprep.subr.bf16.mxu0 %v662
  %1159 = vmatpush2.bf16.msra.mxu0 %v661
  %1160 = vmatprep.subr.bf16.mxu0 %v658
  %1161 = vmatpush2.bf16.msra.mxu0 %v657
  %1162 = vmatprep.subr.bf16.mxu0 %v654
  %1163 = vmatpush2.bf16.msra.mxu0 %v653
  %1164 = vmatprep.mubr.bf16.mxu0 %v998
  %1165 = vmatmul.mubr.bf16.gmra.mxu0 %v997
  %v1166 = vpop.f32.mrf.mxu0
  %v1167 = vadd.f32 %v1124, %v1166
  %v1168 = vpop.f32.mrf.mxu0
  %v1169 = vadd.f32 %v1126, %v1168
  %v1170 = vpop.f32.mrf.mxu0
  %v1171 = vadd.f32 %v1128, %v1170
  %v1172 = vpop.f32.mrf.mxu0
  %v1173 = vadd.f32 %v1130, %v1172
  %1174 = vdwg.mxu0
  %s1175 = scalar_lea.vmem %s1, 2048
  %v1176 = vld [vmem:[%s1175] sm:$0xff]
  %v1177 = vld [vmem:[%s1175 + $0x8] sm:$0xff]
  %v1178 = vld [vmem:[%s1175 + $0x10] sm:$0xff]
  %v1179 = vld [vmem:[%s1175 + $0x18] sm:$0xff]
  %v1180 = vld [vmem:[%s1175 + $0x20] sm:$0xff]
  %v1181 = vld [vmem:[%s1175 + $0x28] sm:$0xff]
  %v1182 = vld [vmem:[%s1175 + $0x30] sm:$0xff]
  %v1183 = vld [vmem:[%s1175 + $0x38] sm:$0xff]
  %v1184 = vld [vmem:[%s1175 + $0x40] sm:$0xff]
  %v1185 = vld [vmem:[%s1175 + $0x48] sm:$0xff]
  %v1186 = vld [vmem:[%s1175 + $0x50] sm:$0xff]
  %v1187 = vld [vmem:[%s1175 + $0x58] sm:$0xff]
  %v1188 = vld [vmem:[%s1175 + $0x60] sm:$0xff]
  %v1189 = vld [vmem:[%s1175 + $0x68] sm:$0xff]
  %v1190 = vld [vmem:[%s1175 + $0x70] sm:$0xff]
  %v1191 = vld [vmem:[%s1175 + $0x78] sm:$0xff]
  %v1192 = vld [vmem:[%s1175 + $0x80] sm:$0xff]
  %v1193 = vld [vmem:[%s1175 + $0x88] sm:$0xff]
  %v1194 = vld [vmem:[%s1175 + $0x90] sm:$0xff]
  %v1195 = vld [vmem:[%s1175 + $0x98] sm:$0xff]
  %v1196 = vld [vmem:[%s1175 + $0xa0] sm:$0xff]
  %v1197 = vld [vmem:[%s1175 + $0xa8] sm:$0xff]
  %v1198 = vld [vmem:[%s1175 + $0xb0] sm:$0xff]
  %v1199 = vld [vmem:[%s1175 + $0xb8] sm:$0xff]
  %v1200 = vld [vmem:[%s1175 + $0xc0] sm:$0xff]
  %v1201 = vld [vmem:[%s1175 + $0xc8] sm:$0xff]
  %v1202 = vld [vmem:[%s1175 + $0xd0] sm:$0xff]
  %v1203 = vld [vmem:[%s1175 + $0xd8] sm:$0xff]
  %v1204 = vld [vmem:[%s1175 + $0xe0] sm:$0xff]
  %v1205 = vld [vmem:[%s1175 + $0xe8] sm:$0xff]
  %v1206 = vld [vmem:[%s1175 + $0xf0] sm:$0xff]
  %v1207 = vld [vmem:[%s1175 + $0xf8] sm:$0xff]
  %v1208 = vld [vmem:[%s1175 + $0x100] sm:$0xff]
  %v1209 = vld [vmem:[%s1175 + $0x108] sm:$0xff]
  %v1210 = vld [vmem:[%s1175 + $0x110] sm:$0xff]
  %v1211 = vld [vmem:[%s1175 + $0x118] sm:$0xff]
  %v1212 = vld [vmem:[%s1175 + $0x120] sm:$0xff]
  %v1213 = vld [vmem:[%s1175 + $0x128] sm:$0xff]
  %v1214 = vld [vmem:[%s1175 + $0x130] sm:$0xff]
  %v1215 = vld [vmem:[%s1175 + $0x138] sm:$0xff]
  %v1216 = vld [vmem:[%s1175 + $0x140] sm:$0xff]
  %v1217 = vld [vmem:[%s1175 + $0x148] sm:$0xff]
  %v1218 = vld [vmem:[%s1175 + $0x150] sm:$0xff]
  %v1219 = vld [vmem:[%s1175 + $0x158] sm:$0xff]
  %v1220 = vld [vmem:[%s1175 + $0x160] sm:$0xff]
  %v1221 = vld [vmem:[%s1175 + $0x168] sm:$0xff]
  %v1222 = vld [vmem:[%s1175 + $0x170] sm:$0xff]
  %v1223 = vld [vmem:[%s1175 + $0x178] sm:$0xff]
  %v1224 = vld [vmem:[%s1175 + $0x180] sm:$0xff]
  %v1225 = vld [vmem:[%s1175 + $0x188] sm:$0xff]
  %v1226 = vld [vmem:[%s1175 + $0x190] sm:$0xff]
  %v1227 = vld [vmem:[%s1175 + $0x198] sm:$0xff]
  %v1228 = vld [vmem:[%s1175 + $0x1a0] sm:$0xff]
  %v1229 = vld [vmem:[%s1175 + $0x1a8] sm:$0xff]
  %v1230 = vld [vmem:[%s1175 + $0x1b0] sm:$0xff]
  %v1231 = vld [vmem:[%s1175 + $0x1b8] sm:$0xff]
  %v1232 = vld [vmem:[%s1175 + $0x1c0] sm:$0xff]
  %v1233 = vld [vmem:[%s1175 + $0x1c8] sm:$0xff]
  %v1234 = vld [vmem:[%s1175 + $0x1d0] sm:$0xff]
  %v1235 = vld [vmem:[%s1175 + $0x1d8] sm:$0xff]
  %v1236 = vld [vmem:[%s1175 + $0x1e0] sm:$0xff]
  %v1237 = vld [vmem:[%s1175 + $0x1e8] sm:$0xff]
  %v1238 = vld [vmem:[%s1175 + $0x1f0] sm:$0xff]
  %v1239 = vld [vmem:[%s1175 + $0x1f8] sm:$0xff]
  %v1240 = vld [vmem:[%s1175 + $0x200] sm:$0xff]
  %v1241 = vld [vmem:[%s1175 + $0x208] sm:$0xff]
  %v1242 = vld [vmem:[%s1175 + $0x210] sm:$0xff]
  %v1243 = vld [vmem:[%s1175 + $0x218] sm:$0xff]
  %v1244 = vld [vmem:[%s1175 + $0x220] sm:$0xff]
  %v1245 = vld [vmem:[%s1175 + $0x228] sm:$0xff]
  %v1246 = vld [vmem:[%s1175 + $0x230] sm:$0xff]
  %v1247 = vld [vmem:[%s1175 + $0x238] sm:$0xff]
  %v1248 = vld [vmem:[%s1175 + $0x240] sm:$0xff]
  %v1249 = vld [vmem:[%s1175 + $0x248] sm:$0xff]
  %v1250 = vld [vmem:[%s1175 + $0x250] sm:$0xff]
  %v1251 = vld [vmem:[%s1175 + $0x258] sm:$0xff]
  %v1252 = vld [vmem:[%s1175 + $0x260] sm:$0xff]
  %v1253 = vld [vmem:[%s1175 + $0x268] sm:$0xff]
  %v1254 = vld [vmem:[%s1175 + $0x270] sm:$0xff]
  %v1255 = vld [vmem:[%s1175 + $0x278] sm:$0xff]
  %v1256 = vld [vmem:[%s1175 + $0x280] sm:$0xff]
  %v1257 = vld [vmem:[%s1175 + $0x288] sm:$0xff]
  %v1258 = vld [vmem:[%s1175 + $0x290] sm:$0xff]
  %v1259 = vld [vmem:[%s1175 + $0x298] sm:$0xff]
  %v1260 = vld [vmem:[%s1175 + $0x2a0] sm:$0xff]
  %v1261 = vld [vmem:[%s1175 + $0x2a8] sm:$0xff]
  %v1262 = vld [vmem:[%s1175 + $0x2b0] sm:$0xff]
  %v1263 = vld [vmem:[%s1175 + $0x2b8] sm:$0xff]
  %v1264 = vld [vmem:[%s1175 + $0x2c0] sm:$0xff]
  %v1265 = vld [vmem:[%s1175 + $0x2c8] sm:$0xff]
  %v1266 = vld [vmem:[%s1175 + $0x2d0] sm:$0xff]
  %v1267 = vld [vmem:[%s1175 + $0x2d8] sm:$0xff]
  %v1268 = vld [vmem:[%s1175 + $0x2e0] sm:$0xff]
  %v1269 = vld [vmem:[%s1175 + $0x2e8] sm:$0xff]
  %v1270 = vld [vmem:[%s1175 + $0x2f0] sm:$0xff]
  %v1271 = vld [vmem:[%s1175 + $0x2f8] sm:$0xff]
  %v1272 = vld [vmem:[%s1175 + $0x300] sm:$0xff]
  %v1273 = vld [vmem:[%s1175 + $0x308] sm:$0xff]
  %v1274 = vld [vmem:[%s1175 + $0x310] sm:$0xff]
  %v1275 = vld [vmem:[%s1175 + $0x318] sm:$0xff]
  %v1276 = vld [vmem:[%s1175 + $0x320] sm:$0xff]
  %v1277 = vld [vmem:[%s1175 + $0x328] sm:$0xff]
  %v1278 = vld [vmem:[%s1175 + $0x330] sm:$0xff]
  %v1279 = vld [vmem:[%s1175 + $0x338] sm:$0xff]
  %v1280 = vld [vmem:[%s1175 + $0x340] sm:$0xff]
  %v1281 = vld [vmem:[%s1175 + $0x348] sm:$0xff]
  %v1282 = vld [vmem:[%s1175 + $0x350] sm:$0xff]
  %v1283 = vld [vmem:[%s1175 + $0x358] sm:$0xff]
  %v1284 = vld [vmem:[%s1175 + $0x360] sm:$0xff]
  %v1285 = vld [vmem:[%s1175 + $0x368] sm:$0xff]
  %v1286 = vld [vmem:[%s1175 + $0x370] sm:$0xff]
  %v1287 = vld [vmem:[%s1175 + $0x378] sm:$0xff]
  %v1288 = vld [vmem:[%s1175 + $0x380] sm:$0xff]
  %v1289 = vld [vmem:[%s1175 + $0x388] sm:$0xff]
  %v1290 = vld [vmem:[%s1175 + $0x390] sm:$0xff]
  %v1291 = vld [vmem:[%s1175 + $0x398] sm:$0xff]
  %v1292 = vld [vmem:[%s1175 + $0x3a0] sm:$0xff]
  %v1293 = vld [vmem:[%s1175 + $0x3a8] sm:$0xff]
  %v1294 = vld [vmem:[%s1175 + $0x3b0] sm:$0xff]
  %v1295 = vld [vmem:[%s1175 + $0x3b8] sm:$0xff]
  %v1296 = vld [vmem:[%s1175 + $0x3c0] sm:$0xff]
  %v1297 = vld [vmem:[%s1175 + $0x3c8] sm:$0xff]
  %v1298 = vld [vmem:[%s1175 + $0x3d0] sm:$0xff]
  %v1299 = vld [vmem:[%s1175 + $0x3d8] sm:$0xff]
  %v1300 = vld [vmem:[%s1175 + $0x3e0] sm:$0xff]
  %v1301 = vld [vmem:[%s1175 + $0x3e8] sm:$0xff]
  %v1302 = vld [vmem:[%s1175 + $0x3f0] sm:$0xff]
  %v1303 = vld [vmem:[%s1175 + $0x3f8] sm:$0xff]
  %v1432 = vunpack.c.l.b16 %v1176
  %v1433 = vunpack.c.h.b16 %v1176
  %v1434 = vunpack.c.l.b16 %v1177
  %v1435 = vunpack.c.h.b16 %v1177
  %v1436 = vunpack.c.l.b16 %v1178
  %v1437 = vunpack.c.h.b16 %v1178
  %v1438 = vunpack.c.l.b16 %v1179
  %v1439 = vunpack.c.h.b16 %v1179
  %v1440 = vunpack.c.l.b16 %v1180
  %v1441 = vunpack.c.h.b16 %v1180
  %v1442 = vunpack.c.l.b16 %v1181
  %v1443 = vunpack.c.h.b16 %v1181
  %v1444 = vunpack.c.l.b16 %v1182
  %v1445 = vunpack.c.h.b16 %v1182
  %v1446 = vunpack.c.l.b16 %v1183
  %v1447 = vunpack.c.h.b16 %v1183
  %v1448 = vunpack.c.l.b16 %v1184
  %v1449 = vunpack.c.h.b16 %v1184
  %v1450 = vunpack.c.l.b16 %v1185
  %v1451 = vunpack.c.h.b16 %v1185
  %v1452 = vunpack.c.l.b16 %v1186
  %v1453 = vunpack.c.h.b16 %v1186
  %v1454 = vunpack.c.l.b16 %v1187
  %v1455 = vunpack.c.h.b16 %v1187
  %v1456 = vunpack.c.l.b16 %v1188
  %v1457 = vunpack.c.h.b16 %v1188
  %v1458 = vunpack.c.l.b16 %v1189
  %v1459 = vunpack.c.h.b16 %v1189
  %v1460 = vunpack.c.l.b16 %v1190
  %v1461 = vunpack.c.h.b16 %v1190
  %v1462 = vunpack.c.l.b16 %v1191
  %v1463 = vunpack.c.h.b16 %v1191
  %v1464 = vunpack.c.l.b16 %v1192
  %v1465 = vunpack.c.h.b16 %v1192
  %v1466 = vunpack.c.l.b16 %v1193
  %v1467 = vunpack.c.h.b16 %v1193
  %v1468 = vunpack.c.l.b16 %v1194
  %v1469 = vunpack.c.h.b16 %v1194
  %v1470 = vunpack.c.l.b16 %v1195
  %v1471 = vunpack.c.h.b16 %v1195
  %v1472 = vunpack.c.l.b16 %v1196
  %v1473 = vunpack.c.h.b16 %v1196
  %v1474 = vunpack.c.l.b16 %v1197
  %v1475 = vunpack.c.h.b16 %v1197
  %v1476 = vunpack.c.l.b16 %v1198
  %v1477 = vunpack.c.h.b16 %v1198
  %v1478 = vunpack.c.l.b16 %v1199
  %v1479 = vunpack.c.h.b16 %v1199
  %v1480 = vunpack.c.l.b16 %v1200
  %v1481 = vunpack.c.h.b16 %v1200
  %v1482 = vunpack.c.l.b16 %v1201
  %v1483 = vunpack.c.h.b16 %v1201
  %v1484 = vunpack.c.l.b16 %v1202
  %v1485 = vunpack.c.h.b16 %v1202
  %v1486 = vunpack.c.l.b16 %v1203
  %v1487 = vunpack.c.h.b16 %v1203
  %v1488 = vunpack.c.l.b16 %v1204
  %v1489 = vunpack.c.h.b16 %v1204
  %v1490 = vunpack.c.l.b16 %v1205
  %v1491 = vunpack.c.h.b16 %v1205
  %v1492 = vunpack.c.l.b16 %v1206
  %v1493 = vunpack.c.h.b16 %v1206
  %v1494 = vunpack.c.l.b16 %v1207
  %v1495 = vunpack.c.h.b16 %v1207
  %v1496 = vunpack.c.l.b16 %v1208
  %v1497 = vunpack.c.h.b16 %v1208
  %v1498 = vunpack.c.l.b16 %v1209
  %v1499 = vunpack.c.h.b16 %v1209
  %v1500 = vunpack.c.l.b16 %v1210
  %v1501 = vunpack.c.h.b16 %v1210
  %v1502 = vunpack.c.l.b16 %v1211
  %v1503 = vunpack.c.h.b16 %v1211
  %v1504 = vunpack.c.l.b16 %v1212
  %v1505 = vunpack.c.h.b16 %v1212
  %v1506 = vunpack.c.l.b16 %v1213
  %v1507 = vunpack.c.h.b16 %v1213
  %v1508 = vunpack.c.l.b16 %v1214
  %v1509 = vunpack.c.h.b16 %v1214
  %v1510 = vunpack.c.l.b16 %v1215
  %v1511 = vunpack.c.h.b16 %v1215
  %v1512 = vunpack.c.l.b16 %v1216
  %v1513 = vunpack.c.h.b16 %v1216
  %v1514 = vunpack.c.l.b16 %v1217
  %v1515 = vunpack.c.h.b16 %v1217
  %v1516 = vunpack.c.l.b16 %v1218
  %v1517 = vunpack.c.h.b16 %v1218
  %v1518 = vunpack.c.l.b16 %v1219
  %v1519 = vunpack.c.h.b16 %v1219
  %v1520 = vunpack.c.l.b16 %v1220
  %v1521 = vunpack.c.h.b16 %v1220
  %v1522 = vunpack.c.l.b16 %v1221
  %v1523 = vunpack.c.h.b16 %v1221
  %v1524 = vunpack.c.l.b16 %v1222
  %v1525 = vunpack.c.h.b16 %v1222
  %v1526 = vunpack.c.l.b16 %v1223
  %v1527 = vunpack.c.h.b16 %v1223
  %v1528 = vunpack.c.l.b16 %v1224
  %v1529 = vunpack.c.h.b16 %v1224
  %v1530 = vunpack.c.l.b16 %v1225
  %v1531 = vunpack.c.h.b16 %v1225
  %v1532 = vunpack.c.l.b16 %v1226
  %v1533 = vunpack.c.h.b16 %v1226
  %v1534 = vunpack.c.l.b16 %v1227
  %v1535 = vunpack.c.h.b16 %v1227
  %v1536 = vunpack.c.l.b16 %v1228
  %v1537 = vunpack.c.h.b16 %v1228
  %v1538 = vunpack.c.l.b16 %v1229
  %v1539 = vunpack.c.h.b16 %v1229
  %v1540 = vunpack.c.l.b16 %v1230
  %v1541 = vunpack.c.h.b16 %v1230
  %v1542 = vunpack.c.l.b16 %v1231
  %v1543 = vunpack.c.h.b16 %v1231
  %v1544 = vunpack.c.l.b16 %v1232
  %v1545 = vunpack.c.h.b16 %v1232
  %v1546 = vunpack.c.l.b16 %v1233
  %v1547 = vunpack.c.h.b16 %v1233
  %v1548 = vunpack.c.l.b16 %v1234
  %v1549 = vunpack.c.h.b16 %v1234
  %v1550 = vunpack.c.l.b16 %v1235
  %v1551 = vunpack.c.h.b16 %v1235
  %v1552 = vunpack.c.l.b16 %v1236
  %v1553 = vunpack.c.h.b16 %v1236
  %v1554 = vunpack.c.l.b16 %v1237
  %v1555 = vunpack.c.h.b16 %v1237
  %v1556 = vunpack.c.l.b16 %v1238
  %v1557 = vunpack.c.h.b16 %v1238
  %v1558 = vunpack.c.l.b16 %v1239
  %v1559 = vunpack.c.h.b16 %v1239
  %v1560 = vunpack.c.l.b16 %v1240
  %v1561 = vunpack.c.h.b16 %v1240
  %v1562 = vunpack.c.l.b16 %v1241
  %v1563 = vunpack.c.h.b16 %v1241
  %v1564 = vunpack.c.l.b16 %v1242
  %v1565 = vunpack.c.h.b16 %v1242
  %v1566 = vunpack.c.l.b16 %v1243
  %v1567 = vunpack.c.h.b16 %v1243
  %v1568 = vunpack.c.l.b16 %v1244
  %v1569 = vunpack.c.h.b16 %v1244
  %v1570 = vunpack.c.l.b16 %v1245
  %v1571 = vunpack.c.h.b16 %v1245
  %v1572 = vunpack.c.l.b16 %v1246
  %v1573 = vunpack.c.h.b16 %v1246
  %v1574 = vunpack.c.l.b16 %v1247
  %v1575 = vunpack.c.h.b16 %v1247
  %v1576 = vunpack.c.l.b16 %v1248
  %v1577 = vunpack.c.h.b16 %v1248
  %v1578 = vunpack.c.l.b16 %v1249
  %v1579 = vunpack.c.h.b16 %v1249
  %v1580 = vunpack.c.l.b16 %v1250
  %v1581 = vunpack.c.h.b16 %v1250
  %v1582 = vunpack.c.l.b16 %v1251
  %v1583 = vunpack.c.h.b16 %v1251
  %v1584 = vunpack.c.l.b16 %v1252
  %v1585 = vunpack.c.h.b16 %v1252
  %v1586 = vunpack.c.l.b16 %v1253
  %v1587 = vunpack.c.h.b16 %v1253
  %v1588 = vunpack.c.l.b16 %v1254
  %v1589 = vunpack.c.h.b16 %v1254
  %v1590 = vunpack.c.l.b16 %v1255
  %v1591 = vunpack.c.h.b16 %v1255
  %v1592 = vunpack.c.l.b16 %v1256
  %v1593 = vunpack.c.h.b16 %v1256
  %v1594 = vunpack.c.l.b16 %v1257
  %v1595 = vunpack.c.h.b16 %v1257
  %v1596 = vunpack.c.l.b16 %v1258
  %v1597 = vunpack.c.h.b16 %v1258
  %v1598 = vunpack.c.l.b16 %v1259
  %v1599 = vunpack.c.h.b16 %v1259
  %v1600 = vunpack.c.l.b16 %v1260
  %v1601 = vunpack.c.h.b16 %v1260
  %v1602 = vunpack.c.l.b16 %v1261
  %v1603 = vunpack.c.h.b16 %v1261
  %v1604 = vunpack.c.l.b16 %v1262
  %v1605 = vunpack.c.h.b16 %v1262
  %v1606 = vunpack.c.l.b16 %v1263
  %v1607 = vunpack.c.h.b16 %v1263
  %v1608 = vunpack.c.l.b16 %v1264
  %v1609 = vunpack.c.h.b16 %v1264
  %v1610 = vunpack.c.l.b16 %v1265
  %v1611 = vunpack.c.h.b16 %v1265
  %v1612 = vunpack.c.l.b16 %v1266
  %v1613 = vunpack.c.h.b16 %v1266
  %v1614 = vunpack.c.l.b16 %v1267
  %v1615 = vunpack.c.h.b16 %v1267
  %v1616 = vunpack.c.l.b16 %v1268
  %v1617 = vunpack.c.h.b16 %v1268
  %v1618 = vunpack.c.l.b16 %v1269
  %v1619 = vunpack.c.h.b16 %v1269
  %v1620 = vunpack.c.l.b16 %v1270
  %v1621 = vunpack.c.h.b16 %v1270
  %v1622 = vunpack.c.l.b16 %v1271
  %v1623 = vunpack.c.h.b16 %v1271
  %v1624 = vunpack.c.l.b16 %v1272
  %v1625 = vunpack.c.h.b16 %v1272
  %v1626 = vunpack.c.l.b16 %v1273
  %v1627 = vunpack.c.h.b16 %v1273
  %v1628 = vunpack.c.l.b16 %v1274
  %v1629 = vunpack.c.h.b16 %v1274
  %v1630 = vunpack.c.l.b16 %v1275
  %v1631 = vunpack.c.h.b16 %v1275
  %v1632 = vunpack.c.l.b16 %v1276
  %v1633 = vunpack.c.h.b16 %v1276
  %v1634 = vunpack.c.l.b16 %v1277
  %v1635 = vunpack.c.h.b16 %v1277
  %v1636 = vunpack.c.l.b16 %v1278
  %v1637 = vunpack.c.h.b16 %v1278
  %v1638 = vunpack.c.l.b16 %v1279
  %v1639 = vunpack.c.h.b16 %v1279
  %v1640 = vunpack.c.l.b16 %v1280
  %v1641 = vunpack.c.h.b16 %v1280
  %v1642 = vunpack.c.l.b16 %v1281
  %v1643 = vunpack.c.h.b16 %v1281
  %v1644 = vunpack.c.l.b16 %v1282
  %v1645 = vunpack.c.h.b16 %v1282
  %v1646 = vunpack.c.l.b16 %v1283
  %v1647 = vunpack.c.h.b16 %v1283
  %v1648 = vunpack.c.l.b16 %v1284
  %v1649 = vunpack.c.h.b16 %v1284
  %v1650 = vunpack.c.l.b16 %v1285
  %v1651 = vunpack.c.h.b16 %v1285
  %v1652 = vunpack.c.l.b16 %v1286
  %v1653 = vunpack.c.h.b16 %v1286
  %v1654 = vunpack.c.l.b16 %v1287
  %v1655 = vunpack.c.h.b16 %v1287
  %v1656 = vunpack.c.l.b16 %v1288
  %v1657 = vunpack.c.h.b16 %v1288
  %v1658 = vunpack.c.l.b16 %v1289
  %v1659 = vunpack.c.h.b16 %v1289
  %v1660 = vunpack.c.l.b16 %v1290
  %v1661 = vunpack.c.h.b16 %v1290
  %v1662 = vunpack.c.l.b16 %v1291
  %v1663 = vunpack.c.h.b16 %v1291
  %v1664 = vunpack.c.l.b16 %v1292
  %v1665 = vunpack.c.h.b16 %v1292
  %v1666 = vunpack.c.l.b16 %v1293
  %v1667 = vunpack.c.h.b16 %v1293
  %v1668 = vunpack.c.l.b16 %v1294
  %v1669 = vunpack.c.h.b16 %v1294
  %v1670 = vunpack.c.l.b16 %v1295
  %v1671 = vunpack.c.h.b16 %v1295
  %v1672 = vunpack.c.l.b16 %v1296
  %v1673 = vunpack.c.h.b16 %v1296
  %v1674 = vunpack.c.l.b16 %v1297
  %v1675 = vunpack.c.h.b16 %v1297
  %v1676 = vunpack.c.l.b16 %v1298
  %v1677 = vunpack.c.h.b16 %v1298
  %v1678 = vunpack.c.l.b16 %v1299
  %v1679 = vunpack.c.h.b16 %v1299
  %v1680 = vunpack.c.l.b16 %v1300
  %v1681 = vunpack.c.h.b16 %v1300
  %v1682 = vunpack.c.l.b16 %v1301
  %v1683 = vunpack.c.h.b16 %v1301
  %v1684 = vunpack.c.l.b16 %v1302
  %v1685 = vunpack.c.h.b16 %v1302
  %v1686 = vunpack.c.l.b16 %v1303
  %v1687 = vunpack.c.h.b16 %v1303
  %v1688 = vpack.c.b16 %v1436, %v1432
  %v1689 = vpack.c.b16 %v1437, %v1433
  %v1690 = vpack.c.b16 %v1438, %v1434
  %v1691 = vpack.c.b16 %v1439, %v1435
  %v1692 = vpack.c.b16 %v1444, %v1440
  %v1693 = vpack.c.b16 %v1445, %v1441
  %v1694 = vpack.c.b16 %v1446, %v1442
  %v1695 = vpack.c.b16 %v1447, %v1443
  %v1696 = vpack.c.b16 %v1452, %v1448
  %v1697 = vpack.c.b16 %v1453, %v1449
  %v1698 = vpack.c.b16 %v1454, %v1450
  %v1699 = vpack.c.b16 %v1455, %v1451
  %v1700 = vpack.c.b16 %v1460, %v1456
  %v1701 = vpack.c.b16 %v1461, %v1457
  %v1702 = vpack.c.b16 %v1462, %v1458
  %v1703 = vpack.c.b16 %v1463, %v1459
  %v1704 = vpack.c.b16 %v1468, %v1464
  %v1705 = vpack.c.b16 %v1469, %v1465
  %v1706 = vpack.c.b16 %v1470, %v1466
  %v1707 = vpack.c.b16 %v1471, %v1467
  %v1708 = vpack.c.b16 %v1476, %v1472
  %v1709 = vpack.c.b16 %v1477, %v1473
  %v1710 = vpack.c.b16 %v1478, %v1474
  %v1711 = vpack.c.b16 %v1479, %v1475
  %v1712 = vpack.c.b16 %v1484, %v1480
  %v1713 = vpack.c.b16 %v1485, %v1481
  %v1714 = vpack.c.b16 %v1486, %v1482
  %v1715 = vpack.c.b16 %v1487, %v1483
  %v1716 = vpack.c.b16 %v1492, %v1488
  %v1717 = vpack.c.b16 %v1493, %v1489
  %v1718 = vpack.c.b16 %v1494, %v1490
  %v1719 = vpack.c.b16 %v1495, %v1491
  %v1720 = vpack.c.b16 %v1500, %v1496
  %v1721 = vpack.c.b16 %v1501, %v1497
  %v1722 = vpack.c.b16 %v1502, %v1498
  %v1723 = vpack.c.b16 %v1503, %v1499
  %v1724 = vpack.c.b16 %v1508, %v1504
  %v1725 = vpack.c.b16 %v1509, %v1505
  %v1726 = vpack.c.b16 %v1510, %v1506
  %v1727 = vpack.c.b16 %v1511, %v1507
  %v1728 = vpack.c.b16 %v1516, %v1512
  %v1729 = vpack.c.b16 %v1517, %v1513
  %v1730 = vpack.c.b16 %v1518, %v1514
  %v1731 = vpack.c.b16 %v1519, %v1515
  %v1732 = vpack.c.b16 %v1524, %v1520
  %v1733 = vpack.c.b16 %v1525, %v1521
  %v1734 = vpack.c.b16 %v1526, %v1522
  %v1735 = vpack.c.b16 %v1527, %v1523
  %v1736 = vpack.c.b16 %v1532, %v1528
  %v1737 = vpack.c.b16 %v1533, %v1529
  %v1738 = vpack.c.b16 %v1534, %v1530
  %v1739 = vpack.c.b16 %v1535, %v1531
  %v1740 = vpack.c.b16 %v1540, %v1536
  %v1741 = vpack.c.b16 %v1541, %v1537
  %v1742 = vpack.c.b16 %v1542, %v1538
  %v1743 = vpack.c.b16 %v1543, %v1539
  %v1744 = vpack.c.b16 %v1548, %v1544
  %v1745 = vpack.c.b16 %v1549, %v1545
  %v1746 = vpack.c.b16 %v1550, %v1546
  %v1747 = vpack.c.b16 %v1551, %v1547
  %v1748 = vpack.c.b16 %v1556, %v1552
  %v1749 = vpack.c.b16 %v1557, %v1553
  %v1750 = vpack.c.b16 %v1558, %v1554
  %v1751 = vpack.c.b16 %v1559, %v1555
  %v1752 = vpack.c.b16 %v1564, %v1560
  %v1753 = vpack.c.b16 %v1565, %v1561
  %v1754 = vpack.c.b16 %v1566, %v1562
  %v1755 = vpack.c.b16 %v1567, %v1563
  %v1756 = vpack.c.b16 %v1572, %v1568
  %v1757 = vpack.c.b16 %v1573, %v1569
  %v1758 = vpack.c.b16 %v1574, %v1570
  %v1759 = vpack.c.b16 %v1575, %v1571
  %v1760 = vpack.c.b16 %v1580, %v1576
  %v1761 = vpack.c.b16 %v1581, %v1577
  %v1762 = vpack.c.b16 %v1582, %v1578
  %v1763 = vpack.c.b16 %v1583, %v1579
  %v1764 = vpack.c.b16 %v1588, %v1584
  %v1765 = vpack.c.b16 %v1589, %v1585
  %v1766 = vpack.c.b16 %v1590, %v1586
  %v1767 = vpack.c.b16 %v1591, %v1587
  %v1768 = vpack.c.b16 %v1596, %v1592
  %v1769 = vpack.c.b16 %v1597, %v1593
  %v1770 = vpack.c.b16 %v1598, %v1594
  %v1771 = vpack.c.b16 %v1599, %v1595
  %v1772 = vpack.c.b16 %v1604, %v1600
  %v1773 = vpack.c.b16 %v1605, %v1601
  %v1774 = vpack.c.b16 %v1606, %v1602
  %v1775 = vpack.c.b16 %v1607, %v1603
  %v1776 = vpack.c.b16 %v1612, %v1608
  %v1777 = vpack.c.b16 %v1613, %v1609
  %v1778 = vpack.c.b16 %v1614, %v1610
  %v1779 = vpack.c.b16 %v1615, %v1611
  %v1780 = vpack.c.b16 %v1620, %v1616
  %v1781 = vpack.c.b16 %v1621, %v1617
  %v1782 = vpack.c.b16 %v1622, %v1618
  %v1783 = vpack.c.b16 %v1623, %v1619
  %v1784 = vpack.c.b16 %v1628, %v1624
  %v1785 = vpack.c.b16 %v1629, %v1625
  %v1786 = vpack.c.b16 %v1630, %v1626
  %v1787 = vpack.c.b16 %v1631, %v1627
  %v1788 = vpack.c.b16 %v1636, %v1632
  %v1789 = vpack.c.b16 %v1637, %v1633
  %v1790 = vpack.c.b16 %v1638, %v1634
  %v1791 = vpack.c.b16 %v1639, %v1635
  %v1792 = vpack.c.b16 %v1644, %v1640
  %v1793 = vpack.c.b16 %v1645, %v1641
  %v1794 = vpack.c.b16 %v1646, %v1642
  %v1795 = vpack.c.b16 %v1647, %v1643
  %v1796 = vpack.c.b16 %v1652, %v1648
  %v1797 = vpack.c.b16 %v1653, %v1649
  %v1798 = vpack.c.b16 %v1654, %v1650
  %v1799 = vpack.c.b16 %v1655, %v1651
  %v1800 = vpack.c.b16 %v1660, %v1656
  %v1801 = vpack.c.b16 %v1661, %v1657
  %v1802 = vpack.c.b16 %v1662, %v1658
  %v1803 = vpack.c.b16 %v1663, %v1659
  %v1804 = vpack.c.b16 %v1668, %v1664
  %v1805 = vpack.c.b16 %v1669, %v1665
  %v1806 = vpack.c.b16 %v1670, %v1666
  %v1807 = vpack.c.b16 %v1671, %v1667
  %v1808 = vpack.c.b16 %v1676, %v1672
  %v1809 = vpack.c.b16 %v1677, %v1673
  %v1810 = vpack.c.b16 %v1678, %v1674
  %v1811 = vpack.c.b16 %v1679, %v1675
  %v1812 = vpack.c.b16 %v1684, %v1680
  %v1813 = vpack.c.b16 %v1685, %v1681
  %v1814 = vpack.c.b16 %v1686, %v1682
  %v1815 = vpack.c.b16 %v1687, %v1683
  %1944 = vmatprep.subr.bf16.mxu0 %v1717
  %1945 = vmatpush1.bf16.msra.mxu0 %v1716
  %1946 = vmatprep.subr.bf16.mxu0 %v1713
  %1947 = vmatpush1.bf16.msra.mxu0 %v1712
  %1948 = vmatprep.subr.bf16.mxu0 %v1709
  %1949 = vmatpush1.bf16.msra.mxu0 %v1708
  %1950 = vmatprep.subr.bf16.mxu0 %v1705
  %1951 = vmatpush1.bf16.msra.mxu0 %v1704
  %1952 = vmatprep.subr.bf16.mxu0 %v1701
  %1953 = vmatpush1.bf16.msra.mxu0 %v1700
  %1954 = vmatprep.subr.bf16.mxu0 %v1697
  %1955 = vmatpush1.bf16.msra.mxu0 %v1696
  %1956 = vmatprep.subr.bf16.mxu0 %v1693
  %1957 = vmatpush1.bf16.msra.mxu0 %v1692
  %1958 = vmatprep.subr.bf16.mxu0 %v1689
  %1959 = vmatpush1.bf16.msra.mxu0 %v1688
  %1960 = vmatprep.subr.bf16.mxu0 %v1749
  %1961 = vmatpush2.bf16.msra.mxu0 %v1748
  %1962 = vmatprep.subr.bf16.mxu0 %v1745
  %1963 = vmatpush2.bf16.msra.mxu0 %v1744
  %1964 = vmatprep.subr.bf16.mxu0 %v1741
  %1965 = vmatpush2.bf16.msra.mxu0 %v1740
  %1966 = vmatprep.subr.bf16.mxu0 %v1737
  %1967 = vmatpush2.bf16.msra.mxu0 %v1736
  %1968 = vmatprep.subr.bf16.mxu0 %v1733
  %1969 = vmatpush2.bf16.msra.mxu0 %v1732
  %1970 = vmatprep.subr.bf16.mxu0 %v1729
  %1971 = vmatpush2.bf16.msra.mxu0 %v1728
  %1972 = vmatprep.subr.bf16.mxu0 %v1725
  %1973 = vmatpush2.bf16.msra.mxu0 %v1724
  %1974 = vmatprep.subr.bf16.mxu0 %v1721
  %1975 = vmatpush2.bf16.msra.mxu0 %v1720
  %1976 = vmatprep.mubr.bf16.mxu0 %v164
  %1977 = vmatmul.mubr.bf16.gmra.mxu0 %v163
  %v1978 = vpop.f32.mrf.mxu0
  %v1979 = vadd.f32 0.0, %v1978
  %v1980 = vpop.f32.mrf.mxu0
  %v1981 = vadd.f32 0.0, %v1980
  %v1982 = vpop.f32.mrf.mxu0
  %v1983 = vadd.f32 0.0, %v1982
  %v1984 = vpop.f32.mrf.mxu0
  %v1985 = vadd.f32 0.0, %v1984
  %1986 = vdwg.mxu0
  %1987 = vmatprep.subr.bf16.mxu0 %v1781
  %1988 = vmatpush1.bf16.msra.mxu0 %v1780
  %1989 = vmatprep.subr.bf16.mxu0 %v1777
  %1990 = vmatpush1.bf16.msra.mxu0 %v1776
  %1991 = vmatprep.subr.bf16.mxu0 %v1773
  %1992 = vmatpush1.bf16.msra.mxu0 %v1772
  %1993 = vmatprep.subr.bf16.mxu0 %v1769
  %1994 = vmatpush1.bf16.msra.mxu0 %v1768
  %1995 = vmatprep.subr.bf16.mxu0 %v1765
  %1996 = vmatpush1.bf16.msra.mxu0 %v1764
  %1997 = vmatprep.subr.bf16.mxu0 %v1761
  %1998 = vmatpush1.bf16.msra.mxu0 %v1760
  %1999 = vmatprep.subr.bf16.mxu0 %v1757
  %2000 = vmatpush1.bf16.msra.mxu0 %v1756
  %2001 = vmatprep.subr.bf16.mxu0 %v1753
  %2002 = vmatpush1.bf16.msra.mxu0 %v1752
  %2003 = vmatprep.subr.bf16.mxu0 %v1813
  %2004 = vmatpush2.bf16.msra.mxu0 %v1812
  %2005 = vmatprep.subr.bf16.mxu0 %v1809
  %2006 = vmatpush2.bf16.msra.mxu0 %v1808
  %2007 = vmatprep.subr.bf16.mxu0 %v1805
  %2008 = vmatpush2.bf16.msra.mxu0 %v1804
  %2009 = vmatprep.subr.bf16.mxu0 %v1801
  %2010 = vmatpush2.bf16.msra.mxu0 %v1800
  %2011 = vmatprep.subr.bf16.mxu0 %v1797
  %2012 = vmatpush2.bf16.msra.mxu0 %v1796
  %2013 = vmatprep.subr.bf16.mxu0 %v1793
  %2014 = vmatpush2.bf16.msra.mxu0 %v1792
  %2015 = vmatprep.subr.bf16.mxu0 %v1789
  %2016 = vmatpush2.bf16.msra.mxu0 %v1788
  %2017 = vmatprep.subr.bf16.mxu0 %v1785
  %2018 = vmatpush2.bf16.msra.mxu0 %v1784
  %2019 = vmatprep.mubr.bf16.mxu0 %v166
  %2020 = vmatmul.mubr.bf16.gmra.mxu0 %v165
  %v2021 = vpop.f32.mrf.mxu0
  %v2022 = vadd.f32 %v1979, %v2021
  %v2023 = vpop.f32.mrf.mxu0
  %v2024 = vadd.f32 %v1981, %v2023
  %v2025 = vpop.f32.mrf.mxu0
  %v2026 = vadd.f32 %v1983, %v2025
  %v2027 = vpop.f32.mrf.mxu0
  %v2028 = vadd.f32 %v1985, %v2027
  %2029 = vdwg.mxu0
  %2030 = vmatprep.subr.bf16.mxu0 %v1719
  %2031 = vmatpush1.bf16.msra.mxu0 %v1718
  %2032 = vmatprep.subr.bf16.mxu0 %v1715
  %2033 = vmatpush1.bf16.msra.mxu0 %v1714
  %2034 = vmatprep.subr.bf16.mxu0 %v1711
  %2035 = vmatpush1.bf16.msra.mxu0 %v1710
  %2036 = vmatprep.subr.bf16.mxu0 %v1707
  %2037 = vmatpush1.bf16.msra.mxu0 %v1706
  %2038 = vmatprep.subr.bf16.mxu0 %v1703
  %2039 = vmatpush1.bf16.msra.mxu0 %v1702
  %2040 = vmatprep.subr.bf16.mxu0 %v1699
  %2041 = vmatpush1.bf16.msra.mxu0 %v1698
  %2042 = vmatprep.subr.bf16.mxu0 %v1695
  %2043 = vmatpush1.bf16.msra.mxu0 %v1694
  %2044 = vmatprep.subr.bf16.mxu0 %v1691
  %2045 = vmatpush1.bf16.msra.mxu0 %v1690
  %2046 = vmatprep.subr.bf16.mxu0 %v1751
  %2047 = vmatpush2.bf16.msra.mxu0 %v1750
  %2048 = vmatprep.subr.bf16.mxu0 %v1747
  %2049 = vmatpush2.bf16.msra.mxu0 %v1746
  %2050 = vmatprep.subr.bf16.mxu0 %v1743
  %2051 = vmatpush2.bf16.msra.mxu0 %v1742
  %2052 = vmatprep.subr.bf16.mxu0 %v1739
  %2053 = vmatpush2.bf16.msra.mxu0 %v1738
  %2054 = vmatprep.subr.bf16.mxu0 %v1735
  %2055 = vmatpush2.bf16.msra.mxu0 %v1734
  %2056 = vmatprep.subr.bf16.mxu0 %v1731
  %2057 = vmatpush2.bf16.msra.mxu0 %v1730
  %2058 = vmatprep.subr.bf16.mxu0 %v1727
  %2059 = vmatpush2.bf16.msra.mxu0 %v1726
  %2060 = vmatprep.subr.bf16.mxu0 %v1723
  %2061 = vmatpush2.bf16.msra.mxu0 %v1722
  %2062 = vmatprep.mubr.bf16.mxu0 %v164
  %2063 = vmatmul.mubr.bf16.gmra.mxu0 %v163
  %v2064 = vpop.f32.mrf.mxu0
  %v2065 = vadd.f32 0.0, %v2064
  %v2066 = vpop.f32.mrf.mxu0
  %v2067 = vadd.f32 0.0, %v2066
  %v2068 = vpop.f32.mrf.mxu0
  %v2069 = vadd.f32 0.0, %v2068
  %v2070 = vpop.f32.mrf.mxu0
  %v2071 = vadd.f32 0.0, %v2070
  %2072 = vdwg.mxu0
  %2073 = vmatprep.subr.bf16.mxu0 %v1783
  %2074 = vmatpush1.bf16.msra.mxu0 %v1782
  %2075 = vmatprep.subr.bf16.mxu0 %v1779
  %2076 = vmatpush1.bf16.msra.mxu0 %v1778
  %2077 = vmatprep.subr.bf16.mxu0 %v1775
  %2078 = vmatpush1.bf16.msra.mxu0 %v1774
  %2079 = vmatprep.subr.bf16.mxu0 %v1771
  %2080 = vmatpush1.bf16.msra.mxu0 %v1770
  %2081 = vmatprep.subr.bf16.mxu0 %v1767
  %2082 = vmatpush1.bf16.msra.mxu0 %v1766
  %2083 = vmatprep.subr.bf16.mxu0 %v1763
  %2084 = vmatpush1.bf16.msra.mxu0 %v1762
  %2085 = vmatprep.subr.bf16.mxu0 %v1759
  %2086 = vmatpush1.bf16.msra.mxu0 %v1758
  %2087 = vmatprep.subr.bf16.mxu0 %v1755
  %2088 = vmatpush1.bf16.msra.mxu0 %v1754
  %2089 = vmatprep.subr.bf16.mxu0 %v1815
  %2090 = vmatpush2.bf16.msra.mxu0 %v1814
  %2091 = vmatprep.subr.bf16.mxu0 %v1811
  %2092 = vmatpush2.bf16.msra.mxu0 %v1810
  %2093 = vmatprep.subr.bf16.mxu0 %v1807
  %2094 = vmatpush2.bf16.msra.mxu0 %v1806
  %2095 = vmatprep.subr.bf16.mxu0 %v1803
  %2096 = vmatpush2.bf16.msra.mxu0 %v1802
  %2097 = vmatprep.subr.bf16.mxu0 %v1799
  %2098 = vmatpush2.bf16.msra.mxu0 %v1798
  %2099 = vmatprep.subr.bf16.mxu0 %v1795
  %2100 = vmatpush2.bf16.msra.mxu0 %v1794
  %2101 = vmatprep.subr.bf16.mxu0 %v1791
  %2102 = vmatpush2.bf16.msra.mxu0 %v1790
  %2103 = vmatprep.subr.bf16.mxu0 %v1787
  %2104 = vmatpush2.bf16.msra.mxu0 %v1786
  %2105 = vmatprep.mubr.bf16.mxu0 %v166
  %2106 = vmatmul.mubr.bf16.gmra.mxu0 %v165
  %v2107 = vpop.f32.mrf.mxu0
  %v2108 = vadd.f32 %v2065, %v2107
  %v2109 = vpop.f32.mrf.mxu0
  %v2110 = vadd.f32 %v2067, %v2109
  %v2111 = vpop.f32.mrf.mxu0
  %v2112 = vadd.f32 %v2069, %v2111
  %v2113 = vpop.f32.mrf.mxu0
  %v2114 = vadd.f32 %v2071, %v2113
  %2115 = vdwg.mxu0
  %2116 = vmatprep.subr.bf16.mxu0 %v1717
  %2117 = vmatpush1.bf16.msra.mxu0 %v1716
  %2118 = vmatprep.subr.bf16.mxu0 %v1713
  %2119 = vmatpush1.bf16.msra.mxu0 %v1712
  %2120 = vmatprep.subr.bf16.mxu0 %v1709
  %2121 = vmatpush1.bf16.msra.mxu0 %v1708
  %2122 = vmatprep.subr.bf16.mxu0 %v1705
  %2123 = vmatpush1.bf16.msra.mxu0 %v1704
  %2124 = vmatprep.subr.bf16.mxu0 %v1701
  %2125 = vmatpush1.bf16.msra.mxu0 %v1700
  %2126 = vmatprep.subr.bf16.mxu0 %v1697
  %2127 = vmatpush1.bf16.msra.mxu0 %v1696
  %2128 = vmatprep.subr.bf16.mxu0 %v1693
  %2129 = vmatpush1.bf16.msra.mxu0 %v1692
  %2130 = vmatprep.subr.bf16.mxu0 %v1689
  %2131 = vmatpush1.bf16.msra.mxu0 %v1688
  %2132 = vmatprep.subr.bf16.mxu0 %v1749
  %2133 = vmatpush2.bf16.msra.mxu0 %v1748
  %2134 = vmatprep.subr.bf16.mxu0 %v1745
  %2135 = vmatpush2.bf16.msra.mxu0 %v1744
  %2136 = vmatprep.subr.bf16.mxu0 %v1741
  %2137 = vmatpush2.bf16.msra.mxu0 %v1740
  %2138 = vmatprep.subr.bf16.mxu0 %v1737
  %2139 = vmatpush2.bf16.msra.mxu0 %v1736
  %2140 = vmatprep.subr.bf16.mxu0 %v1733
  %2141 = vmatpush2.bf16.msra.mxu0 %v1732
  %2142 = vmatprep.subr.bf16.mxu0 %v1729
  %2143 = vmatpush2.bf16.msra.mxu0 %v1728
  %2144 = vmatprep.subr.bf16.mxu0 %v1725
  %2145 = vmatpush2.bf16.msra.mxu0 %v1724
  %2146 = vmatprep.subr.bf16.mxu0 %v1721
  %2147 = vmatpush2.bf16.msra.mxu0 %v1720
  %2148 = vmatprep.mubr.bf16.mxu0 %v996
  %2149 = vmatmul.mubr.bf16.gmra.mxu0 %v995
  %v2150 = vpop.f32.mrf.mxu0
  %v2151 = vadd.f32 0.0, %v2150
  %v2152 = vpop.f32.mrf.mxu0
  %v2153 = vadd.f32 0.0, %v2152
  %v2154 = vpop.f32.mrf.mxu0
  %v2155 = vadd.f32 0.0, %v2154
  %v2156 = vpop.f32.mrf.mxu0
  %v2157 = vadd.f32 0.0, %v2156
  %2158 = vdwg.mxu0
  %2159 = vmatprep.subr.bf16.mxu0 %v1781
  %2160 = vmatpush1.bf16.msra.mxu0 %v1780
  %2161 = vmatprep.subr.bf16.mxu0 %v1777
  %2162 = vmatpush1.bf16.msra.mxu0 %v1776
  %2163 = vmatprep.subr.bf16.mxu0 %v1773
  %2164 = vmatpush1.bf16.msra.mxu0 %v1772
  %2165 = vmatprep.subr.bf16.mxu0 %v1769
  %2166 = vmatpush1.bf16.msra.mxu0 %v1768
  %2167 = vmatprep.subr.bf16.mxu0 %v1765
  %2168 = vmatpush1.bf16.msra.mxu0 %v1764
  %2169 = vmatprep.subr.bf16.mxu0 %v1761
  %2170 = vmatpush1.bf16.msra.mxu0 %v1760
  %2171 = vmatprep.subr.bf16.mxu0 %v1757
  %2172 = vmatpush1.bf16.msra.mxu0 %v1756
  %2173 = vmatprep.subr.bf16.mxu0 %v1753
  %2174 = vmatpush1.bf16.msra.mxu0 %v1752
  %2175 = vmatprep.subr.bf16.mxu0 %v1813
  %2176 = vmatpush2.bf16.msra.mxu0 %v1812
  %2177 = vmatprep.subr.bf16.mxu0 %v1809
  %2178 = vmatpush2.bf16.msra.mxu0 %v1808
  %2179 = vmatprep.subr.bf16.mxu0 %v1805
  %2180 = vmatpush2.bf16.msra.mxu0 %v1804
  %2181 = vmatprep.subr.bf16.mxu0 %v1801
  %2182 = vmatpush2.bf16.msra.mxu0 %v1800
  %2183 = vmatprep.subr.bf16.mxu0 %v1797
  %2184 = vmatpush2.bf16.msra.mxu0 %v1796
  %2185 = vmatprep.subr.bf16.mxu0 %v1793
  %2186 = vmatpush2.bf16.msra.mxu0 %v1792
  %2187 = vmatprep.subr.bf16.mxu0 %v1789
  %2188 = vmatpush2.bf16.msra.mxu0 %v1788
  %2189 = vmatprep.subr.bf16.mxu0 %v1785
  %2190 = vmatpush2.bf16.msra.mxu0 %v1784
  %2191 = vmatprep.mubr.bf16.mxu0 %v998
  %2192 = vmatmul.mubr.bf16.gmra.mxu0 %v997
  %v2193 = vpop.f32.mrf.mxu0
  %v2194 = vadd.f32 %v2151, %v2193
  %v2195 = vpop.f32.mrf.mxu0
  %v2196 = vadd.f32 %v2153, %v2195
  %v2197 = vpop.f32.mrf.mxu0
  %v2198 = vadd.f32 %v2155, %v2197
  %v2199 = vpop.f32.mrf.mxu0
  %v2200 = vadd.f32 %v2157, %v2199
  %2201 = vdwg.mxu0
  %2202 = vmatprep.subr.bf16.mxu0 %v1719
  %2203 = vmatpush1.bf16.msra.mxu0 %v1718
  %2204 = vmatprep.subr.bf16.mxu0 %v1715
  %2205 = vmatpush1.bf16.msra.mxu0 %v1714
  %2206 = vmatprep.subr.bf16.mxu0 %v1711
  %2207 = vmatpush1.bf16.msra.mxu0 %v1710
  %2208 = vmatprep.subr.bf16.mxu0 %v1707
  %2209 = vmatpush1.bf16.msra.mxu0 %v1706
  %2210 = vmatprep.subr.bf16.mxu0 %v1703
  %2211 = vmatpush1.bf16.msra.mxu0 %v1702
  %2212 = vmatprep.subr.bf16.mxu0 %v1699
  %2213 = vmatpush1.bf16.msra.mxu0 %v1698
  %2214 = vmatprep.subr.bf16.mxu0 %v1695
  %2215 = vmatpush1.bf16.msra.mxu0 %v1694
  %2216 = vmatprep.subr.bf16.mxu0 %v1691
  %2217 = vmatpush1.bf16.msra.mxu0 %v1690
  %2218 = vmatprep.subr.bf16.mxu0 %v1751
  %2219 = vmatpush2.bf16.msra.mxu0 %v1750
  %2220 = vmatprep.subr.bf16.mxu0 %v1747
  %2221 = vmatpush2.bf16.msra.mxu0 %v1746
  %2222 = vmatprep.subr.bf16.mxu0 %v1743
  %2223 = vmatpush2.bf16.msra.mxu0 %v1742
  %2224 = vmatprep.subr.bf16.mxu0 %v1739
  %2225 = vmatpush2.bf16.msra.mxu0 %v1738
  %2226 = vmatprep.subr.bf16.mxu0 %v1735
  %2227 = vmatpush2.bf16.msra.mxu0 %v1734
  %2228 = vmatprep.subr.bf16.mxu0 %v1731
  %2229 = vmatpush2.bf16.msra.mxu0 %v1730
  %2230 = vmatprep.subr.bf16.mxu0 %v1727
  %2231 = vmatpush2.bf16.msra.mxu0 %v1726
  %2232 = vmatprep.subr.bf16.mxu0 %v1723
  %2233 = vmatpush2.bf16.msra.mxu0 %v1722
  %2234 = vmatprep.mubr.bf16.mxu0 %v996
  %2235 = vmatmul.mubr.bf16.gmra.mxu0 %v995
  %v2236 = vpop.f32.mrf.mxu0
  %v2237 = vadd.f32 0.0, %v2236
  %v2238 = vpop.f32.mrf.mxu0
  %v2239 = vadd.f32 0.0, %v2238
  %v2240 = vpop.f32.mrf.mxu0
  %v2241 = vadd.f32 0.0, %v2240
  %v2242 = vpop.f32.mrf.mxu0
  %v2243 = vadd.f32 0.0, %v2242
  %2244 = vdwg.mxu0
  %2245 = vmatprep.subr.bf16.mxu0 %v1783
  %2246 = vmatpush1.bf16.msra.mxu0 %v1782
  %2247 = vmatprep.subr.bf16.mxu0 %v1779
  %2248 = vmatpush1.bf16.msra.mxu0 %v1778
  %2249 = vmatprep.subr.bf16.mxu0 %v1775
  %2250 = vmatpush1.bf16.msra.mxu0 %v1774
  %2251 = vmatprep.subr.bf16.mxu0 %v1771
  %2252 = vmatpush1.bf16.msra.mxu0 %v1770
  %2253 = vmatprep.subr.bf16.mxu0 %v1767
  %2254 = vmatpush1.bf16.msra.mxu0 %v1766
  %2255 = vmatprep.subr.bf16.mxu0 %v1763
  %2256 = vmatpush1.bf16.msra.mxu0 %v1762
  %2257 = vmatprep.subr.bf16.mxu0 %v1759
  %2258 = vmatpush1.bf16.msra.mxu0 %v1758
  %2259 = vmatprep.subr.bf16.mxu0 %v1755
  %2260 = vmatpush1.bf16.msra.mxu0 %v1754
  %2261 = vmatprep.subr.bf16.mxu0 %v1815
  %2262 = vmatpush2.bf16.msra.mxu0 %v1814
  %2263 = vmatprep.subr.bf16.mxu0 %v1811
  %2264 = vmatpush2.bf16.msra.mxu0 %v1810
  %2265 = vmatprep.subr.bf16.mxu0 %v1807
  %2266 = vmatpush2.bf16.msra.mxu0 %v1806
  %2267 = vmatprep.subr.bf16.mxu0 %v1803
  %2268 = vmatpush2.bf16.msra.mxu0 %v1802
  %2269 = vmatprep.subr.bf16.mxu0 %v1799
  %2270 = vmatpush2.bf16.msra.mxu0 %v1798
  %2271 = vmatprep.subr.bf16.mxu0 %v1795
  %2272 = vmatpush2.bf16.msra.mxu0 %v1794
  %2273 = vmatprep.subr.bf16.mxu0 %v1791
  %2274 = vmatpush2.bf16.msra.mxu0 %v1790
  %2275 = vmatprep.subr.bf16.mxu0 %v1787
  %2276 = vmatpush2.bf16.msra.mxu0 %v1786
  %2277 = vmatprep.mubr.bf16.mxu0 %v998
  %2278 = vmatmul.mubr.bf16.gmra.mxu0 %v997
  %v2279 = vpop.f32.mrf.mxu0
  %v2280 = vadd.f32 %v2237, %v2279
  %v2281 = vpop.f32.mrf.mxu0
  %v2282 = vadd.f32 %v2239, %v2281
  %v2283 = vpop.f32.mrf.mxu0
  %v2284 = vadd.f32 %v2241, %v2283
  %v2285 = vpop.f32.mrf.mxu0
  %v2286 = vadd.f32 %v2243, %v2285
  %2287 = vdwg.mxu0
  %s2288 = scalar_lea.vmem %s1, 4096
  %v2289 = vld [vmem:[%s2288] sm:$0xff]
  %v2290 = vld [vmem:[%s2288 + $0x8] sm:$0xff]
  %v2291 = vld [vmem:[%s2288 + $0x10] sm:$0xff]
  %v2292 = vld [vmem:[%s2288 + $0x18] sm:$0xff]
  %v2293 = vld [vmem:[%s2288 + $0x20] sm:$0xff]
  %v2294 = vld [vmem:[%s2288 + $0x28] sm:$0xff]
  %v2295 = vld [vmem:[%s2288 + $0x30] sm:$0xff]
  %v2296 = vld [vmem:[%s2288 + $0x38] sm:$0xff]
  %v2297 = vld [vmem:[%s2288 + $0x40] sm:$0xff]
  %v2298 = vld [vmem:[%s2288 + $0x48] sm:$0xff]
  %v2299 = vld [vmem:[%s2288 + $0x50] sm:$0xff]
  %v2300 = vld [vmem:[%s2288 + $0x58] sm:$0xff]
  %v2301 = vld [vmem:[%s2288 + $0x60] sm:$0xff]
  %v2302 = vld [vmem:[%s2288 + $0x68] sm:$0xff]
  %v2303 = vld [vmem:[%s2288 + $0x70] sm:$0xff]
  %v2304 = vld [vmem:[%s2288 + $0x78] sm:$0xff]
  %v2305 = vld [vmem:[%s2288 + $0x80] sm:$0xff]
  %v2306 = vld [vmem:[%s2288 + $0x88] sm:$0xff]
  %v2307 = vld [vmem:[%s2288 + $0x90] sm:$0xff]
  %v2308 = vld [vmem:[%s2288 + $0x98] sm:$0xff]
  %v2309 = vld [vmem:[%s2288 + $0xa0] sm:$0xff]
  %v2310 = vld [vmem:[%s2288 + $0xa8] sm:$0xff]
  %v2311 = vld [vmem:[%s2288 + $0xb0] sm:$0xff]
  %v2312 = vld [vmem:[%s2288 + $0xb8] sm:$0xff]
  %v2313 = vld [vmem:[%s2288 + $0xc0] sm:$0xff]
  %v2314 = vld [vmem:[%s2288 + $0xc8] sm:$0xff]
  %v2315 = vld [vmem:[%s2288 + $0xd0] sm:$0xff]
  %v2316 = vld [vmem:[%s2288 + $0xd8] sm:$0xff]
  %v2317 = vld [vmem:[%s2288 + $0xe0] sm:$0xff]
  %v2318 = vld [vmem:[%s2288 + $0xe8] sm:$0xff]
  %v2319 = vld [vmem:[%s2288 + $0xf0] sm:$0xff]
  %v2320 = vld [vmem:[%s2288 + $0xf8] sm:$0xff]
  %v2321 = vld [vmem:[%s2288 + $0x100] sm:$0xff]
  %v2322 = vld [vmem:[%s2288 + $0x108] sm:$0xff]
  %v2323 = vld [vmem:[%s2288 + $0x110] sm:$0xff]
  %v2324 = vld [vmem:[%s2288 + $0x118] sm:$0xff]
  %v2325 = vld [vmem:[%s2288 + $0x120] sm:$0xff]
  %v2326 = vld [vmem:[%s2288 + $0x128] sm:$0xff]
  %v2327 = vld [vmem:[%s2288 + $0x130] sm:$0xff]
  %v2328 = vld [vmem:[%s2288 + $0x138] sm:$0xff]
  %v2329 = vld [vmem:[%s2288 + $0x140] sm:$0xff]
  %v2330 = vld [vmem:[%s2288 + $0x148] sm:$0xff]
  %v2331 = vld [vmem:[%s2288 + $0x150] sm:$0xff]
  %v2332 = vld [vmem:[%s2288 + $0x158] sm:$0xff]
  %v2333 = vld [vmem:[%s2288 + $0x160] sm:$0xff]
  %v2334 = vld [vmem:[%s2288 + $0x168] sm:$0xff]
  %v2335 = vld [vmem:[%s2288 + $0x170] sm:$0xff]
  %v2336 = vld [vmem:[%s2288 + $0x178] sm:$0xff]
  %v2337 = vld [vmem:[%s2288 + $0x180] sm:$0xff]
  %v2338 = vld [vmem:[%s2288 + $0x188] sm:$0xff]
  %v2339 = vld [vmem:[%s2288 + $0x190] sm:$0xff]
  %v2340 = vld [vmem:[%s2288 + $0x198] sm:$0xff]
  %v2341 = vld [vmem:[%s2288 + $0x1a0] sm:$0xff]
  %v2342 = vld [vmem:[%s2288 + $0x1a8] sm:$0xff]
  %v2343 = vld [vmem:[%s2288 + $0x1b0] sm:$0xff]
  %v2344 = vld [vmem:[%s2288 + $0x1b8] sm:$0xff]
  %v2345 = vld [vmem:[%s2288 + $0x1c0] sm:$0xff]
  %v2346 = vld [vmem:[%s2288 + $0x1c8] sm:$0xff]
  %v2347 = vld [vmem:[%s2288 + $0x1d0] sm:$0xff]
  %v2348 = vld [vmem:[%s2288 + $0x1d8] sm:$0xff]
  %v2349 = vld [vmem:[%s2288 + $0x1e0] sm:$0xff]
  %v2350 = vld [vmem:[%s2288 + $0x1e8] sm:$0xff]
  %v2351 = vld [vmem:[%s2288 + $0x1f0] sm:$0xff]
  %v2352 = vld [vmem:[%s2288 + $0x1f8] sm:$0xff]
  %v2353 = vld [vmem:[%s2288 + $0x200] sm:$0xff]
  %v2354 = vld [vmem:[%s2288 + $0x208] sm:$0xff]
  %v2355 = vld [vmem:[%s2288 + $0x210] sm:$0xff]
  %v2356 = vld [vmem:[%s2288 + $0x218] sm:$0xff]
  %v2357 = vld [vmem:[%s2288 + $0x220] sm:$0xff]
  %v2358 = vld [vmem:[%s2288 + $0x228] sm:$0xff]
  %v2359 = vld [vmem:[%s2288 + $0x230] sm:$0xff]
  %v2360 = vld [vmem:[%s2288 + $0x238] sm:$0xff]
  %v2361 = vld [vmem:[%s2288 + $0x240] sm:$0xff]
  %v2362 = vld [vmem:[%s2288 + $0x248] sm:$0xff]
  %v2363 = vld [vmem:[%s2288 + $0x250] sm:$0xff]
  %v2364 = vld [vmem:[%s2288 + $0x258] sm:$0xff]
  %v2365 = vld [vmem:[%s2288 + $0x260] sm:$0xff]
  %v2366 = vld [vmem:[%s2288 + $0x268] sm:$0xff]
  %v2367 = vld [vmem:[%s2288 + $0x270] sm:$0xff]
  %v2368 = vld [vmem:[%s2288 + $0x278] sm:$0xff]
  %v2369 = vld [vmem:[%s2288 + $0x280] sm:$0xff]
  %v2370 = vld [vmem:[%s2288 + $0x288] sm:$0xff]
  %v2371 = vld [vmem:[%s2288 + $0x290] sm:$0xff]
  %v2372 = vld [vmem:[%s2288 + $0x298] sm:$0xff]
  %v2373 = vld [vmem:[%s2288 + $0x2a0] sm:$0xff]
  %v2374 = vld [vmem:[%s2288 + $0x2a8] sm:$0xff]
  %v2375 = vld [vmem:[%s2288 + $0x2b0] sm:$0xff]
  %v2376 = vld [vmem:[%s2288 + $0x2b8] sm:$0xff]
  %v2377 = vld [vmem:[%s2288 + $0x2c0] sm:$0xff]
  %v2378 = vld [vmem:[%s2288 + $0x2c8] sm:$0xff]
  %v2379 = vld [vmem:[%s2288 + $0x2d0] sm:$0xff]
  %v2380 = vld [vmem:[%s2288 + $0x2d8] sm:$0xff]
  %v2381 = vld [vmem:[%s2288 + $0x2e0] sm:$0xff]
  %v2382 = vld [vmem:[%s2288 + $0x2e8] sm:$0xff]
  %v2383 = vld [vmem:[%s2288 + $0x2f0] sm:$0xff]
  %v2384 = vld [vmem:[%s2288 + $0x2f8] sm:$0xff]
  %v2385 = vld [vmem:[%s2288 + $0x300] sm:$0xff]
  %v2386 = vld [vmem:[%s2288 + $0x308] sm:$0xff]
  %v2387 = vld [vmem:[%s2288 + $0x310] sm:$0xff]
  %v2388 = vld [vmem:[%s2288 + $0x318] sm:$0xff]
  %v2389 = vld [vmem:[%s2288 + $0x320] sm:$0xff]
  %v2390 = vld [vmem:[%s2288 + $0x328] sm:$0xff]
  %v2391 = vld [vmem:[%s2288 + $0x330] sm:$0xff]
  %v2392 = vld [vmem:[%s2288 + $0x338] sm:$0xff]
  %v2393 = vld [vmem:[%s2288 + $0x340] sm:$0xff]
  %v2394 = vld [vmem:[%s2288 + $0x348] sm:$0xff]
  %v2395 = vld [vmem:[%s2288 + $0x350] sm:$0xff]
  %v2396 = vld [vmem:[%s2288 + $0x358] sm:$0xff]
  %v2397 = vld [vmem:[%s2288 + $0x360] sm:$0xff]
  %v2398 = vld [vmem:[%s2288 + $0x368] sm:$0xff]
  %v2399 = vld [vmem:[%s2288 + $0x370] sm:$0xff]
  %v2400 = vld [vmem:[%s2288 + $0x378] sm:$0xff]
  %v2401 = vld [vmem:[%s2288 + $0x380] sm:$0xff]
  %v2402 = vld [vmem:[%s2288 + $0x388] sm:$0xff]
  %v2403 = vld [vmem:[%s2288 + $0x390] sm:$0xff]
  %v2404 = vld [vmem:[%s2288 + $0x398] sm:$0xff]
  %v2405 = vld [vmem:[%s2288 + $0x3a0] sm:$0xff]
  %v2406 = vld [vmem:[%s2288 + $0x3a8] sm:$0xff]
  %v2407 = vld [vmem:[%s2288 + $0x3b0] sm:$0xff]
  %v2408 = vld [vmem:[%s2288 + $0x3b8] sm:$0xff]
  %v2409 = vld [vmem:[%s2288 + $0x3c0] sm:$0xff]
  %v2410 = vld [vmem:[%s2288 + $0x3c8] sm:$0xff]
  %v2411 = vld [vmem:[%s2288 + $0x3d0] sm:$0xff]
  %v2412 = vld [vmem:[%s2288 + $0x3d8] sm:$0xff]
  %v2413 = vld [vmem:[%s2288 + $0x3e0] sm:$0xff]
  %v2414 = vld [vmem:[%s2288 + $0x3e8] sm:$0xff]
  %v2415 = vld [vmem:[%s2288 + $0x3f0] sm:$0xff]
  %v2416 = vld [vmem:[%s2288 + $0x3f8] sm:$0xff]
  %v2545 = vunpack.c.l.b16 %v2289
  %v2546 = vunpack.c.h.b16 %v2289
  %v2547 = vunpack.c.l.b16 %v2290
  %v2548 = vunpack.c.h.b16 %v2290
  %v2549 = vunpack.c.l.b16 %v2291
  %v2550 = vunpack.c.h.b16 %v2291
  %v2551 = vunpack.c.l.b16 %v2292
  %v2552 = vunpack.c.h.b16 %v2292
  %v2553 = vunpack.c.l.b16 %v2293
  %v2554 = vunpack.c.h.b16 %v2293
  %v2555 = vunpack.c.l.b16 %v2294
  %v2556 = vunpack.c.h.b16 %v2294
  %v2557 = vunpack.c.l.b16 %v2295
  %v2558 = vunpack.c.h.b16 %v2295
  %v2559 = vunpack.c.l.b16 %v2296
  %v2560 = vunpack.c.h.b16 %v2296
  %v2561 = vunpack.c.l.b16 %v2297
  %v2562 = vunpack.c.h.b16 %v2297
  %v2563 = vunpack.c.l.b16 %v2298
  %v2564 = vunpack.c.h.b16 %v2298
  %v2565 = vunpack.c.l.b16 %v2299
  %v2566 = vunpack.c.h.b16 %v2299
  %v2567 = vunpack.c.l.b16 %v2300
  %v2568 = vunpack.c.h.b16 %v2300
  %v2569 = vunpack.c.l.b16 %v2301
  %v2570 = vunpack.c.h.b16 %v2301
  %v2571 = vunpack.c.l.b16 %v2302
  %v2572 = vunpack.c.h.b16 %v2302
  %v2573 = vunpack.c.l.b16 %v2303
  %v2574 = vunpack.c.h.b16 %v2303
  %v2575 = vunpack.c.l.b16 %v2304
  %v2576 = vunpack.c.h.b16 %v2304
  %v2577 = vunpack.c.l.b16 %v2305
  %v2578 = vunpack.c.h.b16 %v2305
  %v2579 = vunpack.c.l.b16 %v2306
  %v2580 = vunpack.c.h.b16 %v2306
  %v2581 = vunpack.c.l.b16 %v2307
  %v2582 = vunpack.c.h.b16 %v2307
  %v2583 = vunpack.c.l.b16 %v2308
  %v2584 = vunpack.c.h.b16 %v2308
  %v2585 = vunpack.c.l.b16 %v2309
  %v2586 = vunpack.c.h.b16 %v2309
  %v2587 = vunpack.c.l.b16 %v2310
  %v2588 = vunpack.c.h.b16 %v2310
  %v2589 = vunpack.c.l.b16 %v2311
  %v2590 = vunpack.c.h.b16 %v2311
  %v2591 = vunpack.c.l.b16 %v2312
  %v2592 = vunpack.c.h.b16 %v2312
  %v2593 = vunpack.c.l.b16 %v2313
  %v2594 = vunpack.c.h.b16 %v2313
  %v2595 = vunpack.c.l.b16 %v2314
  %v2596 = vunpack.c.h.b16 %v2314
  %v2597 = vunpack.c.l.b16 %v2315
  %v2598 = vunpack.c.h.b16 %v2315
  %v2599 = vunpack.c.l.b16 %v2316
  %v2600 = vunpack.c.h.b16 %v2316
  %v2601 = vunpack.c.l.b16 %v2317
  %v2602 = vunpack.c.h.b16 %v2317
  %v2603 = vunpack.c.l.b16 %v2318
  %v2604 = vunpack.c.h.b16 %v2318
  %v2605 = vunpack.c.l.b16 %v2319
  %v2606 = vunpack.c.h.b16 %v2319
  %v2607 = vunpack.c.l.b16 %v2320
  %v2608 = vunpack.c.h.b16 %v2320
  %v2609 = vunpack.c.l.b16 %v2321
  %v2610 = vunpack.c.h.b16 %v2321
  %v2611 = vunpack.c.l.b16 %v2322
  %v2612 = vunpack.c.h.b16 %v2322
  %v2613 = vunpack.c.l.b16 %v2323
  %v2614 = vunpack.c.h.b16 %v2323
  %v2615 = vunpack.c.l.b16 %v2324
  %v2616 = vunpack.c.h.b16 %v2324
  %v2617 = vunpack.c.l.b16 %v2325
  %v2618 = vunpack.c.h.b16 %v2325
  %v2619 = vunpack.c.l.b16 %v2326
  %v2620 = vunpack.c.h.b16 %v2326
  %v2621 = vunpack.c.l.b16 %v2327
  %v2622 = vunpack.c.h.b16 %v2327
  %v2623 = vunpack.c.l.b16 %v2328
  %v2624 = vunpack.c.h.b16 %v2328
  %v2625 = vunpack.c.l.b16 %v2329
  %v2626 = vunpack.c.h.b16 %v2329
  %v2627 = vunpack.c.l.b16 %v2330
  %v2628 = vunpack.c.h.b16 %v2330
  %v2629 = vunpack.c.l.b16 %v2331
  %v2630 = vunpack.c.h.b16 %v2331
  %v2631 = vunpack.c.l.b16 %v2332
  %v2632 = vunpack.c.h.b16 %v2332
  %v2633 = vunpack.c.l.b16 %v2333
  %v2634 = vunpack.c.h.b16 %v2333
  %v2635 = vunpack.c.l.b16 %v2334
  %v2636 = vunpack.c.h.b16 %v2334
  %v2637 = vunpack.c.l.b16 %v2335
  %v2638 = vunpack.c.h.b16 %v2335
  %v2639 = vunpack.c.l.b16 %v2336
  %v2640 = vunpack.c.h.b16 %v2336
  %v2641 = vunpack.c.l.b16 %v2337
  %v2642 = vunpack.c.h.b16 %v2337
  %v2643 = vunpack.c.l.b16 %v2338
  %v2644 = vunpack.c.h.b16 %v2338
  %v2645 = vunpack.c.l.b16 %v2339
  %v2646 = vunpack.c.h.b16 %v2339
  %v2647 = vunpack.c.l.b16 %v2340
  %v2648 = vunpack.c.h.b16 %v2340
  %v2649 = vunpack.c.l.b16 %v2341
  %v2650 = vunpack.c.h.b16 %v2341
  %v2651 = vunpack.c.l.b16 %v2342
  %v2652 = vunpack.c.h.b16 %v2342
  %v2653 = vunpack.c.l.b16 %v2343
  %v2654 = vunpack.c.h.b16 %v2343
  %v2655 = vunpack.c.l.b16 %v2344
  %v2656 = vunpack.c.h.b16 %v2344
  %v2657 = vunpack.c.l.b16 %v2345
  %v2658 = vunpack.c.h.b16 %v2345
  %v2659 = vunpack.c.l.b16 %v2346
  %v2660 = vunpack.c.h.b16 %v2346
  %v2661 = vunpack.c.l.b16 %v2347
  %v2662 = vunpack.c.h.b16 %v2347
  %v2663 = vunpack.c.l.b16 %v2348
  %v2664 = vunpack.c.h.b16 %v2348
  %v2665 = vunpack.c.l.b16 %v2349
  %v2666 = vunpack.c.h.b16 %v2349
  %v2667 = vunpack.c.l.b16 %v2350
  %v2668 = vunpack.c.h.b16 %v2350
  %v2669 = vunpack.c.l.b16 %v2351
  %v2670 = vunpack.c.h.b16 %v2351
  %v2671 = vunpack.c.l.b16 %v2352
  %v2672 = vunpack.c.h.b16 %v2352
  %v2673 = vunpack.c.l.b16 %v2353
  %v2674 = vunpack.c.h.b16 %v2353
  %v2675 = vunpack.c.l.b16 %v2354
  %v2676 = vunpack.c.h.b16 %v2354
  %v2677 = vunpack.c.l.b16 %v2355
  %v2678 = vunpack.c.h.b16 %v2355
  %v2679 = vunpack.c.l.b16 %v2356
  %v2680 = vunpack.c.h.b16 %v2356
  %v2681 = vunpack.c.l.b16 %v2357
  %v2682 = vunpack.c.h.b16 %v2357
  %v2683 = vunpack.c.l.b16 %v2358
  %v2684 = vunpack.c.h.b16 %v2358
  %v2685 = vunpack.c.l.b16 %v2359
  %v2686 = vunpack.c.h.b16 %v2359
  %v2687 = vunpack.c.l.b16 %v2360
  %v2688 = vunpack.c.h.b16 %v2360
  %v2689 = vunpack.c.l.b16 %v2361
  %v2690 = vunpack.c.h.b16 %v2361
  %v2691 = vunpack.c.l.b16 %v2362
  %v2692 = vunpack.c.h.b16 %v2362
  %v2693 = vunpack.c.l.b16 %v2363
  %v2694 = vunpack.c.h.b16 %v2363
  %v2695 = vunpack.c.l.b16 %v2364
  %v2696 = vunpack.c.h.b16 %v2364
  %v2697 = vunpack.c.l.b16 %v2365
  %v2698 = vunpack.c.h.b16 %v2365
  %v2699 = vunpack.c.l.b16 %v2366
  %v2700 = vunpack.c.h.b16 %v2366
  %v2701 = vunpack.c.l.b16 %v2367
  %v2702 = vunpack.c.h.b16 %v2367
  %v2703 = vunpack.c.l.b16 %v2368
  %v2704 = vunpack.c.h.b16 %v2368
  %v2705 = vunpack.c.l.b16 %v2369
  %v2706 = vunpack.c.h.b16 %v2369
  %v2707 = vunpack.c.l.b16 %v2370
  %v2708 = vunpack.c.h.b16 %v2370
  %v2709 = vunpack.c.l.b16 %v2371
  %v2710 = vunpack.c.h.b16 %v2371
  %v2711 = vunpack.c.l.b16 %v2372
  %v2712 = vunpack.c.h.b16 %v2372
  %v2713 = vunpack.c.l.b16 %v2373
  %v2714 = vunpack.c.h.b16 %v2373
  %v2715 = vunpack.c.l.b16 %v2374
  %v2716 = vunpack.c.h.b16 %v2374
  %v2717 = vunpack.c.l.b16 %v2375
  %v2718 = vunpack.c.h.b16 %v2375
  %v2719 = vunpack.c.l.b16 %v2376
  %v2720 = vunpack.c.h.b16 %v2376
  %v2721 = vunpack.c.l.b16 %v2377
  %v2722 = vunpack.c.h.b16 %v2377
  %v2723 = vunpack.c.l.b16 %v2378
  %v2724 = vunpack.c.h.b16 %v2378
  %v2725 = vunpack.c.l.b16 %v2379
  %v2726 = vunpack.c.h.b16 %v2379
  %v2727 = vunpack.c.l.b16 %v2380
  %v2728 = vunpack.c.h.b16 %v2380
  %v2729 = vunpack.c.l.b16 %v2381
  %v2730 = vunpack.c.h.b16 %v2381
  %v2731 = vunpack.c.l.b16 %v2382
  %v2732 = vunpack.c.h.b16 %v2382
  %v2733 = vunpack.c.l.b16 %v2383
  %v2734 = vunpack.c.h.b16 %v2383
  %v2735 = vunpack.c.l.b16 %v2384
  %v2736 = vunpack.c.h.b16 %v2384
  %v2737 = vunpack.c.l.b16 %v2385
  %v2738 = vunpack.c.h.b16 %v2385
  %v2739 = vunpack.c.l.b16 %v2386
  %v2740 = vunpack.c.h.b16 %v2386
  %v2741 = vunpack.c.l.b16 %v2387
  %v2742 = vunpack.c.h.b16 %v2387
  %v2743 = vunpack.c.l.b16 %v2388
  %v2744 = vunpack.c.h.b16 %v2388
  %v2745 = vunpack.c.l.b16 %v2389
  %v2746 = vunpack.c.h.b16 %v2389
  %v2747 = vunpack.c.l.b16 %v2390
  %v2748 = vunpack.c.h.b16 %v2390
  %v2749 = vunpack.c.l.b16 %v2391
  %v2750 = vunpack.c.h.b16 %v2391
  %v2751 = vunpack.c.l.b16 %v2392
  %v2752 = vunpack.c.h.b16 %v2392
  %v2753 = vunpack.c.l.b16 %v2393
  %v2754 = vunpack.c.h.b16 %v2393
  %v2755 = vunpack.c.l.b16 %v2394
  %v2756 = vunpack.c.h.b16 %v2394
  %v2757 = vunpack.c.l.b16 %v2395
  %v2758 = vunpack.c.h.b16 %v2395
  %v2759 = vunpack.c.l.b16 %v2396
  %v2760 = vunpack.c.h.b16 %v2396
  %v2761 = vunpack.c.l.b16 %v2397
  %v2762 = vunpack.c.h.b16 %v2397
  %v2763 = vunpack.c.l.b16 %v2398
  %v2764 = vunpack.c.h.b16 %v2398
  %v2765 = vunpack.c.l.b16 %v2399
  %v2766 = vunpack.c.h.b16 %v2399
  %v2767 = vunpack.c.l.b16 %v2400
  %v2768 = vunpack.c.h.b16 %v2400
  %v2769 = vunpack.c.l.b16 %v2401
  %v2770 = vunpack.c.h.b16 %v2401
  %v2771 = vunpack.c.l.b16 %v2402
  %v2772 = vunpack.c.h.b16 %v2402
  %v2773 = vunpack.c.l.b16 %v2403
  %v2774 = vunpack.c.h.b16 %v2403
  %v2775 = vunpack.c.l.b16 %v2404
  %v2776 = vunpack.c.h.b16 %v2404
  %v2777 = vunpack.c.l.b16 %v2405
  %v2778 = vunpack.c.h.b16 %v2405
  %v2779 = vunpack.c.l.b16 %v2406
  %v2780 = vunpack.c.h.b16 %v2406
  %v2781 = vunpack.c.l.b16 %v2407
  %v2782 = vunpack.c.h.b16 %v2407
  %v2783 = vunpack.c.l.b16 %v2408
  %v2784 = vunpack.c.h.b16 %v2408
  %v2785 = vunpack.c.l.b16 %v2409
  %v2786 = vunpack.c.h.b16 %v2409
  %v2787 = vunpack.c.l.b16 %v2410
  %v2788 = vunpack.c.h.b16 %v2410
  %v2789 = vunpack.c.l.b16 %v2411
  %v2790 = vunpack.c.h.b16 %v2411
  %v2791 = vunpack.c.l.b16 %v2412
  %v2792 = vunpack.c.h.b16 %v2412
  %v2793 = vunpack.c.l.b16 %v2413
  %v2794 = vunpack.c.h.b16 %v2413
  %v2795 = vunpack.c.l.b16 %v2414
  %v2796 = vunpack.c.h.b16 %v2414
  %v2797 = vunpack.c.l.b16 %v2415
  %v2798 = vunpack.c.h.b16 %v2415
  %v2799 = vunpack.c.l.b16 %v2416
  %v2800 = vunpack.c.h.b16 %v2416
  %v2801 = vpack.c.b16 %v2549, %v2545
  %v2802 = vpack.c.b16 %v2550, %v2546
  %v2803 = vpack.c.b16 %v2551, %v2547
  %v2804 = vpack.c.b16 %v2552, %v2548
  %v2805 = vpack.c.b16 %v2557, %v2553
  %v2806 = vpack.c.b16 %v2558, %v2554
  %v2807 = vpack.c.b16 %v2559, %v2555
  %v2808 = vpack.c.b16 %v2560, %v2556
  %v2809 = vpack.c.b16 %v2565, %v2561
  %v2810 = vpack.c.b16 %v2566, %v2562
  %v2811 = vpack.c.b16 %v2567, %v2563
  %v2812 = vpack.c.b16 %v2568, %v2564
  %v2813 = vpack.c.b16 %v2573, %v2569
  %v2814 = vpack.c.b16 %v2574, %v2570
  %v2815 = vpack.c.b16 %v2575, %v2571
  %v2816 = vpack.c.b16 %v2576, %v2572
  %v2817 = vpack.c.b16 %v2581, %v2577
  %v2818 = vpack.c.b16 %v2582, %v2578
  %v2819 = vpack.c.b16 %v2583, %v2579
  %v2820 = vpack.c.b16 %v2584, %v2580
  %v2821 = vpack.c.b16 %v2589, %v2585
  %v2822 = vpack.c.b16 %v2590, %v2586
  %v2823 = vpack.c.b16 %v2591, %v2587
  %v2824 = vpack.c.b16 %v2592, %v2588
  %v2825 = vpack.c.b16 %v2597, %v2593
  %v2826 = vpack.c.b16 %v2598, %v2594
  %v2827 = vpack.c.b16 %v2599, %v2595
  %v2828 = vpack.c.b16 %v2600, %v2596
  %v2829 = vpack.c.b16 %v2605, %v2601
  %v2830 = vpack.c.b16 %v2606, %v2602
  %v2831 = vpack.c.b16 %v2607, %v2603
  %v2832 = vpack.c.b16 %v2608, %v2604
  %v2833 = vpack.c.b16 %v2613, %v2609
  %v2834 = vpack.c.b16 %v2614, %v2610
  %v2835 = vpack.c.b16 %v2615, %v2611
  %v2836 = vpack.c.b16 %v2616, %v2612
  %v2837 = vpack.c.b16 %v2621, %v2617
  %v2838 = vpack.c.b16 %v2622, %v2618
  %v2839 = vpack.c.b16 %v2623, %v2619
  %v2840 = vpack.c.b16 %v2624, %v2620
  %v2841 = vpack.c.b16 %v2629, %v2625
  %v2842 = vpack.c.b16 %v2630, %v2626
  %v2843 = vpack.c.b16 %v2631, %v2627
  %v2844 = vpack.c.b16 %v2632, %v2628
  %v2845 = vpack.c.b16 %v2637, %v2633
  %v2846 = vpack.c.b16 %v2638, %v2634
  %v2847 = vpack.c.b16 %v2639, %v2635
  %v2848 = vpack.c.b16 %v2640, %v2636
  %v2849 = vpack.c.b16 %v2645, %v2641
  %v2850 = vpack.c.b16 %v2646, %v2642
  %v2851 = vpack.c.b16 %v2647, %v2643
  %v2852 = vpack.c.b16 %v2648, %v2644
  %v2853 = vpack.c.b16 %v2653, %v2649
  %v2854 = vpack.c.b16 %v2654, %v2650
  %v2855 = vpack.c.b16 %v2655, %v2651
  %v2856 = vpack.c.b16 %v2656, %v2652
  %v2857 = vpack.c.b16 %v2661, %v2657
  %v2858 = vpack.c.b16 %v2662, %v2658
  %v2859 = vpack.c.b16 %v2663, %v2659
  %v2860 = vpack.c.b16 %v2664, %v2660
  %v2861 = vpack.c.b16 %v2669, %v2665
  %v2862 = vpack.c.b16 %v2670, %v2666
  %v2863 = vpack.c.b16 %v2671, %v2667
  %v2864 = vpack.c.b16 %v2672, %v2668
  %v2865 = vpack.c.b16 %v2677, %v2673
  %v2866 = vpack.c.b16 %v2678, %v2674
  %v2867 = vpack.c.b16 %v2679, %v2675
  %v2868 = vpack.c.b16 %v2680, %v2676
  %v2869 = vpack.c.b16 %v2685, %v2681
  %v2870 = vpack.c.b16 %v2686, %v2682
  %v2871 = vpack.c.b16 %v2687, %v2683
  %v2872 = vpack.c.b16 %v2688, %v2684
  %v2873 = vpack.c.b16 %v2693, %v2689
  %v2874 = vpack.c.b16 %v2694, %v2690
  %v2875 = vpack.c.b16 %v2695, %v2691
  %v2876 = vpack.c.b16 %v2696, %v2692
  %v2877 = vpack.c.b16 %v2701, %v2697
  %v2878 = vpack.c.b16 %v2702, %v2698
  %v2879 = vpack.c.b16 %v2703, %v2699
  %v2880 = vpack.c.b16 %v2704, %v2700
  %v2881 = vpack.c.b16 %v2709, %v2705
  %v2882 = vpack.c.b16 %v2710, %v2706
  %v2883 = vpack.c.b16 %v2711, %v2707
  %v2884 = vpack.c.b16 %v2712, %v2708
  %v2885 = vpack.c.b16 %v2717, %v2713
  %v2886 = vpack.c.b16 %v2718, %v2714
  %v2887 = vpack.c.b16 %v2719, %v2715
  %v2888 = vpack.c.b16 %v2720, %v2716
  %v2889 = vpack.c.b16 %v2725, %v2721
  %v2890 = vpack.c.b16 %v2726, %v2722
  %v2891 = vpack.c.b16 %v2727, %v2723
  %v2892 = vpack.c.b16 %v2728, %v2724
  %v2893 = vpack.c.b16 %v2733, %v2729
  %v2894 = vpack.c.b16 %v2734, %v2730
  %v2895 = vpack.c.b16 %v2735, %v2731
  %v2896 = vpack.c.b16 %v2736, %v2732
  %v2897 = vpack.c.b16 %v2741, %v2737
  %v2898 = vpack.c.b16 %v2742, %v2738
  %v2899 = vpack.c.b16 %v2743, %v2739
  %v2900 = vpack.c.b16 %v2744, %v2740
  %v2901 = vpack.c.b16 %v2749, %v2745
  %v2902 = vpack.c.b16 %v2750, %v2746
  %v2903 = vpack.c.b16 %v2751, %v2747
  %v2904 = vpack.c.b16 %v2752, %v2748
  %v2905 = vpack.c.b16 %v2757, %v2753
  %v2906 = vpack.c.b16 %v2758, %v2754
  %v2907 = vpack.c.b16 %v2759, %v2755
  %v2908 = vpack.c.b16 %v2760, %v2756
  %v2909 = vpack.c.b16 %v2765, %v2761
  %v2910 = vpack.c.b16 %v2766, %v2762
  %v2911 = vpack.c.b16 %v2767, %v2763
  %v2912 = vpack.c.b16 %v2768, %v2764
  %v2913 = vpack.c.b16 %v2773, %v2769
  %v2914 = vpack.c.b16 %v2774, %v2770
  %v2915 = vpack.c.b16 %v2775, %v2771
  %v2916 = vpack.c.b16 %v2776, %v2772
  %v2917 = vpack.c.b16 %v2781, %v2777
  %v2918 = vpack.c.b16 %v2782, %v2778
  %v2919 = vpack.c.b16 %v2783, %v2779
  %v2920 = vpack.c.b16 %v2784, %v2780
  %v2921 = vpack.c.b16 %v2789, %v2785
  %v2922 = vpack.c.b16 %v2790, %v2786
  %v2923 = vpack.c.b16 %v2791, %v2787
  %v2924 = vpack.c.b16 %v2792, %v2788
  %v2925 = vpack.c.b16 %v2797, %v2793
  %v2926 = vpack.c.b16 %v2798, %v2794
  %v2927 = vpack.c.b16 %v2799, %v2795
  %v2928 = vpack.c.b16 %v2800, %v2796
  %3057 = vmatprep.subr.bf16.mxu0 %v2830
  %3058 = vmatpush1.bf16.msra.mxu0 %v2829
  %3059 = vmatprep.subr.bf16.mxu0 %v2826
  %3060 = vmatpush1.bf16.msra.mxu0 %v2825
  %3061 = vmatprep.subr.bf16.mxu0 %v2822
  %3062 = vmatpush1.bf16.msra.mxu0 %v2821
  %3063 = vmatprep.subr.bf16.mxu0 %v2818
  %3064 = vmatpush1.bf16.msra.mxu0 %v2817
  %3065 = vmatprep.subr.bf16.mxu0 %v2814
  %3066 = vmatpush1.bf16.msra.mxu0 %v2813
  %3067 = vmatprep.subr.bf16.mxu0 %v2810
  %3068 = vmatpush1.bf16.msra.mxu0 %v2809
  %3069 = vmatprep.subr.bf16.mxu0 %v2806
  %3070 = vmatpush1.bf16.msra.mxu0 %v2805
  %3071 = vmatprep.subr.bf16.mxu0 %v2802
  %3072 = vmatpush1.bf16.msra.mxu0 %v2801
  %3073 = vmatprep.subr.bf16.mxu0 %v2862
  %3074 = vmatpush2.bf16.msra.mxu0 %v2861
  %3075 = vmatprep.subr.bf16.mxu0 %v2858
  %3076 = vmatpush2.bf16.msra.mxu0 %v2857
  %3077 = vmatprep.subr.bf16.mxu0 %v2854
  %3078 = vmatpush2.bf16.msra.mxu0 %v2853
  %3079 = vmatprep.subr.bf16.mxu0 %v2850
  %3080 = vmatpush2.bf16.msra.mxu0 %v2849
  %3081 = vmatprep.subr.bf16.mxu0 %v2846
  %3082 = vmatpush2.bf16.msra.mxu0 %v2845
  %3083 = vmatprep.subr.bf16.mxu0 %v2842
  %3084 = vmatpush2.bf16.msra.mxu0 %v2841
  %3085 = vmatprep.subr.bf16.mxu0 %v2838
  %3086 = vmatpush2.bf16.msra.mxu0 %v2837
  %3087 = vmatprep.subr.bf16.mxu0 %v2834
  %3088 = vmatpush2.bf16.msra.mxu0 %v2833
  %3089 = vmatprep.mubr.bf16.mxu0 %v164
  %3090 = vmatmul.mubr.bf16.gmra.mxu0 %v163
  %v3091 = vpop.f32.mrf.mxu0
  %v3092 = vadd.f32 0.0, %v3091
  %v3093 = vpop.f32.mrf.mxu0
  %v3094 = vadd.f32 0.0, %v3093
  %v3095 = vpop.f32.mrf.mxu0
  %v3096 = vadd.f32 0.0, %v3095
  %v3097 = vpop.f32.mrf.mxu0
  %v3098 = vadd.f32 0.0, %v3097
  %3099 = vdwg.mxu0
  %3100 = vmatprep.subr.bf16.mxu0 %v2894
  %3101 = vmatpush1.bf16.msra.mxu0 %v2893
  %3102 = vmatprep.subr.bf16.mxu0 %v2890
  %3103 = vmatpush1.bf16.msra.mxu0 %v2889
  %3104 = vmatprep.subr.bf16.mxu0 %v2886
  %3105 = vmatpush1.bf16.msra.mxu0 %v2885
  %3106 = vmatprep.subr.bf16.mxu0 %v2882
  %3107 = vmatpush1.bf16.msra.mxu0 %v2881
  %3108 = vmatprep.subr.bf16.mxu0 %v2878
  %3109 = vmatpush1.bf16.msra.mxu0 %v2877
  %3110 = vmatprep.subr.bf16.mxu0 %v2874
  %3111 = vmatpush1.bf16.msra.mxu0 %v2873
  %3112 = vmatprep.subr.bf16.mxu0 %v2870
  %3113 = vmatpush1.bf16.msra.mxu0 %v2869
  %3114 = vmatprep.subr.bf16.mxu0 %v2866
  %3115 = vmatpush1.bf16.msra.mxu0 %v2865
  %3116 = vmatprep.subr.bf16.mxu0 %v2926
  %3117 = vmatpush2.bf16.msra.mxu0 %v2925
  %3118 = vmatprep.subr.bf16.mxu0 %v2922
  %3119 = vmatpush2.bf16.msra.mxu0 %v2921
  %3120 = vmatprep.subr.bf16.mxu0 %v2918
  %3121 = vmatpush2.bf16.msra.mxu0 %v2917
  %3122 = vmatprep.subr.bf16.mxu0 %v2914
  %3123 = vmatpush2.bf16.msra.mxu0 %v2913
  %3124 = vmatprep.subr.bf16.mxu0 %v2910
  %3125 = vmatpush2.bf16.msra.mxu0 %v2909
  %3126 = vmatprep.subr.bf16.mxu0 %v2906
  %3127 = vmatpush2.bf16.msra.mxu0 %v2905
  %3128 = vmatprep.subr.bf16.mxu0 %v2902
  %3129 = vmatpush2.bf16.msra.mxu0 %v2901
  %3130 = vmatprep.subr.bf16.mxu0 %v2898
  %3131 = vmatpush2.bf16.msra.mxu0 %v2897
  %3132 = vmatprep.mubr.bf16.mxu0 %v166
  %3133 = vmatmul.mubr.bf16.gmra.mxu0 %v165
  %v3134 = vpop.f32.mrf.mxu0
  %v3135 = vadd.f32 %v3092, %v3134
  %v3136 = vpop.f32.mrf.mxu0
  %v3137 = vadd.f32 %v3094, %v3136
  %v3138 = vpop.f32.mrf.mxu0
  %v3139 = vadd.f32 %v3096, %v3138
  %v3140 = vpop.f32.mrf.mxu0
  %v3141 = vadd.f32 %v3098, %v3140
  %3142 = vdwg.mxu0
  %3143 = vmatprep.subr.bf16.mxu0 %v2832
  %3144 = vmatpush1.bf16.msra.mxu0 %v2831
  %3145 = vmatprep.subr.bf16.mxu0 %v2828
  %3146 = vmatpush1.bf16.msra.mxu0 %v2827
  %3147 = vmatprep.subr.bf16.mxu0 %v2824
  %3148 = vmatpush1.bf16.msra.mxu0 %v2823
  %3149 = vmatprep.subr.bf16.mxu0 %v2820
  %3150 = vmatpush1.bf16.msra.mxu0 %v2819
  %3151 = vmatprep.subr.bf16.mxu0 %v2816
  %3152 = vmatpush1.bf16.msra.mxu0 %v2815
  %3153 = vmatprep.subr.bf16.mxu0 %v2812
  %3154 = vmatpush1.bf16.msra.mxu0 %v2811
  %3155 = vmatprep.subr.bf16.mxu0 %v2808
  %3156 = vmatpush1.bf16.msra.mxu0 %v2807
  %3157 = vmatprep.subr.bf16.mxu0 %v2804
  %3158 = vmatpush1.bf16.msra.mxu0 %v2803
  %3159 = vmatprep.subr.bf16.mxu0 %v2864
  %3160 = vmatpush2.bf16.msra.mxu0 %v2863
  %3161 = vmatprep.subr.bf16.mxu0 %v2860
  %3162 = vmatpush2.bf16.msra.mxu0 %v2859
  %3163 = vmatprep.subr.bf16.mxu0 %v2856
  %3164 = vmatpush2.bf16.msra.mxu0 %v2855
  %3165 = vmatprep.subr.bf16.mxu0 %v2852
  %3166 = vmatpush2.bf16.msra.mxu0 %v2851
  %3167 = vmatprep.subr.bf16.mxu0 %v2848
  %3168 = vmatpush2.bf16.msra.mxu0 %v2847
  %3169 = vmatprep.subr.bf16.mxu0 %v2844
  %3170 = vmatpush2.bf16.msra.mxu0 %v2843
  %3171 = vmatprep.subr.bf16.mxu0 %v2840
  %3172 = vmatpush2.bf16.msra.mxu0 %v2839
  %3173 = vmatprep.subr.bf16.mxu0 %v2836
  %3174 = vmatpush2.bf16.msra.mxu0 %v2835
  %3175 = vmatprep.mubr.bf16.mxu0 %v164
  %3176 = vmatmul.mubr.bf16.gmra.mxu0 %v163
  %v3177 = vpop.f32.mrf.mxu0
  %v3178 = vadd.f32 0.0, %v3177
  %v3179 = vpop.f32.mrf.mxu0
  %v3180 = vadd.f32 0.0, %v3179
  %v3181 = vpop.f32.mrf.mxu0
  %v3182 = vadd.f32 0.0, %v3181
  %v3183 = vpop.f32.mrf.mxu0
  %v3184 = vadd.f32 0.0, %v3183
  %3185 = vdwg.mxu0
  %3186 = vmatprep.subr.bf16.mxu0 %v2896
  %3187 = vmatpush1.bf16.msra.mxu0 %v2895
  %3188 = vmatprep.subr.bf16.mxu0 %v2892
  %3189 = vmatpush1.bf16.msra.mxu0 %v2891
  %3190 = vmatprep.subr.bf16.mxu0 %v2888
  %3191 = vmatpush1.bf16.msra.mxu0 %v2887
  %3192 = vmatprep.subr.bf16.mxu0 %v2884
  %3193 = vmatpush1.bf16.msra.mxu0 %v2883
  %3194 = vmatprep.subr.bf16.mxu0 %v2880
  %3195 = vmatpush1.bf16.msra.mxu0 %v2879
  %3196 = vmatprep.subr.bf16.mxu0 %v2876
  %3197 = vmatpush1.bf16.msra.mxu0 %v2875
  %3198 = vmatprep.subr.bf16.mxu0 %v2872
  %3199 = vmatpush1.bf16.msra.mxu0 %v2871
  %3200 = vmatprep.subr.bf16.mxu0 %v2868
  %3201 = vmatpush1.bf16.msra.mxu0 %v2867
  %3202 = vmatprep.subr.bf16.mxu0 %v2928
  %3203 = vmatpush2.bf16.msra.mxu0 %v2927
  %3204 = vmatprep.subr.bf16.mxu0 %v2924
  %3205 = vmatpush2.bf16.msra.mxu0 %v2923
  %3206 = vmatprep.subr.bf16.mxu0 %v2920
  %3207 = vmatpush2.bf16.msra.mxu0 %v2919
  %3208 = vmatprep.subr.bf16.mxu0 %v2916
  %3209 = vmatpush2.bf16.msra.mxu0 %v2915
  %3210 = vmatprep.subr.bf16.mxu0 %v2912
  %3211 = vmatpush2.bf16.msra.mxu0 %v2911
  %3212 = vmatprep.subr.bf16.mxu0 %v2908
  %3213 = vmatpush2.bf16.msra.mxu0 %v2907
  %3214 = vmatprep.subr.bf16.mxu0 %v2904
  %3215 = vmatpush2.bf16.msra.mxu0 %v2903
  %3216 = vmatprep.subr.bf16.mxu0 %v2900
  %3217 = vmatpush2.bf16.msra.mxu0 %v2899
  %3218 = vmatprep.mubr.bf16.mxu0 %v166
  %3219 = vmatmul.mubr.bf16.gmra.mxu0 %v165
  %v3220 = vpop.f32.mrf.mxu0
  %v3221 = vadd.f32 %v3178, %v3220
  %v3222 = vpop.f32.mrf.mxu0
  %v3223 = vadd.f32 %v3180, %v3222
  %v3224 = vpop.f32.mrf.mxu0
  %v3225 = vadd.f32 %v3182, %v3224
  %v3226 = vpop.f32.mrf.mxu0
  %v3227 = vadd.f32 %v3184, %v3226
  %3228 = vdwg.mxu0
  %3229 = vmatprep.subr.bf16.mxu0 %v2830
  %3230 = vmatpush1.bf16.msra.mxu0 %v2829
  %3231 = vmatprep.subr.bf16.mxu0 %v2826
  %3232 = vmatpush1.bf16.msra.mxu0 %v2825
  %3233 = vmatprep.subr.bf16.mxu0 %v2822
  %3234 = vmatpush1.bf16.msra.mxu0 %v2821
  %3235 = vmatprep.subr.bf16.mxu0 %v2818
  %3236 = vmatpush1.bf16.msra.mxu0 %v2817
  %3237 = vmatprep.subr.bf16.mxu0 %v2814
  %3238 = vmatpush1.bf16.msra.mxu0 %v2813
  %3239 = vmatprep.subr.bf16.mxu0 %v2810
  %3240 = vmatpush1.bf16.msra.mxu0 %v2809
  %3241 = vmatprep.subr.bf16.mxu0 %v2806
  %3242 = vmatpush1.bf16.msra.mxu0 %v2805
  %3243 = vmatprep.subr.bf16.mxu0 %v2802
  %3244 = vmatpush1.bf16.msra.mxu0 %v2801
  %3245 = vmatprep.subr.bf16.mxu0 %v2862
  %3246 = vmatpush2.bf16.msra.mxu0 %v2861
  %3247 = vmatprep.subr.bf16.mxu0 %v2858
  %3248 = vmatpush2.bf16.msra.mxu0 %v2857
  %3249 = vmatprep.subr.bf16.mxu0 %v2854
  %3250 = vmatpush2.bf16.msra.mxu0 %v2853
  %3251 = vmatprep.subr.bf16.mxu0 %v2850
  %3252 = vmatpush2.bf16.msra.mxu0 %v2849
  %3253 = vmatprep.subr.bf16.mxu0 %v2846
  %3254 = vmatpush2.bf16.msra.mxu0 %v2845
  %3255 = vmatprep.subr.bf16.mxu0 %v2842
  %3256 = vmatpush2.bf16.msra.mxu0 %v2841
  %3257 = vmatprep.subr.bf16.mxu0 %v2838
  %3258 = vmatpush2.bf16.msra.mxu0 %v2837
  %3259 = vmatprep.subr.bf16.mxu0 %v2834
  %3260 = vmatpush2.bf16.msra.mxu0 %v2833
  %3261 = vmatprep.mubr.bf16.mxu0 %v996
  %3262 = vmatmul.mubr.bf16.gmra.mxu0 %v995
  %v3263 = vpop.f32.mrf.mxu0
  %v3264 = vadd.f32 0.0, %v3263
  %v3265 = vpop.f32.mrf.mxu0
  %v3266 = vadd.f32 0.0, %v3265
  %v3267 = vpop.f32.mrf.mxu0
  %v3268 = vadd.f32 0.0, %v3267
  %v3269 = vpop.f32.mrf.mxu0
  %v3270 = vadd.f32 0.0, %v3269
  %3271 = vdwg.mxu0
  %3272 = vmatprep.subr.bf16.mxu0 %v2894
  %3273 = vmatpush1.bf16.msra.mxu0 %v2893
  %3274 = vmatprep.subr.bf16.mxu0 %v2890
  %3275 = vmatpush1.bf16.msra.mxu0 %v2889
  %3276 = vmatprep.subr.bf16.mxu0 %v2886
  %3277 = vmatpush1.bf16.msra.mxu0 %v2885
  %3278 = vmatprep.subr.bf16.mxu0 %v2882
  %3279 = vmatpush1.bf16.msra.mxu0 %v2881
  %3280 = vmatprep.subr.bf16.mxu0 %v2878
  %3281 = vmatpush1.bf16.msra.mxu0 %v2877
  %3282 = vmatprep.subr.bf16.mxu0 %v2874
  %3283 = vmatpush1.bf16.msra.mxu0 %v2873
  %3284 = vmatprep.subr.bf16.mxu0 %v2870
  %3285 = vmatpush1.bf16.msra.mxu0 %v2869
  %3286 = vmatprep.subr.bf16.mxu0 %v2866
  %3287 = vmatpush1.bf16.msra.mxu0 %v2865
  %3288 = vmatprep.subr.bf16.mxu0 %v2926
  %3289 = vmatpush2.bf16.msra.mxu0 %v2925
  %3290 = vmatprep.subr.bf16.mxu0 %v2922
  %3291 = vmatpush2.bf16.msra.mxu0 %v2921
  %3292 = vmatprep.subr.bf16.mxu0 %v2918
  %3293 = vmatpush2.bf16.msra.mxu0 %v2917
  %3294 = vmatprep.subr.bf16.mxu0 %v2914
  %3295 = vmatpush2.bf16.msra.mxu0 %v2913
  %3296 = vmatprep.subr.bf16.mxu0 %v2910
  %3297 = vmatpush2.bf16.msra.mxu0 %v2909
  %3298 = vmatprep.subr.bf16.mxu0 %v2906
  %3299 = vmatpush2.bf16.msra.mxu0 %v2905
  %3300 = vmatprep.subr.bf16.mxu0 %v2902
  %3301 = vmatpush2.bf16.msra.mxu0 %v2901
  %3302 = vmatprep.subr.bf16.mxu0 %v2898
  %3303 = vmatpush2.bf16.msra.mxu0 %v2897
  %3304 = vmatprep.mubr.bf16.mxu0 %v998
  %3305 = vmatmul.mubr.bf16.gmra.mxu0 %v997
  %v3306 = vpop.f32.mrf.mxu0
  %v3307 = vadd.f32 %v3264, %v3306
  %v3308 = vpop.f32.mrf.mxu0
  %v3309 = vadd.f32 %v3266, %v3308
  %v3310 = vpop.f32.mrf.mxu0
  %v3311 = vadd.f32 %v3268, %v3310
  %v3312 = vpop.f32.mrf.mxu0
  %v3313 = vadd.f32 %v3270, %v3312
  %3314 = vdwg.mxu0
  %3315 = vmatprep.subr.bf16.mxu0 %v2832
  %3316 = vmatpush1.bf16.msra.mxu0 %v2831
  %3317 = vmatprep.subr.bf16.mxu0 %v2828
  %3318 = vmatpush1.bf16.msra.mxu0 %v2827
  %3319 = vmatprep.subr.bf16.mxu0 %v2824
  %3320 = vmatpush1.bf16.msra.mxu0 %v2823
  %3321 = vmatprep.subr.bf16.mxu0 %v2820
  %3322 = vmatpush1.bf16.msra.mxu0 %v2819
  %3323 = vmatprep.subr.bf16.mxu0 %v2816
  %3324 = vmatpush1.bf16.msra.mxu0 %v2815
  %3325 = vmatprep.subr.bf16.mxu0 %v2812
  %3326 = vmatpush1.bf16.msra.mxu0 %v2811
  %3327 = vmatprep.subr.bf16.mxu0 %v2808
  %3328 = vmatpush1.bf16.msra.mxu0 %v2807
  %3329 = vmatprep.subr.bf16.mxu0 %v2804
  %3330 = vmatpush1.bf16.msra.mxu0 %v2803
  %3331 = vmatprep.subr.bf16.mxu0 %v2864
  %3332 = vmatpush2.bf16.msra.mxu0 %v2863
  %3333 = vmatprep.subr.bf16.mxu0 %v2860
  %3334 = vmatpush2.bf16.msra.mxu0 %v2859
  %3335 = vmatprep.subr.bf16.mxu0 %v2856
  %3336 = vmatpush2.bf16.msra.mxu0 %v2855
  %3337 = vmatprep.subr.bf16.mxu0 %v2852
  %3338 = vmatpush2.bf16.msra.mxu0 %v2851
  %3339 = vmatprep.subr.bf16.mxu0 %v2848
  %3340 = vmatpush2.bf16.msra.mxu0 %v2847
  %3341 = vmatprep.subr.bf16.mxu0 %v2844
  %3342 = vmatpush2.bf16.msra.mxu0 %v2843
  %3343 = vmatprep.subr.bf16.mxu0 %v2840
  %3344 = vmatpush2.bf16.msra.mxu0 %v2839
  %3345 = vmatprep.subr.bf16.mxu0 %v2836
  %3346 = vmatpush2.bf16.msra.mxu0 %v2835
  %3347 = vmatprep.mubr.bf16.mxu0 %v996
  %3348 = vmatmul.mubr.bf16.gmra.mxu0 %v995
  %v3349 = vpop.f32.mrf.mxu0
  %v3350 = vadd.f32 0.0, %v3349
  %v3351 = vpop.f32.mrf.mxu0
  %v3352 = vadd.f32 0.0, %v3351
  %v3353 = vpop.f32.mrf.mxu0
  %v3354 = vadd.f32 0.0, %v3353
  %v3355 = vpop.f32.mrf.mxu0
  %v3356 = vadd.f32 0.0, %v3355
  %3357 = vdwg.mxu0
  %3358 = vmatprep.subr.bf16.mxu0 %v2896
  %3359 = vmatpush1.bf16.msra.mxu0 %v2895
  %3360 = vmatprep.subr.bf16.mxu0 %v2892
  %3361 = vmatpush1.bf16.msra.mxu0 %v2891
  %3362 = vmatprep.subr.bf16.mxu0 %v2888
  %3363 = vmatpush1.bf16.msra.mxu0 %v2887
  %3364 = vmatprep.subr.bf16.mxu0 %v2884
  %3365 = vmatpush1.bf16.msra.mxu0 %v2883
  %3366 = vmatprep.subr.bf16.mxu0 %v2880
  %3367 = vmatpush1.bf16.msra.mxu0 %v2879
  %3368 = vmatprep.subr.bf16.mxu0 %v2876
  %3369 = vmatpush1.bf16.msra.mxu0 %v2875
  %3370 = vmatprep.subr.bf16.mxu0 %v2872
  %3371 = vmatpush1.bf16.msra.mxu0 %v2871
  %3372 = vmatprep.subr.bf16.mxu0 %v2868
  %3373 = vmatpush1.bf16.msra.mxu0 %v2867
  %3374 = vmatprep.subr.bf16.mxu0 %v2928
  %3375 = vmatpush2.bf16.msra.mxu0 %v2927
  %3376 = vmatprep.subr.bf16.mxu0 %v2924
  %3377 = vmatpush2.bf16.msra.mxu0 %v2923
  %3378 = vmatprep.subr.bf16.mxu0 %v2920
  %3379 = vmatpush2.bf16.msra.mxu0 %v2919
  %3380 = vmatprep.subr.bf16.mxu0 %v2916
  %3381 = vmatpush2.bf16.msra.mxu0 %v2915
  %3382 = vmatprep.subr.bf16.mxu0 %v2912
  %3383 = vmatpush2.bf16.msra.mxu0 %v2911
  %3384 = vmatprep.subr.bf16.mxu0 %v2908
  %3385 = vmatpush2.bf16.msra.mxu0 %v2907
  %3386 = vmatprep.subr.bf16.mxu0 %v2904
  %3387 = vmatpush2.bf16.msra.mxu0 %v2903
  %3388 = vmatprep.subr.bf16.mxu0 %v2900
  %3389 = vmatpush2.bf16.msra.mxu0 %v2899
  %3390 = vmatprep.mubr.bf16.mxu0 %v998
  %3391 = vmatmul.mubr.bf16.gmra.mxu0 %v997
  %v3392 = vpop.f32.mrf.mxu0
  %v3393 = vadd.f32 %v3350, %v3392
  %v3394 = vpop.f32.mrf.mxu0
  %v3395 = vadd.f32 %v3352, %v3394
  %v3396 = vpop.f32.mrf.mxu0
  %v3397 = vadd.f32 %v3354, %v3396
  %v3398 = vpop.f32.mrf.mxu0
  %v3399 = vadd.f32 %v3356, %v3398
  %3400 = vdwg.mxu0
  %v3401 = vadd.f32 %v889, %v2194
  %v3402 = vadd.f32 %v891, %v2196
  %v3403 = vadd.f32 %v975, %v2280
  %v3404 = vadd.f32 %v977, %v2282
  %v3405 = vadd.f32 %v893, %v2198
  %v3406 = vadd.f32 %v895, %v2200
  %v3407 = vadd.f32 %v979, %v2284
  %v3408 = vadd.f32 %v981, %v2286
  %v3417 = vrot.slane %v3135, 1
  %v3418 = vrot.slane %v3137, 1
  %v3419 = vrot.slane %v3221, 1
  %v3420 = vrot.slane %v3223, 1
  %v3421 = vrot.slane %v3139, 1
  %v3422 = vrot.slane %v3141, 1
  %v3423 = vrot.slane %v3225, 1
  %v3424 = vrot.slane %v3227, 1
  %v3433 = vadd.f32 %v3401, %v3417
  %v3434 = vadd.f32 %v3402, %v3418
  %v3435 = vadd.f32 %v3403, %v3419
  %v3436 = vadd.f32 %v3404, %v3420
  %v3437 = vadd.f32 %v3405, %v3421
  %v3438 = vadd.f32 %v3406, %v3422
  %v3439 = vadd.f32 %v3407, %v3423
  %v3440 = vadd.f32 %v3408, %v3424
  %v3449 = vrot.slane %v2022, 1
  %v3450 = vrot.slane %v2024, 1
  %v3451 = vrot.slane %v2108, 1
  %v3452 = vrot.slane %v2110, 1
  %v3453 = vrot.slane %v2026, 1
  %v3454 = vrot.slane %v2028, 1
  %v3455 = vrot.slane %v2112, 1
  %v3456 = vrot.slane %v2114, 1
  %v3465 = vadd.f32 %v1081, %v3449
  %v3466 = vadd.f32 %v1083, %v3450
  %v3467 = vadd.f32 %v1167, %v3451
  %v3468 = vadd.f32 %v1169, %v3452
  %v3469 = vadd.f32 %v1085, %v3453
  %v3470 = vadd.f32 %v1087, %v3454
  %v3471 = vadd.f32 %v1171, %v3455
  %v3472 = vadd.f32 %v1173, %v3456
  %v3481 = vrot.slane %v3307, 1
  %v3482 = vrot.slane %v3309, 1
  %v3483 = vrot.slane %v3393, 1
  %v3484 = vrot.slane %v3395, 1
  %v3485 = vrot.slane %v3311, 1
  %v3486 = vrot.slane %v3313, 1
  %v3487 = vrot.slane %v3397, 1
  %v3488 = vrot.slane %v3399, 1
  %v3497 = vadd.f32 %v3465, %v3481
  %v3498 = vadd.f32 %v3466, %v3482
  %v3499 = vadd.f32 %v3467, %v3483
  %v3500 = vadd.f32 %v3468, %v3484
  %v3501 = vadd.f32 %v3469, %v3485
  %v3502 = vadd.f32 %v3470, %v3486
  %v3503 = vadd.f32 %v3471, %v3487
  %v3504 = vadd.f32 %v3472, %v3488
  %v3505 = vmax.f32 %v3433, %v3497
  %v3506 = vmax.f32 %v3434, %v3498
  %v3507 = vmax.f32 %v3435, %v3499
  %v3508 = vmax.f32 %v3436, %v3500
  %v3509 = vmax.f32 %v3437, %v3501
  %v3510 = vmax.f32 %v3438, %v3502
  %v3511 = vmax.f32 %v3439, %v3503
  %v3512 = vmax.f32 %v3440, %v3504
  %s3513 = scalar_lea.vmem %s1, 1024
  %v3514 = vld [vmem:[%s3513] sm:$0xff]
  %v3515 = vld [vmem:[%s3513 + $0x8] sm:$0xff]
  %v3516 = vld [vmem:[%s3513 + $0x10] sm:$0xff]
  %v3517 = vld [vmem:[%s3513 + $0x18] sm:$0xff]
  %v3518 = vld [vmem:[%s3513 + $0x20] sm:$0xff]
  %v3519 = vld [vmem:[%s3513 + $0x28] sm:$0xff]
  %v3520 = vld [vmem:[%s3513 + $0x30] sm:$0xff]
  %v3521 = vld [vmem:[%s3513 + $0x38] sm:$0xff]
  %v3522 = vld [vmem:[%s3513 + $0x40] sm:$0xff]
  %v3523 = vld [vmem:[%s3513 + $0x48] sm:$0xff]
  %v3524 = vld [vmem:[%s3513 + $0x50] sm:$0xff]
  %v3525 = vld [vmem:[%s3513 + $0x58] sm:$0xff]
  %v3526 = vld [vmem:[%s3513 + $0x60] sm:$0xff]
  %v3527 = vld [vmem:[%s3513 + $0x68] sm:$0xff]
  %v3528 = vld [vmem:[%s3513 + $0x70] sm:$0xff]
  %v3529 = vld [vmem:[%s3513 + $0x78] sm:$0xff]
  %v3530 = vld [vmem:[%s3513 + $0x80] sm:$0xff]
  %v3531 = vld [vmem:[%s3513 + $0x88] sm:$0xff]
  %v3532 = vld [vmem:[%s3513 + $0x90] sm:$0xff]
  %v3533 = vld [vmem:[%s3513 + $0x98] sm:$0xff]
  %v3534 = vld [vmem:[%s3513 + $0xa0] sm:$0xff]
  %v3535 = vld [vmem:[%s3513 + $0xa8] sm:$0xff]
  %v3536 = vld [vmem:[%s3513 + $0xb0] sm:$0xff]
  %v3537 = vld [vmem:[%s3513 + $0xb8] sm:$0xff]
  %v3538 = vld [vmem:[%s3513 + $0xc0] sm:$0xff]
  %v3539 = vld [vmem:[%s3513 + $0xc8] sm:$0xff]
  %v3540 = vld [vmem:[%s3513 + $0xd0] sm:$0xff]
  %v3541 = vld [vmem:[%s3513 + $0xd8] sm:$0xff]
  %v3542 = vld [vmem:[%s3513 + $0xe0] sm:$0xff]
  %v3543 = vld [vmem:[%s3513 + $0xe8] sm:$0xff]
  %v3544 = vld [vmem:[%s3513 + $0xf0] sm:$0xff]
  %v3545 = vld [vmem:[%s3513 + $0xf8] sm:$0xff]
  %v3546 = vld [vmem:[%s3513 + $0x100] sm:$0xff]
  %v3547 = vld [vmem:[%s3513 + $0x108] sm:$0xff]
  %v3548 = vld [vmem:[%s3513 + $0x110] sm:$0xff]
  %v3549 = vld [vmem:[%s3513 + $0x118] sm:$0xff]
  %v3550 = vld [vmem:[%s3513 + $0x120] sm:$0xff]
  %v3551 = vld [vmem:[%s3513 + $0x128] sm:$0xff]
  %v3552 = vld [vmem:[%s3513 + $0x130] sm:$0xff]
  %v3553 = vld [vmem:[%s3513 + $0x138] sm:$0xff]
  %v3554 = vld [vmem:[%s3513 + $0x140] sm:$0xff]
  %v3555 = vld [vmem:[%s3513 + $0x148] sm:$0xff]
  %v3556 = vld [vmem:[%s3513 + $0x150] sm:$0xff]
  %v3557 = vld [vmem:[%s3513 + $0x158] sm:$0xff]
  %v3558 = vld [vmem:[%s3513 + $0x160] sm:$0xff]
  %v3559 = vld [vmem:[%s3513 + $0x168] sm:$0xff]
  %v3560 = vld [vmem:[%s3513 + $0x170] sm:$0xff]
  %v3561 = vld [vmem:[%s3513 + $0x178] sm:$0xff]
  %v3562 = vld [vmem:[%s3513 + $0x180] sm:$0xff]
  %v3563 = vld [vmem:[%s3513 + $0x188] sm:$0xff]
  %v3564 = vld [vmem:[%s3513 + $0x190] sm:$0xff]
  %v3565 = vld [vmem:[%s3513 + $0x198] sm:$0xff]
  %v3566 = vld [vmem:[%s3513 + $0x1a0] sm:$0xff]
  %v3567 = vld [vmem:[%s3513 + $0x1a8] sm:$0xff]
  %v3568 = vld [vmem:[%s3513 + $0x1b0] sm:$0xff]
  %v3569 = vld [vmem:[%s3513 + $0x1b8] sm:$0xff]
  %v3570 = vld [vmem:[%s3513 + $0x1c0] sm:$0xff]
  %v3571 = vld [vmem:[%s3513 + $0x1c8] sm:$0xff]
  %v3572 = vld [vmem:[%s3513 + $0x1d0] sm:$0xff]
  %v3573 = vld [vmem:[%s3513 + $0x1d8] sm:$0xff]
  %v3574 = vld [vmem:[%s3513 + $0x1e0] sm:$0xff]
  %v3575 = vld [vmem:[%s3513 + $0x1e8] sm:$0xff]
  %v3576 = vld [vmem:[%s3513 + $0x1f0] sm:$0xff]
  %v3577 = vld [vmem:[%s3513 + $0x1f8] sm:$0xff]
  %v3578 = vld [vmem:[%s3513 + $0x200] sm:$0xff]
  %v3579 = vld [vmem:[%s3513 + $0x208] sm:$0xff]
  %v3580 = vld [vmem:[%s3513 + $0x210] sm:$0xff]
  %v3581 = vld [vmem:[%s3513 + $0x218] sm:$0xff]
  %v3582 = vld [vmem:[%s3513 + $0x220] sm:$0xff]
  %v3583 = vld [vmem:[%s3513 + $0x228] sm:$0xff]
  %v3584 = vld [vmem:[%s3513 + $0x230] sm:$0xff]
  %v3585 = vld [vmem:[%s3513 + $0x238] sm:$0xff]
  %v3586 = vld [vmem:[%s3513 + $0x240] sm:$0xff]
  %v3587 = vld [vmem:[%s3513 + $0x248] sm:$0xff]
  %v3588 = vld [vmem:[%s3513 + $0x250] sm:$0xff]
  %v3589 = vld [vmem:[%s3513 + $0x258] sm:$0xff]
  %v3590 = vld [vmem:[%s3513 + $0x260] sm:$0xff]
  %v3591 = vld [vmem:[%s3513 + $0x268] sm:$0xff]
  %v3592 = vld [vmem:[%s3513 + $0x270] sm:$0xff]
  %v3593 = vld [vmem:[%s3513 + $0x278] sm:$0xff]
  %v3594 = vld [vmem:[%s3513 + $0x280] sm:$0xff]
  %v3595 = vld [vmem:[%s3513 + $0x288] sm:$0xff]
  %v3596 = vld [vmem:[%s3513 + $0x290] sm:$0xff]
  %v3597 = vld [vmem:[%s3513 + $0x298] sm:$0xff]
  %v3598 = vld [vmem:[%s3513 + $0x2a0] sm:$0xff]
  %v3599 = vld [vmem:[%s3513 + $0x2a8] sm:$0xff]
  %v3600 = vld [vmem:[%s3513 + $0x2b0] sm:$0xff]
  %v3601 = vld [vmem:[%s3513 + $0x2b8] sm:$0xff]
  %v3602 = vld [vmem:[%s3513 + $0x2c0] sm:$0xff]
  %v3603 = vld [vmem:[%s3513 + $0x2c8] sm:$0xff]
  %v3604 = vld [vmem:[%s3513 + $0x2d0] sm:$0xff]
  %v3605 = vld [vmem:[%s3513 + $0x2d8] sm:$0xff]
  %v3606 = vld [vmem:[%s3513 + $0x2e0] sm:$0xff]
  %v3607 = vld [vmem:[%s3513 + $0x2e8] sm:$0xff]
  %v3608 = vld [vmem:[%s3513 + $0x2f0] sm:$0xff]
  %v3609 = vld [vmem:[%s3513 + $0x2f8] sm:$0xff]
  %v3610 = vld [vmem:[%s3513 + $0x300] sm:$0xff]
  %v3611 = vld [vmem:[%s3513 + $0x308] sm:$0xff]
  %v3612 = vld [vmem:[%s3513 + $0x310] sm:$0xff]
  %v3613 = vld [vmem:[%s3513 + $0x318] sm:$0xff]
  %v3614 = vld [vmem:[%s3513 + $0x320] sm:$0xff]
  %v3615 = vld [vmem:[%s3513 + $0x328] sm:$0xff]
  %v3616 = vld [vmem:[%s3513 + $0x330] sm:$0xff]
  %v3617 = vld [vmem:[%s3513 + $0x338] sm:$0xff]
  %v3618 = vld [vmem:[%s3513 + $0x340] sm:$0xff]
  %v3619 = vld [vmem:[%s3513 + $0x348] sm:$0xff]
  %v3620 = vld [vmem:[%s3513 + $0x350] sm:$0xff]
  %v3621 = vld [vmem:[%s3513 + $0x358] sm:$0xff]
  %v3622 = vld [vmem:[%s3513 + $0x360] sm:$0xff]
  %v3623 = vld [vmem:[%s3513 + $0x368] sm:$0xff]
  %v3624 = vld [vmem:[%s3513 + $0x370] sm:$0xff]
  %v3625 = vld [vmem:[%s3513 + $0x378] sm:$0xff]
  %v3626 = vld [vmem:[%s3513 + $0x380] sm:$0xff]
  %v3627 = vld [vmem:[%s3513 + $0x388] sm:$0xff]
  %v3628 = vld [vmem:[%s3513 + $0x390] sm:$0xff]
  %v3629 = vld [vmem:[%s3513 + $0x398] sm:$0xff]
  %v3630 = vld [vmem:[%s3513 + $0x3a0] sm:$0xff]
  %v3631 = vld [vmem:[%s3513 + $0x3a8] sm:$0xff]
  %v3632 = vld [vmem:[%s3513 + $0x3b0] sm:$0xff]
  %v3633 = vld [vmem:[%s3513 + $0x3b8] sm:$0xff]
  %v3634 = vld [vmem:[%s3513 + $0x3c0] sm:$0xff]
  %v3635 = vld [vmem:[%s3513 + $0x3c8] sm:$0xff]
  %v3636 = vld [vmem:[%s3513 + $0x3d0] sm:$0xff]
  %v3637 = vld [vmem:[%s3513 + $0x3d8] sm:$0xff]
  %v3638 = vld [vmem:[%s3513 + $0x3e0] sm:$0xff]
  %v3639 = vld [vmem:[%s3513 + $0x3e8] sm:$0xff]
  %v3640 = vld [vmem:[%s3513 + $0x3f0] sm:$0xff]
  %v3641 = vld [vmem:[%s3513 + $0x3f8] sm:$0xff]
  %v3770 = vunpack.c.l.b16 %v3514
  %v3771 = vunpack.c.h.b16 %v3514
  %v3772 = vunpack.c.l.b16 %v3515
  %v3773 = vunpack.c.h.b16 %v3515
  %v3774 = vunpack.c.l.b16 %v3516
  %v3775 = vunpack.c.h.b16 %v3516
  %v3776 = vunpack.c.l.b16 %v3517
  %v3777 = vunpack.c.h.b16 %v3517
  %v3778 = vunpack.c.l.b16 %v3518
  %v3779 = vunpack.c.h.b16 %v3518
  %v3780 = vunpack.c.l.b16 %v3519
  %v3781 = vunpack.c.h.b16 %v3519
  %v3782 = vunpack.c.l.b16 %v3520
  %v3783 = vunpack.c.h.b16 %v3520
  %v3784 = vunpack.c.l.b16 %v3521
  %v3785 = vunpack.c.h.b16 %v3521
  %v3786 = vunpack.c.l.b16 %v3522
  %v3787 = vunpack.c.h.b16 %v3522
  %v3788 = vunpack.c.l.b16 %v3523
  %v3789 = vunpack.c.h.b16 %v3523
  %v3790 = vunpack.c.l.b16 %v3524
  %v3791 = vunpack.c.h.b16 %v3524
  %v3792 = vunpack.c.l.b16 %v3525
  %v3793 = vunpack.c.h.b16 %v3525
  %v3794 = vunpack.c.l.b16 %v3526
  %v3795 = vunpack.c.h.b16 %v3526
  %v3796 = vunpack.c.l.b16 %v3527
  %v3797 = vunpack.c.h.b16 %v3527
  %v3798 = vunpack.c.l.b16 %v3528
  %v3799 = vunpack.c.h.b16 %v3528
  %v3800 = vunpack.c.l.b16 %v3529
  %v3801 = vunpack.c.h.b16 %v3529
  %v3802 = vunpack.c.l.b16 %v3530
  %v3803 = vunpack.c.h.b16 %v3530
  %v3804 = vunpack.c.l.b16 %v3531
  %v3805 = vunpack.c.h.b16 %v3531
  %v3806 = vunpack.c.l.b16 %v3532
  %v3807 = vunpack.c.h.b16 %v3532
  %v3808 = vunpack.c.l.b16 %v3533
  %v3809 = vunpack.c.h.b16 %v3533
  %v3810 = vunpack.c.l.b16 %v3534
  %v3811 = vunpack.c.h.b16 %v3534
  %v3812 = vunpack.c.l.b16 %v3535
  %v3813 = vunpack.c.h.b16 %v3535
  %v3814 = vunpack.c.l.b16 %v3536
  %v3815 = vunpack.c.h.b16 %v3536
  %v3816 = vunpack.c.l.b16 %v3537
  %v3817 = vunpack.c.h.b16 %v3537
  %v3818 = vunpack.c.l.b16 %v3538
  %v3819 = vunpack.c.h.b16 %v3538
  %v3820 = vunpack.c.l.b16 %v3539
  %v3821 = vunpack.c.h.b16 %v3539
  %v3822 = vunpack.c.l.b16 %v3540
  %v3823 = vunpack.c.h.b16 %v3540
  %v3824 = vunpack.c.l.b16 %v3541
  %v3825 = vunpack.c.h.b16 %v3541
  %v3826 = vunpack.c.l.b16 %v3542
  %v3827 = vunpack.c.h.b16 %v3542
  %v3828 = vunpack.c.l.b16 %v3543
  %v3829 = vunpack.c.h.b16 %v3543
  %v3830 = vunpack.c.l.b16 %v3544
  %v3831 = vunpack.c.h.b16 %v3544
  %v3832 = vunpack.c.l.b16 %v3545
  %v3833 = vunpack.c.h.b16 %v3545
  %v3834 = vunpack.c.l.b16 %v3546
  %v3835 = vunpack.c.h.b16 %v3546
  %v3836 = vunpack.c.l.b16 %v3547
  %v3837 = vunpack.c.h.b16 %v3547
  %v3838 = vunpack.c.l.b16 %v3548
  %v3839 = vunpack.c.h.b16 %v3548
  %v3840 = vunpack.c.l.b16 %v3549
  %v3841 = vunpack.c.h.b16 %v3549
  %v3842 = vunpack.c.l.b16 %v3550
  %v3843 = vunpack.c.h.b16 %v3550
  %v3844 = vunpack.c.l.b16 %v3551
  %v3845 = vunpack.c.h.b16 %v3551
  %v3846 = vunpack.c.l.b16 %v3552
  %v3847 = vunpack.c.h.b16 %v3552
  %v3848 = vunpack.c.l.b16 %v3553
  %v3849 = vunpack.c.h.b16 %v3553
  %v3850 = vunpack.c.l.b16 %v3554
  %v3851 = vunpack.c.h.b16 %v3554
  %v3852 = vunpack.c.l.b16 %v3555
  %v3853 = vunpack.c.h.b16 %v3555
  %v3854 = vunpack.c.l.b16 %v3556
  %v3855 = vunpack.c.h.b16 %v3556
  %v3856 = vunpack.c.l.b16 %v3557
  %v3857 = vunpack.c.h.b16 %v3557
  %v3858 = vunpack.c.l.b16 %v3558
  %v3859 = vunpack.c.h.b16 %v3558
  %v3860 = vunpack.c.l.b16 %v3559
  %v3861 = vunpack.c.h.b16 %v3559
  %v3862 = vunpack.c.l.b16 %v3560
  %v3863 = vunpack.c.h.b16 %v3560
  %v3864 = vunpack.c.l.b16 %v3561
  %v3865 = vunpack.c.h.b16 %v3561
  %v3866 = vunpack.c.l.b16 %v3562
  %v3867 = vunpack.c.h.b16 %v3562
  %v3868 = vunpack.c.l.b16 %v3563
  %v3869 = vunpack.c.h.b16 %v3563
  %v3870 = vunpack.c.l.b16 %v3564
  %v3871 = vunpack.c.h.b16 %v3564
  %v3872 = vunpack.c.l.b16 %v3565
  %v3873 = vunpack.c.h.b16 %v3565
  %v3874 = vunpack.c.l.b16 %v3566
  %v3875 = vunpack.c.h.b16 %v3566
  %v3876 = vunpack.c.l.b16 %v3567
  %v3877 = vunpack.c.h.b16 %v3567
  %v3878 = vunpack.c.l.b16 %v3568
  %v3879 = vunpack.c.h.b16 %v3568
  %v3880 = vunpack.c.l.b16 %v3569
  %v3881 = vunpack.c.h.b16 %v3569
  %v3882 = vunpack.c.l.b16 %v3570
  %v3883 = vunpack.c.h.b16 %v3570
  %v3884 = vunpack.c.l.b16 %v3571
  %v3885 = vunpack.c.h.b16 %v3571
  %v3886 = vunpack.c.l.b16 %v3572
  %v3887 = vunpack.c.h.b16 %v3572
  %v3888 = vunpack.c.l.b16 %v3573
  %v3889 = vunpack.c.h.b16 %v3573
  %v3890 = vunpack.c.l.b16 %v3574
  %v3891 = vunpack.c.h.b16 %v3574
  %v3892 = vunpack.c.l.b16 %v3575
  %v3893 = vunpack.c.h.b16 %v3575
  %v3894 = vunpack.c.l.b16 %v3576
  %v3895 = vunpack.c.h.b16 %v3576
  %v3896 = vunpack.c.l.b16 %v3577
  %v3897 = vunpack.c.h.b16 %v3577
  %v3898 = vunpack.c.l.b16 %v3578
  %v3899 = vunpack.c.h.b16 %v3578
  %v3900 = vunpack.c.l.b16 %v3579
  %v3901 = vunpack.c.h.b16 %v3579
  %v3902 = vunpack.c.l.b16 %v3580
  %v3903 = vunpack.c.h.b16 %v3580
  %v3904 = vunpack.c.l.b16 %v3581
  %v3905 = vunpack.c.h.b16 %v3581
  %v3906 = vunpack.c.l.b16 %v3582
  %v3907 = vunpack.c.h.b16 %v3582
  %v3908 = vunpack.c.l.b16 %v3583
  %v3909 = vunpack.c.h.b16 %v3583
  %v3910 = vunpack.c.l.b16 %v3584
  %v3911 = vunpack.c.h.b16 %v3584
  %v3912 = vunpack.c.l.b16 %v3585
  %v3913 = vunpack.c.h.b16 %v3585
  %v3914 = vunpack.c.l.b16 %v3586
  %v3915 = vunpack.c.h.b16 %v3586
  %v3916 = vunpack.c.l.b16 %v3587
  %v3917 = vunpack.c.h.b16 %v3587
  %v3918 = vunpack.c.l.b16 %v3588
  %v3919 = vunpack.c.h.b16 %v3588
  %v3920 = vunpack.c.l.b16 %v3589
  %v3921 = vunpack.c.h.b16 %v3589
  %v3922 = vunpack.c.l.b16 %v3590
  %v3923 = vunpack.c.h.b16 %v3590
  %v3924 = vunpack.c.l.b16 %v3591
  %v3925 = vunpack.c.h.b16 %v3591
  %v3926 = vunpack.c.l.b16 %v3592
  %v3927 = vunpack.c.h.b16 %v3592
  %v3928 = vunpack.c.l.b16 %v3593
  %v3929 = vunpack.c.h.b16 %v3593
  %v3930 = vunpack.c.l.b16 %v3594
  %v3931 = vunpack.c.h.b16 %v3594
  %v3932 = vunpack.c.l.b16 %v3595
  %v3933 = vunpack.c.h.b16 %v3595
  %v3934 = vunpack.c.l.b16 %v3596
  %v3935 = vunpack.c.h.b16 %v3596
  %v3936 = vunpack.c.l.b16 %v3597
  %v3937 = vunpack.c.h.b16 %v3597
  %v3938 = vunpack.c.l.b16 %v3598
  %v3939 = vunpack.c.h.b16 %v3598
  %v3940 = vunpack.c.l.b16 %v3599
  %v3941 = vunpack.c.h.b16 %v3599
  %v3942 = vunpack.c.l.b16 %v3600
  %v3943 = vunpack.c.h.b16 %v3600
  %v3944 = vunpack.c.l.b16 %v3601
  %v3945 = vunpack.c.h.b16 %v3601
  %v3946 = vunpack.c.l.b16 %v3602
  %v3947 = vunpack.c.h.b16 %v3602
  %v3948 = vunpack.c.l.b16 %v3603
  %v3949 = vunpack.c.h.b16 %v3603
  %v3950 = vunpack.c.l.b16 %v3604
  %v3951 = vunpack.c.h.b16 %v3604
  %v3952 = vunpack.c.l.b16 %v3605
  %v3953 = vunpack.c.h.b16 %v3605
  %v3954 = vunpack.c.l.b16 %v3606
  %v3955 = vunpack.c.h.b16 %v3606
  %v3956 = vunpack.c.l.b16 %v3607
  %v3957 = vunpack.c.h.b16 %v3607
  %v3958 = vunpack.c.l.b16 %v3608
  %v3959 = vunpack.c.h.b16 %v3608
  %v3960 = vunpack.c.l.b16 %v3609
  %v3961 = vunpack.c.h.b16 %v3609
  %v3962 = vunpack.c.l.b16 %v3610
  %v3963 = vunpack.c.h.b16 %v3610
  %v3964 = vunpack.c.l.b16 %v3611
  %v3965 = vunpack.c.h.b16 %v3611
  %v3966 = vunpack.c.l.b16 %v3612
  %v3967 = vunpack.c.h.b16 %v3612
  %v3968 = vunpack.c.l.b16 %v3613
  %v3969 = vunpack.c.h.b16 %v3613
  %v3970 = vunpack.c.l.b16 %v3614
  %v3971 = vunpack.c.h.b16 %v3614
  %v3972 = vunpack.c.l.b16 %v3615
  %v3973 = vunpack.c.h.b16 %v3615
  %v3974 = vunpack.c.l.b16 %v3616
  %v3975 = vunpack.c.h.b16 %v3616
  %v3976 = vunpack.c.l.b16 %v3617
  %v3977 = vunpack.c.h.b16 %v3617
  %v3978 = vunpack.c.l.b16 %v3618
  %v3979 = vunpack.c.h.b16 %v3618
  %v3980 = vunpack.c.l.b16 %v3619
  %v3981 = vunpack.c.h.b16 %v3619
  %v3982 = vunpack.c.l.b16 %v3620
  %v3983 = vunpack.c.h.b16 %v3620
  %v3984 = vunpack.c.l.b16 %v3621
  %v3985 = vunpack.c.h.b16 %v3621
  %v3986 = vunpack.c.l.b16 %v3622
  %v3987 = vunpack.c.h.b16 %v3622
  %v3988 = vunpack.c.l.b16 %v3623
  %v3989 = vunpack.c.h.b16 %v3623
  %v3990 = vunpack.c.l.b16 %v3624
  %v3991 = vunpack.c.h.b16 %v3624
  %v3992 = vunpack.c.l.b16 %v3625
  %v3993 = vunpack.c.h.b16 %v3625
  %v3994 = vunpack.c.l.b16 %v3626
  %v3995 = vunpack.c.h.b16 %v3626
  %v3996 = vunpack.c.l.b16 %v3627
  %v3997 = vunpack.c.h.b16 %v3627
  %v3998 = vunpack.c.l.b16 %v3628
  %v3999 = vunpack.c.h.b16 %v3628
  %v4000 = vunpack.c.l.b16 %v3629
  %v4001 = vunpack.c.h.b16 %v3629
  %v4002 = vunpack.c.l.b16 %v3630
  %v4003 = vunpack.c.h.b16 %v3630
  %v4004 = vunpack.c.l.b16 %v3631
  %v4005 = vunpack.c.h.b16 %v3631
  %v4006 = vunpack.c.l.b16 %v3632
  %v4007 = vunpack.c.h.b16 %v3632
  %v4008 = vunpack.c.l.b16 %v3633
  %v4009 = vunpack.c.h.b16 %v3633
  %v4010 = vunpack.c.l.b16 %v3634
  %v4011 = vunpack.c.h.b16 %v3634
  %v4012 = vunpack.c.l.b16 %v3635
  %v4013 = vunpack.c.h.b16 %v3635
  %v4014 = vunpack.c.l.b16 %v3636
  %v4015 = vunpack.c.h.b16 %v3636
  %v4016 = vunpack.c.l.b16 %v3637
  %v4017 = vunpack.c.h.b16 %v3637
  %v4018 = vunpack.c.l.b16 %v3638
  %v4019 = vunpack.c.h.b16 %v3638
  %v4020 = vunpack.c.l.b16 %v3639
  %v4021 = vunpack.c.h.b16 %v3639
  %v4022 = vunpack.c.l.b16 %v3640
  %v4023 = vunpack.c.h.b16 %v3640
  %v4024 = vunpack.c.l.b16 %v3641
  %v4025 = vunpack.c.h.b16 %v3641
  %v4026 = vpack.c.b16 %v3774, %v3770
  %v4027 = vpack.c.b16 %v3775, %v3771
  %v4028 = vpack.c.b16 %v3776, %v3772
  %v4029 = vpack.c.b16 %v3777, %v3773
  %v4030 = vpack.c.b16 %v3782, %v3778
  %v4031 = vpack.c.b16 %v3783, %v3779
  %v4032 = vpack.c.b16 %v3784, %v3780
  %v4033 = vpack.c.b16 %v3785, %v3781
  %v4034 = vpack.c.b16 %v3790, %v3786
  %v4035 = vpack.c.b16 %v3791, %v3787
  %v4036 = vpack.c.b16 %v3792, %v3788
  %v4037 = vpack.c.b16 %v3793, %v3789
  %v4038 = vpack.c.b16 %v3798, %v3794
  %v4039 = vpack.c.b16 %v3799, %v3795
  %v4040 = vpack.c.b16 %v3800, %v3796
  %v4041 = vpack.c.b16 %v3801, %v3797
  %v4042 = vpack.c.b16 %v3806, %v3802
  %v4043 = vpack.c.b16 %v3807, %v3803
  %v4044 = vpack.c.b16 %v3808, %v3804
  %v4045 = vpack.c.b16 %v3809, %v3805
  %v4046 = vpack.c.b16 %v3814, %v3810
  %v4047 = vpack.c.b16 %v3815, %v3811
  %v4048 = vpack.c.b16 %v3816, %v3812
  %v4049 = vpack.c.b16 %v3817, %v3813
  %v4050 = vpack.c.b16 %v3822, %v3818
  %v4051 = vpack.c.b16 %v3823, %v3819
  %v4052 = vpack.c.b16 %v3824, %v3820
  %v4053 = vpack.c.b16 %v3825, %v3821
  %v4054 = vpack.c.b16 %v3830, %v3826
  %v4055 = vpack.c.b16 %v3831, %v3827
  %v4056 = vpack.c.b16 %v3832, %v3828
  %v4057 = vpack.c.b16 %v3833, %v3829
  %v4058 = vpack.c.b16 %v3838, %v3834
  %v4059 = vpack.c.b16 %v3839, %v3835
  %v4060 = vpack.c.b16 %v3840, %v3836
  %v4061 = vpack.c.b16 %v3841, %v3837
  %v4062 = vpack.c.b16 %v3846, %v3842
  %v4063 = vpack.c.b16 %v3847, %v3843
  %v4064 = vpack.c.b16 %v3848, %v3844
  %v4065 = vpack.c.b16 %v3849, %v3845
  %v4066 = vpack.c.b16 %v3854, %v3850
  %v4067 = vpack.c.b16 %v3855, %v3851
  %v4068 = vpack.c.b16 %v3856, %v3852
  %v4069 = vpack.c.b16 %v3857, %v3853
  %v4070 = vpack.c.b16 %v3862, %v3858
  %v4071 = vpack.c.b16 %v3863, %v3859
  %v4072 = vpack.c.b16 %v3864, %v3860
  %v4073 = vpack.c.b16 %v3865, %v3861
  %v4074 = vpack.c.b16 %v3870, %v3866
  %v4075 = vpack.c.b16 %v3871, %v3867
  %v4076 = vpack.c.b16 %v3872, %v3868
  %v4077 = vpack.c.b16 %v3873, %v3869
  %v4078 = vpack.c.b16 %v3878, %v3874
  %v4079 = vpack.c.b16 %v3879, %v3875
  %v4080 = vpack.c.b16 %v3880, %v3876
  %v4081 = vpack.c.b16 %v3881, %v3877
  %v4082 = vpack.c.b16 %v3886, %v3882
  %v4083 = vpack.c.b16 %v3887, %v3883
  %v4084 = vpack.c.b16 %v3888, %v3884
  %v4085 = vpack.c.b16 %v3889, %v3885
  %v4086 = vpack.c.b16 %v3894, %v3890
  %v4087 = vpack.c.b16 %v3895, %v3891
  %v4088 = vpack.c.b16 %v3896, %v3892
  %v4089 = vpack.c.b16 %v3897, %v3893
  %v4090 = vpack.c.b16 %v3902, %v3898
  %v4091 = vpack.c.b16 %v3903, %v3899
  %v4092 = vpack.c.b16 %v3904, %v3900
  %v4093 = vpack.c.b16 %v3905, %v3901
  %v4094 = vpack.c.b16 %v3910, %v3906
  %v4095 = vpack.c.b16 %v3911, %v3907
  %v4096 = vpack.c.b16 %v3912, %v3908
  %v4097 = vpack.c.b16 %v3913, %v3909
  %v4098 = vpack.c.b16 %v3918, %v3914
  %v4099 = vpack.c.b16 %v3919, %v3915
  %v4100 = vpack.c.b16 %v3920, %v3916
  %v4101 = vpack.c.b16 %v3921, %v3917
  %v4102 = vpack.c.b16 %v3926, %v3922
  %v4103 = vpack.c.b16 %v3927, %v3923
  %v4104 = vpack.c.b16 %v3928, %v3924
  %v4105 = vpack.c.b16 %v3929, %v3925
  %v4106 = vpack.c.b16 %v3934, %v3930
  %v4107 = vpack.c.b16 %v3935, %v3931
  %v4108 = vpack.c.b16 %v3936, %v3932
  %v4109 = vpack.c.b16 %v3937, %v3933
  %v4110 = vpack.c.b16 %v3942, %v3938
  %v4111 = vpack.c.b16 %v3943, %v3939
  %v4112 = vpack.c.b16 %v3944, %v3940
  %v4113 = vpack.c.b16 %v3945, %v3941
  %v4114 = vpack.c.b16 %v3950, %v3946
  %v4115 = vpack.c.b16 %v3951, %v3947
  %v4116 = vpack.c.b16 %v3952, %v3948
  %v4117 = vpack.c.b16 %v3953, %v3949
  %v4118 = vpack.c.b16 %v3958, %v3954
  %v4119 = vpack.c.b16 %v3959, %v3955
  %v4120 = vpack.c.b16 %v3960, %v3956
  %v4121 = vpack.c.b16 %v3961, %v3957
  %v4122 = vpack.c.b16 %v3966, %v3962
  %v4123 = vpack.c.b16 %v3967, %v3963
  %v4124 = vpack.c.b16 %v3968, %v3964
  %v4125 = vpack.c.b16 %v3969, %v3965
  %v4126 = vpack.c.b16 %v3974, %v3970
  %v4127 = vpack.c.b16 %v3975, %v3971
  %v4128 = vpack.c.b16 %v3976, %v3972
  %v4129 = vpack.c.b16 %v3977, %v3973
  %v4130 = vpack.c.b16 %v3982, %v3978
  %v4131 = vpack.c.b16 %v3983, %v3979
  %v4132 = vpack.c.b16 %v3984, %v3980
  %v4133 = vpack.c.b16 %v3985, %v3981
  %v4134 = vpack.c.b16 %v3990, %v3986
  %v4135 = vpack.c.b16 %v3991, %v3987
  %v4136 = vpack.c.b16 %v3992, %v3988
  %v4137 = vpack.c.b16 %v3993, %v3989
  %v4138 = vpack.c.b16 %v3998, %v3994
  %v4139 = vpack.c.b16 %v3999, %v3995
  %v4140 = vpack.c.b16 %v4000, %v3996
  %v4141 = vpack.c.b16 %v4001, %v3997
  %v4142 = vpack.c.b16 %v4006, %v4002
  %v4143 = vpack.c.b16 %v4007, %v4003
  %v4144 = vpack.c.b16 %v4008, %v4004
  %v4145 = vpack.c.b16 %v4009, %v4005
  %v4146 = vpack.c.b16 %v4014, %v4010
  %v4147 = vpack.c.b16 %v4015, %v4011
  %v4148 = vpack.c.b16 %v4016, %v4012
  %v4149 = vpack.c.b16 %v4017, %v4013
  %v4150 = vpack.c.b16 %v4022, %v4018
  %v4151 = vpack.c.b16 %v4023, %v4019
  %v4152 = vpack.c.b16 %v4024, %v4020
  %v4153 = vpack.c.b16 %v4025, %v4021
  %4282 = vmatprep.subr.bf16.mxu0 %v4055
  %4283 = vmatpush1.bf16.msra.mxu0 %v4054
  %4284 = vmatprep.subr.bf16.mxu0 %v4051
  %4285 = vmatpush1.bf16.msra.mxu0 %v4050
  %4286 = vmatprep.subr.bf16.mxu0 %v4047
  %4287 = vmatpush1.bf16.msra.mxu0 %v4046
  %4288 = vmatprep.subr.bf16.mxu0 %v4043
  %4289 = vmatpush1.bf16.msra.mxu0 %v4042
  %4290 = vmatprep.subr.bf16.mxu0 %v4039
  %4291 = vmatpush1.bf16.msra.mxu0 %v4038
  %4292 = vmatprep.subr.bf16.mxu0 %v4035
  %4293 = vmatpush1.bf16.msra.mxu0 %v4034
  %4294 = vmatprep.subr.bf16.mxu0 %v4031
  %4295 = vmatpush1.bf16.msra.mxu0 %v4030
  %4296 = vmatprep.subr.bf16.mxu0 %v4027
  %4297 = vmatpush1.bf16.msra.mxu0 %v4026
  %4298 = vmatprep.subr.bf16.mxu0 %v4087
  %4299 = vmatpush2.bf16.msra.mxu0 %v4086
  %4300 = vmatprep.subr.bf16.mxu0 %v4083
  %4301 = vmatpush2.bf16.msra.mxu0 %v4082
  %4302 = vmatprep.subr.bf16.mxu0 %v4079
  %4303 = vmatpush2.bf16.msra.mxu0 %v4078
  %4304 = vmatprep.subr.bf16.mxu0 %v4075
  %4305 = vmatpush2.bf16.msra.mxu0 %v4074
  %4306 = vmatprep.subr.bf16.mxu0 %v4071
  %4307 = vmatpush2.bf16.msra.mxu0 %v4070
  %4308 = vmatprep.subr.bf16.mxu0 %v4067
  %4309 = vmatpush2.bf16.msra.mxu0 %v4066
  %4310 = vmatprep.subr.bf16.mxu0 %v4063
  %4311 = vmatpush2.bf16.msra.mxu0 %v4062
  %4312 = vmatprep.subr.bf16.mxu0 %v4059
  %4313 = vmatpush2.bf16.msra.mxu0 %v4058
  %4314 = vmatprep.mubr.bf16.mxu0 %v164
  %4315 = vmatmul.mubr.bf16.gmra.mxu0 %v163
  %v4316 = vpop.f32.mrf.mxu0
  %v4317 = vadd.f32 0.0, %v4316
  %v4318 = vpop.f32.mrf.mxu0
  %v4319 = vadd.f32 0.0, %v4318
  %v4320 = vpop.f32.mrf.mxu0
  %v4321 = vadd.f32 0.0, %v4320
  %v4322 = vpop.f32.mrf.mxu0
  %v4323 = vadd.f32 0.0, %v4322
  %4324 = vdwg.mxu0
  %4325 = vmatprep.subr.bf16.mxu0 %v4119
  %4326 = vmatpush1.bf16.msra.mxu0 %v4118
  %4327 = vmatprep.subr.bf16.mxu0 %v4115
  %4328 = vmatpush1.bf16.msra.mxu0 %v4114
  %4329 = vmatprep.subr.bf16.mxu0 %v4111
  %4330 = vmatpush1.bf16.msra.mxu0 %v4110
  %4331 = vmatprep.subr.bf16.mxu0 %v4107
  %4332 = vmatpush1.bf16.msra.mxu0 %v4106
  %4333 = vmatprep.subr.bf16.mxu0 %v4103
  %4334 = vmatpush1.bf16.msra.mxu0 %v4102
  %4335 = vmatprep.subr.bf16.mxu0 %v4099
  %4336 = vmatpush1.bf16.msra.mxu0 %v4098
  %4337 = vmatprep.subr.bf16.mxu0 %v4095
  %4338 = vmatpush1.bf16.msra.mxu0 %v4094
  %4339 = vmatprep.subr.bf16.mxu0 %v4091
  %4340 = vmatpush1.bf16.msra.mxu0 %v4090
  %4341 = vmatprep.subr.bf16.mxu0 %v4151
  %4342 = vmatpush2.bf16.msra.mxu0 %v4150
  %4343 = vmatprep.subr.bf16.mxu0 %v4147
  %4344 = vmatpush2.bf16.msra.mxu0 %v4146
  %4345 = vmatprep.subr.bf16.mxu0 %v4143
  %4346 = vmatpush2.bf16.msra.mxu0 %v4142
  %4347 = vmatprep.subr.bf16.mxu0 %v4139
  %4348 = vmatpush2.bf16.msra.mxu0 %v4138
  %4349 = vmatprep.subr.bf16.mxu0 %v4135
  %4350 = vmatpush2.bf16.msra.mxu0 %v4134
  %4351 = vmatprep.subr.bf16.mxu0 %v4131
  %4352 = vmatpush2.bf16.msra.mxu0 %v4130
  %4353 = vmatprep.subr.bf16.mxu0 %v4127
  %4354 = vmatpush2.bf16.msra.mxu0 %v4126
  %4355 = vmatprep.subr.bf16.mxu0 %v4123
  %4356 = vmatpush2.bf16.msra.mxu0 %v4122
  %4357 = vmatprep.mubr.bf16.mxu0 %v166
  %4358 = vmatmul.mubr.bf16.gmra.mxu0 %v165
  %v4359 = vpop.f32.mrf.mxu0
  %v4360 = vadd.f32 %v4317, %v4359
  %v4361 = vpop.f32.mrf.mxu0
  %v4362 = vadd.f32 %v4319, %v4361
  %v4363 = vpop.f32.mrf.mxu0
  %v4364 = vadd.f32 %v4321, %v4363
  %v4365 = vpop.f32.mrf.mxu0
  %v4366 = vadd.f32 %v4323, %v4365
  %4367 = vdwg.mxu0
  %4368 = vmatprep.subr.bf16.mxu0 %v4057
  %4369 = vmatpush1.bf16.msra.mxu0 %v4056
  %4370 = vmatprep.subr.bf16.mxu0 %v4053
  %4371 = vmatpush1.bf16.msra.mxu0 %v4052
  %4372 = vmatprep.subr.bf16.mxu0 %v4049
  %4373 = vmatpush1.bf16.msra.mxu0 %v4048
  %4374 = vmatprep.subr.bf16.mxu0 %v4045
  %4375 = vmatpush1.bf16.msra.mxu0 %v4044
  %4376 = vmatprep.subr.bf16.mxu0 %v4041
  %4377 = vmatpush1.bf16.msra.mxu0 %v4040
  %4378 = vmatprep.subr.bf16.mxu0 %v4037
  %4379 = vmatpush1.bf16.msra.mxu0 %v4036
  %4380 = vmatprep.subr.bf16.mxu0 %v4033
  %4381 = vmatpush1.bf16.msra.mxu0 %v4032
  %4382 = vmatprep.subr.bf16.mxu0 %v4029
  %4383 = vmatpush1.bf16.msra.mxu0 %v4028
  %4384 = vmatprep.subr.bf16.mxu0 %v4089
  %4385 = vmatpush2.bf16.msra.mxu0 %v4088
  %4386 = vmatprep.subr.bf16.mxu0 %v4085
  %4387 = vmatpush2.bf16.msra.mxu0 %v4084
  %4388 = vmatprep.subr.bf16.mxu0 %v4081
  %4389 = vmatpush2.bf16.msra.mxu0 %v4080
  %4390 = vmatprep.subr.bf16.mxu0 %v4077
  %4391 = vmatpush2.bf16.msra.mxu0 %v4076
  %4392 = vmatprep.subr.bf16.mxu0 %v4073
  %4393 = vmatpush2.bf16.msra.mxu0 %v4072
  %4394 = vmatprep.subr.bf16.mxu0 %v4069
  %4395 = vmatpush2.bf16.msra.mxu0 %v4068
  %4396 = vmatprep.subr.bf16.mxu0 %v4065
  %4397 = vmatpush2.bf16.msra.mxu0 %v4064
  %4398 = vmatprep.subr.bf16.mxu0 %v4061
  %4399 = vmatpush2.bf16.msra.mxu0 %v4060
  %4400 = vmatprep.mubr.bf16.mxu0 %v164
  %4401 = vmatmul.mubr.bf16.gmra.mxu0 %v163
  %v4402 = vpop.f32.mrf.mxu0
  %v4403 = vadd.f32 0.0, %v4402
  %v4404 = vpop.f32.mrf.mxu0
  %v4405 = vadd.f32 0.0, %v4404
  %v4406 = vpop.f32.mrf.mxu0
  %v4407 = vadd.f32 0.0, %v4406
  %v4408 = vpop.f32.mrf.mxu0
  %v4409 = vadd.f32 0.0, %v4408
  %4410 = vdwg.mxu0
  %4411 = vmatprep.subr.bf16.mxu0 %v4121
  %4412 = vmatpush1.bf16.msra.mxu0 %v4120
  %4413 = vmatprep.subr.bf16.mxu0 %v4117
  %4414 = vmatpush1.bf16.msra.mxu0 %v4116
  %4415 = vmatprep.subr.bf16.mxu0 %v4113
  %4416 = vmatpush1.bf16.msra.mxu0 %v4112
  %4417 = vmatprep.subr.bf16.mxu0 %v4109
  %4418 = vmatpush1.bf16.msra.mxu0 %v4108
  %4419 = vmatprep.subr.bf16.mxu0 %v4105
  %4420 = vmatpush1.bf16.msra.mxu0 %v4104
  %4421 = vmatprep.subr.bf16.mxu0 %v4101
  %4422 = vmatpush1.bf16.msra.mxu0 %v4100
  %4423 = vmatprep.subr.bf16.mxu0 %v4097
  %4424 = vmatpush1.bf16.msra.mxu0 %v4096
  %4425 = vmatprep.subr.bf16.mxu0 %v4093
  %4426 = vmatpush1.bf16.msra.mxu0 %v4092
  %4427 = vmatprep.subr.bf16.mxu0 %v4153
  %4428 = vmatpush2.bf16.msra.mxu0 %v4152
  %4429 = vmatprep.subr.bf16.mxu0 %v4149
  %4430 = vmatpush2.bf16.msra.mxu0 %v4148
  %4431 = vmatprep.subr.bf16.mxu0 %v4145
  %4432 = vmatpush2.bf16.msra.mxu0 %v4144
  %4433 = vmatprep.subr.bf16.mxu0 %v4141
  %4434 = vmatpush2.bf16.msra.mxu0 %v4140
  %4435 = vmatprep.subr.bf16.mxu0 %v4137
  %4436 = vmatpush2.bf16.msra.mxu0 %v4136
  %4437 = vmatprep.subr.bf16.mxu0 %v4133
  %4438 = vmatpush2.bf16.msra.mxu0 %v4132
  %4439 = vmatprep.subr.bf16.mxu0 %v4129
  %4440 = vmatpush2.bf16.msra.mxu0 %v4128
  %4441 = vmatprep.subr.bf16.mxu0 %v4125
  %4442 = vmatpush2.bf16.msra.mxu0 %v4124
  %4443 = vmatprep.mubr.bf16.mxu0 %v166
  %4444 = vmatmul.mubr.bf16.gmra.mxu0 %v165
  %v4445 = vpop.f32.mrf.mxu0
  %v4446 = vadd.f32 %v4403, %v4445
  %v4447 = vpop.f32.mrf.mxu0
  %v4448 = vadd.f32 %v4405, %v4447
  %v4449 = vpop.f32.mrf.mxu0
  %v4450 = vadd.f32 %v4407, %v4449
  %v4451 = vpop.f32.mrf.mxu0
  %v4452 = vadd.f32 %v4409, %v4451
  %4453 = vdwg.mxu0
  %4454 = vmatprep.subr.bf16.mxu0 %v4055
  %4455 = vmatpush1.bf16.msra.mxu0 %v4054
  %4456 = vmatprep.subr.bf16.mxu0 %v4051
  %4457 = vmatpush1.bf16.msra.mxu0 %v4050
  %4458 = vmatprep.subr.bf16.mxu0 %v4047
  %4459 = vmatpush1.bf16.msra.mxu0 %v4046
  %4460 = vmatprep.subr.bf16.mxu0 %v4043
  %4461 = vmatpush1.bf16.msra.mxu0 %v4042
  %4462 = vmatprep.subr.bf16.mxu0 %v4039
  %4463 = vmatpush1.bf16.msra.mxu0 %v4038
  %4464 = vmatprep.subr.bf16.mxu0 %v4035
  %4465 = vmatpush1.bf16.msra.mxu0 %v4034
  %4466 = vmatprep.subr.bf16.mxu0 %v4031
  %4467 = vmatpush1.bf16.msra.mxu0 %v4030
  %4468 = vmatprep.subr.bf16.mxu0 %v4027
  %4469 = vmatpush1.bf16.msra.mxu0 %v4026
  %4470 = vmatprep.subr.bf16.mxu0 %v4087
  %4471 = vmatpush2.bf16.msra.mxu0 %v4086
  %4472 = vmatprep.subr.bf16.mxu0 %v4083
  %4473 = vmatpush2.bf16.msra.mxu0 %v4082
  %4474 = vmatprep.subr.bf16.mxu0 %v4079
  %4475 = vmatpush2.bf16.msra.mxu0 %v4078
  %4476 = vmatprep.subr.bf16.mxu0 %v4075
  %4477 = vmatpush2.bf16.msra.mxu0 %v4074
  %4478 = vmatprep.subr.bf16.mxu0 %v4071
  %4479 = vmatpush2.bf16.msra.mxu0 %v4070
  %4480 = vmatprep.subr.bf16.mxu0 %v4067
  %4481 = vmatpush2.bf16.msra.mxu0 %v4066
  %4482 = vmatprep.subr.bf16.mxu0 %v4063
  %4483 = vmatpush2.bf16.msra.mxu0 %v4062
  %4484 = vmatprep.subr.bf16.mxu0 %v4059
  %4485 = vmatpush2.bf16.msra.mxu0 %v4058
  %4486 = vmatprep.mubr.bf16.mxu0 %v996
  %4487 = vmatmul.mubr.bf16.gmra.mxu0 %v995
  %v4488 = vpop.f32.mrf.mxu0
  %v4489 = vadd.f32 0.0, %v4488
  %v4490 = vpop.f32.mrf.mxu0
  %v4491 = vadd.f32 0.0, %v4490
  %v4492 = vpop.f32.mrf.mxu0
  %v4493 = vadd.f32 0.0, %v4492
  %v4494 = vpop.f32.mrf.mxu0
  %v4495 = vadd.f32 0.0, %v4494
  %4496 = vdwg.mxu0
  %4497 = vmatprep.subr.bf16.mxu0 %v4119
  %4498 = vmatpush1.bf16.msra.mxu0 %v4118
  %4499 = vmatprep.subr.bf16.mxu0 %v4115
  %4500 = vmatpush1.bf16.msra.mxu0 %v4114
  %4501 = vmatprep.subr.bf16.mxu0 %v4111
  %4502 = vmatpush1.bf16.msra.mxu0 %v4110
  %4503 = vmatprep.subr.bf16.mxu0 %v4107
  %4504 = vmatpush1.bf16.msra.mxu0 %v4106
  %4505 = vmatprep.subr.bf16.mxu0 %v4103
  %4506 = vmatpush1.bf16.msra.mxu0 %v4102
  %4507 = vmatprep.subr.bf16.mxu0 %v4099
  %4508 = vmatpush1.bf16.msra.mxu0 %v4098
  %4509 = vmatprep.subr.bf16.mxu0 %v4095
  %4510 = vmatpush1.bf16.msra.mxu0 %v4094
  %4511 = vmatprep.subr.bf16.mxu0 %v4091
  %4512 = vmatpush1.bf16.msra.mxu0 %v4090
  %4513 = vmatprep.subr.bf16.mxu0 %v4151
  %4514 = vmatpush2.bf16.msra.mxu0 %v4150
  %4515 = vmatprep.subr.bf16.mxu0 %v4147
  %4516 = vmatpush2.bf16.msra.mxu0 %v4146
  %4517 = vmatprep.subr.bf16.mxu0 %v4143
  %4518 = vmatpush2.bf16.msra.mxu0 %v4142
  %4519 = vmatprep.subr.bf16.mxu0 %v4139
  %4520 = vmatpush2.bf16.msra.mxu0 %v4138
  %4521 = vmatprep.subr.bf16.mxu0 %v4135
  %4522 = vmatpush2.bf16.msra.mxu0 %v4134
  %4523 = vmatprep.subr.bf16.mxu0 %v4131
  %4524 = vmatpush2.bf16.msra.mxu0 %v4130
  %4525 = vmatprep.subr.bf16.mxu0 %v4127
  %4526 = vmatpush2.bf16.msra.mxu0 %v4126
  %4527 = vmatprep.subr.bf16.mxu0 %v4123
  %4528 = vmatpush2.bf16.msra.mxu0 %v4122
  %4529 = vmatprep.mubr.bf16.mxu0 %v998
  %4530 = vmatmul.mubr.bf16.gmra.mxu0 %v997
  %v4531 = vpop.f32.mrf.mxu0
  %v4532 = vadd.f32 %v4489, %v4531
  %v4533 = vpop.f32.mrf.mxu0
  %v4534 = vadd.f32 %v4491, %v4533
  %v4535 = vpop.f32.mrf.mxu0
  %v4536 = vadd.f32 %v4493, %v4535
  %v4537 = vpop.f32.mrf.mxu0
  %v4538 = vadd.f32 %v4495, %v4537
  %4539 = vdwg.mxu0
  %4540 = vmatprep.subr.bf16.mxu0 %v4057
  %4541 = vmatpush1.bf16.msra.mxu0 %v4056
  %4542 = vmatprep.subr.bf16.mxu0 %v4053
  %4543 = vmatpush1.bf16.msra.mxu0 %v4052
  %4544 = vmatprep.subr.bf16.mxu0 %v4049
  %4545 = vmatpush1.bf16.msra.mxu0 %v4048
  %4546 = vmatprep.subr.bf16.mxu0 %v4045
  %4547 = vmatpush1.bf16.msra.mxu0 %v4044
  %4548 = vmatprep.subr.bf16.mxu0 %v4041
  %4549 = vmatpush1.bf16.msra.mxu0 %v4040
  %4550 = vmatprep.subr.bf16.mxu0 %v4037
  %4551 = vmatpush1.bf16.msra.mxu0 %v4036
  %4552 = vmatprep.subr.bf16.mxu0 %v4033
  %4553 = vmatpush1.bf16.msra.mxu0 %v4032
  %4554 = vmatprep.subr.bf16.mxu0 %v4029
  %4555 = vmatpush1.bf16.msra.mxu0 %v4028
  %4556 = vmatprep.subr.bf16.mxu0 %v4089
  %4557 = vmatpush2.bf16.msra.mxu0 %v4088
  %4558 = vmatprep.subr.bf16.mxu0 %v4085
  %4559 = vmatpush2.bf16.msra.mxu0 %v4084
  %4560 = vmatprep.subr.bf16.mxu0 %v4081
  %4561 = vmatpush2.bf16.msra.mxu0 %v4080
  %4562 = vmatprep.subr.bf16.mxu0 %v4077
  %4563 = vmatpush2.bf16.msra.mxu0 %v4076
  %4564 = vmatprep.subr.bf16.mxu0 %v4073
  %4565 = vmatpush2.bf16.msra.mxu0 %v4072
  %4566 = vmatprep.subr.bf16.mxu0 %v4069
  %4567 = vmatpush2.bf16.msra.mxu0 %v4068
  %4568 = vmatprep.subr.bf16.mxu0 %v4065
  %4569 = vmatpush2.bf16.msra.mxu0 %v4064
  %4570 = vmatprep.subr.bf16.mxu0 %v4061
  %4571 = vmatpush2.bf16.msra.mxu0 %v4060
  %4572 = vmatprep.mubr.bf16.mxu0 %v996
  %4573 = vmatmul.mubr.bf16.gmra.mxu0 %v995
  %v4574 = vpop.f32.mrf.mxu0
  %v4575 = vadd.f32 0.0, %v4574
  %v4576 = vpop.f32.mrf.mxu0
  %v4577 = vadd.f32 0.0, %v4576
  %v4578 = vpop.f32.mrf.mxu0
  %v4579 = vadd.f32 0.0, %v4578
  %v4580 = vpop.f32.mrf.mxu0
  %v4581 = vadd.f32 0.0, %v4580
  %4582 = vdwg.mxu0
  %4583 = vmatprep.subr.bf16.mxu0 %v4121
  %4584 = vmatpush1.bf16.msra.mxu0 %v4120
  %4585 = vmatprep.subr.bf16.mxu0 %v4117
  %4586 = vmatpush1.bf16.msra.mxu0 %v4116
  %4587 = vmatprep.subr.bf16.mxu0 %v4113
  %4588 = vmatpush1.bf16.msra.mxu0 %v4112
  %4589 = vmatprep.subr.bf16.mxu0 %v4109
  %4590 = vmatpush1.bf16.msra.mxu0 %v4108
  %4591 = vmatprep.subr.bf16.mxu0 %v4105
  %4592 = vmatpush1.bf16.msra.mxu0 %v4104
  %4593 = vmatprep.subr.bf16.mxu0 %v4101
  %4594 = vmatpush1.bf16.msra.mxu0 %v4100
  %4595 = vmatprep.subr.bf16.mxu0 %v4097
  %4596 = vmatpush1.bf16.msra.mxu0 %v4096
  %4597 = vmatprep.subr.bf16.mxu0 %v4093
  %4598 = vmatpush1.bf16.msra.mxu0 %v4092
  %4599 = vmatprep.subr.bf16.mxu0 %v4153
  %4600 = vmatpush2.bf16.msra.mxu0 %v4152
  %4601 = vmatprep.subr.bf16.mxu0 %v4149
  %4602 = vmatpush2.bf16.msra.mxu0 %v4148
  %4603 = vmatprep.subr.bf16.mxu0 %v4145
  %4604 = vmatpush2.bf16.msra.mxu0 %v4144
  %4605 = vmatprep.subr.bf16.mxu0 %v4141
  %4606 = vmatpush2.bf16.msra.mxu0 %v4140
  %4607 = vmatprep.subr.bf16.mxu0 %v4137
  %4608 = vmatpush2.bf16.msra.mxu0 %v4136
  %4609 = vmatprep.subr.bf16.mxu0 %v4133
  %4610 = vmatpush2.bf16.msra.mxu0 %v4132
  %4611 = vmatprep.subr.bf16.mxu0 %v4129
  %4612 = vmatpush2.bf16.msra.mxu0 %v4128
  %4613 = vmatprep.subr.bf16.mxu0 %v4125
  %4614 = vmatpush2.bf16.msra.mxu0 %v4124
  %4615 = vmatprep.mubr.bf16.mxu0 %v998
  %4616 = vmatmul.mubr.bf16.gmra.mxu0 %v997
  %v4617 = vpop.f32.mrf.mxu0
  %v4618 = vadd.f32 %v4575, %v4617
  %v4619 = vpop.f32.mrf.mxu0
  %v4620 = vadd.f32 %v4577, %v4619
  %v4621 = vpop.f32.mrf.mxu0
  %v4622 = vadd.f32 %v4579, %v4621
  %v4623 = vpop.f32.mrf.mxu0
  %v4624 = vadd.f32 %v4581, %v4623
  %4625 = vdwg.mxu0
  %s4626 = scalar_lea.vmem %s1, 3072
  %v4627 = vld [vmem:[%s4626] sm:$0xff]
  %v4628 = vld [vmem:[%s4626 + $0x8] sm:$0xff]
  %v4629 = vld [vmem:[%s4626 + $0x10] sm:$0xff]
  %v4630 = vld [vmem:[%s4626 + $0x18] sm:$0xff]
  %v4631 = vld [vmem:[%s4626 + $0x20] sm:$0xff]
  %v4632 = vld [vmem:[%s4626 + $0x28] sm:$0xff]
  %v4633 = vld [vmem:[%s4626 + $0x30] sm:$0xff]
  %v4634 = vld [vmem:[%s4626 + $0x38] sm:$0xff]
  %v4635 = vld [vmem:[%s4626 + $0x40] sm:$0xff]
  %v4636 = vld [vmem:[%s4626 + $0x48] sm:$0xff]
  %v4637 = vld [vmem:[%s4626 + $0x50] sm:$0xff]
  %v4638 = vld [vmem:[%s4626 + $0x58] sm:$0xff]
  %v4639 = vld [vmem:[%s4626 + $0x60] sm:$0xff]
  %v4640 = vld [vmem:[%s4626 + $0x68] sm:$0xff]
  %v4641 = vld [vmem:[%s4626 + $0x70] sm:$0xff]
  %v4642 = vld [vmem:[%s4626 + $0x78] sm:$0xff]
  %v4643 = vld [vmem:[%s4626 + $0x80] sm:$0xff]
  %v4644 = vld [vmem:[%s4626 + $0x88] sm:$0xff]
  %v4645 = vld [vmem:[%s4626 + $0x90] sm:$0xff]
  %v4646 = vld [vmem:[%s4626 + $0x98] sm:$0xff]
  %v4647 = vld [vmem:[%s4626 + $0xa0] sm:$0xff]
  %v4648 = vld [vmem:[%s4626 + $0xa8] sm:$0xff]
  %v4649 = vld [vmem:[%s4626 + $0xb0] sm:$0xff]
  %v4650 = vld [vmem:[%s4626 + $0xb8] sm:$0xff]
  %v4651 = vld [vmem:[%s4626 + $0xc0] sm:$0xff]
  %v4652 = vld [vmem:[%s4626 + $0xc8] sm:$0xff]
  %v4653 = vld [vmem:[%s4626 + $0xd0] sm:$0xff]
  %v4654 = vld [vmem:[%s4626 + $0xd8] sm:$0xff]
  %v4655 = vld [vmem:[%s4626 + $0xe0] sm:$0xff]
  %v4656 = vld [vmem:[%s4626 + $0xe8] sm:$0xff]
  %v4657 = vld [vmem:[%s4626 + $0xf0] sm:$0xff]
  %v4658 = vld [vmem:[%s4626 + $0xf8] sm:$0xff]
  %v4659 = vld [vmem:[%s4626 + $0x100] sm:$0xff]
  %v4660 = vld [vmem:[%s4626 + $0x108] sm:$0xff]
  %v4661 = vld [vmem:[%s4626 + $0x110] sm:$0xff]
  %v4662 = vld [vmem:[%s4626 + $0x118] sm:$0xff]
  %v4663 = vld [vmem:[%s4626 + $0x120] sm:$0xff]
  %v4664 = vld [vmem:[%s4626 + $0x128] sm:$0xff]
  %v4665 = vld [vmem:[%s4626 + $0x130] sm:$0xff]
  %v4666 = vld [vmem:[%s4626 + $0x138] sm:$0xff]
  %v4667 = vld [vmem:[%s4626 + $0x140] sm:$0xff]
  %v4668 = vld [vmem:[%s4626 + $0x148] sm:$0xff]
  %v4669 = vld [vmem:[%s4626 + $0x150] sm:$0xff]
  %v4670 = vld [vmem:[%s4626 + $0x158] sm:$0xff]
  %v4671 = vld [vmem:[%s4626 + $0x160] sm:$0xff]
  %v4672 = vld [vmem:[%s4626 + $0x168] sm:$0xff]
  %v4673 = vld [vmem:[%s4626 + $0x170] sm:$0xff]
  %v4674 = vld [vmem:[%s4626 + $0x178] sm:$0xff]
  %v4675 = vld [vmem:[%s4626 + $0x180] sm:$0xff]
  %v4676 = vld [vmem:[%s4626 + $0x188] sm:$0xff]
  %v4677 = vld [vmem:[%s4626 + $0x190] sm:$0xff]
  %v4678 = vld [vmem:[%s4626 + $0x198] sm:$0xff]
  %v4679 = vld [vmem:[%s4626 + $0x1a0] sm:$0xff]
  %v4680 = vld [vmem:[%s4626 + $0x1a8] sm:$0xff]
  %v4681 = vld [vmem:[%s4626 + $0x1b0] sm:$0xff]
  %v4682 = vld [vmem:[%s4626 + $0x1b8] sm:$0xff]
  %v4683 = vld [vmem:[%s4626 + $0x1c0] sm:$0xff]
  %v4684 = vld [vmem:[%s4626 + $0x1c8] sm:$0xff]
  %v4685 = vld [vmem:[%s4626 + $0x1d0] sm:$0xff]
  %v4686 = vld [vmem:[%s4626 + $0x1d8] sm:$0xff]
  %v4687 = vld [vmem:[%s4626 + $0x1e0] sm:$0xff]
  %v4688 = vld [vmem:[%s4626 + $0x1e8] sm:$0xff]
  %v4689 = vld [vmem:[%s4626 + $0x1f0] sm:$0xff]
  %v4690 = vld [vmem:[%s4626 + $0x1f8] sm:$0xff]
  %v4691 = vld [vmem:[%s4626 + $0x200] sm:$0xff]
  %v4692 = vld [vmem:[%s4626 + $0x208] sm:$0xff]
  %v4693 = vld [vmem:[%s4626 + $0x210] sm:$0xff]
  %v4694 = vld [vmem:[%s4626 + $0x218] sm:$0xff]
  %v4695 = vld [vmem:[%s4626 + $0x220] sm:$0xff]
  %v4696 = vld [vmem:[%s4626 + $0x228] sm:$0xff]
  %v4697 = vld [vmem:[%s4626 + $0x230] sm:$0xff]
  %v4698 = vld [vmem:[%s4626 + $0x238] sm:$0xff]
  %v4699 = vld [vmem:[%s4626 + $0x240] sm:$0xff]
  %v4700 = vld [vmem:[%s4626 + $0x248] sm:$0xff]
  %v4701 = vld [vmem:[%s4626 + $0x250] sm:$0xff]
  %v4702 = vld [vmem:[%s4626 + $0x258] sm:$0xff]
  %v4703 = vld [vmem:[%s4626 + $0x260] sm:$0xff]
  %v4704 = vld [vmem:[%s4626 + $0x268] sm:$0xff]
  %v4705 = vld [vmem:[%s4626 + $0x270] sm:$0xff]
  %v4706 = vld [vmem:[%s4626 + $0x278] sm:$0xff]
  %v4707 = vld [vmem:[%s4626 + $0x280] sm:$0xff]
  %v4708 = vld [vmem:[%s4626 + $0x288] sm:$0xff]
  %v4709 = vld [vmem:[%s4626 + $0x290] sm:$0xff]
  %v4710 = vld [vmem:[%s4626 + $0x298] sm:$0xff]
  %v4711 = vld [vmem:[%s4626 + $0x2a0] sm:$0xff]
  %v4712 = vld [vmem:[%s4626 + $0x2a8] sm:$0xff]
  %v4713 = vld [vmem:[%s4626 + $0x2b0] sm:$0xff]
  %v4714 = vld [vmem:[%s4626 + $0x2b8] sm:$0xff]
  %v4715 = vld [vmem:[%s4626 + $0x2c0] sm:$0xff]
  %v4716 = vld [vmem:[%s4626 + $0x2c8] sm:$0xff]
  %v4717 = vld [vmem:[%s4626 + $0x2d0] sm:$0xff]
  %v4718 = vld [vmem:[%s4626 + $0x2d8] sm:$0xff]
  %v4719 = vld [vmem:[%s4626 + $0x2e0] sm:$0xff]
  %v4720 = vld [vmem:[%s4626 + $0x2e8] sm:$0xff]
  %v4721 = vld [vmem:[%s4626 + $0x2f0] sm:$0xff]
  %v4722 = vld [vmem:[%s4626 + $0x2f8] sm:$0xff]
  %v4723 = vld [vmem:[%s4626 + $0x300] sm:$0xff]
  %v4724 = vld [vmem:[%s4626 + $0x308] sm:$0xff]
  %v4725 = vld [vmem:[%s4626 + $0x310] sm:$0xff]
  %v4726 = vld [vmem:[%s4626 + $0x318] sm:$0xff]
  %v4727 = vld [vmem:[%s4626 + $0x320] sm:$0xff]
  %v4728 = vld [vmem:[%s4626 + $0x328] sm:$0xff]
  %v4729 = vld [vmem:[%s4626 + $0x330] sm:$0xff]
  %v4730 = vld [vmem:[%s4626 + $0x338] sm:$0xff]
  %v4731 = vld [vmem:[%s4626 + $0x340] sm:$0xff]
  %v4732 = vld [vmem:[%s4626 + $0x348] sm:$0xff]
  %v4733 = vld [vmem:[%s4626 + $0x350] sm:$0xff]
  %v4734 = vld [vmem:[%s4626 + $0x358] sm:$0xff]
  %v4735 = vld [vmem:[%s4626 + $0x360] sm:$0xff]
  %v4736 = vld [vmem:[%s4626 + $0x368] sm:$0xff]
  %v4737 = vld [vmem:[%s4626 + $0x370] sm:$0xff]
  %v4738 = vld [vmem:[%s4626 + $0x378] sm:$0xff]
  %v4739 = vld [vmem:[%s4626 + $0x380] sm:$0xff]
  %v4740 = vld [vmem:[%s4626 + $0x388] sm:$0xff]
  %v4741 = vld [vmem:[%s4626 + $0x390] sm:$0xff]
  %v4742 = vld [vmem:[%s4626 + $0x398] sm:$0xff]
  %v4743 = vld [vmem:[%s4626 + $0x3a0] sm:$0xff]
  %v4744 = vld [vmem:[%s4626 + $0x3a8] sm:$0xff]
  %v4745 = vld [vmem:[%s4626 + $0x3b0] sm:$0xff]
  %v4746 = vld [vmem:[%s4626 + $0x3b8] sm:$0xff]
  %v4747 = vld [vmem:[%s4626 + $0x3c0] sm:$0xff]
  %v4748 = vld [vmem:[%s4626 + $0x3c8] sm:$0xff]
  %v4749 = vld [vmem:[%s4626 + $0x3d0] sm:$0xff]
  %v4750 = vld [vmem:[%s4626 + $0x3d8] sm:$0xff]
  %v4751 = vld [vmem:[%s4626 + $0x3e0] sm:$0xff]
  %v4752 = vld [vmem:[%s4626 + $0x3e8] sm:$0xff]
  %v4753 = vld [vmem:[%s4626 + $0x3f0] sm:$0xff]
  %v4754 = vld [vmem:[%s4626 + $0x3f8] sm:$0xff]
  %v4883 = vunpack.c.l.b16 %v4627
  %v4884 = vunpack.c.h.b16 %v4627
  %v4885 = vunpack.c.l.b16 %v4628
  %v4886 = vunpack.c.h.b16 %v4628
  %v4887 = vunpack.c.l.b16 %v4629
  %v4888 = vunpack.c.h.b16 %v4629
  %v4889 = vunpack.c.l.b16 %v4630
  %v4890 = vunpack.c.h.b16 %v4630
  %v4891 = vunpack.c.l.b16 %v4631
  %v4892 = vunpack.c.h.b16 %v4631
  %v4893 = vunpack.c.l.b16 %v4632
  %v4894 = vunpack.c.h.b16 %v4632
  %v4895 = vunpack.c.l.b16 %v4633
  %v4896 = vunpack.c.h.b16 %v4633
  %v4897 = vunpack.c.l.b16 %v4634
  %v4898 = vunpack.c.h.b16 %v4634
  %v4899 = vunpack.c.l.b16 %v4635
  %v4900 = vunpack.c.h.b16 %v4635
  %v4901 = vunpack.c.l.b16 %v4636
  %v4902 = vunpack.c.h.b16 %v4636
  %v4903 = vunpack.c.l.b16 %v4637
  %v4904 = vunpack.c.h.b16 %v4637
  %v4905 = vunpack.c.l.b16 %v4638
  %v4906 = vunpack.c.h.b16 %v4638
  %v4907 = vunpack.c.l.b16 %v4639
  %v4908 = vunpack.c.h.b16 %v4639
  %v4909 = vunpack.c.l.b16 %v4640
  %v4910 = vunpack.c.h.b16 %v4640
  %v4911 = vunpack.c.l.b16 %v4641
  %v4912 = vunpack.c.h.b16 %v4641
  %v4913 = vunpack.c.l.b16 %v4642
  %v4914 = vunpack.c.h.b16 %v4642
  %v4915 = vunpack.c.l.b16 %v4643
  %v4916 = vunpack.c.h.b16 %v4643
  %v4917 = vunpack.c.l.b16 %v4644
  %v4918 = vunpack.c.h.b16 %v4644
  %v4919 = vunpack.c.l.b16 %v4645
  %v4920 = vunpack.c.h.b16 %v4645
  %v4921 = vunpack.c.l.b16 %v4646
  %v4922 = vunpack.c.h.b16 %v4646
  %v4923 = vunpack.c.l.b16 %v4647
  %v4924 = vunpack.c.h.b16 %v4647
  %v4925 = vunpack.c.l.b16 %v4648
  %v4926 = vunpack.c.h.b16 %v4648
  %v4927 = vunpack.c.l.b16 %v4649
  %v4928 = vunpack.c.h.b16 %v4649
  %v4929 = vunpack.c.l.b16 %v4650
  %v4930 = vunpack.c.h.b16 %v4650
  %v4931 = vunpack.c.l.b16 %v4651
  %v4932 = vunpack.c.h.b16 %v4651
  %v4933 = vunpack.c.l.b16 %v4652
  %v4934 = vunpack.c.h.b16 %v4652
  %v4935 = vunpack.c.l.b16 %v4653
  %v4936 = vunpack.c.h.b16 %v4653
  %v4937 = vunpack.c.l.b16 %v4654
  %v4938 = vunpack.c.h.b16 %v4654
  %v4939 = vunpack.c.l.b16 %v4655
  %v4940 = vunpack.c.h.b16 %v4655
  %v4941 = vunpack.c.l.b16 %v4656
  %v4942 = vunpack.c.h.b16 %v4656
  %v4943 = vunpack.c.l.b16 %v4657
  %v4944 = vunpack.c.h.b16 %v4657
  %v4945 = vunpack.c.l.b16 %v4658
  %v4946 = vunpack.c.h.b16 %v4658
  %v4947 = vunpack.c.l.b16 %v4659
  %v4948 = vunpack.c.h.b16 %v4659
  %v4949 = vunpack.c.l.b16 %v4660
  %v4950 = vunpack.c.h.b16 %v4660
  %v4951 = vunpack.c.l.b16 %v4661
  %v4952 = vunpack.c.h.b16 %v4661
  %v4953 = vunpack.c.l.b16 %v4662
  %v4954 = vunpack.c.h.b16 %v4662
  %v4955 = vunpack.c.l.b16 %v4663
  %v4956 = vunpack.c.h.b16 %v4663
  %v4957 = vunpack.c.l.b16 %v4664
  %v4958 = vunpack.c.h.b16 %v4664
  %v4959 = vunpack.c.l.b16 %v4665
  %v4960 = vunpack.c.h.b16 %v4665
  %v4961 = vunpack.c.l.b16 %v4666
  %v4962 = vunpack.c.h.b16 %v4666
  %v4963 = vunpack.c.l.b16 %v4667
  %v4964 = vunpack.c.h.b16 %v4667
  %v4965 = vunpack.c.l.b16 %v4668
  %v4966 = vunpack.c.h.b16 %v4668
  %v4967 = vunpack.c.l.b16 %v4669
  %v4968 = vunpack.c.h.b16 %v4669
  %v4969 = vunpack.c.l.b16 %v4670
  %v4970 = vunpack.c.h.b16 %v4670
  %v4971 = vunpack.c.l.b16 %v4671
  %v4972 = vunpack.c.h.b16 %v4671
  %v4973 = vunpack.c.l.b16 %v4672
  %v4974 = vunpack.c.h.b16 %v4672
  %v4975 = vunpack.c.l.b16 %v4673
  %v4976 = vunpack.c.h.b16 %v4673
  %v4977 = vunpack.c.l.b16 %v4674
  %v4978 = vunpack.c.h.b16 %v4674
  %v4979 = vunpack.c.l.b16 %v4675
  %v4980 = vunpack.c.h.b16 %v4675
  %v4981 = vunpack.c.l.b16 %v4676
  %v4982 = vunpack.c.h.b16 %v4676
  %v4983 = vunpack.c.l.b16 %v4677
  %v4984 = vunpack.c.h.b16 %v4677
  %v4985 = vunpack.c.l.b16 %v4678
  %v4986 = vunpack.c.h.b16 %v4678
  %v4987 = vunpack.c.l.b16 %v4679
  %v4988 = vunpack.c.h.b16 %v4679
  %v4989 = vunpack.c.l.b16 %v4680
  %v4990 = vunpack.c.h.b16 %v4680
  %v4991 = vunpack.c.l.b16 %v4681
  %v4992 = vunpack.c.h.b16 %v4681
  %v4993 = vunpack.c.l.b16 %v4682
  %v4994 = vunpack.c.h.b16 %v4682
  %v4995 = vunpack.c.l.b16 %v4683
  %v4996 = vunpack.c.h.b16 %v4683
  %v4997 = vunpack.c.l.b16 %v4684
  %v4998 = vunpack.c.h.b16 %v4684
  %v4999 = vunpack.c.l.b16 %v4685
  %v5000 = vunpack.c.h.b16 %v4685
  %v5001 = vunpack.c.l.b16 %v4686
  %v5002 = vunpack.c.h.b16 %v4686
  %v5003 = vunpack.c.l.b16 %v4687
  %v5004 = vunpack.c.h.b16 %v4687
  %v5005 = vunpack.c.l.b16 %v4688
  %v5006 = vunpack.c.h.b16 %v4688
  %v5007 = vunpack.c.l.b16 %v4689
  %v5008 = vunpack.c.h.b16 %v4689
  %v5009 = vunpack.c.l.b16 %v4690
  %v5010 = vunpack.c.h.b16 %v4690
  %v5011 = vunpack.c.l.b16 %v4691
  %v5012 = vunpack.c.h.b16 %v4691
  %v5013 = vunpack.c.l.b16 %v4692
  %v5014 = vunpack.c.h.b16 %v4692
  %v5015 = vunpack.c.l.b16 %v4693
  %v5016 = vunpack.c.h.b16 %v4693
  %v5017 = vunpack.c.l.b16 %v4694
  %v5018 = vunpack.c.h.b16 %v4694
  %v5019 = vunpack.c.l.b16 %v4695
  %v5020 = vunpack.c.h.b16 %v4695
  %v5021 = vunpack.c.l.b16 %v4696
  %v5022 = vunpack.c.h.b16 %v4696
  %v5023 = vunpack.c.l.b16 %v4697
  %v5024 = vunpack.c.h.b16 %v4697
  %v5025 = vunpack.c.l.b16 %v4698
  %v5026 = vunpack.c.h.b16 %v4698
  %v5027 = vunpack.c.l.b16 %v4699
  %v5028 = vunpack.c.h.b16 %v4699
  %v5029 = vunpack.c.l.b16 %v4700
  %v5030 = vunpack.c.h.b16 %v4700
  %v5031 = vunpack.c.l.b16 %v4701
  %v5032 = vunpack.c.h.b16 %v4701
  %v5033 = vunpack.c.l.b16 %v4702
  %v5034 = vunpack.c.h.b16 %v4702
  %v5035 = vunpack.c.l.b16 %v4703
  %v5036 = vunpack.c.h.b16 %v4703
  %v5037 = vunpack.c.l.b16 %v4704
  %v5038 = vunpack.c.h.b16 %v4704
  %v5039 = vunpack.c.l.b16 %v4705
  %v5040 = vunpack.c.h.b16 %v4705
  %v5041 = vunpack.c.l.b16 %v4706
  %v5042 = vunpack.c.h.b16 %v4706
  %v5043 = vunpack.c.l.b16 %v4707
  %v5044 = vunpack.c.h.b16 %v4707
  %v5045 = vunpack.c.l.b16 %v4708
  %v5046 = vunpack.c.h.b16 %v4708
  %v5047 = vunpack.c.l.b16 %v4709
  %v5048 = vunpack.c.h.b16 %v4709
  %v5049 = vunpack.c.l.b16 %v4710
  %v5050 = vunpack.c.h.b16 %v4710
  %v5051 = vunpack.c.l.b16 %v4711
  %v5052 = vunpack.c.h.b16 %v4711
  %v5053 = vunpack.c.l.b16 %v4712
  %v5054 = vunpack.c.h.b16 %v4712
  %v5055 = vunpack.c.l.b16 %v4713
  %v5056 = vunpack.c.h.b16 %v4713
  %v5057 = vunpack.c.l.b16 %v4714
  %v5058 = vunpack.c.h.b16 %v4714
  %v5059 = vunpack.c.l.b16 %v4715
  %v5060 = vunpack.c.h.b16 %v4715
  %v5061 = vunpack.c.l.b16 %v4716
  %v5062 = vunpack.c.h.b16 %v4716
  %v5063 = vunpack.c.l.b16 %v4717
  %v5064 = vunpack.c.h.b16 %v4717
  %v5065 = vunpack.c.l.b16 %v4718
  %v5066 = vunpack.c.h.b16 %v4718
  %v5067 = vunpack.c.l.b16 %v4719
  %v5068 = vunpack.c.h.b16 %v4719
  %v5069 = vunpack.c.l.b16 %v4720
  %v5070 = vunpack.c.h.b16 %v4720
  %v5071 = vunpack.c.l.b16 %v4721
  %v5072 = vunpack.c.h.b16 %v4721
  %v5073 = vunpack.c.l.b16 %v4722
  %v5074 = vunpack.c.h.b16 %v4722
  %v5075 = vunpack.c.l.b16 %v4723
  %v5076 = vunpack.c.h.b16 %v4723
  %v5077 = vunpack.c.l.b16 %v4724
  %v5078 = vunpack.c.h.b16 %v4724
  %v5079 = vunpack.c.l.b16 %v4725
  %v5080 = vunpack.c.h.b16 %v4725
  %v5081 = vunpack.c.l.b16 %v4726
  %v5082 = vunpack.c.h.b16 %v4726
  %v5083 = vunpack.c.l.b16 %v4727
  %v5084 = vunpack.c.h.b16 %v4727
  %v5085 = vunpack.c.l.b16 %v4728
  %v5086 = vunpack.c.h.b16 %v4728
  %v5087 = vunpack.c.l.b16 %v4729
  %v5088 = vunpack.c.h.b16 %v4729
  %v5089 = vunpack.c.l.b16 %v4730
  %v5090 = vunpack.c.h.b16 %v4730
  %v5091 = vunpack.c.l.b16 %v4731
  %v5092 = vunpack.c.h.b16 %v4731
  %v5093 = vunpack.c.l.b16 %v4732
  %v5094 = vunpack.c.h.b16 %v4732
  %v5095 = vunpack.c.l.b16 %v4733
  %v5096 = vunpack.c.h.b16 %v4733
  %v5097 = vunpack.c.l.b16 %v4734
  %v5098 = vunpack.c.h.b16 %v4734
  %v5099 = vunpack.c.l.b16 %v4735
  %v5100 = vunpack.c.h.b16 %v4735
  %v5101 = vunpack.c.l.b16 %v4736
  %v5102 = vunpack.c.h.b16 %v4736
  %v5103 = vunpack.c.l.b16 %v4737
  %v5104 = vunpack.c.h.b16 %v4737
  %v5105 = vunpack.c.l.b16 %v4738
  %v5106 = vunpack.c.h.b16 %v4738
  %v5107 = vunpack.c.l.b16 %v4739
  %v5108 = vunpack.c.h.b16 %v4739
  %v5109 = vunpack.c.l.b16 %v4740
  %v5110 = vunpack.c.h.b16 %v4740
  %v5111 = vunpack.c.l.b16 %v4741
  %v5112 = vunpack.c.h.b16 %v4741
  %v5113 = vunpack.c.l.b16 %v4742
  %v5114 = vunpack.c.h.b16 %v4742
  %v5115 = vunpack.c.l.b16 %v4743
  %v5116 = vunpack.c.h.b16 %v4743
  %v5117 = vunpack.c.l.b16 %v4744
  %v5118 = vunpack.c.h.b16 %v4744
  %v5119 = vunpack.c.l.b16 %v4745
  %v5120 = vunpack.c.h.b16 %v4745
  %v5121 = vunpack.c.l.b16 %v4746
  %v5122 = vunpack.c.h.b16 %v4746
  %v5123 = vunpack.c.l.b16 %v4747
  %v5124 = vunpack.c.h.b16 %v4747
  %v5125 = vunpack.c.l.b16 %v4748
  %v5126 = vunpack.c.h.b16 %v4748
  %v5127 = vunpack.c.l.b16 %v4749
  %v5128 = vunpack.c.h.b16 %v4749
  %v5129 = vunpack.c.l.b16 %v4750
  %v5130 = vunpack.c.h.b16 %v4750
  %v5131 = vunpack.c.l.b16 %v4751
  %v5132 = vunpack.c.h.b16 %v4751
  %v5133 = vunpack.c.l.b16 %v4752
  %v5134 = vunpack.c.h.b16 %v4752
  %v5135 = vunpack.c.l.b16 %v4753
  %v5136 = vunpack.c.h.b16 %v4753
  %v5137 = vunpack.c.l.b16 %v4754
  %v5138 = vunpack.c.h.b16 %v4754
  %v5139 = vpack.c.b16 %v4887, %v4883
  %v5140 = vpack.c.b16 %v4888, %v4884
  %v5141 = vpack.c.b16 %v4889, %v4885
  %v5142 = vpack.c.b16 %v4890, %v4886
  %v5143 = vpack.c.b16 %v4895, %v4891
  %v5144 = vpack.c.b16 %v4896, %v4892
  %v5145 = vpack.c.b16 %v4897, %v4893
  %v5146 = vpack.c.b16 %v4898, %v4894
  %v5147 = vpack.c.b16 %v4903, %v4899
  %v5148 = vpack.c.b16 %v4904, %v4900
  %v5149 = vpack.c.b16 %v4905, %v4901
  %v5150 = vpack.c.b16 %v4906, %v4902
  %v5151 = vpack.c.b16 %v4911, %v4907
  %v5152 = vpack.c.b16 %v4912, %v4908
  %v5153 = vpack.c.b16 %v4913, %v4909
  %v5154 = vpack.c.b16 %v4914, %v4910
  %v5155 = vpack.c.b16 %v4919, %v4915
  %v5156 = vpack.c.b16 %v4920, %v4916
  %v5157 = vpack.c.b16 %v4921, %v4917
  %v5158 = vpack.c.b16 %v4922, %v4918
  %v5159 = vpack.c.b16 %v4927, %v4923
  %v5160 = vpack.c.b16 %v4928, %v4924
  %v5161 = vpack.c.b16 %v4929, %v4925
  %v5162 = vpack.c.b16 %v4930, %v4926
  %v5163 = vpack.c.b16 %v4935, %v4931
  %v5164 = vpack.c.b16 %v4936, %v4932
  %v5165 = vpack.c.b16 %v4937, %v4933
  %v5166 = vpack.c.b16 %v4938, %v4934
  %v5167 = vpack.c.b16 %v4943, %v4939
  %v5168 = vpack.c.b16 %v4944, %v4940
  %v5169 = vpack.c.b16 %v4945, %v4941
  %v5170 = vpack.c.b16 %v4946, %v4942
  %v5171 = vpack.c.b16 %v4951, %v4947
  %v5172 = vpack.c.b16 %v4952, %v4948
  %v5173 = vpack.c.b16 %v4953, %v4949
  %v5174 = vpack.c.b16 %v4954, %v4950
  %v5175 = vpack.c.b16 %v4959, %v4955
  %v5176 = vpack.c.b16 %v4960, %v4956
  %v5177 = vpack.c.b16 %v4961, %v4957
  %v5178 = vpack.c.b16 %v4962, %v4958
  %v5179 = vpack.c.b16 %v4967, %v4963
  %v5180 = vpack.c.b16 %v4968, %v4964
  %v5181 = vpack.c.b16 %v4969, %v4965
  %v5182 = vpack.c.b16 %v4970, %v4966
  %v5183 = vpack.c.b16 %v4975, %v4971
  %v5184 = vpack.c.b16 %v4976, %v4972
  %v5185 = vpack.c.b16 %v4977, %v4973
  %v5186 = vpack.c.b16 %v4978, %v4974
  %v5187 = vpack.c.b16 %v4983, %v4979
  %v5188 = vpack.c.b16 %v4984, %v4980
  %v5189 = vpack.c.b16 %v4985, %v4981
  %v5190 = vpack.c.b16 %v4986, %v4982
  %v5191 = vpack.c.b16 %v4991, %v4987
  %v5192 = vpack.c.b16 %v4992, %v4988
  %v5193 = vpack.c.b16 %v4993, %v4989
  %v5194 = vpack.c.b16 %v4994, %v4990
  %v5195 = vpack.c.b16 %v4999, %v4995
  %v5196 = vpack.c.b16 %v5000, %v4996
  %v5197 = vpack.c.b16 %v5001, %v4997
  %v5198 = vpack.c.b16 %v5002, %v4998
  %v5199 = vpack.c.b16 %v5007, %v5003
  %v5200 = vpack.c.b16 %v5008, %v5004
  %v5201 = vpack.c.b16 %v5009, %v5005
  %v5202 = vpack.c.b16 %v5010, %v5006
  %v5203 = vpack.c.b16 %v5015, %v5011
  %v5204 = vpack.c.b16 %v5016, %v5012
  %v5205 = vpack.c.b16 %v5017, %v5013
  %v5206 = vpack.c.b16 %v5018, %v5014
  %v5207 = vpack.c.b16 %v5023, %v5019
  %v5208 = vpack.c.b16 %v5024, %v5020
  %v5209 = vpack.c.b16 %v5025, %v5021
  %v5210 = vpack.c.b16 %v5026, %v5022
  %v5211 = vpack.c.b16 %v5031, %v5027
  %v5212 = vpack.c.b16 %v5032, %v5028
  %v5213 = vpack.c.b16 %v5033, %v5029
  %v5214 = vpack.c.b16 %v5034, %v5030
  %v5215 = vpack.c.b16 %v5039, %v5035
  %v5216 = vpack.c.b16 %v5040, %v5036
  %v5217 = vpack.c.b16 %v5041, %v5037
  %v5218 = vpack.c.b16 %v5042, %v5038
  %v5219 = vpack.c.b16 %v5047, %v5043
  %v5220 = vpack.c.b16 %v5048, %v5044
  %v5221 = vpack.c.b16 %v5049, %v5045
  %v5222 = vpack.c.b16 %v5050, %v5046
  %v5223 = vpack.c.b16 %v5055, %v5051
  %v5224 = vpack.c.b16 %v5056, %v5052
  %v5225 = vpack.c.b16 %v5057, %v5053
  %v5226 = vpack.c.b16 %v5058, %v5054
  %v5227 = vpack.c.b16 %v5063, %v5059
  %v5228 = vpack.c.b16 %v5064, %v5060
  %v5229 = vpack.c.b16 %v5065, %v5061
  %v5230 = vpack.c.b16 %v5066, %v5062
  %v5231 = vpack.c.b16 %v5071, %v5067
  %v5232 = vpack.c.b16 %v5072, %v5068
  %v5233 = vpack.c.b16 %v5073, %v5069
  %v5234 = vpack.c.b16 %v5074, %v5070
  %v5235 = vpack.c.b16 %v5079, %v5075
  %v5236 = vpack.c.b16 %v5080, %v5076
  %v5237 = vpack.c.b16 %v5081, %v5077
  %v5238 = vpack.c.b16 %v5082, %v5078
  %v5239 = vpack.c.b16 %v5087, %v5083
  %v5240 = vpack.c.b16 %v5088, %v5084
  %v5241 = vpack.c.b16 %v5089, %v5085
  %v5242 = vpack.c.b16 %v5090, %v5086
  %v5243 = vpack.c.b16 %v5095, %v5091
  %v5244 = vpack.c.b16 %v5096, %v5092
  %v5245 = vpack.c.b16 %v5097, %v5093
  %v5246 = vpack.c.b16 %v5098, %v5094
  %v5247 = vpack.c.b16 %v5103, %v5099
  %v5248 = vpack.c.b16 %v5104, %v5100
  %v5249 = vpack.c.b16 %v5105, %v5101
  %v5250 = vpack.c.b16 %v5106, %v5102
  %v5251 = vpack.c.b16 %v5111, %v5107
  %v5252 = vpack.c.b16 %v5112, %v5108
  %v5253 = vpack.c.b16 %v5113, %v5109
  %v5254 = vpack.c.b16 %v5114, %v5110
  %v5255 = vpack.c.b16 %v5119, %v5115
  %v5256 = vpack.c.b16 %v5120, %v5116
  %v5257 = vpack.c.b16 %v5121, %v5117
  %v5258 = vpack.c.b16 %v5122, %v5118
  %v5259 = vpack.c.b16 %v5127, %v5123
  %v5260 = vpack.c.b16 %v5128, %v5124
  %v5261 = vpack.c.b16 %v5129, %v5125
  %v5262 = vpack.c.b16 %v5130, %v5126
  %v5263 = vpack.c.b16 %v5135, %v5131
  %v5264 = vpack.c.b16 %v5136, %v5132
  %v5265 = vpack.c.b16 %v5137, %v5133
  %v5266 = vpack.c.b16 %v5138, %v5134
  %5395 = vmatprep.subr.bf16.mxu0 %v5168
  %5396 = vmatpush1.bf16.msra.mxu0 %v5167
  %5397 = vmatprep.subr.bf16.mxu0 %v5164
  %5398 = vmatpush1.bf16.msra.mxu0 %v5163
  %5399 = vmatprep.subr.bf16.mxu0 %v5160
  %5400 = vmatpush1.bf16.msra.mxu0 %v5159
  %5401 = vmatprep.subr.bf16.mxu0 %v5156
  %5402 = vmatpush1.bf16.msra.mxu0 %v5155
  %5403 = vmatprep.subr.bf16.mxu0 %v5152
  %5404 = vmatpush1.bf16.msra.mxu0 %v5151
  %5405 = vmatprep.subr.bf16.mxu0 %v5148
  %5406 = vmatpush1.bf16.msra.mxu0 %v5147
  %5407 = vmatprep.subr.bf16.mxu0 %v5144
  %5408 = vmatpush1.bf16.msra.mxu0 %v5143
  %5409 = vmatprep.subr.bf16.mxu0 %v5140
  %5410 = vmatpush1.bf16.msra.mxu0 %v5139
  %5411 = vmatprep.subr.bf16.mxu0 %v5200
  %5412 = vmatpush2.bf16.msra.mxu0 %v5199
  %5413 = vmatprep.subr.bf16.mxu0 %v5196
  %5414 = vmatpush2.bf16.msra.mxu0 %v5195
  %5415 = vmatprep.subr.bf16.mxu0 %v5192
  %5416 = vmatpush2.bf16.msra.mxu0 %v5191
  %5417 = vmatprep.subr.bf16.mxu0 %v5188
  %5418 = vmatpush2.bf16.msra.mxu0 %v5187
  %5419 = vmatprep.subr.bf16.mxu0 %v5184
  %5420 = vmatpush2.bf16.msra.mxu0 %v5183
  %5421 = vmatprep.subr.bf16.mxu0 %v5180
  %5422 = vmatpush2.bf16.msra.mxu0 %v5179
  %5423 = vmatprep.subr.bf16.mxu0 %v5176
  %5424 = vmatpush2.bf16.msra.mxu0 %v5175
  %5425 = vmatprep.subr.bf16.mxu0 %v5172
  %5426 = vmatpush2.bf16.msra.mxu0 %v5171
  %5427 = vmatprep.mubr.bf16.mxu0 %v164
  %5428 = vmatmul.mubr.bf16.gmra.mxu0 %v163
  %v5429 = vpop.f32.mrf.mxu0
  %v5430 = vadd.f32 0.0, %v5429
  %v5431 = vpop.f32.mrf.mxu0
  %v5432 = vadd.f32 0.0, %v5431
  %v5433 = vpop.f32.mrf.mxu0
  %v5434 = vadd.f32 0.0, %v5433
  %v5435 = vpop.f32.mrf.mxu0
  %v5436 = vadd.f32 0.0, %v5435
  %5437 = vdwg.mxu0
  %5438 = vmatprep.subr.bf16.mxu0 %v5232
  %5439 = vmatpush1.bf16.msra.mxu0 %v5231
  %5440 = vmatprep.subr.bf16.mxu0 %v5228
  %5441 = vmatpush1.bf16.msra.mxu0 %v5227
  %5442 = vmatprep.subr.bf16.mxu0 %v5224
  %5443 = vmatpush1.bf16.msra.mxu0 %v5223
  %5444 = vmatprep.subr.bf16.mxu0 %v5220
  %5445 = vmatpush1.bf16.msra.mxu0 %v5219
  %5446 = vmatprep.subr.bf16.mxu0 %v5216
  %5447 = vmatpush1.bf16.msra.mxu0 %v5215
  %5448 = vmatprep.subr.bf16.mxu0 %v5212
  %5449 = vmatpush1.bf16.msra.mxu0 %v5211
  %5450 = vmatprep.subr.bf16.mxu0 %v5208
  %5451 = vmatpush1.bf16.msra.mxu0 %v5207
  %5452 = vmatprep.subr.bf16.mxu0 %v5204
  %5453 = vmatpush1.bf16.msra.mxu0 %v5203
  %5454 = vmatprep.subr.bf16.mxu0 %v5264
  %5455 = vmatpush2.bf16.msra.mxu0 %v5263
  %5456 = vmatprep.subr.bf16.mxu0 %v5260
  %5457 = vmatpush2.bf16.msra.mxu0 %v5259
  %5458 = vmatprep.subr.bf16.mxu0 %v5256
  %5459 = vmatpush2.bf16.msra.mxu0 %v5255
  %5460 = vmatprep.subr.bf16.mxu0 %v5252
  %5461 = vmatpush2.bf16.msra.mxu0 %v5251
  %5462 = vmatprep.subr.bf16.mxu0 %v5248
  %5463 = vmatpush2.bf16.msra.mxu0 %v5247
  %5464 = vmatprep.subr.bf16.mxu0 %v5244
  %5465 = vmatpush2.bf16.msra.mxu0 %v5243
  %5466 = vmatprep.subr.bf16.mxu0 %v5240
  %5467 = vmatpush2.bf16.msra.mxu0 %v5239
  %5468 = vmatprep.subr.bf16.mxu0 %v5236
  %5469 = vmatpush2.bf16.msra.mxu0 %v5235
  %5470 = vmatprep.mubr.bf16.mxu0 %v166
  %5471 = vmatmul.mubr.bf16.gmra.mxu0 %v165
  %v5472 = vpop.f32.mrf.mxu0
  %v5473 = vadd.f32 %v5430, %v5472
  %v5474 = vpop.f32.mrf.mxu0
  %v5475 = vadd.f32 %v5432, %v5474
  %v5476 = vpop.f32.mrf.mxu0
  %v5477 = vadd.f32 %v5434, %v5476
  %v5478 = vpop.f32.mrf.mxu0
  %v5479 = vadd.f32 %v5436, %v5478
  %5480 = vdwg.mxu0
  %5481 = vmatprep.subr.bf16.mxu0 %v5170
  %5482 = vmatpush1.bf16.msra.mxu0 %v5169
  %5483 = vmatprep.subr.bf16.mxu0 %v5166
  %5484 = vmatpush1.bf16.msra.mxu0 %v5165
  %5485 = vmatprep.subr.bf16.mxu0 %v5162
  %5486 = vmatpush1.bf16.msra.mxu0 %v5161
  %5487 = vmatprep.subr.bf16.mxu0 %v5158
  %5488 = vmatpush1.bf16.msra.mxu0 %v5157
  %5489 = vmatprep.subr.bf16.mxu0 %v5154
  %5490 = vmatpush1.bf16.msra.mxu0 %v5153
  %5491 = vmatprep.subr.bf16.mxu0 %v5150
  %5492 = vmatpush1.bf16.msra.mxu0 %v5149
  %5493 = vmatprep.subr.bf16.mxu0 %v5146
  %5494 = vmatpush1.bf16.msra.mxu0 %v5145
  %5495 = vmatprep.subr.bf16.mxu0 %v5142
  %5496 = vmatpush1.bf16.msra.mxu0 %v5141
  %5497 = vmatprep.subr.bf16.mxu0 %v5202
  %5498 = vmatpush2.bf16.msra.mxu0 %v5201
  %5499 = vmatprep.subr.bf16.mxu0 %v5198
  %5500 = vmatpush2.bf16.msra.mxu0 %v5197
  %5501 = vmatprep.subr.bf16.mxu0 %v5194
  %5502 = vmatpush2.bf16.msra.mxu0 %v5193
  %5503 = vmatprep.subr.bf16.mxu0 %v5190
  %5504 = vmatpush2.bf16.msra.mxu0 %v5189
  %5505 = vmatprep.subr.bf16.mxu0 %v5186
  %5506 = vmatpush2.bf16.msra.mxu0 %v5185
  %5507 = vmatprep.subr.bf16.mxu0 %v5182
  %5508 = vmatpush2.bf16.msra.mxu0 %v5181
  %5509 = vmatprep.subr.bf16.mxu0 %v5178
  %5510 = vmatpush2.bf16.msra.mxu0 %v5177
  %5511 = vmatprep.subr.bf16.mxu0 %v5174
  %5512 = vmatpush2.bf16.msra.mxu0 %v5173
  %5513 = vmatprep.mubr.bf16.mxu0 %v164
  %5514 = vmatmul.mubr.bf16.gmra.mxu0 %v163
  %v5515 = vpop.f32.mrf.mxu0
  %v5516 = vadd.f32 0.0, %v5515
  %v5517 = vpop.f32.mrf.mxu0
  %v5518 = vadd.f32 0.0, %v5517
  %v5519 = vpop.f32.mrf.mxu0
  %v5520 = vadd.f32 0.0, %v5519
  %v5521 = vpop.f32.mrf.mxu0
  %v5522 = vadd.f32 0.0, %v5521
  %5523 = vdwg.mxu0
  %5524 = vmatprep.subr.bf16.mxu0 %v5234
  %5525 = vmatpush1.bf16.msra.mxu0 %v5233
  %5526 = vmatprep.subr.bf16.mxu0 %v5230
  %5527 = vmatpush1.bf16.msra.mxu0 %v5229
  %5528 = vmatprep.subr.bf16.mxu0 %v5226
  %5529 = vmatpush1.bf16.msra.mxu0 %v5225
  %5530 = vmatprep.subr.bf16.mxu0 %v5222
  %5531 = vmatpush1.bf16.msra.mxu0 %v5221
  %5532 = vmatprep.subr.bf16.mxu0 %v5218
  %5533 = vmatpush1.bf16.msra.mxu0 %v5217
  %5534 = vmatprep.subr.bf16.mxu0 %v5214
  %5535 = vmatpush1.bf16.msra.mxu0 %v5213
  %5536 = vmatprep.subr.bf16.mxu0 %v5210
  %5537 = vmatpush1.bf16.msra.mxu0 %v5209
  %5538 = vmatprep.subr.bf16.mxu0 %v5206
  %5539 = vmatpush1.bf16.msra.mxu0 %v5205
  %5540 = vmatprep.subr.bf16.mxu0 %v5266
  %5541 = vmatpush2.bf16.msra.mxu0 %v5265
  %5542 = vmatprep.subr.bf16.mxu0 %v5262
  %5543 = vmatpush2.bf16.msra.mxu0 %v5261
  %5544 = vmatprep.subr.bf16.mxu0 %v5258
  %5545 = vmatpush2.bf16.msra.mxu0 %v5257
  %5546 = vmatprep.subr.bf16.mxu0 %v5254
  %5547 = vmatpush2.bf16.msra.mxu0 %v5253
  %5548 = vmatprep.subr.bf16.mxu0 %v5250
  %5549 = vmatpush2.bf16.msra.mxu0 %v5249
  %5550 = vmatprep.subr.bf16.mxu0 %v5246
  %5551 = vmatpush2.bf16.msra.mxu0 %v5245
  %5552 = vmatprep.subr.bf16.mxu0 %v5242
  %5553 = vmatpush2.bf16.msra.mxu0 %v5241
  %5554 = vmatprep.subr.bf16.mxu0 %v5238
  %5555 = vmatpush2.bf16.msra.mxu0 %v5237
  %5556 = vmatprep.mubr.bf16.mxu0 %v166
  %5557 = vmatmul.mubr.bf16.gmra.mxu0 %v165
  %v5558 = vpop.f32.mrf.mxu0
  %v5559 = vadd.f32 %v5516, %v5558
  %v5560 = vpop.f32.mrf.mxu0
  %v5561 = vadd.f32 %v5518, %v5560
  %v5562 = vpop.f32.mrf.mxu0
  %v5563 = vadd.f32 %v5520, %v5562
  %v5564 = vpop.f32.mrf.mxu0
  %v5565 = vadd.f32 %v5522, %v5564
  %5566 = vdwg.mxu0
  %5567 = vmatprep.subr.bf16.mxu0 %v5168
  %5568 = vmatpush1.bf16.msra.mxu0 %v5167
  %5569 = vmatprep.subr.bf16.mxu0 %v5164
  %5570 = vmatpush1.bf16.msra.mxu0 %v5163
  %5571 = vmatprep.subr.bf16.mxu0 %v5160
  %5572 = vmatpush1.bf16.msra.mxu0 %v5159
  %5573 = vmatprep.subr.bf16.mxu0 %v5156
  %5574 = vmatpush1.bf16.msra.mxu0 %v5155
  %5575 = vmatprep.subr.bf16.mxu0 %v5152
  %5576 = vmatpush1.bf16.msra.mxu0 %v5151
  %5577 = vmatprep.subr.bf16.mxu0 %v5148
  %5578 = vmatpush1.bf16.msra.mxu0 %v5147
  %5579 = vmatprep.subr.bf16.mxu0 %v5144
  %5580 = vmatpush1.bf16.msra.mxu0 %v5143
  %5581 = vmatprep.subr.bf16.mxu0 %v5140
  %5582 = vmatpush1.bf16.msra.mxu0 %v5139
  %5583 = vmatprep.subr.bf16.mxu0 %v5200
  %5584 = vmatpush2.bf16.msra.mxu0 %v5199
  %5585 = vmatprep.subr.bf16.mxu0 %v5196
  %5586 = vmatpush2.bf16.msra.mxu0 %v5195
  %5587 = vmatprep.subr.bf16.mxu0 %v5192
  %5588 = vmatpush2.bf16.msra.mxu0 %v5191
  %5589 = vmatprep.subr.bf16.mxu0 %v5188
  %5590 = vmatpush2.bf16.msra.mxu0 %v5187
  %5591 = vmatprep.subr.bf16.mxu0 %v5184
  %5592 = vmatpush2.bf16.msra.mxu0 %v5183
  %5593 = vmatprep.subr.bf16.mxu0 %v5180
  %5594 = vmatpush2.bf16.msra.mxu0 %v5179
  %5595 = vmatprep.subr.bf16.mxu0 %v5176
  %5596 = vmatpush2.bf16.msra.mxu0 %v5175
  %5597 = vmatprep.subr.bf16.mxu0 %v5172
  %5598 = vmatpush2.bf16.msra.mxu0 %v5171
  %5599 = vmatprep.mubr.bf16.mxu0 %v996
  %5600 = vmatmul.mubr.bf16.gmra.mxu0 %v995
  %v5601 = vpop.f32.mrf.mxu0
  %v5602 = vadd.f32 0.0, %v5601
  %v5603 = vpop.f32.mrf.mxu0
  %v5604 = vadd.f32 0.0, %v5603
  %v5605 = vpop.f32.mrf.mxu0
  %v5606 = vadd.f32 0.0, %v5605
  %v5607 = vpop.f32.mrf.mxu0
  %v5608 = vadd.f32 0.0, %v5607
  %5609 = vdwg.mxu0
  %5610 = vmatprep.subr.bf16.mxu0 %v5232
  %5611 = vmatpush1.bf16.msra.mxu0 %v5231
  %5612 = vmatprep.subr.bf16.mxu0 %v5228
  %5613 = vmatpush1.bf16.msra.mxu0 %v5227
  %5614 = vmatprep.subr.bf16.mxu0 %v5224
  %5615 = vmatpush1.bf16.msra.mxu0 %v5223
  %5616 = vmatprep.subr.bf16.mxu0 %v5220
  %5617 = vmatpush1.bf16.msra.mxu0 %v5219
  %5618 = vmatprep.subr.bf16.mxu0 %v5216
  %5619 = vmatpush1.bf16.msra.mxu0 %v5215
  %5620 = vmatprep.subr.bf16.mxu0 %v5212
  %5621 = vmatpush1.bf16.msra.mxu0 %v5211
  %5622 = vmatprep.subr.bf16.mxu0 %v5208
  %5623 = vmatpush1.bf16.msra.mxu0 %v5207
  %5624 = vmatprep.subr.bf16.mxu0 %v5204
  %5625 = vmatpush1.bf16.msra.mxu0 %v5203
  %5626 = vmatprep.subr.bf16.mxu0 %v5264
  %5627 = vmatpush2.bf16.msra.mxu0 %v5263
  %5628 = vmatprep.subr.bf16.mxu0 %v5260
  %5629 = vmatpush2.bf16.msra.mxu0 %v5259
  %5630 = vmatprep.subr.bf16.mxu0 %v5256
  %5631 = vmatpush2.bf16.msra.mxu0 %v5255
  %5632 = vmatprep.subr.bf16.mxu0 %v5252
  %5633 = vmatpush2.bf16.msra.mxu0 %v5251
  %5634 = vmatprep.subr.bf16.mxu0 %v5248
  %5635 = vmatpush2.bf16.msra.mxu0 %v5247
  %5636 = vmatprep.subr.bf16.mxu0 %v5244
  %5637 = vmatpush2.bf16.msra.mxu0 %v5243
  %5638 = vmatprep.subr.bf16.mxu0 %v5240
  %5639 = vmatpush2.bf16.msra.mxu0 %v5239
  %5640 = vmatprep.subr.bf16.mxu0 %v5236
  %5641 = vmatpush2.bf16.msra.mxu0 %v5235
  %5642 = vmatprep.mubr.bf16.mxu0 %v998
  %5643 = vmatmul.mubr.bf16.gmra.mxu0 %v997
  %v5644 = vpop.f32.mrf.mxu0
  %v5645 = vadd.f32 %v5602, %v5644
  %v5646 = vpop.f32.mrf.mxu0
  %v5647 = vadd.f32 %v5604, %v5646
  %v5648 = vpop.f32.mrf.mxu0
  %v5649 = vadd.f32 %v5606, %v5648
  %v5650 = vpop.f32.mrf.mxu0
  %v5651 = vadd.f32 %v5608, %v5650
  %5652 = vdwg.mxu0
  %5653 = vmatprep.subr.bf16.mxu0 %v5170
  %5654 = vmatpush1.bf16.msra.mxu0 %v5169
  %5655 = vmatprep.subr.bf16.mxu0 %v5166
  %5656 = vmatpush1.bf16.msra.mxu0 %v5165
  %5657 = vmatprep.subr.bf16.mxu0 %v5162
  %5658 = vmatpush1.bf16.msra.mxu0 %v5161
  %5659 = vmatprep.subr.bf16.mxu0 %v5158
  %5660 = vmatpush1.bf16.msra.mxu0 %v5157
  %5661 = vmatprep.subr.bf16.mxu0 %v5154
  %5662 = vmatpush1.bf16.msra.mxu0 %v5153
  %5663 = vmatprep.subr.bf16.mxu0 %v5150
  %5664 = vmatpush1.bf16.msra.mxu0 %v5149
  %5665 = vmatprep.subr.bf16.mxu0 %v5146
  %5666 = vmatpush1.bf16.msra.mxu0 %v5145
  %5667 = vmatprep.subr.bf16.mxu0 %v5142
  %5668 = vmatpush1.bf16.msra.mxu0 %v5141
  %5669 = vmatprep.subr.bf16.mxu0 %v5202
  %5670 = vmatpush2.bf16.msra.mxu0 %v5201
  %5671 = vmatprep.subr.bf16.mxu0 %v5198
  %5672 = vmatpush2.bf16.msra.mxu0 %v5197
  %5673 = vmatprep.subr.bf16.mxu0 %v5194
  %5674 = vmatpush2.bf16.msra.mxu0 %v5193
  %5675 = vmatprep.subr.bf16.mxu0 %v5190
  %5676 = vmatpush2.bf16.msra.mxu0 %v5189
  %5677 = vmatprep.subr.bf16.mxu0 %v5186
  %5678 = vmatpush2.bf16.msra.mxu0 %v5185
  %5679 = vmatprep.subr.bf16.mxu0 %v5182
  %5680 = vmatpush2.bf16.msra.mxu0 %v5181
  %5681 = vmatprep.subr.bf16.mxu0 %v5178
  %5682 = vmatpush2.bf16.msra.mxu0 %v5177
  %5683 = vmatprep.subr.bf16.mxu0 %v5174
  %5684 = vmatpush2.bf16.msra.mxu0 %v5173
  %5685 = vmatprep.mubr.bf16.mxu0 %v996
  %5686 = vmatmul.mubr.bf16.gmra.mxu0 %v995
  %v5687 = vpop.f32.mrf.mxu0
  %v5688 = vadd.f32 0.0, %v5687
  %v5689 = vpop.f32.mrf.mxu0
  %v5690 = vadd.f32 0.0, %v5689
  %v5691 = vpop.f32.mrf.mxu0
  %v5692 = vadd.f32 0.0, %v5691
  %v5693 = vpop.f32.mrf.mxu0
  %v5694 = vadd.f32 0.0, %v5693
  %5695 = vdwg.mxu0
  %5696 = vmatprep.subr.bf16.mxu0 %v5234
  %5697 = vmatpush1.bf16.msra.mxu0 %v5233
  %5698 = vmatprep.subr.bf16.mxu0 %v5230
  %5699 = vmatpush1.bf16.msra.mxu0 %v5229
  %5700 = vmatprep.subr.bf16.mxu0 %v5226
  %5701 = vmatpush1.bf16.msra.mxu0 %v5225
  %5702 = vmatprep.subr.bf16.mxu0 %v5222
  %5703 = vmatpush1.bf16.msra.mxu0 %v5221
  %5704 = vmatprep.subr.bf16.mxu0 %v5218
  %5705 = vmatpush1.bf16.msra.mxu0 %v5217
  %5706 = vmatprep.subr.bf16.mxu0 %v5214
  %5707 = vmatpush1.bf16.msra.mxu0 %v5213
  %5708 = vmatprep.subr.bf16.mxu0 %v5210
  %5709 = vmatpush1.bf16.msra.mxu0 %v5209
  %5710 = vmatprep.subr.bf16.mxu0 %v5206
  %5711 = vmatpush1.bf16.msra.mxu0 %v5205
  %5712 = vmatprep.subr.bf16.mxu0 %v5266
  %5713 = vmatpush2.bf16.msra.mxu0 %v5265
  %5714 = vmatprep.subr.bf16.mxu0 %v5262
  %5715 = vmatpush2.bf16.msra.mxu0 %v5261
  %5716 = vmatprep.subr.bf16.mxu0 %v5258
  %5717 = vmatpush2.bf16.msra.mxu0 %v5257
  %5718 = vmatprep.subr.bf16.mxu0 %v5254
  %5719 = vmatpush2.bf16.msra.mxu0 %v5253
  %5720 = vmatprep.subr.bf16.mxu0 %v5250
  %5721 = vmatpush2.bf16.msra.mxu0 %v5249
  %5722 = vmatprep.subr.bf16.mxu0 %v5246
  %5723 = vmatpush2.bf16.msra.mxu0 %v5245
  %5724 = vmatprep.subr.bf16.mxu0 %v5242
  %5725 = vmatpush2.bf16.msra.mxu0 %v5241
  %5726 = vmatprep.subr.bf16.mxu0 %v5238
  %5727 = vmatpush2.bf16.msra.mxu0 %v5237
  %5728 = vmatprep.mubr.bf16.mxu0 %v998
  %5729 = vmatmul.mubr.bf16.gmra.mxu0 %v997
  %v5730 = vpop.f32.mrf.mxu0
  %v5731 = vadd.f32 %v5688, %v5730
  %v5732 = vpop.f32.mrf.mxu0
  %v5733 = vadd.f32 %v5690, %v5732
  %v5734 = vpop.f32.mrf.mxu0
  %v5735 = vadd.f32 %v5692, %v5734
  %v5736 = vpop.f32.mrf.mxu0
  %v5737 = vadd.f32 %v5694, %v5736
  %5738 = vdwg.mxu0
  %s5739 = scalar_lea.vmem %s1, 5120
  %v5740 = vld [vmem:[%s5739] sm:$0xff]
  %v5741 = vld [vmem:[%s5739 + $0x8] sm:$0xff]
  %v5742 = vld [vmem:[%s5739 + $0x10] sm:$0xff]
  %v5743 = vld [vmem:[%s5739 + $0x18] sm:$0xff]
  %v5744 = vld [vmem:[%s5739 + $0x20] sm:$0xff]
  %v5745 = vld [vmem:[%s5739 + $0x28] sm:$0xff]
  %v5746 = vld [vmem:[%s5739 + $0x30] sm:$0xff]
  %v5747 = vld [vmem:[%s5739 + $0x38] sm:$0xff]
  %v5748 = vld [vmem:[%s5739 + $0x40] sm:$0xff]
  %v5749 = vld [vmem:[%s5739 + $0x48] sm:$0xff]
  %v5750 = vld [vmem:[%s5739 + $0x50] sm:$0xff]
  %v5751 = vld [vmem:[%s5739 + $0x58] sm:$0xff]
  %v5752 = vld [vmem:[%s5739 + $0x60] sm:$0xff]
  %v5753 = vld [vmem:[%s5739 + $0x68] sm:$0xff]
  %v5754 = vld [vmem:[%s5739 + $0x70] sm:$0xff]
  %v5755 = vld [vmem:[%s5739 + $0x78] sm:$0xff]
  %v5756 = vld [vmem:[%s5739 + $0x80] sm:$0xff]
  %v5757 = vld [vmem:[%s5739 + $0x88] sm:$0xff]
  %v5758 = vld [vmem:[%s5739 + $0x90] sm:$0xff]
  %v5759 = vld [vmem:[%s5739 + $0x98] sm:$0xff]
  %v5760 = vld [vmem:[%s5739 + $0xa0] sm:$0xff]
  %v5761 = vld [vmem:[%s5739 + $0xa8] sm:$0xff]
  %v5762 = vld [vmem:[%s5739 + $0xb0] sm:$0xff]
  %v5763 = vld [vmem:[%s5739 + $0xb8] sm:$0xff]
  %v5764 = vld [vmem:[%s5739 + $0xc0] sm:$0xff]
  %v5765 = vld [vmem:[%s5739 + $0xc8] sm:$0xff]
  %v5766 = vld [vmem:[%s5739 + $0xd0] sm:$0xff]
  %v5767 = vld [vmem:[%s5739 + $0xd8] sm:$0xff]
  %v5768 = vld [vmem:[%s5739 + $0xe0] sm:$0xff]
  %v5769 = vld [vmem:[%s5739 + $0xe8] sm:$0xff]
  %v5770 = vld [vmem:[%s5739 + $0xf0] sm:$0xff]
  %v5771 = vld [vmem:[%s5739 + $0xf8] sm:$0xff]
  %v5772 = vld [vmem:[%s5739 + $0x100] sm:$0xff]
  %v5773 = vld [vmem:[%s5739 + $0x108] sm:$0xff]
  %v5774 = vld [vmem:[%s5739 + $0x110] sm:$0xff]
  %v5775 = vld [vmem:[%s5739 + $0x118] sm:$0xff]
  %v5776 = vld [vmem:[%s5739 + $0x120] sm:$0xff]
  %v5777 = vld [vmem:[%s5739 + $0x128] sm:$0xff]
  %v5778 = vld [vmem:[%s5739 + $0x130] sm:$0xff]
  %v5779 = vld [vmem:[%s5739 + $0x138] sm:$0xff]
  %v5780 = vld [vmem:[%s5739 + $0x140] sm:$0xff]
  %v5781 = vld [vmem:[%s5739 + $0x148] sm:$0xff]
  %v5782 = vld [vmem:[%s5739 + $0x150] sm:$0xff]
  %v5783 = vld [vmem:[%s5739 + $0x158] sm:$0xff]
  %v5784 = vld [vmem:[%s5739 + $0x160] sm:$0xff]
  %v5785 = vld [vmem:[%s5739 + $0x168] sm:$0xff]
  %v5786 = vld [vmem:[%s5739 + $0x170] sm:$0xff]
  %v5787 = vld [vmem:[%s5739 + $0x178] sm:$0xff]
  %v5788 = vld [vmem:[%s5739 + $0x180] sm:$0xff]
  %v5789 = vld [vmem:[%s5739 + $0x188] sm:$0xff]
  %v5790 = vld [vmem:[%s5739 + $0x190] sm:$0xff]
  %v5791 = vld [vmem:[%s5739 + $0x198] sm:$0xff]
  %v5792 = vld [vmem:[%s5739 + $0x1a0] sm:$0xff]
  %v5793 = vld [vmem:[%s5739 + $0x1a8] sm:$0xff]
  %v5794 = vld [vmem:[%s5739 + $0x1b0] sm:$0xff]
  %v5795 = vld [vmem:[%s5739 + $0x1b8] sm:$0xff]
  %v5796 = vld [vmem:[%s5739 + $0x1c0] sm:$0xff]
  %v5797 = vld [vmem:[%s5739 + $0x1c8] sm:$0xff]
  %v5798 = vld [vmem:[%s5739 + $0x1d0] sm:$0xff]
  %v5799 = vld [vmem:[%s5739 + $0x1d8] sm:$0xff]
  %v5800 = vld [vmem:[%s5739 + $0x1e0] sm:$0xff]
  %v5801 = vld [vmem:[%s5739 + $0x1e8] sm:$0xff]
  %v5802 = vld [vmem:[%s5739 + $0x1f0] sm:$0xff]
  %v5803 = vld [vmem:[%s5739 + $0x1f8] sm:$0xff]
  %v5804 = vld [vmem:[%s5739 + $0x200] sm:$0xff]
  %v5805 = vld [vmem:[%s5739 + $0x208] sm:$0xff]
  %v5806 = vld [vmem:[%s5739 + $0x210] sm:$0xff]
  %v5807 = vld [vmem:[%s5739 + $0x218] sm:$0xff]
  %v5808 = vld [vmem:[%s5739 + $0x220] sm:$0xff]
  %v5809 = vld [vmem:[%s5739 + $0x228] sm:$0xff]
  %v5810 = vld [vmem:[%s5739 + $0x230] sm:$0xff]
  %v5811 = vld [vmem:[%s5739 + $0x238] sm:$0xff]
  %v5812 = vld [vmem:[%s5739 + $0x240] sm:$0xff]
  %v5813 = vld [vmem:[%s5739 + $0x248] sm:$0xff]
  %v5814 = vld [vmem:[%s5739 + $0x250] sm:$0xff]
  %v5815 = vld [vmem:[%s5739 + $0x258] sm:$0xff]
  %v5816 = vld [vmem:[%s5739 + $0x260] sm:$0xff]
  %v5817 = vld [vmem:[%s5739 + $0x268] sm:$0xff]
  %v5818 = vld [vmem:[%s5739 + $0x270] sm:$0xff]
  %v5819 = vld [vmem:[%s5739 + $0x278] sm:$0xff]
  %v5820 = vld [vmem:[%s5739 + $0x280] sm:$0xff]
  %v5821 = vld [vmem:[%s5739 + $0x288] sm:$0xff]
  %v5822 = vld [vmem:[%s5739 + $0x290] sm:$0xff]
  %v5823 = vld [vmem:[%s5739 + $0x298] sm:$0xff]
  %v5824 = vld [vmem:[%s5739 + $0x2a0] sm:$0xff]
  %v5825 = vld [vmem:[%s5739 + $0x2a8] sm:$0xff]
  %v5826 = vld [vmem:[%s5739 + $0x2b0] sm:$0xff]
  %v5827 = vld [vmem:[%s5739 + $0x2b8] sm:$0xff]
  %v5828 = vld [vmem:[%s5739 + $0x2c0] sm:$0xff]
  %v5829 = vld [vmem:[%s5739 + $0x2c8] sm:$0xff]
  %v5830 = vld [vmem:[%s5739 + $0x2d0] sm:$0xff]
  %v5831 = vld [vmem:[%s5739 + $0x2d8] sm:$0xff]
  %v5832 = vld [vmem:[%s5739 + $0x2e0] sm:$0xff]
  %v5833 = vld [vmem:[%s5739 + $0x2e8] sm:$0xff]
  %v5834 = vld [vmem:[%s5739 + $0x2f0] sm:$0xff]
  %v5835 = vld [vmem:[%s5739 + $0x2f8] sm:$0xff]
  %v5836 = vld [vmem:[%s5739 + $0x300] sm:$0xff]
  %v5837 = vld [vmem:[%s5739 + $0x308] sm:$0xff]
  %v5838 = vld [vmem:[%s5739 + $0x310] sm:$0xff]
  %v5839 = vld [vmem:[%s5739 + $0x318] sm:$0xff]
  %v5840 = vld [vmem:[%s5739 + $0x320] sm:$0xff]
  %v5841 = vld [vmem:[%s5739 + $0x328] sm:$0xff]
  %v5842 = vld [vmem:[%s5739 + $0x330] sm:$0xff]
  %v5843 = vld [vmem:[%s5739 + $0x338] sm:$0xff]
  %v5844 = vld [vmem:[%s5739 + $0x340] sm:$0xff]
  %v5845 = vld [vmem:[%s5739 + $0x348] sm:$0xff]
  %v5846 = vld [vmem:[%s5739 + $0x350] sm:$0xff]
  %v5847 = vld [vmem:[%s5739 + $0x358] sm:$0xff]
  %v5848 = vld [vmem:[%s5739 + $0x360] sm:$0xff]
  %v5849 = vld [vmem:[%s5739 + $0x368] sm:$0xff]
  %v5850 = vld [vmem:[%s5739 + $0x370] sm:$0xff]
  %v5851 = vld [vmem:[%s5739 + $0x378] sm:$0xff]
  %v5852 = vld [vmem:[%s5739 + $0x380] sm:$0xff]
  %v5853 = vld [vmem:[%s5739 + $0x388] sm:$0xff]
  %v5854 = vld [vmem:[%s5739 + $0x390] sm:$0xff]
  %v5855 = vld [vmem:[%s5739 + $0x398] sm:$0xff]
  %v5856 = vld [vmem:[%s5739 + $0x3a0] sm:$0xff]
  %v5857 = vld [vmem:[%s5739 + $0x3a8] sm:$0xff]
  %v5858 = vld [vmem:[%s5739 + $0x3b0] sm:$0xff]
  %v5859 = vld [vmem:[%s5739 + $0x3b8] sm:$0xff]
  %v5860 = vld [vmem:[%s5739 + $0x3c0] sm:$0xff]
  %v5861 = vld [vmem:[%s5739 + $0x3c8] sm:$0xff]
  %v5862 = vld [vmem:[%s5739 + $0x3d0] sm:$0xff]
  %v5863 = vld [vmem:[%s5739 + $0x3d8] sm:$0xff]
  %v5864 = vld [vmem:[%s5739 + $0x3e0] sm:$0xff]
  %v5865 = vld [vmem:[%s5739 + $0x3e8] sm:$0xff]
  %v5866 = vld [vmem:[%s5739 + $0x3f0] sm:$0xff]
  %v5867 = vld [vmem:[%s5739 + $0x3f8] sm:$0xff]
  %v5996 = vunpack.c.l.b16 %v5740
  %v5997 = vunpack.c.h.b16 %v5740
  %v5998 = vunpack.c.l.b16 %v5741
  %v5999 = vunpack.c.h.b16 %v5741
  %v6000 = vunpack.c.l.b16 %v5742
  %v6001 = vunpack.c.h.b16 %v5742
  %v6002 = vunpack.c.l.b16 %v5743
  %v6003 = vunpack.c.h.b16 %v5743
  %v6004 = vunpack.c.l.b16 %v5744
  %v6005 = vunpack.c.h.b16 %v5744
  %v6006 = vunpack.c.l.b16 %v5745
  %v6007 = vunpack.c.h.b16 %v5745
  %v6008 = vunpack.c.l.b16 %v5746
  %v6009 = vunpack.c.h.b16 %v5746
  %v6010 = vunpack.c.l.b16 %v5747
  %v6011 = vunpack.c.h.b16 %v5747
  %v6012 = vunpack.c.l.b16 %v5748
  %v6013 = vunpack.c.h.b16 %v5748
  %v6014 = vunpack.c.l.b16 %v5749
  %v6015 = vunpack.c.h.b16 %v5749
  %v6016 = vunpack.c.l.b16 %v5750
  %v6017 = vunpack.c.h.b16 %v5750
  %v6018 = vunpack.c.l.b16 %v5751
  %v6019 = vunpack.c.h.b16 %v5751
  %v6020 = vunpack.c.l.b16 %v5752
  %v6021 = vunpack.c.h.b16 %v5752
  %v6022 = vunpack.c.l.b16 %v5753
  %v6023 = vunpack.c.h.b16 %v5753
  %v6024 = vunpack.c.l.b16 %v5754
  %v6025 = vunpack.c.h.b16 %v5754
  %v6026 = vunpack.c.l.b16 %v5755
  %v6027 = vunpack.c.h.b16 %v5755
  %v6028 = vunpack.c.l.b16 %v5756
  %v6029 = vunpack.c.h.b16 %v5756
  %v6030 = vunpack.c.l.b16 %v5757
  %v6031 = vunpack.c.h.b16 %v5757
  %v6032 = vunpack.c.l.b16 %v5758
  %v6033 = vunpack.c.h.b16 %v5758
  %v6034 = vunpack.c.l.b16 %v5759
  %v6035 = vunpack.c.h.b16 %v5759
  %v6036 = vunpack.c.l.b16 %v5760
  %v6037 = vunpack.c.h.b16 %v5760
  %v6038 = vunpack.c.l.b16 %v5761
  %v6039 = vunpack.c.h.b16 %v5761
  %v6040 = vunpack.c.l.b16 %v5762
  %v6041 = vunpack.c.h.b16 %v5762
  %v6042 = vunpack.c.l.b16 %v5763
  %v6043 = vunpack.c.h.b16 %v5763
  %v6044 = vunpack.c.l.b16 %v5764
  %v6045 = vunpack.c.h.b16 %v5764
  %v6046 = vunpack.c.l.b16 %v5765
  %v6047 = vunpack.c.h.b16 %v5765
  %v6048 = vunpack.c.l.b16 %v5766
  %v6049 = vunpack.c.h.b16 %v5766
  %v6050 = vunpack.c.l.b16 %v5767
  %v6051 = vunpack.c.h.b16 %v5767
  %v6052 = vunpack.c.l.b16 %v5768
  %v6053 = vunpack.c.h.b16 %v5768
  %v6054 = vunpack.c.l.b16 %v5769
  %v6055 = vunpack.c.h.b16 %v5769
  %v6056 = vunpack.c.l.b16 %v5770
  %v6057 = vunpack.c.h.b16 %v5770
  %v6058 = vunpack.c.l.b16 %v5771
  %v6059 = vunpack.c.h.b16 %v5771
  %v6060 = vunpack.c.l.b16 %v5772
  %v6061 = vunpack.c.h.b16 %v5772
  %v6062 = vunpack.c.l.b16 %v5773
  %v6063 = vunpack.c.h.b16 %v5773
  %v6064 = vunpack.c.l.b16 %v5774
  %v6065 = vunpack.c.h.b16 %v5774
  %v6066 = vunpack.c.l.b16 %v5775
  %v6067 = vunpack.c.h.b16 %v5775
  %v6068 = vunpack.c.l.b16 %v5776
  %v6069 = vunpack.c.h.b16 %v5776
  %v6070 = vunpack.c.l.b16 %v5777
  %v6071 = vunpack.c.h.b16 %v5777
  %v6072 = vunpack.c.l.b16 %v5778
  %v6073 = vunpack.c.h.b16 %v5778
  %v6074 = vunpack.c.l.b16 %v5779
  %v6075 = vunpack.c.h.b16 %v5779
  %v6076 = vunpack.c.l.b16 %v5780
  %v6077 = vunpack.c.h.b16 %v5780
  %v6078 = vunpack.c.l.b16 %v5781
  %v6079 = vunpack.c.h.b16 %v5781
  %v6080 = vunpack.c.l.b16 %v5782
  %v6081 = vunpack.c.h.b16 %v5782
  %v6082 = vunpack.c.l.b16 %v5783
  %v6083 = vunpack.c.h.b16 %v5783
  %v6084 = vunpack.c.l.b16 %v5784
  %v6085 = vunpack.c.h.b16 %v5784
  %v6086 = vunpack.c.l.b16 %v5785
  %v6087 = vunpack.c.h.b16 %v5785
  %v6088 = vunpack.c.l.b16 %v5786
  %v6089 = vunpack.c.h.b16 %v5786
  %v6090 = vunpack.c.l.b16 %v5787
  %v6091 = vunpack.c.h.b16 %v5787
  %v6092 = vunpack.c.l.b16 %v5788
  %v6093 = vunpack.c.h.b16 %v5788
  %v6094 = vunpack.c.l.b16 %v5789
  %v6095 = vunpack.c.h.b16 %v5789
  %v6096 = vunpack.c.l.b16 %v5790
  %v6097 = vunpack.c.h.b16 %v5790
  %v6098 = vunpack.c.l.b16 %v5791
  %v6099 = vunpack.c.h.b16 %v5791
  %v6100 = vunpack.c.l.b16 %v5792
  %v6101 = vunpack.c.h.b16 %v5792
  %v6102 = vunpack.c.l.b16 %v5793
  %v6103 = vunpack.c.h.b16 %v5793
  %v6104 = vunpack.c.l.b16 %v5794
  %v6105 = vunpack.c.h.b16 %v5794
  %v6106 = vunpack.c.l.b16 %v5795
  %v6107 = vunpack.c.h.b16 %v5795
  %v6108 = vunpack.c.l.b16 %v5796
  %v6109 = vunpack.c.h.b16 %v5796
  %v6110 = vunpack.c.l.b16 %v5797
  %v6111 = vunpack.c.h.b16 %v5797
  %v6112 = vunpack.c.l.b16 %v5798
  %v6113 = vunpack.c.h.b16 %v5798
  %v6114 = vunpack.c.l.b16 %v5799
  %v6115 = vunpack.c.h.b16 %v5799
  %v6116 = vunpack.c.l.b16 %v5800
  %v6117 = vunpack.c.h.b16 %v5800
  %v6118 = vunpack.c.l.b16 %v5801
  %v6119 = vunpack.c.h.b16 %v5801
  %v6120 = vunpack.c.l.b16 %v5802
  %v6121 = vunpack.c.h.b16 %v5802
  %v6122 = vunpack.c.l.b16 %v5803
  %v6123 = vunpack.c.h.b16 %v5803
  %v6124 = vunpack.c.l.b16 %v5804
  %v6125 = vunpack.c.h.b16 %v5804
  %v6126 = vunpack.c.l.b16 %v5805
  %v6127 = vunpack.c.h.b16 %v5805
  %v6128 = vunpack.c.l.b16 %v5806
  %v6129 = vunpack.c.h.b16 %v5806
  %v6130 = vunpack.c.l.b16 %v5807
  %v6131 = vunpack.c.h.b16 %v5807
  %v6132 = vunpack.c.l.b16 %v5808
  %v6133 = vunpack.c.h.b16 %v5808
  %v6134 = vunpack.c.l.b16 %v5809
  %v6135 = vunpack.c.h.b16 %v5809
  %v6136 = vunpack.c.l.b16 %v5810
  %v6137 = vunpack.c.h.b16 %v5810
  %v6138 = vunpack.c.l.b16 %v5811
  %v6139 = vunpack.c.h.b16 %v5811
  %v6140 = vunpack.c.l.b16 %v5812
  %v6141 = vunpack.c.h.b16 %v5812
  %v6142 = vunpack.c.l.b16 %v5813
  %v6143 = vunpack.c.h.b16 %v5813
  %v6144 = vunpack.c.l.b16 %v5814
  %v6145 = vunpack.c.h.b16 %v5814
  %v6146 = vunpack.c.l.b16 %v5815
  %v6147 = vunpack.c.h.b16 %v5815
  %v6148 = vunpack.c.l.b16 %v5816
  %v6149 = vunpack.c.h.b16 %v5816
  %v6150 = vunpack.c.l.b16 %v5817
  %v6151 = vunpack.c.h.b16 %v5817
  %v6152 = vunpack.c.l.b16 %v5818
  %v6153 = vunpack.c.h.b16 %v5818
  %v6154 = vunpack.c.l.b16 %v5819
  %v6155 = vunpack.c.h.b16 %v5819
  %v6156 = vunpack.c.l.b16 %v5820
  %v6157 = vunpack.c.h.b16 %v5820
  %v6158 = vunpack.c.l.b16 %v5821
  %v6159 = vunpack.c.h.b16 %v5821
  %v6160 = vunpack.c.l.b16 %v5822
  %v6161 = vunpack.c.h.b16 %v5822
  %v6162 = vunpack.c.l.b16 %v5823
  %v6163 = vunpack.c.h.b16 %v5823
  %v6164 = vunpack.c.l.b16 %v5824
  %v6165 = vunpack.c.h.b16 %v5824
  %v6166 = vunpack.c.l.b16 %v5825
  %v6167 = vunpack.c.h.b16 %v5825
  %v6168 = vunpack.c.l.b16 %v5826
  %v6169 = vunpack.c.h.b16 %v5826
  %v6170 = vunpack.c.l.b16 %v5827
  %v6171 = vunpack.c.h.b16 %v5827
  %v6172 = vunpack.c.l.b16 %v5828
  %v6173 = vunpack.c.h.b16 %v5828
  %v6174 = vunpack.c.l.b16 %v5829
  %v6175 = vunpack.c.h.b16 %v5829
  %v6176 = vunpack.c.l.b16 %v5830
  %v6177 = vunpack.c.h.b16 %v5830
  %v6178 = vunpack.c.l.b16 %v5831
  %v6179 = vunpack.c.h.b16 %v5831
  %v6180 = vunpack.c.l.b16 %v5832
  %v6181 = vunpack.c.h.b16 %v5832
  %v6182 = vunpack.c.l.b16 %v5833
  %v6183 = vunpack.c.h.b16 %v5833
  %v6184 = vunpack.c.l.b16 %v5834
  %v6185 = vunpack.c.h.b16 %v5834
  %v6186 = vunpack.c.l.b16 %v5835
  %v6187 = vunpack.c.h.b16 %v5835
  %v6188 = vunpack.c.l.b16 %v5836
  %v6189 = vunpack.c.h.b16 %v5836
  %v6190 = vunpack.c.l.b16 %v5837
  %v6191 = vunpack.c.h.b16 %v5837
  %v6192 = vunpack.c.l.b16 %v5838
  %v6193 = vunpack.c.h.b16 %v5838
  %v6194 = vunpack.c.l.b16 %v5839
  %v6195 = vunpack.c.h.b16 %v5839
  %v6196 = vunpack.c.l.b16 %v5840
  %v6197 = vunpack.c.h.b16 %v5840
  %v6198 = vunpack.c.l.b16 %v5841
  %v6199 = vunpack.c.h.b16 %v5841
  %v6200 = vunpack.c.l.b16 %v5842
  %v6201 = vunpack.c.h.b16 %v5842
  %v6202 = vunpack.c.l.b16 %v5843
  %v6203 = vunpack.c.h.b16 %v5843
  %v6204 = vunpack.c.l.b16 %v5844
  %v6205 = vunpack.c.h.b16 %v5844
  %v6206 = vunpack.c.l.b16 %v5845
  %v6207 = vunpack.c.h.b16 %v5845
  %v6208 = vunpack.c.l.b16 %v5846
  %v6209 = vunpack.c.h.b16 %v5846
  %v6210 = vunpack.c.l.b16 %v5847
  %v6211 = vunpack.c.h.b16 %v5847
  %v6212 = vunpack.c.l.b16 %v5848
  %v6213 = vunpack.c.h.b16 %v5848
  %v6214 = vunpack.c.l.b16 %v5849
  %v6215 = vunpack.c.h.b16 %v5849
  %v6216 = vunpack.c.l.b16 %v5850
  %v6217 = vunpack.c.h.b16 %v5850
  %v6218 = vunpack.c.l.b16 %v5851
  %v6219 = vunpack.c.h.b16 %v5851
  %v6220 = vunpack.c.l.b16 %v5852
  %v6221 = vunpack.c.h.b16 %v5852
  %v6222 = vunpack.c.l.b16 %v5853
  %v6223 = vunpack.c.h.b16 %v5853
  %v6224 = vunpack.c.l.b16 %v5854
  %v6225 = vunpack.c.h.b16 %v5854
  %v6226 = vunpack.c.l.b16 %v5855
  %v6227 = vunpack.c.h.b16 %v5855
  %v6228 = vunpack.c.l.b16 %v5856
  %v6229 = vunpack.c.h.b16 %v5856
  %v6230 = vunpack.c.l.b16 %v5857
  %v6231 = vunpack.c.h.b16 %v5857
  %v6232 = vunpack.c.l.b16 %v5858
  %v6233 = vunpack.c.h.b16 %v5858
  %v6234 = vunpack.c.l.b16 %v5859
  %v6235 = vunpack.c.h.b16 %v5859
  %v6236 = vunpack.c.l.b16 %v5860
  %v6237 = vunpack.c.h.b16 %v5860
  %v6238 = vunpack.c.l.b16 %v5861
  %v6239 = vunpack.c.h.b16 %v5861
  %v6240 = vunpack.c.l.b16 %v5862
  %v6241 = vunpack.c.h.b16 %v5862
  %v6242 = vunpack.c.l.b16 %v5863
  %v6243 = vunpack.c.h.b16 %v5863
  %v6244 = vunpack.c.l.b16 %v5864
  %v6245 = vunpack.c.h.b16 %v5864
  %v6246 = vunpack.c.l.b16 %v5865
  %v6247 = vunpack.c.h.b16 %v5865
  %v6248 = vunpack.c.l.b16 %v5866
  %v6249 = vunpack.c.h.b16 %v5866
  %v6250 = vunpack.c.l.b16 %v5867
  %v6251 = vunpack.c.h.b16 %v5867
  %v6252 = vpack.c.b16 %v6000, %v5996
  %v6253 = vpack.c.b16 %v6001, %v5997
  %v6254 = vpack.c.b16 %v6002, %v5998
  %v6255 = vpack.c.b16 %v6003, %v5999
  %v6256 = vpack.c.b16 %v6008, %v6004
  %v6257 = vpack.c.b16 %v6009, %v6005
  %v6258 = vpack.c.b16 %v6010, %v6006
  %v6259 = vpack.c.b16 %v6011, %v6007
  %v6260 = vpack.c.b16 %v6016, %v6012
  %v6261 = vpack.c.b16 %v6017, %v6013
  %v6262 = vpack.c.b16 %v6018, %v6014
  %v6263 = vpack.c.b16 %v6019, %v6015
  %v6264 = vpack.c.b16 %v6024, %v6020
  %v6265 = vpack.c.b16 %v6025, %v6021
  %v6266 = vpack.c.b16 %v6026, %v6022
  %v6267 = vpack.c.b16 %v6027, %v6023
  %v6268 = vpack.c.b16 %v6032, %v6028
  %v6269 = vpack.c.b16 %v6033, %v6029
  %v6270 = vpack.c.b16 %v6034, %v6030
  %v6271 = vpack.c.b16 %v6035, %v6031
  %v6272 = vpack.c.b16 %v6040, %v6036
  %v6273 = vpack.c.b16 %v6041, %v6037
  %v6274 = vpack.c.b16 %v6042, %v6038
  %v6275 = vpack.c.b16 %v6043, %v6039
  %v6276 = vpack.c.b16 %v6048, %v6044
  %v6277 = vpack.c.b16 %v6049, %v6045
  %v6278 = vpack.c.b16 %v6050, %v6046
  %v6279 = vpack.c.b16 %v6051, %v6047
  %v6280 = vpack.c.b16 %v6056, %v6052
  %v6281 = vpack.c.b16 %v6057, %v6053
  %v6282 = vpack.c.b16 %v6058, %v6054
  %v6283 = vpack.c.b16 %v6059, %v6055
  %v6284 = vpack.c.b16 %v6064, %v6060
  %v6285 = vpack.c.b16 %v6065, %v6061
  %v6286 = vpack.c.b16 %v6066, %v6062
  %v6287 = vpack.c.b16 %v6067, %v6063
  %v6288 = vpack.c.b16 %v6072, %v6068
  %v6289 = vpack.c.b16 %v6073, %v6069
  %v6290 = vpack.c.b16 %v6074, %v6070
  %v6291 = vpack.c.b16 %v6075, %v6071
  %v6292 = vpack.c.b16 %v6080, %v6076
  %v6293 = vpack.c.b16 %v6081, %v6077
  %v6294 = vpack.c.b16 %v6082, %v6078
  %v6295 = vpack.c.b16 %v6083, %v6079
  %v6296 = vpack.c.b16 %v6088, %v6084
  %v6297 = vpack.c.b16 %v6089, %v6085
  %v6298 = vpack.c.b16 %v6090, %v6086
  %v6299 = vpack.c.b16 %v6091, %v6087
  %v6300 = vpack.c.b16 %v6096, %v6092
  %v6301 = vpack.c.b16 %v6097, %v6093
  %v6302 = vpack.c.b16 %v6098, %v6094
  %v6303 = vpack.c.b16 %v6099, %v6095
  %v6304 = vpack.c.b16 %v6104, %v6100
  %v6305 = vpack.c.b16 %v6105, %v6101
  %v6306 = vpack.c.b16 %v6106, %v6102
  %v6307 = vpack.c.b16 %v6107, %v6103
  %v6308 = vpack.c.b16 %v6112, %v6108
  %v6309 = vpack.c.b16 %v6113, %v6109
  %v6310 = vpack.c.b16 %v6114, %v6110
  %v6311 = vpack.c.b16 %v6115, %v6111
  %v6312 = vpack.c.b16 %v6120, %v6116
  %v6313 = vpack.c.b16 %v6121, %v6117
  %v6314 = vpack.c.b16 %v6122, %v6118
  %v6315 = vpack.c.b16 %v6123, %v6119
  %v6316 = vpack.c.b16 %v6128, %v6124
  %v6317 = vpack.c.b16 %v6129, %v6125
  %v6318 = vpack.c.b16 %v6130, %v6126
  %v6319 = vpack.c.b16 %v6131, %v6127
  %v6320 = vpack.c.b16 %v6136, %v6132
  %v6321 = vpack.c.b16 %v6137, %v6133
  %v6322 = vpack.c.b16 %v6138, %v6134
  %v6323 = vpack.c.b16 %v6139, %v6135
  %v6324 = vpack.c.b16 %v6144, %v6140
  %v6325 = vpack.c.b16 %v6145, %v6141
  %v6326 = vpack.c.b16 %v6146, %v6142
  %v6327 = vpack.c.b16 %v6147, %v6143
  %v6328 = vpack.c.b16 %v6152, %v6148
  %v6329 = vpack.c.b16 %v6153, %v6149
  %v6330 = vpack.c.b16 %v6154, %v6150
  %v6331 = vpack.c.b16 %v6155, %v6151
  %v6332 = vpack.c.b16 %v6160, %v6156
  %v6333 = vpack.c.b16 %v6161, %v6157
  %v6334 = vpack.c.b16 %v6162, %v6158
  %v6335 = vpack.c.b16 %v6163, %v6159
  %v6336 = vpack.c.b16 %v6168, %v6164
  %v6337 = vpack.c.b16 %v6169, %v6165
  %v6338 = vpack.c.b16 %v6170, %v6166
  %v6339 = vpack.c.b16 %v6171, %v6167
  %v6340 = vpack.c.b16 %v6176, %v6172
  %v6341 = vpack.c.b16 %v6177, %v6173
  %v6342 = vpack.c.b16 %v6178, %v6174
  %v6343 = vpack.c.b16 %v6179, %v6175
  %v6344 = vpack.c.b16 %v6184, %v6180
  %v6345 = vpack.c.b16 %v6185, %v6181
  %v6346 = vpack.c.b16 %v6186, %v6182
  %v6347 = vpack.c.b16 %v6187, %v6183
  %v6348 = vpack.c.b16 %v6192, %v6188
  %v6349 = vpack.c.b16 %v6193, %v6189
  %v6350 = vpack.c.b16 %v6194, %v6190
  %v6351 = vpack.c.b16 %v6195, %v6191
  %v6352 = vpack.c.b16 %v6200, %v6196
  %v6353 = vpack.c.b16 %v6201, %v6197
  %v6354 = vpack.c.b16 %v6202, %v6198
  %v6355 = vpack.c.b16 %v6203, %v6199
  %v6356 = vpack.c.b16 %v6208, %v6204
  %v6357 = vpack.c.b16 %v6209, %v6205
  %v6358 = vpack.c.b16 %v6210, %v6206
  %v6359 = vpack.c.b16 %v6211, %v6207
  %v6360 = vpack.c.b16 %v6216, %v6212
  %v6361 = vpack.c.b16 %v6217, %v6213
  %v6362 = vpack.c.b16 %v6218, %v6214
  %v6363 = vpack.c.b16 %v6219, %v6215
  %v6364 = vpack.c.b16 %v6224, %v6220
  %v6365 = vpack.c.b16 %v6225, %v6221
  %v6366 = vpack.c.b16 %v6226, %v6222
  %v6367 = vpack.c.b16 %v6227, %v6223
  %v6368 = vpack.c.b16 %v6232, %v6228
  %v6369 = vpack.c.b16 %v6233, %v6229
  %v6370 = vpack.c.b16 %v6234, %v6230
  %v6371 = vpack.c.b16 %v6235, %v6231
  %v6372 = vpack.c.b16 %v6240, %v6236
  %v6373 = vpack.c.b16 %v6241, %v6237
  %v6374 = vpack.c.b16 %v6242, %v6238
  %v6375 = vpack.c.b16 %v6243, %v6239
  %v6376 = vpack.c.b16 %v6248, %v6244
  %v6377 = vpack.c.b16 %v6249, %v6245
  %v6378 = vpack.c.b16 %v6250, %v6246
  %v6379 = vpack.c.b16 %v6251, %v6247
  %6508 = vmatprep.subr.bf16.mxu0 %v6281
  %6509 = vmatpush1.bf16.msra.mxu0 %v6280
  %6510 = vmatprep.subr.bf16.mxu0 %v6277
  %6511 = vmatpush1.bf16.msra.mxu0 %v6276
  %6512 = vmatprep.subr.bf16.mxu0 %v6273
  %6513 = vmatpush1.bf16.msra.mxu0 %v6272
  %6514 = vmatprep.subr.bf16.mxu0 %v6269
  %6515 = vmatpush1.bf16.msra.mxu0 %v6268
  %6516 = vmatprep.subr.bf16.mxu0 %v6265
  %6517 = vmatpush1.bf16.msra.mxu0 %v6264
  %6518 = vmatprep.subr.bf16.mxu0 %v6261
  %6519 = vmatpush1.bf16.msra.mxu0 %v6260
  %6520 = vmatprep.subr.bf16.mxu0 %v6257
  %6521 = vmatpush1.bf16.msra.mxu0 %v6256
  %6522 = vmatprep.subr.bf16.mxu0 %v6253
  %6523 = vmatpush1.bf16.msra.mxu0 %v6252
  %6524 = vmatprep.subr.bf16.mxu0 %v6313
  %6525 = vmatpush2.bf16.msra.mxu0 %v6312
  %6526 = vmatprep.subr.bf16.mxu0 %v6309
  %6527 = vmatpush2.bf16.msra.mxu0 %v6308
  %6528 = vmatprep.subr.bf16.mxu0 %v6305
  %6529 = vmatpush2.bf16.msra.mxu0 %v6304
  %6530 = vmatprep.subr.bf16.mxu0 %v6301
  %6531 = vmatpush2.bf16.msra.mxu0 %v6300
  %6532 = vmatprep.subr.bf16.mxu0 %v6297
  %6533 = vmatpush2.bf16.msra.mxu0 %v6296
  %6534 = vmatprep.subr.bf16.mxu0 %v6293
  %6535 = vmatpush2.bf16.msra.mxu0 %v6292
  %6536 = vmatprep.subr.bf16.mxu0 %v6289
  %6537 = vmatpush2.bf16.msra.mxu0 %v6288
  %6538 = vmatprep.subr.bf16.mxu0 %v6285
  %6539 = vmatpush2.bf16.msra.mxu0 %v6284
  %6540 = vmatprep.mubr.bf16.mxu0 %v164
  %6541 = vmatmul.mubr.bf16.gmra.mxu0 %v163
  %v6542 = vpop.f32.mrf.mxu0
  %v6543 = vadd.f32 0.0, %v6542
  %v6544 = vpop.f32.mrf.mxu0
  %v6545 = vadd.f32 0.0, %v6544
  %v6546 = vpop.f32.mrf.mxu0
  %v6547 = vadd.f32 0.0, %v6546
  %v6548 = vpop.f32.mrf.mxu0
  %v6549 = vadd.f32 0.0, %v6548
  %6550 = vdwg.mxu0
  %6551 = vmatprep.subr.bf16.mxu0 %v6345
  %6552 = vmatpush1.bf16.msra.mxu0 %v6344
  %6553 = vmatprep.subr.bf16.mxu0 %v6341
  %6554 = vmatpush1.bf16.msra.mxu0 %v6340
  %6555 = vmatprep.subr.bf16.mxu0 %v6337
  %6556 = vmatpush1.bf16.msra.mxu0 %v6336
  %6557 = vmatprep.subr.bf16.mxu0 %v6333
  %6558 = vmatpush1.bf16.msra.mxu0 %v6332
  %6559 = vmatprep.subr.bf16.mxu0 %v6329
  %6560 = vmatpush1.bf16.msra.mxu0 %v6328
  %6561 = vmatprep.subr.bf16.mxu0 %v6325
  %6562 = vmatpush1.bf16.msra.mxu0 %v6324
  %6563 = vmatprep.subr.bf16.mxu0 %v6321
  %6564 = vmatpush1.bf16.msra.mxu0 %v6320
  %6565 = vmatprep.subr.bf16.mxu0 %v6317
  %6566 = vmatpush1.bf16.msra.mxu0 %v6316
  %6567 = vmatprep.subr.bf16.mxu0 %v6377
  %6568 = vmatpush2.bf16.msra.mxu0 %v6376
  %6569 = vmatprep.subr.bf16.mxu0 %v6373
  %6570 = vmatpush2.bf16.msra.mxu0 %v6372
  %6571 = vmatprep.subr.bf16.mxu0 %v6369
  %6572 = vmatpush2.bf16.msra.mxu0 %v6368
  %6573 = vmatprep.subr.bf16.mxu0 %v6365
  %6574 = vmatpush2.bf16.msra.mxu0 %v6364
  %6575 = vmatprep.subr.bf16.mxu0 %v6361
  %6576 = vmatpush2.bf16.msra.mxu0 %v6360
  %6577 = vmatprep.subr.bf16.mxu0 %v6357
  %6578 = vmatpush2.bf16.msra.mxu0 %v6356
  %6579 = vmatprep.subr.bf16.mxu0 %v6353
  %6580 = vmatpush2.bf16.msra.mxu0 %v6352
  %6581 = vmatprep.subr.bf16.mxu0 %v6349
  %6582 = vmatpush2.bf16.msra.mxu0 %v6348
  %6583 = vmatprep.mubr.bf16.mxu0 %v166
  %6584 = vmatmul.mubr.bf16.gmra.mxu0 %v165
  %v6585 = vpop.f32.mrf.mxu0
  %v6586 = vadd.f32 %v6543, %v6585
  %v6587 = vpop.f32.mrf.mxu0
  %v6588 = vadd.f32 %v6545, %v6587
  %v6589 = vpop.f32.mrf.mxu0
  %v6590 = vadd.f32 %v6547, %v6589
  %v6591 = vpop.f32.mrf.mxu0
  %v6592 = vadd.f32 %v6549, %v6591
  %6593 = vdwg.mxu0
  %6594 = vmatprep.subr.bf16.mxu0 %v6283
  %6595 = vmatpush1.bf16.msra.mxu0 %v6282
  %6596 = vmatprep.subr.bf16.mxu0 %v6279
  %6597 = vmatpush1.bf16.msra.mxu0 %v6278
  %6598 = vmatprep.subr.bf16.mxu0 %v6275
  %6599 = vmatpush1.bf16.msra.mxu0 %v6274
  %6600 = vmatprep.subr.bf16.mxu0 %v6271
  %6601 = vmatpush1.bf16.msra.mxu0 %v6270
  %6602 = vmatprep.subr.bf16.mxu0 %v6267
  %6603 = vmatpush1.bf16.msra.mxu0 %v6266
  %6604 = vmatprep.subr.bf16.mxu0 %v6263
  %6605 = vmatpush1.bf16.msra.mxu0 %v6262
  %6606 = vmatprep.subr.bf16.mxu0 %v6259
  %6607 = vmatpush1.bf16.msra.mxu0 %v6258
  %6608 = vmatprep.subr.bf16.mxu0 %v6255
  %6609 = vmatpush1.bf16.msra.mxu0 %v6254
  %6610 = vmatprep.subr.bf16.mxu0 %v6315
  %6611 = vmatpush2.bf16.msra.mxu0 %v6314
  %6612 = vmatprep.subr.bf16.mxu0 %v6311
  %6613 = vmatpush2.bf16.msra.mxu0 %v6310
  %6614 = vmatprep.subr.bf16.mxu0 %v6307
  %6615 = vmatpush2.bf16.msra.mxu0 %v6306
  %6616 = vmatprep.subr.bf16.mxu0 %v6303
  %6617 = vmatpush2.bf16.msra.mxu0 %v6302
  %6618 = vmatprep.subr.bf16.mxu0 %v6299
  %6619 = vmatpush2.bf16.msra.mxu0 %v6298
  %6620 = vmatprep.subr.bf16.mxu0 %v6295
  %6621 = vmatpush2.bf16.msra.mxu0 %v6294
  %6622 = vmatprep.subr.bf16.mxu0 %v6291
  %6623 = vmatpush2.bf16.msra.mxu0 %v6290
  %6624 = vmatprep.subr.bf16.mxu0 %v6287
  %6625 = vmatpush2.bf16.msra.mxu0 %v6286
  %6626 = vmatprep.mubr.bf16.mxu0 %v164
  %6627 = vmatmul.mubr.bf16.gmra.mxu0 %v163
  %v6628 = vpop.f32.mrf.mxu0
  %v6629 = vadd.f32 0.0, %v6628
  %v6630 = vpop.f32.mrf.mxu0
  %v6631 = vadd.f32 0.0, %v6630
  %v6632 = vpop.f32.mrf.mxu0
  %v6633 = vadd.f32 0.0, %v6632
  %v6634 = vpop.f32.mrf.mxu0
  %v6635 = vadd.f32 0.0, %v6634
  %6636 = vdwg.mxu0
  %6637 = vmatprep.subr.bf16.mxu0 %v6347
  %6638 = vmatpush1.bf16.msra.mxu0 %v6346
  %6639 = vmatprep.subr.bf16.mxu0 %v6343
  %6640 = vmatpush1.bf16.msra.mxu0 %v6342
  %6641 = vmatprep.subr.bf16.mxu0 %v6339
  %6642 = vmatpush1.bf16.msra.mxu0 %v6338
  %6643 = vmatprep.subr.bf16.mxu0 %v6335
  %6644 = vmatpush1.bf16.msra.mxu0 %v6334
  %6645 = vmatprep.subr.bf16.mxu0 %v6331
  %6646 = vmatpush1.bf16.msra.mxu0 %v6330
  %6647 = vmatprep.subr.bf16.mxu0 %v6327
  %6648 = vmatpush1.bf16.msra.mxu0 %v6326
  %6649 = vmatprep.subr.bf16.mxu0 %v6323
  %6650 = vmatpush1.bf16.msra.mxu0 %v6322
  %6651 = vmatprep.subr.bf16.mxu0 %v6319
  %6652 = vmatpush1.bf16.msra.mxu0 %v6318
  %6653 = vmatprep.subr.bf16.mxu0 %v6379
  %6654 = vmatpush2.bf16.msra.mxu0 %v6378
  %6655 = vmatprep.subr.bf16.mxu0 %v6375
  %6656 = vmatpush2.bf16.msra.mxu0 %v6374
  %6657 = vmatprep.subr.bf16.mxu0 %v6371
  %6658 = vmatpush2.bf16.msra.mxu0 %v6370
  %6659 = vmatprep.subr.bf16.mxu0 %v6367
  %6660 = vmatpush2.bf16.msra.mxu0 %v6366
  %6661 = vmatprep.subr.bf16.mxu0 %v6363
  %6662 = vmatpush2.bf16.msra.mxu0 %v6362
  %6663 = vmatprep.subr.bf16.mxu0 %v6359
  %6664 = vmatpush2.bf16.msra.mxu0 %v6358
  %6665 = vmatprep.subr.bf16.mxu0 %v6355
  %6666 = vmatpush2.bf16.msra.mxu0 %v6354
  %6667 = vmatprep.subr.bf16.mxu0 %v6351
  %6668 = vmatpush2.bf16.msra.mxu0 %v6350
  %6669 = vmatprep.mubr.bf16.mxu0 %v166
  %6670 = vmatmul.mubr.bf16.gmra.mxu0 %v165
  %v6671 = vpop.f32.mrf.mxu0
  %v6672 = vadd.f32 %v6629, %v6671
  %v6673 = vpop.f32.mrf.mxu0
  %v6674 = vadd.f32 %v6631, %v6673
  %v6675 = vpop.f32.mrf.mxu0
  %v6676 = vadd.f32 %v6633, %v6675
  %v6677 = vpop.f32.mrf.mxu0
  %v6678 = vadd.f32 %v6635, %v6677
  %6679 = vdwg.mxu0
  %6680 = vmatprep.subr.bf16.mxu0 %v6281
  %6681 = vmatpush1.bf16.msra.mxu0 %v6280
  %6682 = vmatprep.subr.bf16.mxu0 %v6277
  %6683 = vmatpush1.bf16.msra.mxu0 %v6276
  %6684 = vmatprep.subr.bf16.mxu0 %v6273
  %6685 = vmatpush1.bf16.msra.mxu0 %v6272
  %6686 = vmatprep.subr.bf16.mxu0 %v6269
  %6687 = vmatpush1.bf16.msra.mxu0 %v6268
  %6688 = vmatprep.subr.bf16.mxu0 %v6265
  %6689 = vmatpush1.bf16.msra.mxu0 %v6264
  %6690 = vmatprep.subr.bf16.mxu0 %v6261
  %6691 = vmatpush1.bf16.msra.mxu0 %v6260
  %6692 = vmatprep.subr.bf16.mxu0 %v6257
  %6693 = vmatpush1.bf16.msra.mxu0 %v6256
  %6694 = vmatprep.subr.bf16.mxu0 %v6253
  %6695 = vmatpush1.bf16.msra.mxu0 %v6252
  %6696 = vmatprep.subr.bf16.mxu0 %v6313
  %6697 = vmatpush2.bf16.msra.mxu0 %v6312
  %6698 = vmatprep.subr.bf16.mxu0 %v6309
  %6699 = vmatpush2.bf16.msra.mxu0 %v6308
  %6700 = vmatprep.subr.bf16.mxu0 %v6305
  %6701 = vmatpush2.bf16.msra.mxu0 %v6304
  %6702 = vmatprep.subr.bf16.mxu0 %v6301
  %6703 = vmatpush2.bf16.msra.mxu0 %v6300
  %6704 = vmatprep.subr.bf16.mxu0 %v6297
  %6705 = vmatpush2.bf16.msra.mxu0 %v6296
  %6706 = vmatprep.subr.bf16.mxu0 %v6293
  %6707 = vmatpush2.bf16.msra.mxu0 %v6292
  %6708 = vmatprep.subr.bf16.mxu0 %v6289
  %6709 = vmatpush2.bf16.msra.mxu0 %v6288
  %6710 = vmatprep.subr.bf16.mxu0 %v6285
  %6711 = vmatpush2.bf16.msra.mxu0 %v6284
  %6712 = vmatprep.mubr.bf16.mxu0 %v996
  %6713 = vmatmul.mubr.bf16.gmra.mxu0 %v995
  %v6714 = vpop.f32.mrf.mxu0
  %v6715 = vadd.f32 0.0, %v6714
  %v6716 = vpop.f32.mrf.mxu0
  %v6717 = vadd.f32 0.0, %v6716
  %v6718 = vpop.f32.mrf.mxu0
  %v6719 = vadd.f32 0.0, %v6718
  %v6720 = vpop.f32.mrf.mxu0
  %v6721 = vadd.f32 0.0, %v6720
  %6722 = vdwg.mxu0
  %6723 = vmatprep.subr.bf16.mxu0 %v6345
  %6724 = vmatpush1.bf16.msra.mxu0 %v6344
  %6725 = vmatprep.subr.bf16.mxu0 %v6341
  %6726 = vmatpush1.bf16.msra.mxu0 %v6340
  %6727 = vmatprep.subr.bf16.mxu0 %v6337
  %6728 = vmatpush1.bf16.msra.mxu0 %v6336
  %6729 = vmatprep.subr.bf16.mxu0 %v6333
  %6730 = vmatpush1.bf16.msra.mxu0 %v6332
  %6731 = vmatprep.subr.bf16.mxu0 %v6329
  %6732 = vmatpush1.bf16.msra.mxu0 %v6328
  %6733 = vmatprep.subr.bf16.mxu0 %v6325
  %6734 = vmatpush1.bf16.msra.mxu0 %v6324
  %6735 = vmatprep.subr.bf16.mxu0 %v6321
  %6736 = vmatpush1.bf16.msra.mxu0 %v6320
  %6737 = vmatprep.subr.bf16.mxu0 %v6317
  %6738 = vmatpush1.bf16.msra.mxu0 %v6316
  %6739 = vmatprep.subr.bf16.mxu0 %v6377
  %6740 = vmatpush2.bf16.msra.mxu0 %v6376
  %6741 = vmatprep.subr.bf16.mxu0 %v6373
  %6742 = vmatpush2.bf16.msra.mxu0 %v6372
  %6743 = vmatprep.subr.bf16.mxu0 %v6369
  %6744 = vmatpush2.bf16.msra.mxu0 %v6368
  %6745 = vmatprep.subr.bf16.mxu0 %v6365
  %6746 = vmatpush2.bf16.msra.mxu0 %v6364
  %6747 = vmatprep.subr.bf16.mxu0 %v6361
  %6748 = vmatpush2.bf16.msra.mxu0 %v6360
  %6749 = vmatprep.subr.bf16.mxu0 %v6357
  %6750 = vmatpush2.bf16.msra.mxu0 %v6356
  %6751 = vmatprep.subr.bf16.mxu0 %v6353
  %6752 = vmatpush2.bf16.msra.mxu0 %v6352
  %6753 = vmatprep.subr.bf16.mxu0 %v6349
  %6754 = vmatpush2.bf16.msra.mxu0 %v6348
  %6755 = vmatprep.mubr.bf16.mxu0 %v998
  %6756 = vmatmul.mubr.bf16.gmra.mxu0 %v997
  %v6757 = vpop.f32.mrf.mxu0
  %v6758 = vadd.f32 %v6715, %v6757
  %v6759 = vpop.f32.mrf.mxu0
  %v6760 = vadd.f32 %v6717, %v6759
  %v6761 = vpop.f32.mrf.mxu0
  %v6762 = vadd.f32 %v6719, %v6761
  %v6763 = vpop.f32.mrf.mxu0
  %v6764 = vadd.f32 %v6721, %v6763
  %6765 = vdwg.mxu0
  %6766 = vmatprep.subr.bf16.mxu0 %v6283
  %6767 = vmatpush1.bf16.msra.mxu0 %v6282
  %6768 = vmatprep.subr.bf16.mxu0 %v6279
  %6769 = vmatpush1.bf16.msra.mxu0 %v6278
  %6770 = vmatprep.subr.bf16.mxu0 %v6275
  %6771 = vmatpush1.bf16.msra.mxu0 %v6274
  %6772 = vmatprep.subr.bf16.mxu0 %v6271
  %6773 = vmatpush1.bf16.msra.mxu0 %v6270
  %6774 = vmatprep.subr.bf16.mxu0 %v6267
  %6775 = vmatpush1.bf16.msra.mxu0 %v6266
  %6776 = vmatprep.subr.bf16.mxu0 %v6263
  %6777 = vmatpush1.bf16.msra.mxu0 %v6262
  %6778 = vmatprep.subr.bf16.mxu0 %v6259
  %6779 = vmatpush1.bf16.msra.mxu0 %v6258
  %6780 = vmatprep.subr.bf16.mxu0 %v6255
  %6781 = vmatpush1.bf16.msra.mxu0 %v6254
  %6782 = vmatprep.subr.bf16.mxu0 %v6315
  %6783 = vmatpush2.bf16.msra.mxu0 %v6314
  %6784 = vmatprep.subr.bf16.mxu0 %v6311
  %6785 = vmatpush2.bf16.msra.mxu0 %v6310
  %6786 = vmatprep.subr.bf16.mxu0 %v6307
  %6787 = vmatpush2.bf16.msra.mxu0 %v6306
  %6788 = vmatprep.subr.bf16.mxu0 %v6303
  %6789 = vmatpush2.bf16.msra.mxu0 %v6302
  %6790 = vmatprep.subr.bf16.mxu0 %v6299
  %6791 = vmatpush2.bf16.msra.mxu0 %v6298
  %6792 = vmatprep.subr.bf16.mxu0 %v6295
  %6793 = vmatpush2.bf16.msra.mxu0 %v6294
  %6794 = vmatprep.subr.bf16.mxu0 %v6291
  %6795 = vmatpush2.bf16.msra.mxu0 %v6290
  %6796 = vmatprep.subr.bf16.mxu0 %v6287
  %6797 = vmatpush2.bf16.msra.mxu0 %v6286
  %6798 = vmatprep.mubr.bf16.mxu0 %v996
  %6799 = vmatmul.mubr.bf16.gmra.mxu0 %v995
  %v6800 = vpop.f32.mrf.mxu0
  %v6801 = vadd.f32 0.0, %v6800
  %v6802 = vpop.f32.mrf.mxu0
  %v6803 = vadd.f32 0.0, %v6802
  %v6804 = vpop.f32.mrf.mxu0
  %v6805 = vadd.f32 0.0, %v6804
  %v6806 = vpop.f32.mrf.mxu0
  %v6807 = vadd.f32 0.0, %v6806
  %6808 = vdwg.mxu0
  %6809 = vmatprep.subr.bf16.mxu0 %v6347
  %6810 = vmatpush1.bf16.msra.mxu0 %v6346
  %6811 = vmatprep.subr.bf16.mxu0 %v6343
  %6812 = vmatpush1.bf16.msra.mxu0 %v6342
  %6813 = vmatprep.subr.bf16.mxu0 %v6339
  %6814 = vmatpush1.bf16.msra.mxu0 %v6338
  %6815 = vmatprep.subr.bf16.mxu0 %v6335
  %6816 = vmatpush1.bf16.msra.mxu0 %v6334
  %6817 = vmatprep.subr.bf16.mxu0 %v6331
  %6818 = vmatpush1.bf16.msra.mxu0 %v6330
  %6819 = vmatprep.subr.bf16.mxu0 %v6327
  %6820 = vmatpush1.bf16.msra.mxu0 %v6326
  %6821 = vmatprep.subr.bf16.mxu0 %v6323
  %6822 = vmatpush1.bf16.msra.mxu0 %v6322
  %6823 = vmatprep.subr.bf16.mxu0 %v6319
  %6824 = vmatpush1.bf16.msra.mxu0 %v6318
  %6825 = vmatprep.subr.bf16.mxu0 %v6379
  %6826 = vmatpush2.bf16.msra.mxu0 %v6378
  %6827 = vmatprep.subr.bf16.mxu0 %v6375
  %6828 = vmatpush2.bf16.msra.mxu0 %v6374
  %6829 = vmatprep.subr.bf16.mxu0 %v6371
  %6830 = vmatpush2.bf16.msra.mxu0 %v6370
  %6831 = vmatprep.subr.bf16.mxu0 %v6367
  %6832 = vmatpush2.bf16.msra.mxu0 %v6366
  %6833 = vmatprep.subr.bf16.mxu0 %v6363
  %6834 = vmatpush2.bf16.msra.mxu0 %v6362
  %6835 = vmatprep.subr.bf16.mxu0 %v6359
  %6836 = vmatpush2.bf16.msra.mxu0 %v6358
  %6837 = vmatprep.subr.bf16.mxu0 %v6355
  %6838 = vmatpush2.bf16.msra.mxu0 %v6354
  %6839 = vmatprep.subr.bf16.mxu0 %v6351
  %6840 = vmatpush2.bf16.msra.mxu0 %v6350
  %6841 = vmatprep.mubr.bf16.mxu0 %v998
  %6842 = vmatmul.mubr.bf16.gmra.mxu0 %v997
  %v6843 = vpop.f32.mrf.mxu0
  %v6844 = vadd.f32 %v6801, %v6843
  %v6845 = vpop.f32.mrf.mxu0
  %v6846 = vadd.f32 %v6803, %v6845
  %v6847 = vpop.f32.mrf.mxu0
  %v6848 = vadd.f32 %v6805, %v6847
  %v6849 = vpop.f32.mrf.mxu0
  %v6850 = vadd.f32 %v6807, %v6849
  %6851 = vdwg.mxu0
  %v6852 = vadd.f32 %v4360, %v5645
  %v6853 = vadd.f32 %v4362, %v5647
  %v6854 = vadd.f32 %v4446, %v5731
  %v6855 = vadd.f32 %v4448, %v5733
  %v6856 = vadd.f32 %v4364, %v5649
  %v6857 = vadd.f32 %v4366, %v5651
  %v6858 = vadd.f32 %v4450, %v5735
  %v6859 = vadd.f32 %v4452, %v5737
  %v6868 = vrot.slane %v6586, 1
  %v6869 = vrot.slane %v6588, 1
  %v6870 = vrot.slane %v6672, 1
  %v6871 = vrot.slane %v6674, 1
  %v6872 = vrot.slane %v6590, 1
  %v6873 = vrot.slane %v6592, 1
  %v6874 = vrot.slane %v6676, 1
  %v6875 = vrot.slane %v6678, 1
  %v6884 = vadd.f32 %v6852, %v6868
  %v6885 = vadd.f32 %v6853, %v6869
  %v6886 = vadd.f32 %v6854, %v6870
  %v6887 = vadd.f32 %v6855, %v6871
  %v6888 = vadd.f32 %v6856, %v6872
  %v6889 = vadd.f32 %v6857, %v6873
  %v6890 = vadd.f32 %v6858, %v6874
  %v6891 = vadd.f32 %v6859, %v6875
  %v6892 = vmax.f32 %v3505, %v6884
  %v6893 = vmax.f32 %v3506, %v6885
  %v6894 = vmax.f32 %v3507, %v6886
  %v6895 = vmax.f32 %v3508, %v6887
  %v6896 = vmax.f32 %v3509, %v6888
  %v6897 = vmax.f32 %v3510, %v6889
  %v6898 = vmax.f32 %v3511, %v6890
  %v6899 = vmax.f32 %v3512, %v6891
  %v6908 = vrot.slane %v5473, 1
  %v6909 = vrot.slane %v5475, 1
  %v6910 = vrot.slane %v5559, 1
  %v6911 = vrot.slane %v5561, 1
  %v6912 = vrot.slane %v5477, 1
  %v6913 = vrot.slane %v5479, 1
  %v6914 = vrot.slane %v5563, 1
  %v6915 = vrot.slane %v5565, 1
  %v6924 = vadd.f32 %v4532, %v6908
  %v6925 = vadd.f32 %v4534, %v6909
  %v6926 = vadd.f32 %v4618, %v6910
  %v6927 = vadd.f32 %v4620, %v6911
  %v6928 = vadd.f32 %v4536, %v6912
  %v6929 = vadd.f32 %v4538, %v6913
  %v6930 = vadd.f32 %v4622, %v6914
  %v6931 = vadd.f32 %v4624, %v6915
  %v6940 = vrot.slane %v6758, 1
  %v6941 = vrot.slane %v6760, 1
  %v6942 = vrot.slane %v6844, 1
  %v6943 = vrot.slane %v6846, 1
  %v6944 = vrot.slane %v6762, 1
  %v6945 = vrot.slane %v6764, 1
  %v6946 = vrot.slane %v6848, 1
  %v6947 = vrot.slane %v6850, 1
  %v6956 = vadd.f32 %v6924, %v6940
  %v6957 = vadd.f32 %v6925, %v6941
  %v6958 = vadd.f32 %v6926, %v6942
  %v6959 = vadd.f32 %v6927, %v6943
  %v6960 = vadd.f32 %v6928, %v6944
  %v6961 = vadd.f32 %v6929, %v6945
  %v6962 = vadd.f32 %v6930, %v6946
  %v6963 = vadd.f32 %v6931, %v6947
  %v6964 = vmax.f32 %v6892, %v6956
  %v6965 = vmax.f32 %v6893, %v6957
  %v6966 = vmax.f32 %v6894, %v6958
  %v6967 = vmax.f32 %v6895, %v6959
  %v6968 = vmax.f32 %v6896, %v6960
  %v6969 = vmax.f32 %v6897, %v6961
  %v6970 = vmax.f32 %v6898, %v6962
  %v6971 = vmax.f32 %v6899, %v6963
  %v6972 = vld [vmem:[%s2] sm:$0xf]
  %v6974 = vlaneseq
  %v6975 = vshrl.u32 %v6974, 7
  %v6976 = vsub.s32 0, %v6975
  %v6977 = vrot.slane %v6972, %v6976
  %v6978 = vlaneseq
  %v6979 = vshrl.u32 %v6978, 7
  %v6980 = vsub.s32 1, %v6979
  %v6981 = vrot.slane %v6972, %v6980
  %v6982 = vlaneseq
  %v6983 = vshrl.u32 %v6982, 7
  %v6984 = vsub.s32 2, %v6983
  %v6985 = vrot.slane %v6972, %v6984
  %v6986 = vlaneseq
  %v6987 = vshrl.u32 %v6986, 7
  %v6988 = vsub.s32 3, %v6987
  %v6989 = vrot.slane %v6972, %v6988
  %v6994 = vadd.f32 %v6964, %v6977
  %v6995 = vadd.f32 %v6965, %v6981
  %v6996 = vadd.f32 %v6966, %v6985
  %v6997 = vadd.f32 %v6967, %v6989
  %v6998 = vadd.f32 %v6968, %v6977
  %v6999 = vadd.f32 %v6969, %v6981
  %v7000 = vadd.f32 %v6970, %v6985
  %v7001 = vadd.f32 %v6971, %v6989
  %v7002 = vmax.f32 %v6994, 0.0
  %v7003 = vmax.f32 %v6995, 0.0
  %v7004 = vmax.f32 %v6996, 0.0
  %v7005 = vmax.f32 %v6997, 0.0
  %v7006 = vmax.f32 %v6998, 0.0
  %v7007 = vmax.f32 %v6999, 0.0
  %v7008 = vmax.f32 %v7000, 0.0
  %v7009 = vmax.f32 %v7001, 0.0
  %v7010 = vpack.c.bf16 %v7002, %v7002
  %v7011 = vpack.c.bf16 %v7003, %v7003
  %v7012 = vpack.c.bf16 %v7004, %v7004
  %v7013 = vpack.c.bf16 %v7005, %v7005
  %v7014 = vpack.c.bf16 %v7006, %v7006
  %v7015 = vpack.c.bf16 %v7007, %v7007
  %v7016 = vpack.c.bf16 %v7008, %v7008
  %v7017 = vpack.c.bf16 %v7009, %v7009
  %v7026 = vunpack.c.l.b16 %v7010
  %v7027 = vunpack.c.l.b16 %v7011
  %v7028 = vunpack.c.l.b16 %v7012
  %v7029 = vunpack.c.l.b16 %v7013
  %v7030 = vunpack.c.l.b16 %v7014
  %v7031 = vunpack.c.l.b16 %v7015
  %v7032 = vunpack.c.l.b16 %v7016
  %v7033 = vunpack.c.l.b16 %v7017
  %v7034 = vpack.c.b16 %v7027, %v7026
  %v7035 = vpack.c.b16 %v7029, %v7028
  %v7036 = vpack.c.b16 %v7031, %v7030
  %v7037 = vpack.c.b16 %v7033, %v7032
  %vm7042 = vcmask 1043456
  %vm7043 = vsmask.f32 3328
  %vm7044 = vmand %vm7042, %vm7043
  %vm7045 = vcmask 1047556
  %vm7046 = vsmask.f32 7424
  %vm7047 = vmand %vm7045, %vm7046
  %vm7048 = vmor %vm7047, %vm7044
  %v7049 = vld [vmem:[%s3] sm:$0xff]
  %v7050 = vsel %vm7048, %v7034, %v7049
  %7051 = vst [vmem:[%s3] sm:$0xff] %v7050
  %vm7052 = vcmask 523268
  %vm7053 = vmand %vm7052, %vm7046
  %vm7054 = vmor %vm7053, %vm7044
  %v7055 = vld [vmem:[%s3 + $0x8] sm:$0xff]
  %v7056 = vsel %vm7054, %v7035, %v7055
  %7057 = vst [vmem:[%s3 + $0x8] sm:$0xff] %v7056
  %v7058 = vld [vmem:[%s3 + $0x10] sm:$0xff]
  %v7059 = vsel %vm7048, %v7036, %v7058
  %7060 = vst [vmem:[%s3 + $0x10] sm:$0xff] %v7059
  %v7061 = vld [vmem:[%s3 + $0x18] sm:$0xff]
  %v7062 = vsel %vm7054, %v7037, %v7061
  %7063 = vst [vmem:[%s3 + $0x18] sm:$0xff] %v7062
  // Predicated region
  $region14: #{cnn_forward.4} parent=0 // pred_check
    _
  $region15: #{cnn_forward.4} parent=0 // pred_check_branch
    %7065 = sbr.rel (0) target = $region17
  $region16: #{cnn_forward.4} parent=0 // pred_region
    _
  $region17: #{cnn_forward.4} parent=0 // pred_fallthru
    _
  // Predicated region
  $region18: #{cnn_forward.4} parent=0 // pred_check
    _
  $region19: #{cnn_forward.4} parent=0 // pred_check_branch
    %7067 = sbr.rel (0) target = $region21
  $region20: #{cnn_forward.4} parent=0 // pred_region
    _
  $region21: #{cnn_forward.4} parent=0 // pred_fallthru
    _

</llo_original>
